<compile_context>
chip_gen: v7x
topology: tpu7x:2x2x1
jax: 0.10.0
libtpu: 0.0.40
codegen_flags: <defaults>
</compile_context>

<pallas_src>
import functools
import math

import jax
import jax.numpy as jnp
from jax.experimental import pallas as pl
from jax.experimental.pallas import tpu as pltpu

EPS = 1e-5  # torch.nn.LayerNorm default


def _ln(x, g, b):
    """LayerNorm in f32 (mirrors the fp16-safe LayerNorm subclass)."""
    mu = jnp.mean(x, axis=-1, keepdims=True)
    var = jnp.mean((x - mu) ** 2, axis=-1, keepdims=True)
    return (x - mu) * jax.lax.rsqrt(var + EPS) * g + b


def _split_heads(x2d, n_head, hd):
    """(S, n_head*hd) -> (n_head, S, hd) via static lane slices.

    Avoids a minor-dim-splitting reshape + 3-D transpose inside Mosaic; the
    batched einsums that follow keep the MXU fed with back-to-back pushes.
    """
    return jnp.stack([x2d[:, h * hd:(h + 1) * hd] for h in range(n_head)], axis=0)


# ----------------------------- fused forward kernel -----------------------------
def _style_adapter_kernel(x_ref, style_ref, lnpre_g, lnpre_b,
                          ln1_g, ln1_b, wqkv, bqkv, wo, bo,
                          ln2_g, ln2_b, wfc, bfc, wpr, bpr,
                          lnpost_g, lnpost_b, proj_ref, o_ref, *, n_head):
    S0, D = x_ref.shape[1], x_ref.shape[2]
    T = style_ref.shape[1]
    L = wqkv.shape[0]
    s_valid = S0 + T
    s_pad = ((s_valid + 7) // 8) * 8          # sublane-aligned sequence length
    hd = D // n_head
    scale = 1.0 / math.sqrt(hd)

    # Build the padded (s_pad, D) sequence: [x ; style_embedding ; zeros].
    parts = [x_ref[0].astype(jnp.float32), style_ref[0].astype(jnp.float32)]
    if s_pad > s_valid:
        parts.append(jnp.zeros((s_pad - s_valid, D), jnp.float32))
    h = jnp.concatenate(parts, axis=0)

    # ln_pre
    h = _ln(h, lnpre_g[...], lnpre_b[...])

    # Mask padded key columns once (padded rows are never read back as outputs).
    if s_pad > s_valid:
        key_idx = jax.lax.broadcasted_iota(jnp.int32, (1, 1, s_pad), 2)
        key_mask = key_idx < s_valid          # (1, 1, s_pad)
    else:
        key_mask = None

    # Static unroll over layers; all layer weights stay VMEM-resident.
    for l in range(L):
        # ---- self-attention branch: h + W_o(softmax(q k^T / sqrt(hd)) v) + b_o ----
        hn = _ln(h, ln1_g[pl.ds(l, 1), :], ln1_b[pl.ds(l, 1), :])
        qkv = jnp.dot(hn.astype(jnp.bfloat16), wqkv[l],
                      preferred_element_type=jnp.float32) + bqkv[pl.ds(l, 1), :]
        q = _split_heads(qkv[:, 0:D], n_head, hd) * scale        # (H, S, hd) f32
        k = _split_heads(qkv[:, D:2 * D], n_head, hd)
        v = _split_heads(qkv[:, 2 * D:3 * D], n_head, hd)

        s = jnp.einsum('hqd,hkd->hqk',
                       q.astype(jnp.bfloat16), k.astype(jnp.bfloat16),
                       preferred_element_type=jnp.float32)       # (H, S, S)
        if key_mask is not None:
            s = jnp.where(key_mask, s, -1e30)
        s = s - jnp.max(s, axis=-1, keepdims=True)
        p = jnp.exp(s)
        p = p * pl.reciprocal(jnp.sum(p, axis=-1, keepdims=True), approx=True)

        ctx = jnp.einsum('hqk,hkd->hqd',
                         p.astype(jnp.bfloat16), v.astype(jnp.bfloat16),
                         preferred_element_type=jnp.float32)     # (H, S, hd)
        # Per-head output projection merged by a head-sum (no lane concat).
        attn = jnp.einsum('hqd,hdn->hqn', ctx.astype(jnp.bfloat16), wo[l],
                          preferred_element_type=jnp.float32).sum(axis=0)
        h = h + attn + bo[pl.ds(l, 1), :]

        # ---- MLP branch: h + c_proj(QuickGELU(c_fc(ln_2(h)))) ----
        hn2 = _ln(h, ln2_g[pl.ds(l, 1), :], ln2_b[pl.ds(l, 1), :])
        fc = jnp.dot(hn2.astype(jnp.bfloat16), wfc[l],
                     preferred_element_type=jnp.float32) + bfc[pl.ds(l, 1), :]
        act = fc * jax.nn.sigmoid(1.702 * fc)                    # QuickGELU, f32
        mlp = jnp.dot(act.astype(jnp.bfloat16), wpr[l],
                      preferred_element_type=jnp.float32) + bpr[pl.ds(l, 1), :]
        h = h + mlp

    # ---- ln_post + projection on the last num_token (valid) rows ----
    tok = _ln(h[S0:s_valid, :], lnpost_g[...], lnpost_b[...])
    out = jnp.dot(tok.astype(jnp.bfloat16), proj_ref[...],
                  preferred_element_type=jnp.float32)            # (T, C_pad)
    o_ref[0] = out.astype(o_ref.dtype)


# ------------------------------- wrapper -------------------------------
def style_adapter_forward(x, params, n_head, num_token):
    B, S0, D = x.shape
    T = num_token
    C = params['proj'].shape[1]
    C_pad = ((C + 127) // 128) * 128   # lane-dense output slab, sliced back below
    proj_p = jnp.pad(params['proj'], ((0, 0), (0, C_pad - C))).astype(jnp.bfloat16)
    style = params['style_embedding'].astype(x.dtype)            # (1, T, D)

    weights = [params['ln_pre_g'], params['ln_pre_b'],
               params['ln1_g'], params['ln1_b'],
               params['w_qkv'], params['b_qkv'],
               params['w_o'], params['b_o'],
               params['ln2_g'], params['ln2_b'],
               params['w_fc'], params['b_fc'],
               params['w_pr'], params['b_pr'],
               params['ln_post_g'], params['ln_post_b'], proj_p]

    def const_spec(a):
        nd = a.ndim
        return pl.BlockSpec(a.shape, lambda i, _nd=nd: (0,) * _nd)

    in_specs = ([pl.BlockSpec((1, S0, D), lambda i: (i, 0, 0)),
                 pl.BlockSpec((1, T, D), lambda i: (0, 0, 0))]
                + [const_spec(w) for w in weights])

    out = pl.pallas_call(
        functools.partial(_style_adapter_kernel, n_head=n_head),
        out_shape=jax.ShapeDtypeStruct((B, T, C_pad), x.dtype),
        grid=(B,),
        in_specs=in_specs,
        out_specs=pl.BlockSpec((1, T, C_pad), lambda i: (i, 0, 0)),
        compiler_params=pltpu.CompilerParams(
            dimension_semantics=("parallel",),   # v7x: batch across both TCs
            vmem_limit_bytes=48 * 1024 * 1024),
    )(x, style, *weights)
    return out[:, :, :C]


# --------------------------- deterministic parameters ---------------------------
def init_params(key, width, context_dim, n_layers, num_head, num_token):
    D = width
    hd = D // num_head
    scale = D ** (-0.5)
    w_init = 0.02
    k = jax.random.split(key, 6)

    def bf16(a):
        return a.astype(jnp.bfloat16)

    return {
        'style_embedding': scale * jax.random.normal(k[0], (1, num_token, D), jnp.float32),
        'proj': scale * jax.random.normal(k[1], (D, context_dim), jnp.float32),
        'ln_pre_g': jnp.ones((1, D), jnp.float32),
        'ln_pre_b': jnp.zeros((1, D), jnp.float32),
        'ln_post_g': jnp.ones((1, D), jnp.float32),
        'ln_post_b': jnp.zeros((1, D), jnp.float32),
        # Per-layer weights stacked on a leading layer axis.  Matmul weights are
        # pre-transposed vs torch (kernel computes x @ W) and stored in bf16;
        # LayerNorm params and biases stay f32.
        'ln1_g': jnp.ones((n_layers, D), jnp.float32),
        'ln1_b': jnp.zeros((n_layers, D), jnp.float32),
        'ln2_g': jnp.ones((n_layers, D), jnp.float32),
        'ln2_b': jnp.zeros((n_layers, D), jnp.float32),
        'w_qkv': bf16(w_init * jax.random.normal(k[2], (n_layers, D, 3 * D), jnp.float32)),
        'b_qkv': jnp.zeros((n_layers, 3 * D), jnp.float32),
        # out-proj weight stored head-split (L, H, hd, D) == (L, D, D) reshaped,
        # so the kernel can do a per-head batched matmul + head-sum.
        'w_o': bf16((w_init * jax.random.normal(k[3], (n_layers, D, D), jnp.float32))
                    .reshape(n_layers, num_head, hd, D)),
        'b_o': jnp.zeros((n_layers, D), jnp.float32),
        'w_fc': bf16(w_init * jax.random.normal(k[4], (n_layers, D, 4 * D), jnp.float32)),
        'b_fc': jnp.zeros((n_layers, 4 * D), jnp.float32),
        'w_pr': bf16(w_init * jax.random.normal(k[5], (n_layers, 4 * D, D), jnp.float32)),
        'b_pr': jnp.zeros((n_layers, D), jnp.float32),
    }


if __name__ == "__main__":
    # Small, module-consistent shapes: width divisible by num_head; the 4 style
    # tokens are appended to an 8-token input sequence (S = 12, padded to 16).
    WIDTH, CONTEXT_DIM, NUM_HEAD, N_LAYERS, NUM_TOKEN = 128, 64, 8, 3, 4
    B, S0 = 2, 8

    key = jax.random.PRNGKey(0)
    kx, kp = jax.random.split(key)
    x = jax.random.normal(kx, (B, S0, WIDTH), jnp.float32)
    params = init_params(kp, WIDTH, CONTEXT_DIM, N_LAYERS, NUM_HEAD, NUM_TOKEN)

    out = style_adapter_forward(x, params, NUM_HEAD, NUM_TOKEN)
    out = jax.block_until_ready(out)
    assert out.shape == (B, NUM_TOKEN, CONTEXT_DIM), out.shape
    assert out.dtype == x.dtype
    print("KERNEL_OK")
</pallas_src>

<mosaic_0001>
module attributes {stable_mosaic.version = 11 : i64} {
  func.func @_style_adapter_kernel(%arg0: i32, %arg1: memref<1x8x128xf32, #tpu.memory_space<vmem>>, %arg2: memref<1x4x128xf32, #tpu.memory_space<vmem>>, %arg3: memref<1x128xf32, #tpu.memory_space<vmem>>, %arg4: memref<1x128xf32, #tpu.memory_space<vmem>>, %arg5: memref<3x128xf32, #tpu.memory_space<vmem>>, %arg6: memref<3x128xf32, #tpu.memory_space<vmem>>, %arg7: memref<3x128x384xbf16, #tpu.memory_space<vmem>>, %arg8: memref<3x384xf32, #tpu.memory_space<vmem>>, %arg9: memref<3x8x16x128xbf16, #tpu.memory_space<vmem>>, %arg10: memref<3x128xf32, #tpu.memory_space<vmem>>, %arg11: memref<3x128xf32, #tpu.memory_space<vmem>>, %arg12: memref<3x128xf32, #tpu.memory_space<vmem>>, %arg13: memref<3x128x512xbf16, #tpu.memory_space<vmem>>, %arg14: memref<3x512xf32, #tpu.memory_space<vmem>>, %arg15: memref<3x512x128xbf16, #tpu.memory_space<vmem>>, %arg16: memref<3x128xf32, #tpu.memory_space<vmem>>, %arg17: memref<1x128xf32, #tpu.memory_space<vmem>>, %arg18: memref<1x128xf32, #tpu.memory_space<vmem>>, %arg19: memref<128x128xbf16, #tpu.memory_space<vmem>>, %arg20: memref<1x4x128xf32, #tpu.memory_space<vmem>>) attributes {dimension_semantics = [#tpu.dimension_semantics<parallel>], iteration_bounds = array<i64: 2>, scalar_prefetch = 0 : i64, scratch_operands = 0 : i64, tpu.core_type = #tpu.core_type<tc>, window_params = [{transform_indices = @transform_0, window_bounds = array<i64: 1, 8, 128>}, {pipeline_mode = #tpu.pipeline_mode<synchronous>, transform_indices = @transform_1, window_bounds = array<i64: 1, 4, 128>}, {pipeline_mode = #tpu.pipeline_mode<synchronous>, transform_indices = @transform_2, window_bounds = array<i64: 1, 128>}, {pipeline_mode = #tpu.pipeline_mode<synchronous>, transform_indices = @transform_3, window_bounds = array<i64: 1, 128>}, {pipeline_mode = #tpu.pipeline_mode<synchronous>, transform_indices = @transform_4, window_bounds = array<i64: 3, 128>}, {pipeline_mode = #tpu.pipeline_mode<synchronous>, transform_indices = @transform_5, window_bounds = array<i64: 3, 128>}, {pipeline_mode = #tpu.pipeline_mode<synchronous>, transform_indices = @transform_6, window_bounds = array<i64: 3, 128, 384>}, {pipeline_mode = #tpu.pipeline_mode<synchronous>, transform_indices = @transform_7, window_bounds = array<i64: 3, 384>}, {pipeline_mode = #tpu.pipeline_mode<synchronous>, transform_indices = @transform_8, window_bounds = array<i64: 3, 8, 16, 128>}, {pipeline_mode = #tpu.pipeline_mode<synchronous>, transform_indices = @transform_9, window_bounds = array<i64: 3, 128>}, {pipeline_mode = #tpu.pipeline_mode<synchronous>, transform_indices = @transform_10, window_bounds = array<i64: 3, 128>}, {pipeline_mode = #tpu.pipeline_mode<synchronous>, transform_indices = @transform_11, window_bounds = array<i64: 3, 128>}, {pipeline_mode = #tpu.pipeline_mode<synchronous>, transform_indices = @transform_12, window_bounds = array<i64: 3, 128, 512>}, {pipeline_mode = #tpu.pipeline_mode<synchronous>, transform_indices = @transform_13, window_bounds = array<i64: 3, 512>}, {pipeline_mode = #tpu.pipeline_mode<synchronous>, transform_indices = @transform_14, window_bounds = array<i64: 3, 512, 128>}, {pipeline_mode = #tpu.pipeline_mode<synchronous>, transform_indices = @transform_15, window_bounds = array<i64: 3, 128>}, {pipeline_mode = #tpu.pipeline_mode<synchronous>, transform_indices = @transform_16, window_bounds = array<i64: 1, 128>}, {pipeline_mode = #tpu.pipeline_mode<synchronous>, transform_indices = @transform_17, window_bounds = array<i64: 1, 128>}, {pipeline_mode = #tpu.pipeline_mode<synchronous>, transform_indices = @transform_18, window_bounds = array<i64: 128, 128>}, {transform_indices = @transform_19, window_bounds = array<i64: 1, 4, 128>}]} {
    %c0 = arith.constant 0 : index
    %c0_0 = arith.constant 0 : index
    %c0_1 = arith.constant 0 : index
    %0 = vector.load %arg1[%c0, %c0_0, %c0_1] : memref<1x8x128xf32, #tpu.memory_space<vmem>>, vector<1x8x128xf32>
    %1 = vector.shape_cast %0 : vector<1x8x128xf32> to vector<8x128xf32>
    %c0_2 = arith.constant 0 : index
    %c0_3 = arith.constant 0 : index
    %c0_4 = arith.constant 0 : index
    %2 = vector.load %arg2[%c0_2, %c0_3, %c0_4] : memref<1x4x128xf32, #tpu.memory_space<vmem>>, vector<1x4x128xf32>
    %3 = vector.shape_cast %2 : vector<1x4x128xf32> to vector<4x128xf32>
    %cst = arith.constant 0.000000e+00 : f32
    %4 = vector.broadcast %cst : f32 to vector<4x128xf32>
    %5 = tpu.concatenate %1, %3, %4 in 0 : vector<8x128xf32>, vector<4x128xf32>, vector<4x128xf32> -> vector<16x128xf32>
    %c0_5 = arith.constant 0 : index
    %c0_6 = arith.constant 0 : index
    %6 = vector.load %arg3[%c0_5, %c0_6] : memref<1x128xf32, #tpu.memory_space<vmem>>, vector<1x128xf32>
    %c0_7 = arith.constant 0 : index
    %c0_8 = arith.constant 0 : index
    %7 = vector.load %arg4[%c0_7, %c0_8] : memref<1x128xf32, #tpu.memory_space<vmem>>, vector<1x128xf32>
    %cst_9 = arith.constant dense<0.000000e+00> : vector<16xf32>
    %8 = vector.multi_reduction <add>, %5, %cst_9 [1] : vector<16x128xf32> to vector<16xf32>
    %9 = vector.shape_cast %8 : vector<16xf32> to vector<16x1xf32>
    %cst_10 = arith.constant 1.280000e+02 : f32
    %10 = vector.broadcast %cst_10 : f32 to vector<16x1xf32>
    %11 = arith.divf %9, %10 : vector<16x1xf32>
    %12 = vector.broadcast %11 : vector<16x1xf32> to vector<16x128xf32>
    %13 = arith.subf %5, %12 : vector<16x128xf32>
    %14 = arith.mulf %13, %13 : vector<16x128xf32>
    %cst_11 = arith.constant dense<0.000000e+00> : vector<16xf32>
    %15 = vector.multi_reduction <add>, %14, %cst_11 [1] : vector<16x128xf32> to vector<16xf32>
    %16 = vector.shape_cast %15 : vector<16xf32> to vector<16x1xf32>
    %cst_12 = arith.constant 1.280000e+02 : f32
    %17 = vector.broadcast %cst_12 : f32 to vector<16x1xf32>
    %18 = arith.divf %16, %17 : vector<16x1xf32>
    %19 = vector.broadcast %11 : vector<16x1xf32> to vector<16x128xf32>
    %20 = arith.subf %5, %19 : vector<16x128xf32>
    %cst_13 = arith.constant 9.99999974E-6 : f32
    %21 = vector.broadcast %cst_13 : f32 to vector<16x1xf32>
    %22 = arith.addf %18, %21 : vector<16x1xf32>
    %23 = math.rsqrt %22 : vector<16x1xf32>
    %24 = vector.broadcast %23 : vector<16x1xf32> to vector<16x128xf32>
    %25 = arith.mulf %20, %24 : vector<16x128xf32>
    %26 = vector.broadcast %6 : vector<1x128xf32> to vector<16x128xf32>
    %27 = arith.mulf %25, %26 : vector<16x128xf32>
    %28 = vector.broadcast %7 : vector<1x128xf32> to vector<16x128xf32>
    %29 = arith.addf %27, %28 : vector<16x128xf32>
    %30 = tpu.iota {dimensions = array<i32: 2>} : vector<1x1x16xi32>
    %c12_i32 = arith.constant 12 : i32
    %31 = vector.broadcast %c12_i32 : i32 to vector<1x1x16xi32>
    %32 = arith.cmpi slt, %30, %31 : vector<1x1x16xi32>
    %c0_14 = arith.constant 0 : index
    %c0_15 = arith.constant 0 : index
    %33 = vector.load %arg5[%c0_14, %c0_15] : memref<3x128xf32, #tpu.memory_space<vmem>>, vector<1x128xf32>
    %c0_16 = arith.constant 0 : index
    %c0_17 = arith.constant 0 : index
    %34 = vector.load %arg6[%c0_16, %c0_17] : memref<3x128xf32, #tpu.memory_space<vmem>>, vector<1x128xf32>
    %cst_18 = arith.constant dense<0.000000e+00> : vector<16xf32>
    %35 = vector.multi_reduction <add>, %29, %cst_18 [1] : vector<16x128xf32> to vector<16xf32>
    %36 = vector.shape_cast %35 : vector<16xf32> to vector<16x1xf32>
    %cst_19 = arith.constant 1.280000e+02 : f32
    %37 = vector.broadcast %cst_19 : f32 to vector<16x1xf32>
    %38 = arith.divf %36, %37 : vector<16x1xf32>
    %39 = vector.broadcast %38 : vector<16x1xf32> to vector<16x128xf32>
    %40 = arith.subf %29, %39 : vector<16x128xf32>
    %41 = arith.mulf %40, %40 : vector<16x128xf32>
    %cst_20 = arith.constant dense<0.000000e+00> : vector<16xf32>
    %42 = vector.multi_reduction <add>, %41, %cst_20 [1] : vector<16x128xf32> to vector<16xf32>
    %43 = vector.shape_cast %42 : vector<16xf32> to vector<16x1xf32>
    %cst_21 = arith.constant 1.280000e+02 : f32
    %44 = vector.broadcast %cst_21 : f32 to vector<16x1xf32>
    %45 = arith.divf %43, %44 : vector<16x1xf32>
    %46 = vector.broadcast %38 : vector<16x1xf32> to vector<16x128xf32>
    %47 = arith.subf %29, %46 : vector<16x128xf32>
    %cst_22 = arith.constant 9.99999974E-6 : f32
    %48 = vector.broadcast %cst_22 : f32 to vector<16x1xf32>
    %49 = arith.addf %45, %48 : vector<16x1xf32>
    %50 = math.rsqrt %49 : vector<16x1xf32>
    %51 = vector.broadcast %50 : vector<16x1xf32> to vector<16x128xf32>
    %52 = arith.mulf %47, %51 : vector<16x128xf32>
    %53 = vector.broadcast %33 : vector<1x128xf32> to vector<16x128xf32>
    %54 = arith.mulf %52, %53 : vector<16x128xf32>
    %55 = vector.broadcast %34 : vector<1x128xf32> to vector<16x128xf32>
    %56 = arith.addf %54, %55 : vector<16x128xf32>
    %57 = arith.truncf %56 : vector<16x128xf32> to vector<16x128xbf16>
    %c0_23 = arith.constant 0 : index
    %c0_24 = arith.constant 0 : index
    %c0_25 = arith.constant 0 : index
    %58 = vector.load %arg7[%c0_23, %c0_24, %c0_25] : memref<3x128x384xbf16, #tpu.memory_space<vmem>>, vector<1x128x384xbf16>
    %59 = vector.shape_cast %58 : vector<1x128x384xbf16> to vector<128x384xbf16>
    %cst_26 = arith.constant dense<0.000000e+00> : vector<16x384xf32>
    %60 = tpu.matmul %57, %59, %cst_26 {dimension_numbers = #tpu.dot_dimension_numbers<[1], [0], [0], [1], [0, 0, 1, 1], [], []>} : vector<16x128xbf16>, vector<128x384xbf16>, vector<16x384xf32> -> vector<16x384xf32>
    %c0_27 = arith.constant 0 : index
    %c0_28 = arith.constant 0 : index
    %61 = vector.load %arg8[%c0_27, %c0_28] : memref<3x384xf32, #tpu.memory_space<vmem>>, vector<1x384xf32>
    %62 = vector.broadcast %61 : vector<1x384xf32> to vector<16x384xf32>
    %63 = arith.addf %60, %62 : vector<16x384xf32>
    %64 = vector.extract_strided_slice %63 {offsets = [0, 0], sizes = [16, 128], strides = [1, 1]} : vector<16x384xf32> to vector<16x128xf32>
    %65 = vector.extract_strided_slice %64 {offsets = [0, 0], sizes = [16, 16], strides = [1, 1]} : vector<16x128xf32> to vector<16x16xf32>
    %66 = vector.extract_strided_slice %64 {offsets = [0, 16], sizes = [16, 16], strides = [1, 1]} : vector<16x128xf32> to vector<16x16xf32>
    %67 = vector.extract_strided_slice %64 {offsets = [0, 32], sizes = [16, 16], strides = [1, 1]} : vector<16x128xf32> to vector<16x16xf32>
    %68 = vector.extract_strided_slice %64 {offsets = [0, 48], sizes = [16, 16], strides = [1, 1]} : vector<16x128xf32> to vector<16x16xf32>
    %69 = vector.extract_strided_slice %64 {offsets = [0, 64], sizes = [16, 16], strides = [1, 1]} : vector<16x128xf32> to vector<16x16xf32>
    %70 = vector.extract_strided_slice %64 {offsets = [0, 80], sizes = [16, 16], strides = [1, 1]} : vector<16x128xf32> to vector<16x16xf32>
    %71 = vector.extract_strided_slice %64 {offsets = [0, 96], sizes = [16, 16], strides = [1, 1]} : vector<16x128xf32> to vector<16x16xf32>
    %72 = vector.extract_strided_slice %64 {offsets = [0, 112], sizes = [16, 16], strides = [1, 1]} : vector<16x128xf32> to vector<16x16xf32>
    %73 = vector.shape_cast %65 : vector<16x16xf32> to vector<1x16x16xf32>
    %74 = vector.shape_cast %66 : vector<16x16xf32> to vector<1x16x16xf32>
    %75 = vector.shape_cast %67 : vector<16x16xf32> to vector<1x16x16xf32>
    %76 = vector.shape_cast %68 : vector<16x16xf32> to vector<1x16x16xf32>
    %77 = vector.shape_cast %69 : vector<16x16xf32> to vector<1x16x16xf32>
    %78 = vector.shape_cast %70 : vector<16x16xf32> to vector<1x16x16xf32>
    %79 = vector.shape_cast %71 : vector<16x16xf32> to vector<1x16x16xf32>
    %80 = vector.shape_cast %72 : vector<16x16xf32> to vector<1x16x16xf32>
    %81 = tpu.concatenate %73, %74, %75, %76, %77, %78, %79, %80 in 0 : vector<1x16x16xf32>, vector<1x16x16xf32>, vector<1x16x16xf32>, vector<1x16x16xf32>, vector<1x16x16xf32>, vector<1x16x16xf32>, vector<1x16x16xf32>, vector<1x16x16xf32> -> vector<8x16x16xf32>
    %cst_29 = arith.constant 2.500000e-01 : f32
    %82 = vector.broadcast %cst_29 : f32 to vector<8x16x16xf32>
    %83 = arith.mulf %81, %82 : vector<8x16x16xf32>
    %84 = vector.extract_strided_slice %63 {offsets = [0, 128], sizes = [16, 128], strides = [1, 1]} : vector<16x384xf32> to vector<16x128xf32>
    %85 = vector.extract_strided_slice %84 {offsets = [0, 0], sizes = [16, 16], strides = [1, 1]} : vector<16x128xf32> to vector<16x16xf32>
    %86 = vector.extract_strided_slice %84 {offsets = [0, 16], sizes = [16, 16], strides = [1, 1]} : vector<16x128xf32> to vector<16x16xf32>
    %87 = vector.extract_strided_slice %84 {offsets = [0, 32], sizes = [16, 16], strides = [1, 1]} : vector<16x128xf32> to vector<16x16xf32>
    %88 = vector.extract_strided_slice %84 {offsets = [0, 48], sizes = [16, 16], strides = [1, 1]} : vector<16x128xf32> to vector<16x16xf32>
    %89 = vector.extract_strided_slice %84 {offsets = [0, 64], sizes = [16, 16], strides = [1, 1]} : vector<16x128xf32> to vector<16x16xf32>
    %90 = vector.extract_strided_slice %84 {offsets = [0, 80], sizes = [16, 16], strides = [1, 1]} : vector<16x128xf32> to vector<16x16xf32>
    %91 = vector.extract_strided_slice %84 {offsets = [0, 96], sizes = [16, 16], strides = [1, 1]} : vector<16x128xf32> to vector<16x16xf32>
    %92 = vector.extract_strided_slice %84 {offsets = [0, 112], sizes = [16, 16], strides = [1, 1]} : vector<16x128xf32> to vector<16x16xf32>
    %93 = vector.shape_cast %85 : vector<16x16xf32> to vector<1x16x16xf32>
    %94 = vector.shape_cast %86 : vector<16x16xf32> to vector<1x16x16xf32>
    %95 = vector.shape_cast %87 : vector<16x16xf32> to vector<1x16x16xf32>
    %96 = vector.shape_cast %88 : vector<16x16xf32> to vector<1x16x16xf32>
    %97 = vector.shape_cast %89 : vector<16x16xf32> to vector<1x16x16xf32>
    %98 = vector.shape_cast %90 : vector<16x16xf32> to vector<1x16x16xf32>
    %99 = vector.shape_cast %91 : vector<16x16xf32> to vector<1x16x16xf32>
    %100 = vector.shape_cast %92 : vector<16x16xf32> to vector<1x16x16xf32>
    %101 = tpu.concatenate %93, %94, %95, %96, %97, %98, %99, %100 in 0 : vector<1x16x16xf32>, vector<1x16x16xf32>, vector<1x16x16xf32>, vector<1x16x16xf32>, vector<1x16x16xf32>, vector<1x16x16xf32>, vector<1x16x16xf32>, vector<1x16x16xf32> -> vector<8x16x16xf32>
    %102 = vector.extract_strided_slice %63 {offsets = [0, 256], sizes = [16, 128], strides = [1, 1]} : vector<16x384xf32> to vector<16x128xf32>
    %103 = vector.extract_strided_slice %102 {offsets = [0, 0], sizes = [16, 16], strides = [1, 1]} : vector<16x128xf32> to vector<16x16xf32>
    %104 = vector.extract_strided_slice %102 {offsets = [0, 16], sizes = [16, 16], strides = [1, 1]} : vector<16x128xf32> to vector<16x16xf32>
    %105 = vector.extract_strided_slice %102 {offsets = [0, 32], sizes = [16, 16], strides = [1, 1]} : vector<16x128xf32> to vector<16x16xf32>
    %106 = vector.extract_strided_slice %102 {offsets = [0, 48], sizes = [16, 16], strides = [1, 1]} : vector<16x128xf32> to vector<16x16xf32>
    %107 = vector.extract_strided_slice %102 {offsets = [0, 64], sizes = [16, 16], strides = [1, 1]} : vector<16x128xf32> to vector<16x16xf32>
    %108 = vector.extract_strided_slice %102 {offsets = [0, 80], sizes = [16, 16], strides = [1, 1]} : vector<16x128xf32> to vector<16x16xf32>
    %109 = vector.extract_strided_slice %102 {offsets = [0, 96], sizes = [16, 16], strides = [1, 1]} : vector<16x128xf32> to vector<16x16xf32>
    %110 = vector.extract_strided_slice %102 {offsets = [0, 112], sizes = [16, 16], strides = [1, 1]} : vector<16x128xf32> to vector<16x16xf32>
    %111 = vector.shape_cast %103 : vector<16x16xf32> to vector<1x16x16xf32>
    %112 = vector.shape_cast %104 : vector<16x16xf32> to vector<1x16x16xf32>
    %113 = vector.shape_cast %105 : vector<16x16xf32> to vector<1x16x16xf32>
    %114 = vector.shape_cast %106 : vector<16x16xf32> to vector<1x16x16xf32>
    %115 = vector.shape_cast %107 : vector<16x16xf32> to vector<1x16x16xf32>
    %116 = vector.shape_cast %108 : vector<16x16xf32> to vector<1x16x16xf32>
    %117 = vector.shape_cast %109 : vector<16x16xf32> to vector<1x16x16xf32>
    %118 = vector.shape_cast %110 : vector<16x16xf32> to vector<1x16x16xf32>
    %119 = tpu.concatenate %111, %112, %113, %114, %115, %116, %117, %118 in 0 : vector<1x16x16xf32>, vector<1x16x16xf32>, vector<1x16x16xf32>, vector<1x16x16xf32>, vector<1x16x16xf32>, vector<1x16x16xf32>, vector<1x16x16xf32>, vector<1x16x16xf32> -> vector<8x16x16xf32>
    %120 = arith.truncf %83 : vector<8x16x16xf32> to vector<8x16x16xbf16>
    %121 = arith.truncf %101 : vector<8x16x16xf32> to vector<8x16x16xbf16>
    "tpu.trace_start"() <{level = 10 : i32, message = "hqd,hkd->hqk"}> : () -> ()
    %cst_30 = arith.constant dense<0.000000e+00> : vector<8x16x16xf32>
    %122 = tpu.matmul %120, %121, %cst_30 {dimension_numbers = #tpu.dot_dimension_numbers<[2], [2], [1], [1], [0, 0, 0, 1, 1, 1], [0], [0]>} : vector<8x16x16xbf16>, vector<8x16x16xbf16>, vector<8x16x16xf32> -> vector<8x16x16xf32>
    %cst_31 = arith.constant -1.000000e+30 : f32
    "tpu.trace_stop"() : () -> ()
    %123 = vector.shape_cast %32 : vector<1x1x16xi1> to vector<1x1x16xi1>
    %124 = vector.broadcast %123 : vector<1x1x16xi1> to vector<8x16x16xi1>
    %125 = vector.broadcast %cst_31 : f32 to vector<8x16x16xf32>
    %126 = arith.select %124, %122, %125 : vector<8x16x16xi1>, vector<8x16x16xf32>
    %cst_32 = arith.constant dense<0xFF800000> : vector<8x16xf32>
    %127 = vector.multi_reduction <maximumf>, %126, %cst_32 [2] : vector<8x16x16xf32> to vector<8x16xf32>
    %128 = vector.shape_cast %127 : vector<8x16xf32> to vector<8x16x1xf32>
    %129 = vector.broadcast %128 : vector<8x16x1xf32> to vector<8x16x16xf32>
    %130 = arith.subf %126, %129 : vector<8x16x16xf32>
    %131 = math.exp %130 : vector<8x16x16xf32>
    %cst_33 = arith.constant dense<0.000000e+00> : vector<8x16xf32>
    %132 = vector.multi_reduction <add>, %131, %cst_33 [2] : vector<8x16x16xf32> to vector<8x16xf32>
    %133 = vector.shape_cast %132 : vector<8x16xf32> to vector<8x16x1xf32>
    %134 = tpu.reciprocal %133 {approx = true} : vector<8x16x1xf32> -> vector<8x16x1xf32>
    %135 = vector.broadcast %134 : vector<8x16x1xf32> to vector<8x16x16xf32>
    %136 = arith.mulf %131, %135 : vector<8x16x16xf32>
    %137 = arith.truncf %136 : vector<8x16x16xf32> to vector<8x16x16xbf16>
    %138 = arith.truncf %119 : vector<8x16x16xf32> to vector<8x16x16xbf16>
    "tpu.trace_start"() <{level = 10 : i32, message = "hqk,hkd->hqd"}> : () -> ()
    %cst_34 = arith.constant dense<0.000000e+00> : vector<8x16x16xf32>
    %139 = tpu.matmul %137, %138, %cst_34 {dimension_numbers = #tpu.dot_dimension_numbers<[2], [1], [1], [2], [0, 0, 0, 1, 1, 2], [0], [0]>} : vector<8x16x16xbf16>, vector<8x16x16xbf16>, vector<8x16x16xf32> -> vector<8x16x16xf32>
    "tpu.trace_stop"() : () -> ()
    %140 = arith.truncf %139 : vector<8x16x16xf32> to vector<8x16x16xbf16>
    %c0_35 = arith.constant 0 : index
    %c0_36 = arith.constant 0 : index
    %c0_37 = arith.constant 0 : index
    %c0_38 = arith.constant 0 : index
    %141 = vector.load %arg9[%c0_35, %c0_36, %c0_37, %c0_38] : memref<3x8x16x128xbf16, #tpu.memory_space<vmem>>, vector<1x8x16x128xbf16>
    %142 = vector.shape_cast %141 : vector<1x8x16x128xbf16> to vector<8x16x128xbf16>
    "tpu.trace_start"() <{level = 10 : i32, message = "hqd,hdn->hqn"}> : () -> ()
    %cst_39 = arith.constant dense<0.000000e+00> : vector<8x16x128xf32>
    %143 = tpu.matmul %140, %142, %cst_39 {dimension_numbers = #tpu.dot_dimension_numbers<[2], [1], [1], [2], [0, 0, 0, 1, 1, 2], [0], [0]>} : vector<8x16x16xbf16>, vector<8x16x128xbf16>, vector<8x16x128xf32> -> vector<8x16x128xf32>
    "tpu.trace_stop"() : () -> ()
    %cst_40 = arith.constant dense<0.000000e+00> : vector<16x128xf32>
    %144 = vector.multi_reduction <add>, %143, %cst_40 [0] : vector<8x16x128xf32> to vector<16x128xf32>
    %145 = arith.addf %29, %144 : vector<16x128xf32>
    %c0_41 = arith.constant 0 : index
    %c0_42 = arith.constant 0 : index
    %146 = vector.load %arg10[%c0_41, %c0_42] : memref<3x128xf32, #tpu.memory_space<vmem>>, vector<1x128xf32>
    %147 = vector.broadcast %146 : vector<1x128xf32> to vector<16x128xf32>
    %148 = arith.addf %145, %147 : vector<16x128xf32>
    %c0_43 = arith.constant 0 : index
    %c0_44 = arith.constant 0 : index
    %149 = vector.load %arg11[%c0_43, %c0_44] : memref<3x128xf32, #tpu.memory_space<vmem>>, vector<1x128xf32>
    %c0_45 = arith.constant 0 : index
    %c0_46 = arith.constant 0 : index
    %150 = vector.load %arg12[%c0_45, %c0_46] : memref<3x128xf32, #tpu.memory_space<vmem>>, vector<1x128xf32>
    %cst_47 = arith.constant dense<0.000000e+00> : vector<16xf32>
    %151 = vector.multi_reduction <add>, %148, %cst_47 [1] : vector<16x128xf32> to vector<16xf32>
    %152 = vector.shape_cast %151 : vector<16xf32> to vector<16x1xf32>
    %cst_48 = arith.constant 1.280000e+02 : f32
    %153 = vector.broadcast %cst_48 : f32 to vector<16x1xf32>
    %154 = arith.divf %152, %153 : vector<16x1xf32>
    %155 = vector.broadcast %154 : vector<16x1xf32> to vector<16x128xf32>
    %156 = arith.subf %148, %155 : vector<16x128xf32>
    %157 = arith.mulf %156, %156 : vector<16x128xf32>
    %cst_49 = arith.constant dense<0.000000e+00> : vector<16xf32>
    %158 = vector.multi_reduction <add>, %157, %cst_49 [1] : vector<16x128xf32> to vector<16xf32>
    %159 = vector.shape_cast %158 : vector<16xf32> to vector<16x1xf32>
    %cst_50 = arith.constant 1.280000e+02 : f32
    %160 = vector.broadcast %cst_50 : f32 to vector<16x1xf32>
    %161 = arith.divf %159, %160 : vector<16x1xf32>
    %162 = vector.broadcast %154 : vector<16x1xf32> to vector<16x128xf32>
    %163 = arith.subf %148, %162 : vector<16x128xf32>
    %cst_51 = arith.constant 9.99999974E-6 : f32
    %164 = vector.broadcast %cst_51 : f32 to vector<16x1xf32>
    %165 = arith.addf %161, %164 : vector<16x1xf32>
    %166 = math.rsqrt %165 : vector<16x1xf32>
    %167 = vector.broadcast %166 : vector<16x1xf32> to vector<16x128xf32>
    %168 = arith.mulf %163, %167 : vector<16x128xf32>
    %169 = vector.broadcast %149 : vector<1x128xf32> to vector<16x128xf32>
    %170 = arith.mulf %168, %169 : vector<16x128xf32>
    %171 = vector.broadcast %150 : vector<1x128xf32> to vector<16x128xf32>
    %172 = arith.addf %170, %171 : vector<16x128xf32>
    %173 = arith.truncf %172 : vector<16x128xf32> to vector<16x128xbf16>
    %c0_52 = arith.constant 0 : index
    %c0_53 = arith.constant 0 : index
    %c0_54 = arith.constant 0 : index
    %174 = vector.load %arg13[%c0_52, %c0_53, %c0_54] : memref<3x128x512xbf16, #tpu.memory_space<vmem>>, vector<1x128x512xbf16>
    %175 = vector.shape_cast %174 : vector<1x128x512xbf16> to vector<128x512xbf16>
    %cst_55 = arith.constant dense<0.000000e+00> : vector<16x512xf32>
    %176 = tpu.matmul %173, %175, %cst_55 {dimension_numbers = #tpu.dot_dimension_numbers<[1], [0], [0], [1], [0, 0, 1, 1], [], []>} : vector<16x128xbf16>, vector<128x512xbf16>, vector<16x512xf32> -> vector<16x512xf32>
    %c0_56 = arith.constant 0 : index
    %c0_57 = arith.constant 0 : index
    %177 = vector.load %arg14[%c0_56, %c0_57] : memref<3x512xf32, #tpu.memory_space<vmem>>, vector<1x512xf32>
    %178 = vector.broadcast %177 : vector<1x512xf32> to vector<16x512xf32>
    %179 = arith.addf %176, %178 : vector<16x512xf32>
    %cst_58 = arith.constant 1.702000e+00 : f32
    %180 = vector.broadcast %cst_58 : f32 to vector<16x512xf32>
    %181 = arith.mulf %180, %179 : vector<16x512xf32>
    %182 = arith.negf %181 : vector<16x512xf32>
    %183 = math.exp %182 : vector<16x512xf32>
    %cst_59 = arith.constant 1.000000e+00 : f32
    %184 = vector.broadcast %cst_59 : f32 to vector<16x512xf32>
    %185 = arith.addf %184, %183 : vector<16x512xf32>
    %186 = arith.divf %184, %185 : vector<16x512xf32>
    %187 = arith.mulf %179, %186 : vector<16x512xf32>
    %188 = arith.truncf %187 : vector<16x512xf32> to vector<16x512xbf16>
    %c0_60 = arith.constant 0 : index
    %c0_61 = arith.constant 0 : index
    %c0_62 = arith.constant 0 : index
    %189 = vector.load %arg15[%c0_60, %c0_61, %c0_62] : memref<3x512x128xbf16, #tpu.memory_space<vmem>>, vector<1x512x128xbf16>
    %190 = vector.shape_cast %189 : vector<1x512x128xbf16> to vector<512x128xbf16>
    %cst_63 = arith.constant dense<0.000000e+00> : vector<16x128xf32>
    %191 = tpu.matmul %188, %190, %cst_63 {dimension_numbers = #tpu.dot_dimension_numbers<[1], [0], [0], [1], [0, 0, 1, 1], [], []>} : vector<16x512xbf16>, vector<512x128xbf16>, vector<16x128xf32> -> vector<16x128xf32>
    %c0_64 = arith.constant 0 : index
    %c0_65 = arith.constant 0 : index
    %192 = vector.load %arg16[%c0_64, %c0_65] : memref<3x128xf32, #tpu.memory_space<vmem>>, vector<1x128xf32>
    %193 = vector.broadcast %192 : vector<1x128xf32> to vector<16x128xf32>
    %194 = arith.addf %191, %193 : vector<16x128xf32>
    %195 = arith.addf %148, %194 : vector<16x128xf32>
    %c1 = arith.constant 1 : index
    %c0_66 = arith.constant 0 : index
    %196 = vector.load %arg5[%c1, %c0_66] : memref<3x128xf32, #tpu.memory_space<vmem>>, vector<1x128xf32>
    %c1_67 = arith.constant 1 : index
    %c0_68 = arith.constant 0 : index
    %197 = vector.load %arg6[%c1_67, %c0_68] : memref<3x128xf32, #tpu.memory_space<vmem>>, vector<1x128xf32>
    %cst_69 = arith.constant dense<0.000000e+00> : vector<16xf32>
    %198 = vector.multi_reduction <add>, %195, %cst_69 [1] : vector<16x128xf32> to vector<16xf32>
    %199 = vector.shape_cast %198 : vector<16xf32> to vector<16x1xf32>
    %cst_70 = arith.constant 1.280000e+02 : f32
    %200 = vector.broadcast %cst_70 : f32 to vector<16x1xf32>
    %201 = arith.divf %199, %200 : vector<16x1xf32>
    %202 = vector.broadcast %201 : vector<16x1xf32> to vector<16x128xf32>
    %203 = arith.subf %195, %202 : vector<16x128xf32>
    %204 = arith.mulf %203, %203 : vector<16x128xf32>
    %cst_71 = arith.constant dense<0.000000e+00> : vector<16xf32>
    %205 = vector.multi_reduction <add>, %204, %cst_71 [1] : vector<16x128xf32> to vector<16xf32>
    %206 = vector.shape_cast %205 : vector<16xf32> to vector<16x1xf32>
    %cst_72 = arith.constant 1.280000e+02 : f32
    %207 = vector.broadcast %cst_72 : f32 to vector<16x1xf32>
    %208 = arith.divf %206, %207 : vector<16x1xf32>
    %209 = vector.broadcast %201 : vector<16x1xf32> to vector<16x128xf32>
    %210 = arith.subf %195, %209 : vector<16x128xf32>
    %cst_73 = arith.constant 9.99999974E-6 : f32
    %211 = vector.broadcast %cst_73 : f32 to vector<16x1xf32>
    %212 = arith.addf %208, %211 : vector<16x1xf32>
    %213 = math.rsqrt %212 : vector<16x1xf32>
    %214 = vector.broadcast %213 : vector<16x1xf32> to vector<16x128xf32>
    %215 = arith.mulf %210, %214 : vector<16x128xf32>
    %216 = vector.broadcast %196 : vector<1x128xf32> to vector<16x128xf32>
    %217 = arith.mulf %215, %216 : vector<16x128xf32>
    %218 = vector.broadcast %197 : vector<1x128xf32> to vector<16x128xf32>
    %219 = arith.addf %217, %218 : vector<16x128xf32>
    %220 = arith.truncf %219 : vector<16x128xf32> to vector<16x128xbf16>
    %c1_74 = arith.constant 1 : index
    %c0_75 = arith.constant 0 : index
    %c0_76 = arith.constant 0 : index
    %221 = vector.load %arg7[%c1_74, %c0_75, %c0_76] : memref<3x128x384xbf16, #tpu.memory_space<vmem>>, vector<1x128x384xbf16>
    %222 = vector.shape_cast %221 : vector<1x128x384xbf16> to vector<128x384xbf16>
    %cst_77 = arith.constant dense<0.000000e+00> : vector<16x384xf32>
    %223 = tpu.matmul %220, %222, %cst_77 {dimension_numbers = #tpu.dot_dimension_numbers<[1], [0], [0], [1], [0, 0, 1, 1], [], []>} : vector<16x128xbf16>, vector<128x384xbf16>, vector<16x384xf32> -> vector<16x384xf32>
    %c1_78 = arith.constant 1 : index
    %c0_79 = arith.constant 0 : index
    %224 = vector.load %arg8[%c1_78, %c0_79] : memref<3x384xf32, #tpu.memory_space<vmem>>, vector<1x384xf32>
    %225 = vector.broadcast %224 : vector<1x384xf32> to vector<16x384xf32>
    %226 = arith.addf %223, %225 : vector<16x384xf32>
    %227 = vector.extract_strided_slice %226 {offsets = [0, 0], sizes = [16, 128], strides = [1, 1]} : vector<16x384xf32> to vector<16x128xf32>
    %228 = vector.extract_strided_slice %227 {offsets = [0, 0], sizes = [16, 16], strides = [1, 1]} : vector<16x128xf32> to vector<16x16xf32>
    %229 = vector.extract_strided_slice %227 {offsets = [0, 16], sizes = [16, 16], strides = [1, 1]} : vector<16x128xf32> to vector<16x16xf32>
    %230 = vector.extract_strided_slice %227 {offsets = [0, 32], sizes = [16, 16], strides = [1, 1]} : vector<16x128xf32> to vector<16x16xf32>
    %231 = vector.extract_strided_slice %227 {offsets = [0, 48], sizes = [16, 16], strides = [1, 1]} : vector<16x128xf32> to vector<16x16xf32>
    %232 = vector.extract_strided_slice %227 {offsets = [0, 64], sizes = [16, 16], strides = [1, 1]} : vector<16x128xf32> to vector<16x16xf32>
    %233 = vector.extract_strided_slice %227 {offsets = [0, 80], sizes = [16, 16], strides = [1, 1]} : vector<16x128xf32> to vector<16x16xf32>
    %234 = vector.extract_strided_slice %227 {offsets = [0, 96], sizes = [16, 16], strides = [1, 1]} : vector<16x128xf32> to vector<16x16xf32>
    %235 = vector.extract_strided_slice %227 {offsets = [0, 112], sizes = [16, 16], strides = [1, 1]} : vector<16x128xf32> to vector<16x16xf32>
    %236 = vector.shape_cast %228 : vector<16x16xf32> to vector<1x16x16xf32>
    %237 = vector.shape_cast %229 : vector<16x16xf32> to vector<1x16x16xf32>
    %238 = vector.shape_cast %230 : vector<16x16xf32> to vector<1x16x16xf32>
    %239 = vector.shape_cast %231 : vector<16x16xf32> to vector<1x16x16xf32>
    %240 = vector.shape_cast %232 : vector<16x16xf32> to vector<1x16x16xf32>
    %241 = vector.shape_cast %233 : vector<16x16xf32> to vector<1x16x16xf32>
    %242 = vector.shape_cast %234 : vector<16x16xf32> to vector<1x16x16xf32>
    %243 = vector.shape_cast %235 : vector<16x16xf32> to vector<1x16x16xf32>
    %244 = tpu.concatenate %236, %237, %238, %239, %240, %241, %242, %243 in 0 : vector<1x16x16xf32>, vector<1x16x16xf32>, vector<1x16x16xf32>, vector<1x16x16xf32>, vector<1x16x16xf32>, vector<1x16x16xf32>, vector<1x16x16xf32>, vector<1x16x16xf32> -> vector<8x16x16xf32>
    %cst_80 = arith.constant 2.500000e-01 : f32
    %245 = vector.broadcast %cst_80 : f32 to vector<8x16x16xf32>
    %246 = arith.mulf %244, %245 : vector<8x16x16xf32>
    %247 = vector.extract_strided_slice %226 {offsets = [0, 128], sizes = [16, 128], strides = [1, 1]} : vector<16x384xf32> to vector<16x128xf32>
    %248 = vector.extract_strided_slice %247 {offsets = [0, 0], sizes = [16, 16], strides = [1, 1]} : vector<16x128xf32> to vector<16x16xf32>
    %249 = vector.extract_strided_slice %247 {offsets = [0, 16], sizes = [16, 16], strides = [1, 1]} : vector<16x128xf32> to vector<16x16xf32>
    %250 = vector.extract_strided_slice %247 {offsets = [0, 32], sizes = [16, 16], strides = [1, 1]} : vector<16x128xf32> to vector<16x16xf32>
    %251 = vector.extract_strided_slice %247 {offsets = [0, 48], sizes = [16, 16], strides = [1, 1]} : vector<16x128xf32> to vector<16x16xf32>
    %252 = vector.extract_strided_slice %247 {offsets = [0, 64], sizes = [16, 16], strides = [1, 1]} : vector<16x128xf32> to vector<16x16xf32>
    %253 = vector.extract_strided_slice %247 {offsets = [0, 80], sizes = [16, 16], strides = [1, 1]} : vector<16x128xf32> to vector<16x16xf32>
    %254 = vector.extract_strided_slice %247 {offsets = [0, 96], sizes = [16, 16], strides = [1, 1]} : vector<16x128xf32> to vector<16x16xf32>
    %255 = vector.extract_strided_slice %247 {offsets = [0, 112], sizes = [16, 16], strides = [1, 1]} : vector<16x128xf32> to vector<16x16xf32>
    %256 = vector.shape_cast %248 : vector<16x16xf32> to vector<1x16x16xf32>
    %257 = vector.shape_cast %249 : vector<16x16xf32> to vector<1x16x16xf32>
    %258 = vector.shape_cast %250 : vector<16x16xf32> to vector<1x16x16xf32>
    %259 = vector.shape_cast %251 : vector<16x16xf32> to vector<1x16x16xf32>
    %260 = vector.shape_cast %252 : vector<16x16xf32> to vector<1x16x16xf32>
    %261 = vector.shape_cast %253 : vector<16x16xf32> to vector<1x16x16xf32>
    %262 = vector.shape_cast %254 : vector<16x16xf32> to vector<1x16x16xf32>
    %263 = vector.shape_cast %255 : vector<16x16xf32> to vector<1x16x16xf32>
    %264 = tpu.concatenate %256, %257, %258, %259, %260, %261, %262, %263 in 0 : vector<1x16x16xf32>, vector<1x16x16xf32>, vector<1x16x16xf32>, vector<1x16x16xf32>, vector<1x16x16xf32>, vector<1x16x16xf32>, vector<1x16x16xf32>, vector<1x16x16xf32> -> vector<8x16x16xf32>
    %265 = vector.extract_strided_slice %226 {offsets = [0, 256], sizes = [16, 128], strides = [1, 1]} : vector<16x384xf32> to vector<16x128xf32>
    %266 = vector.extract_strided_slice %265 {offsets = [0, 0], sizes = [16, 16], strides = [1, 1]} : vector<16x128xf32> to vector<16x16xf32>
    %267 = vector.extract_strided_slice %265 {offsets = [0, 16], sizes = [16, 16], strides = [1, 1]} : vector<16x128xf32> to vector<16x16xf32>
    %268 = vector.extract_strided_slice %265 {offsets = [0, 32], sizes = [16, 16], strides = [1, 1]} : vector<16x128xf32> to vector<16x16xf32>
    %269 = vector.extract_strided_slice %265 {offsets = [0, 48], sizes = [16, 16], strides = [1, 1]} : vector<16x128xf32> to vector<16x16xf32>
    %270 = vector.extract_strided_slice %265 {offsets = [0, 64], sizes = [16, 16], strides = [1, 1]} : vector<16x128xf32> to vector<16x16xf32>
    %271 = vector.extract_strided_slice %265 {offsets = [0, 80], sizes = [16, 16], strides = [1, 1]} : vector<16x128xf32> to vector<16x16xf32>
    %272 = vector.extract_strided_slice %265 {offsets = [0, 96], sizes = [16, 16], strides = [1, 1]} : vector<16x128xf32> to vector<16x16xf32>
    %273 = vector.extract_strided_slice %265 {offsets = [0, 112], sizes = [16, 16], strides = [1, 1]} : vector<16x128xf32> to vector<16x16xf32>
    %274 = vector.shape_cast %266 : vector<16x16xf32> to vector<1x16x16xf32>
    %275 = vector.shape_cast %267 : vector<16x16xf32> to vector<1x16x16xf32>
    %276 = vector.shape_cast %268 : vector<16x16xf32> to vector<1x16x16xf32>
    %277 = vector.shape_cast %269 : vector<16x16xf32> to vector<1x16x16xf32>
    %278 = vector.shape_cast %270 : vector<16x16xf32> to vector<1x16x16xf32>
    %279 = vector.shape_cast %271 : vector<16x16xf32> to vector<1x16x16xf32>
    %280 = vector.shape_cast %272 : vector<16x16xf32> to vector<1x16x16xf32>
    %281 = vector.shape_cast %273 : vector<16x16xf32> to vector<1x16x16xf32>
    %282 = tpu.concatenate %274, %275, %276, %277, %278, %279, %280, %281 in 0 : vector<1x16x16xf32>, vector<1x16x16xf32>, vector<1x16x16xf32>, vector<1x16x16xf32>, vector<1x16x16xf32>, vector<1x16x16xf32>, vector<1x16x16xf32>, vector<1x16x16xf32> -> vector<8x16x16xf32>
    %283 = arith.truncf %246 : vector<8x16x16xf32> to vector<8x16x16xbf16>
    %284 = arith.truncf %264 : vector<8x16x16xf32> to vector<8x16x16xbf16>
    "tpu.trace_start"() <{level = 10 : i32, message = "hqd,hkd->hqk"}> : () -> ()
    %cst_81 = arith.constant dense<0.000000e+00> : vector<8x16x16xf32>
    %285 = tpu.matmul %283, %284, %cst_81 {dimension_numbers = #tpu.dot_dimension_numbers<[2], [2], [1], [1], [0, 0, 0, 1, 1, 1], [0], [0]>} : vector<8x16x16xbf16>, vector<8x16x16xbf16>, vector<8x16x16xf32> -> vector<8x16x16xf32>
    %cst_82 = arith.constant -1.000000e+30 : f32
    "tpu.trace_stop"() : () -> ()
    %286 = vector.shape_cast %32 : vector<1x1x16xi1> to vector<1x1x16xi1>
    %287 = vector.broadcast %286 : vector<1x1x16xi1> to vector<8x16x16xi1>
    %288 = vector.broadcast %cst_82 : f32 to vector<8x16x16xf32>
    %289 = arith.select %287, %285, %288 : vector<8x16x16xi1>, vector<8x16x16xf32>
    %cst_83 = arith.constant dense<0xFF800000> : vector<8x16xf32>
    %290 = vector.multi_reduction <maximumf>, %289, %cst_83 [2] : vector<8x16x16xf32> to vector<8x16xf32>
    %291 = vector.shape_cast %290 : vector<8x16xf32> to vector<8x16x1xf32>
    %292 = vector.broadcast %291 : vector<8x16x1xf32> to vector<8x16x16xf32>
    %293 = arith.subf %289, %292 : vector<8x16x16xf32>
    %294 = math.exp %293 : vector<8x16x16xf32>
    %cst_84 = arith.constant dense<0.000000e+00> : vector<8x16xf32>
    %295 = vector.multi_reduction <add>, %294, %cst_84 [2] : vector<8x16x16xf32> to vector<8x16xf32>
    %296 = vector.shape_cast %295 : vector<8x16xf32> to vector<8x16x1xf32>
    %297 = tpu.reciprocal %296 {approx = true} : vector<8x16x1xf32> -> vector<8x16x1xf32>
    %298 = vector.broadcast %297 : vector<8x16x1xf32> to vector<8x16x16xf32>
    %299 = arith.mulf %294, %298 : vector<8x16x16xf32>
    %300 = arith.truncf %299 : vector<8x16x16xf32> to vector<8x16x16xbf16>
    %301 = arith.truncf %282 : vector<8x16x16xf32> to vector<8x16x16xbf16>
    "tpu.trace_start"() <{level = 10 : i32, message = "hqk,hkd->hqd"}> : () -> ()
    %cst_85 = arith.constant dense<0.000000e+00> : vector<8x16x16xf32>
    %302 = tpu.matmul %300, %301, %cst_85 {dimension_numbers = #tpu.dot_dimension_numbers<[2], [1], [1], [2], [0, 0, 0, 1, 1, 2], [0], [0]>} : vector<8x16x16xbf16>, vector<8x16x16xbf16>, vector<8x16x16xf32> -> vector<8x16x16xf32>
    "tpu.trace_stop"() : () -> ()
    %303 = arith.truncf %302 : vector<8x16x16xf32> to vector<8x16x16xbf16>
    %c1_86 = arith.constant 1 : index
    %c0_87 = arith.constant 0 : index
    %c0_88 = arith.constant 0 : index
    %c0_89 = arith.constant 0 : index
    %304 = vector.load %arg9[%c1_86, %c0_87, %c0_88, %c0_89] : memref<3x8x16x128xbf16, #tpu.memory_space<vmem>>, vector<1x8x16x128xbf16>
    %305 = vector.shape_cast %304 : vector<1x8x16x128xbf16> to vector<8x16x128xbf16>
    "tpu.trace_start"() <{level = 10 : i32, message = "hqd,hdn->hqn"}> : () -> ()
    %cst_90 = arith.constant dense<0.000000e+00> : vector<8x16x128xf32>
    %306 = tpu.matmul %303, %305, %cst_90 {dimension_numbers = #tpu.dot_dimension_numbers<[2], [1], [1], [2], [0, 0, 0, 1, 1, 2], [0], [0]>} : vector<8x16x16xbf16>, vector<8x16x128xbf16>, vector<8x16x128xf32> -> vector<8x16x128xf32>
    "tpu.trace_stop"() : () -> ()
    %cst_91 = arith.constant dense<0.000000e+00> : vector<16x128xf32>
    %307 = vector.multi_reduction <add>, %306, %cst_91 [0] : vector<8x16x128xf32> to vector<16x128xf32>
    %308 = arith.addf %195, %307 : vector<16x128xf32>
    %c1_92 = arith.constant 1 : index
    %c0_93 = arith.constant 0 : index
    %309 = vector.load %arg10[%c1_92, %c0_93] : memref<3x128xf32, #tpu.memory_space<vmem>>, vector<1x128xf32>
    %310 = vector.broadcast %309 : vector<1x128xf32> to vector<16x128xf32>
    %311 = arith.addf %308, %310 : vector<16x128xf32>
    %c1_94 = arith.constant 1 : index
    %c0_95 = arith.constant 0 : index
    %312 = vector.load %arg11[%c1_94, %c0_95] : memref<3x128xf32, #tpu.memory_space<vmem>>, vector<1x128xf32>
    %c1_96 = arith.constant 1 : index
    %c0_97 = arith.constant 0 : index
    %313 = vector.load %arg12[%c1_96, %c0_97] : memref<3x128xf32, #tpu.memory_space<vmem>>, vector<1x128xf32>
    %cst_98 = arith.constant dense<0.000000e+00> : vector<16xf32>
    %314 = vector.multi_reduction <add>, %311, %cst_98 [1] : vector<16x128xf32> to vector<16xf32>
    %315 = vector.shape_cast %314 : vector<16xf32> to vector<16x1xf32>
    %cst_99 = arith.constant 1.280000e+02 : f32
    %316 = vector.broadcast %cst_99 : f32 to vector<16x1xf32>
    %317 = arith.divf %315, %316 : vector<16x1xf32>
    %318 = vector.broadcast %317 : vector<16x1xf32> to vector<16x128xf32>
    %319 = arith.subf %311, %318 : vector<16x128xf32>
    %320 = arith.mulf %319, %319 : vector<16x128xf32>
    %cst_100 = arith.constant dense<0.000000e+00> : vector<16xf32>
    %321 = vector.multi_reduction <add>, %320, %cst_100 [1] : vector<16x128xf32> to vector<16xf32>
    %322 = vector.shape_cast %321 : vector<16xf32> to vector<16x1xf32>
    %cst_101 = arith.constant 1.280000e+02 : f32
    %323 = vector.broadcast %cst_101 : f32 to vector<16x1xf32>
    %324 = arith.divf %322, %323 : vector<16x1xf32>
    %325 = vector.broadcast %317 : vector<16x1xf32> to vector<16x128xf32>
    %326 = arith.subf %311, %325 : vector<16x128xf32>
    %cst_102 = arith.constant 9.99999974E-6 : f32
    %327 = vector.broadcast %cst_102 : f32 to vector<16x1xf32>
    %328 = arith.addf %324, %327 : vector<16x1xf32>
    %329 = math.rsqrt %328 : vector<16x1xf32>
    %330 = vector.broadcast %329 : vector<16x1xf32> to vector<16x128xf32>
    %331 = arith.mulf %326, %330 : vector<16x128xf32>
    %332 = vector.broadcast %312 : vector<1x128xf32> to vector<16x128xf32>
    %333 = arith.mulf %331, %332 : vector<16x128xf32>
    %334 = vector.broadcast %313 : vector<1x128xf32> to vector<16x128xf32>
    %335 = arith.addf %333, %334 : vector<16x128xf32>
    %336 = arith.truncf %335 : vector<16x128xf32> to vector<16x128xbf16>
    %c1_103 = arith.constant 1 : index
    %c0_104 = arith.constant 0 : index
    %c0_105 = arith.constant 0 : index
    %337 = vector.load %arg13[%c1_103, %c0_104, %c0_105] : memref<3x128x512xbf16, #tpu.memory_space<vmem>>, vector<1x128x512xbf16>
    %338 = vector.shape_cast %337 : vector<1x128x512xbf16> to vector<128x512xbf16>
    %cst_106 = arith.constant dense<0.000000e+00> : vector<16x512xf32>
    %339 = tpu.matmul %336, %338, %cst_106 {dimension_numbers = #tpu.dot_dimension_numbers<[1], [0], [0], [1], [0, 0, 1, 1], [], []>} : vector<16x128xbf16>, vector<128x512xbf16>, vector<16x512xf32> -> vector<16x512xf32>
    %c1_107 = arith.constant 1 : index
    %c0_108 = arith.constant 0 : index
    %340 = vector.load %arg14[%c1_107, %c0_108] : memref<3x512xf32, #tpu.memory_space<vmem>>, vector<1x512xf32>
    %341 = vector.broadcast %340 : vector<1x512xf32> to vector<16x512xf32>
    %342 = arith.addf %339, %341 : vector<16x512xf32>
    %cst_109 = arith.constant 1.702000e+00 : f32
    %343 = vector.broadcast %cst_109 : f32 to vector<16x512xf32>
    %344 = arith.mulf %343, %342 : vector<16x512xf32>
    %345 = arith.negf %344 : vector<16x512xf32>
    %346 = math.exp %345 : vector<16x512xf32>
    %cst_110 = arith.constant 1.000000e+00 : f32
    %347 = vector.broadcast %cst_110 : f32 to vector<16x512xf32>
    %348 = arith.addf %347, %346 : vector<16x512xf32>
    %349 = arith.divf %347, %348 : vector<16x512xf32>
    %350 = arith.mulf %342, %349 : vector<16x512xf32>
    %351 = arith.truncf %350 : vector<16x512xf32> to vector<16x512xbf16>
    %c1_111 = arith.constant 1 : index
    %c0_112 = arith.constant 0 : index
    %c0_113 = arith.constant 0 : index
    %352 = vector.load %arg15[%c1_111, %c0_112, %c0_113] : memref<3x512x128xbf16, #tpu.memory_space<vmem>>, vector<1x512x128xbf16>
    %353 = vector.shape_cast %352 : vector<1x512x128xbf16> to vector<512x128xbf16>
    %cst_114 = arith.constant dense<0.000000e+00> : vector<16x128xf32>
    %354 = tpu.matmul %351, %353, %cst_114 {dimension_numbers = #tpu.dot_dimension_numbers<[1], [0], [0], [1], [0, 0, 1, 1], [], []>} : vector<16x512xbf16>, vector<512x128xbf16>, vector<16x128xf32> -> vector<16x128xf32>
    %c1_115 = arith.constant 1 : index
    %c0_116 = arith.constant 0 : index
    %355 = vector.load %arg16[%c1_115, %c0_116] : memref<3x128xf32, #tpu.memory_space<vmem>>, vector<1x128xf32>
    %356 = vector.broadcast %355 : vector<1x128xf32> to vector<16x128xf32>
    %357 = arith.addf %354, %356 : vector<16x128xf32>
    %358 = arith.addf %311, %357 : vector<16x128xf32>
    %c2 = arith.constant 2 : index
    %c0_117 = arith.constant 0 : index
    %359 = vector.load %arg5[%c2, %c0_117] : memref<3x128xf32, #tpu.memory_space<vmem>>, vector<1x128xf32>
    %c2_118 = arith.constant 2 : index
    %c0_119 = arith.constant 0 : index
    %360 = vector.load %arg6[%c2_118, %c0_119] : memref<3x128xf32, #tpu.memory_space<vmem>>, vector<1x128xf32>
    %cst_120 = arith.constant dense<0.000000e+00> : vector<16xf32>
    %361 = vector.multi_reduction <add>, %358, %cst_120 [1] : vector<16x128xf32> to vector<16xf32>
    %362 = vector.shape_cast %361 : vector<16xf32> to vector<16x1xf32>
    %cst_121 = arith.constant 1.280000e+02 : f32
    %363 = vector.broadcast %cst_121 : f32 to vector<16x1xf32>
    %364 = arith.divf %362, %363 : vector<16x1xf32>
    %365 = vector.broadcast %364 : vector<16x1xf32> to vector<16x128xf32>
    %366 = arith.subf %358, %365 : vector<16x128xf32>
    %367 = arith.mulf %366, %366 : vector<16x128xf32>
    %cst_122 = arith.constant dense<0.000000e+00> : vector<16xf32>
    %368 = vector.multi_reduction <add>, %367, %cst_122 [1] : vector<16x128xf32> to vector<16xf32>
    %369 = vector.shape_cast %368 : vector<16xf32> to vector<16x1xf32>
    %cst_123 = arith.constant 1.280000e+02 : f32
    %370 = vector.broadcast %cst_123 : f32 to vector<16x1xf32>
    %371 = arith.divf %369, %370 : vector<16x1xf32>
    %372 = vector.broadcast %364 : vector<16x1xf32> to vector<16x128xf32>
    %373 = arith.subf %358, %372 : vector<16x128xf32>
    %cst_124 = arith.constant 9.99999974E-6 : f32
    %374 = vector.broadcast %cst_124 : f32 to vector<16x1xf32>
    %375 = arith.addf %371, %374 : vector<16x1xf32>
    %376 = math.rsqrt %375 : vector<16x1xf32>
    %377 = vector.broadcast %376 : vector<16x1xf32> to vector<16x128xf32>
    %378 = arith.mulf %373, %377 : vector<16x128xf32>
    %379 = vector.broadcast %359 : vector<1x128xf32> to vector<16x128xf32>
    %380 = arith.mulf %378, %379 : vector<16x128xf32>
    %381 = vector.broadcast %360 : vector<1x128xf32> to vector<16x128xf32>
    %382 = arith.addf %380, %381 : vector<16x128xf32>
    %383 = arith.truncf %382 : vector<16x128xf32> to vector<16x128xbf16>
    %c2_125 = arith.constant 2 : index
    %c0_126 = arith.constant 0 : index
    %c0_127 = arith.constant 0 : index
    %384 = vector.load %arg7[%c2_125, %c0_126, %c0_127] : memref<3x128x384xbf16, #tpu.memory_space<vmem>>, vector<1x128x384xbf16>
    %385 = vector.shape_cast %384 : vector<1x128x384xbf16> to vector<128x384xbf16>
    %cst_128 = arith.constant dense<0.000000e+00> : vector<16x384xf32>
    %386 = tpu.matmul %383, %385, %cst_128 {dimension_numbers = #tpu.dot_dimension_numbers<[1], [0], [0], [1], [0, 0, 1, 1], [], []>} : vector<16x128xbf16>, vector<128x384xbf16>, vector<16x384xf32> -> vector<16x384xf32>
    %c2_129 = arith.constant 2 : index
    %c0_130 = arith.constant 0 : index
    %387 = vector.load %arg8[%c2_129, %c0_130] : memref<3x384xf32, #tpu.memory_space<vmem>>, vector<1x384xf32>
    %388 = vector.broadcast %387 : vector<1x384xf32> to vector<16x384xf32>
    %389 = arith.addf %386, %388 : vector<16x384xf32>
    %390 = vector.extract_strided_slice %389 {offsets = [0, 0], sizes = [16, 128], strides = [1, 1]} : vector<16x384xf32> to vector<16x128xf32>
    %391 = vector.extract_strided_slice %390 {offsets = [0, 0], sizes = [16, 16], strides = [1, 1]} : vector<16x128xf32> to vector<16x16xf32>
    %392 = vector.extract_strided_slice %390 {offsets = [0, 16], sizes = [16, 16], strides = [1, 1]} : vector<16x128xf32> to vector<16x16xf32>
    %393 = vector.extract_strided_slice %390 {offsets = [0, 32], sizes = [16, 16], strides = [1, 1]} : vector<16x128xf32> to vector<16x16xf32>
    %394 = vector.extract_strided_slice %390 {offsets = [0, 48], sizes = [16, 16], strides = [1, 1]} : vector<16x128xf32> to vector<16x16xf32>
    %395 = vector.extract_strided_slice %390 {offsets = [0, 64], sizes = [16, 16], strides = [1, 1]} : vector<16x128xf32> to vector<16x16xf32>
    %396 = vector.extract_strided_slice %390 {offsets = [0, 80], sizes = [16, 16], strides = [1, 1]} : vector<16x128xf32> to vector<16x16xf32>
    %397 = vector.extract_strided_slice %390 {offsets = [0, 96], sizes = [16, 16], strides = [1, 1]} : vector<16x128xf32> to vector<16x16xf32>
    %398 = vector.extract_strided_slice %390 {offsets = [0, 112], sizes = [16, 16], strides = [1, 1]} : vector<16x128xf32> to vector<16x16xf32>
    %399 = vector.shape_cast %391 : vector<16x16xf32> to vector<1x16x16xf32>
    %400 = vector.shape_cast %392 : vector<16x16xf32> to vector<1x16x16xf32>
    %401 = vector.shape_cast %393 : vector<16x16xf32> to vector<1x16x16xf32>
    %402 = vector.shape_cast %394 : vector<16x16xf32> to vector<1x16x16xf32>
    %403 = vector.shape_cast %395 : vector<16x16xf32> to vector<1x16x16xf32>
    %404 = vector.shape_cast %396 : vector<16x16xf32> to vector<1x16x16xf32>
    %405 = vector.shape_cast %397 : vector<16x16xf32> to vector<1x16x16xf32>
    %406 = vector.shape_cast %398 : vector<16x16xf32> to vector<1x16x16xf32>
    %407 = tpu.concatenate %399, %400, %401, %402, %403, %404, %405, %406 in 0 : vector<1x16x16xf32>, vector<1x16x16xf32>, vector<1x16x16xf32>, vector<1x16x16xf32>, vector<1x16x16xf32>, vector<1x16x16xf32>, vector<1x16x16xf32>, vector<1x16x16xf32> -> vector<8x16x16xf32>
    %cst_131 = arith.constant 2.500000e-01 : f32
    %408 = vector.broadcast %cst_131 : f32 to vector<8x16x16xf32>
    %409 = arith.mulf %407, %408 : vector<8x16x16xf32>
    %410 = vector.extract_strided_slice %389 {offsets = [0, 128], sizes = [16, 128], strides = [1, 1]} : vector<16x384xf32> to vector<16x128xf32>
    %411 = vector.extract_strided_slice %410 {offsets = [0, 0], sizes = [16, 16], strides = [1, 1]} : vector<16x128xf32> to vector<16x16xf32>
    %412 = vector.extract_strided_slice %410 {offsets = [0, 16], sizes = [16, 16], strides = [1, 1]} : vector<16x128xf32> to vector<16x16xf32>
    %413 = vector.extract_strided_slice %410 {offsets = [0, 32], sizes = [16, 16], strides = [1, 1]} : vector<16x128xf32> to vector<16x16xf32>
    %414 = vector.extract_strided_slice %410 {offsets = [0, 48], sizes = [16, 16], strides = [1, 1]} : vector<16x128xf32> to vector<16x16xf32>
    %415 = vector.extract_strided_slice %410 {offsets = [0, 64], sizes = [16, 16], strides = [1, 1]} : vector<16x128xf32> to vector<16x16xf32>
    %416 = vector.extract_strided_slice %410 {offsets = [0, 80], sizes = [16, 16], strides = [1, 1]} : vector<16x128xf32> to vector<16x16xf32>
    %417 = vector.extract_strided_slice %410 {offsets = [0, 96], sizes = [16, 16], strides = [1, 1]} : vector<16x128xf32> to vector<16x16xf32>
    %418 = vector.extract_strided_slice %410 {offsets = [0, 112], sizes = [16, 16], strides = [1, 1]} : vector<16x128xf32> to vector<16x16xf32>
    %419 = vector.shape_cast %411 : vector<16x16xf32> to vector<1x16x16xf32>
    %420 = vector.shape_cast %412 : vector<16x16xf32> to vector<1x16x16xf32>
    %421 = vector.shape_cast %413 : vector<16x16xf32> to vector<1x16x16xf32>
    %422 = vector.shape_cast %414 : vector<16x16xf32> to vector<1x16x16xf32>
    %423 = vector.shape_cast %415 : vector<16x16xf32> to vector<1x16x16xf32>
    %424 = vector.shape_cast %416 : vector<16x16xf32> to vector<1x16x16xf32>
    %425 = vector.shape_cast %417 : vector<16x16xf32> to vector<1x16x16xf32>
    %426 = vector.shape_cast %418 : vector<16x16xf32> to vector<1x16x16xf32>
    %427 = tpu.concatenate %419, %420, %421, %422, %423, %424, %425, %426 in 0 : vector<1x16x16xf32>, vector<1x16x16xf32>, vector<1x16x16xf32>, vector<1x16x16xf32>, vector<1x16x16xf32>, vector<1x16x16xf32>, vector<1x16x16xf32>, vector<1x16x16xf32> -> vector<8x16x16xf32>
    %428 = vector.extract_strided_slice %389 {offsets = [0, 256], sizes = [16, 128], strides = [1, 1]} : vector<16x384xf32> to vector<16x128xf32>
    %429 = vector.extract_strided_slice %428 {offsets = [0, 0], sizes = [16, 16], strides = [1, 1]} : vector<16x128xf32> to vector<16x16xf32>
    %430 = vector.extract_strided_slice %428 {offsets = [0, 16], sizes = [16, 16], strides = [1, 1]} : vector<16x128xf32> to vector<16x16xf32>
    %431 = vector.extract_strided_slice %428 {offsets = [0, 32], sizes = [16, 16], strides = [1, 1]} : vector<16x128xf32> to vector<16x16xf32>
    %432 = vector.extract_strided_slice %428 {offsets = [0, 48], sizes = [16, 16], strides = [1, 1]} : vector<16x128xf32> to vector<16x16xf32>
    %433 = vector.extract_strided_slice %428 {offsets = [0, 64], sizes = [16, 16], strides = [1, 1]} : vector<16x128xf32> to vector<16x16xf32>
    %434 = vector.extract_strided_slice %428 {offsets = [0, 80], sizes = [16, 16], strides = [1, 1]} : vector<16x128xf32> to vector<16x16xf32>
    %435 = vector.extract_strided_slice %428 {offsets = [0, 96], sizes = [16, 16], strides = [1, 1]} : vector<16x128xf32> to vector<16x16xf32>
    %436 = vector.extract_strided_slice %428 {offsets = [0, 112], sizes = [16, 16], strides = [1, 1]} : vector<16x128xf32> to vector<16x16xf32>
    %437 = vector.shape_cast %429 : vector<16x16xf32> to vector<1x16x16xf32>
    %438 = vector.shape_cast %430 : vector<16x16xf32> to vector<1x16x16xf32>
    %439 = vector.shape_cast %431 : vector<16x16xf32> to vector<1x16x16xf32>
    %440 = vector.shape_cast %432 : vector<16x16xf32> to vector<1x16x16xf32>
    %441 = vector.shape_cast %433 : vector<16x16xf32> to vector<1x16x16xf32>
    %442 = vector.shape_cast %434 : vector<16x16xf32> to vector<1x16x16xf32>
    %443 = vector.shape_cast %435 : vector<16x16xf32> to vector<1x16x16xf32>
    %444 = vector.shape_cast %436 : vector<16x16xf32> to vector<1x16x16xf32>
    %445 = tpu.concatenate %437, %438, %439, %440, %441, %442, %443, %444 in 0 : vector<1x16x16xf32>, vector<1x16x16xf32>, vector<1x16x16xf32>, vector<1x16x16xf32>, vector<1x16x16xf32>, vector<1x16x16xf32>, vector<1x16x16xf32>, vector<1x16x16xf32> -> vector<8x16x16xf32>
    %446 = arith.truncf %409 : vector<8x16x16xf32> to vector<8x16x16xbf16>
    %447 = arith.truncf %427 : vector<8x16x16xf32> to vector<8x16x16xbf16>
    "tpu.trace_start"() <{level = 10 : i32, message = "hqd,hkd->hqk"}> : () -> ()
    %cst_132 = arith.constant dense<0.000000e+00> : vector<8x16x16xf32>
    %448 = tpu.matmul %446, %447, %cst_132 {dimension_numbers = #tpu.dot_dimension_numbers<[2], [2], [1], [1], [0, 0, 0, 1, 1, 1], [0], [0]>} : vector<8x16x16xbf16>, vector<8x16x16xbf16>, vector<8x16x16xf32> -> vector<8x16x16xf32>
    %cst_133 = arith.constant -1.000000e+30 : f32
    "tpu.trace_stop"() : () -> ()
    %449 = vector.shape_cast %32 : vector<1x1x16xi1> to vector<1x1x16xi1>
    %450 = vector.broadcast %449 : vector<1x1x16xi1> to vector<8x16x16xi1>
    %451 = vector.broadcast %cst_133 : f32 to vector<8x16x16xf32>
    %452 = arith.select %450, %448, %451 : vector<8x16x16xi1>, vector<8x16x16xf32>
    %cst_134 = arith.constant dense<0xFF800000> : vector<8x16xf32>
    %453 = vector.multi_reduction <maximumf>, %452, %cst_134 [2] : vector<8x16x16xf32> to vector<8x16xf32>
    %454 = vector.shape_cast %453 : vector<8x16xf32> to vector<8x16x1xf32>
    %455 = vector.broadcast %454 : vector<8x16x1xf32> to vector<8x16x16xf32>
    %456 = arith.subf %452, %455 : vector<8x16x16xf32>
    %457 = math.exp %456 : vector<8x16x16xf32>
    %cst_135 = arith.constant dense<0.000000e+00> : vector<8x16xf32>
    %458 = vector.multi_reduction <add>, %457, %cst_135 [2] : vector<8x16x16xf32> to vector<8x16xf32>
    %459 = vector.shape_cast %458 : vector<8x16xf32> to vector<8x16x1xf32>
    %460 = tpu.reciprocal %459 {approx = true} : vector<8x16x1xf32> -> vector<8x16x1xf32>
    %461 = vector.broadcast %460 : vector<8x16x1xf32> to vector<8x16x16xf32>
    %462 = arith.mulf %457, %461 : vector<8x16x16xf32>
    %463 = arith.truncf %462 : vector<8x16x16xf32> to vector<8x16x16xbf16>
    %464 = arith.truncf %445 : vector<8x16x16xf32> to vector<8x16x16xbf16>
    "tpu.trace_start"() <{level = 10 : i32, message = "hqk,hkd->hqd"}> : () -> ()
    %cst_136 = arith.constant dense<0.000000e+00> : vector<8x16x16xf32>
    %465 = tpu.matmul %463, %464, %cst_136 {dimension_numbers = #tpu.dot_dimension_numbers<[2], [1], [1], [2], [0, 0, 0, 1, 1, 2], [0], [0]>} : vector<8x16x16xbf16>, vector<8x16x16xbf16>, vector<8x16x16xf32> -> vector<8x16x16xf32>
    "tpu.trace_stop"() : () -> ()
    %466 = arith.truncf %465 : vector<8x16x16xf32> to vector<8x16x16xbf16>
    %c2_137 = arith.constant 2 : index
    %c0_138 = arith.constant 0 : index
    %c0_139 = arith.constant 0 : index
    %c0_140 = arith.constant 0 : index
    %467 = vector.load %arg9[%c2_137, %c0_138, %c0_139, %c0_140] : memref<3x8x16x128xbf16, #tpu.memory_space<vmem>>, vector<1x8x16x128xbf16>
    %468 = vector.shape_cast %467 : vector<1x8x16x128xbf16> to vector<8x16x128xbf16>
    "tpu.trace_start"() <{level = 10 : i32, message = "hqd,hdn->hqn"}> : () -> ()
    %cst_141 = arith.constant dense<0.000000e+00> : vector<8x16x128xf32>
    %469 = tpu.matmul %466, %468, %cst_141 {dimension_numbers = #tpu.dot_dimension_numbers<[2], [1], [1], [2], [0, 0, 0, 1, 1, 2], [0], [0]>} : vector<8x16x16xbf16>, vector<8x16x128xbf16>, vector<8x16x128xf32> -> vector<8x16x128xf32>
    "tpu.trace_stop"() : () -> ()
    %cst_142 = arith.constant dense<0.000000e+00> : vector<16x128xf32>
    %470 = vector.multi_reduction <add>, %469, %cst_142 [0] : vector<8x16x128xf32> to vector<16x128xf32>
    %471 = arith.addf %358, %470 : vector<16x128xf32>
    %c2_143 = arith.constant 2 : index
    %c0_144 = arith.constant 0 : index
    %472 = vector.load %arg10[%c2_143, %c0_144] : memref<3x128xf32, #tpu.memory_space<vmem>>, vector<1x128xf32>
    %473 = vector.broadcast %472 : vector<1x128xf32> to vector<16x128xf32>
    %474 = arith.addf %471, %473 : vector<16x128xf32>
    %c2_145 = arith.constant 2 : index
    %c0_146 = arith.constant 0 : index
    %475 = vector.load %arg11[%c2_145, %c0_146] : memref<3x128xf32, #tpu.memory_space<vmem>>, vector<1x128xf32>
    %c2_147 = arith.constant 2 : index
    %c0_148 = arith.constant 0 : index
    %476 = vector.load %arg12[%c2_147, %c0_148] : memref<3x128xf32, #tpu.memory_space<vmem>>, vector<1x128xf32>
    %cst_149 = arith.constant dense<0.000000e+00> : vector<16xf32>
    %477 = vector.multi_reduction <add>, %474, %cst_149 [1] : vector<16x128xf32> to vector<16xf32>
    %478 = vector.shape_cast %477 : vector<16xf32> to vector<16x1xf32>
    %cst_150 = arith.constant 1.280000e+02 : f32
    %479 = vector.broadcast %cst_150 : f32 to vector<16x1xf32>
    %480 = arith.divf %478, %479 : vector<16x1xf32>
    %481 = vector.broadcast %480 : vector<16x1xf32> to vector<16x128xf32>
    %482 = arith.subf %474, %481 : vector<16x128xf32>
    %483 = arith.mulf %482, %482 : vector<16x128xf32>
    %cst_151 = arith.constant dense<0.000000e+00> : vector<16xf32>
    %484 = vector.multi_reduction <add>, %483, %cst_151 [1] : vector<16x128xf32> to vector<16xf32>
    %485 = vector.shape_cast %484 : vector<16xf32> to vector<16x1xf32>
    %cst_152 = arith.constant 1.280000e+02 : f32
    %486 = vector.broadcast %cst_152 : f32 to vector<16x1xf32>
    %487 = arith.divf %485, %486 : vector<16x1xf32>
    %488 = vector.broadcast %480 : vector<16x1xf32> to vector<16x128xf32>
    %489 = arith.subf %474, %488 : vector<16x128xf32>
    %cst_153 = arith.constant 9.99999974E-6 : f32
    %490 = vector.broadcast %cst_153 : f32 to vector<16x1xf32>
    %491 = arith.addf %487, %490 : vector<16x1xf32>
    %492 = math.rsqrt %491 : vector<16x1xf32>
    %493 = vector.broadcast %492 : vector<16x1xf32> to vector<16x128xf32>
    %494 = arith.mulf %489, %493 : vector<16x128xf32>
    %495 = vector.broadcast %475 : vector<1x128xf32> to vector<16x128xf32>
    %496 = arith.mulf %494, %495 : vector<16x128xf32>
    %497 = vector.broadcast %476 : vector<1x128xf32> to vector<16x128xf32>
    %498 = arith.addf %496, %497 : vector<16x128xf32>
    %499 = arith.truncf %498 : vector<16x128xf32> to vector<16x128xbf16>
    %c2_154 = arith.constant 2 : index
    %c0_155 = arith.constant 0 : index
    %c0_156 = arith.constant 0 : index
    %500 = vector.load %arg13[%c2_154, %c0_155, %c0_156] : memref<3x128x512xbf16, #tpu.memory_space<vmem>>, vector<1x128x512xbf16>
    %501 = vector.shape_cast %500 : vector<1x128x512xbf16> to vector<128x512xbf16>
    %cst_157 = arith.constant dense<0.000000e+00> : vector<16x512xf32>
    %502 = tpu.matmul %499, %501, %cst_157 {dimension_numbers = #tpu.dot_dimension_numbers<[1], [0], [0], [1], [0, 0, 1, 1], [], []>} : vector<16x128xbf16>, vector<128x512xbf16>, vector<16x512xf32> -> vector<16x512xf32>
    %c2_158 = arith.constant 2 : index
    %c0_159 = arith.constant 0 : index
    %503 = vector.load %arg14[%c2_158, %c0_159] : memref<3x512xf32, #tpu.memory_space<vmem>>, vector<1x512xf32>
    %504 = vector.broadcast %503 : vector<1x512xf32> to vector<16x512xf32>
    %505 = arith.addf %502, %504 : vector<16x512xf32>
    %cst_160 = arith.constant 1.702000e+00 : f32
    %506 = vector.broadcast %cst_160 : f32 to vector<16x512xf32>
    %507 = arith.mulf %506, %505 : vector<16x512xf32>
    %508 = arith.negf %507 : vector<16x512xf32>
    %509 = math.exp %508 : vector<16x512xf32>
    %cst_161 = arith.constant 1.000000e+00 : f32
    %510 = vector.broadcast %cst_161 : f32 to vector<16x512xf32>
    %511 = arith.addf %510, %509 : vector<16x512xf32>
    %512 = arith.divf %510, %511 : vector<16x512xf32>
    %513 = arith.mulf %505, %512 : vector<16x512xf32>
    %514 = arith.truncf %513 : vector<16x512xf32> to vector<16x512xbf16>
    %c2_162 = arith.constant 2 : index
    %c0_163 = arith.constant 0 : index
    %c0_164 = arith.constant 0 : index
    %515 = vector.load %arg15[%c2_162, %c0_163, %c0_164] : memref<3x512x128xbf16, #tpu.memory_space<vmem>>, vector<1x512x128xbf16>
    %516 = vector.shape_cast %515 : vector<1x512x128xbf16> to vector<512x128xbf16>
    %cst_165 = arith.constant dense<0.000000e+00> : vector<16x128xf32>
    %517 = tpu.matmul %514, %516, %cst_165 {dimension_numbers = #tpu.dot_dimension_numbers<[1], [0], [0], [1], [0, 0, 1, 1], [], []>} : vector<16x512xbf16>, vector<512x128xbf16>, vector<16x128xf32> -> vector<16x128xf32>
    %c2_166 = arith.constant 2 : index
    %c0_167 = arith.constant 0 : index
    %518 = vector.load %arg16[%c2_166, %c0_167] : memref<3x128xf32, #tpu.memory_space<vmem>>, vector<1x128xf32>
    %519 = vector.broadcast %518 : vector<1x128xf32> to vector<16x128xf32>
    %520 = arith.addf %517, %519 : vector<16x128xf32>
    %521 = arith.addf %474, %520 : vector<16x128xf32>
    %522 = vector.extract_strided_slice %521 {offsets = [8, 0], sizes = [4, 128], strides = [1, 1]} : vector<16x128xf32> to vector<4x128xf32>
    %c0_168 = arith.constant 0 : index
    %c0_169 = arith.constant 0 : index
    %523 = vector.load %arg17[%c0_168, %c0_169] : memref<1x128xf32, #tpu.memory_space<vmem>>, vector<1x128xf32>
    %c0_170 = arith.constant 0 : index
    %c0_171 = arith.constant 0 : index
    %524 = vector.load %arg18[%c0_170, %c0_171] : memref<1x128xf32, #tpu.memory_space<vmem>>, vector<1x128xf32>
    %cst_172 = arith.constant dense<0.000000e+00> : vector<4xf32>
    %525 = vector.multi_reduction <add>, %522, %cst_172 [1] : vector<4x128xf32> to vector<4xf32>
    %526 = vector.shape_cast %525 : vector<4xf32> to vector<4x1xf32>
    %cst_173 = arith.constant 1.280000e+02 : f32
    %527 = vector.broadcast %cst_173 : f32 to vector<4x1xf32>
    %528 = arith.divf %526, %527 : vector<4x1xf32>
    %529 = vector.broadcast %528 : vector<4x1xf32> to vector<4x128xf32>
    %530 = arith.subf %522, %529 : vector<4x128xf32>
    %531 = arith.mulf %530, %530 : vector<4x128xf32>
    %cst_174 = arith.constant dense<0.000000e+00> : vector<4xf32>
    %532 = vector.multi_reduction <add>, %531, %cst_174 [1] : vector<4x128xf32> to vector<4xf32>
    %533 = vector.shape_cast %532 : vector<4xf32> to vector<4x1xf32>
    %cst_175 = arith.constant 1.280000e+02 : f32
    %534 = vector.broadcast %cst_175 : f32 to vector<4x1xf32>
    %535 = arith.divf %533, %534 : vector<4x1xf32>
    %536 = vector.broadcast %528 : vector<4x1xf32> to vector<4x128xf32>
    %537 = arith.subf %522, %536 : vector<4x128xf32>
    %cst_176 = arith.constant 9.99999974E-6 : f32
    %538 = vector.broadcast %cst_176 : f32 to vector<4x1xf32>
    %539 = arith.addf %535, %538 : vector<4x1xf32>
    %540 = math.rsqrt %539 : vector<4x1xf32>
    %541 = vector.broadcast %540 : vector<4x1xf32> to vector<4x128xf32>
    %542 = arith.mulf %537, %541 : vector<4x128xf32>
    %543 = vector.broadcast %523 : vector<1x128xf32> to vector<4x128xf32>
    %544 = arith.mulf %542, %543 : vector<4x128xf32>
    %545 = vector.broadcast %524 : vector<1x128xf32> to vector<4x128xf32>
    %546 = arith.addf %544, %545 : vector<4x128xf32>
    %547 = arith.truncf %546 : vector<4x128xf32> to vector<4x128xbf16>
    %c0_177 = arith.constant 0 : index
    %c0_178 = arith.constant 0 : index
    %548 = vector.load %arg19[%c0_177, %c0_178] : memref<128x128xbf16, #tpu.memory_space<vmem>>, vector<128x128xbf16>
    %cst_179 = arith.constant dense<0.000000e+00> : vector<4x128xf32>
    %549 = tpu.matmul %547, %548, %cst_179 {dimension_numbers = #tpu.dot_dimension_numbers<[1], [0], [0], [1], [0, 0, 1, 1], [], []>} : vector<4x128xbf16>, vector<128x128xbf16>, vector<4x128xf32> -> vector<4x128xf32>
    %c0_180 = arith.constant 0 : index
    %c0_181 = arith.constant 0 : index
    %c0_182 = arith.constant 0 : index
    %550 = vector.load %arg20[%c0_180, %c0_181, %c0_182] : memref<1x4x128xf32, #tpu.memory_space<vmem>>, vector<1x4x128xf32>
    %551 = vector.shape_cast %550 : vector<1x4x128xf32> to vector<4x128xf32>
    %552 = vector.shape_cast %549 : vector<4x128xf32> to vector<1x4x128xf32>
    tpu.vector_store %arg20[%c0_180, %c0_181, %c0_182], %552 {strides = array<i32>} : memref<1x4x128xf32, #tpu.memory_space<vmem>>, vector<1x4x128xf32>,
    return
  }
  func.func @transform_0(%arg0: i32) -> (i32, i32, i32) {
    %c0_i32 = arith.constant 0 : i32
    %c0_i32_0 = arith.constant 0 : i32
    %c0_i32_1 = arith.constant 0 : i32
    return %arg0, %c0_i32, %c0_i32_0 : i32, i32, i32
  }
  func.func @transform_1(%arg0: i32) -> (i32, i32, i32) {
    %c0_i32 = arith.constant 0 : i32
    %c0_i32_0 = arith.constant 0 : i32
    %c0_i32_1 = arith.constant 0 : i32
    %c0_i32_2 = arith.constant 0 : i32
    return %c0_i32, %c0_i32_0, %c0_i32_1 : i32, i32, i32
  }
  func.func @transform_2(%arg0: i32) -> (i32, i32) {
    %c0_i32 = arith.constant 0 : i32
    %c0_i32_0 = arith.constant 0 : i32
    %c0_i32_1 = arith.constant 0 : i32
    return %c0_i32, %c0_i32_0 : i32, i32
  }
  func.func @transform_3(%arg0: i32) -> (i32, i32) {
    %c0_i32 = arith.constant 0 : i32
    %c0_i32_0 = arith.constant 0 : i32
    %c0_i32_1 = arith.constant 0 : i32
    return %c0_i32, %c0_i32_0 : i32, i32
  }
  func.func @transform_4(%arg0: i32) -> (i32, i32) {
    %c0_i32 = arith.constant 0 : i32
    %c0_i32_0 = arith.constant 0 : i32
    %c0_i32_1 = arith.constant 0 : i32
    return %c0_i32, %c0_i32_0 : i32, i32
  }
  func.func @transform_5(%arg0: i32) -> (i32, i32) {
    %c0_i32 = arith.constant 0 : i32
    %c0_i32_0 = arith.constant 0 : i32
    %c0_i32_1 = arith.constant 0 : i32
    return %c0_i32, %c0_i32_0 : i32, i32
  }
  func.func @transform_6(%arg0: i32) -> (i32, i32, i32) {
    %c0_i32 = arith.constant 0 : i32
    %c0_i32_0 = arith.constant 0 : i32
    %c0_i32_1 = arith.constant 0 : i32
    %c0_i32_2 = arith.constant 0 : i32
    return %c0_i32, %c0_i32_0, %c0_i32_1 : i32, i32, i32
  }
  func.func @transform_7(%arg0: i32) -> (i32, i32) {
    %c0_i32 = arith.constant 0 : i32
    %c0_i32_0 = arith.constant 0 : i32
    %c0_i32_1 = arith.constant 0 : i32
    return %c0_i32, %c0_i32_0 : i32, i32
  }
  func.func @transform_8(%arg0: i32) -> (i32, i32, i32, i32) {
    %c0_i32 = arith.constant 0 : i32
    %c0_i32_0 = arith.constant 0 : i32
    %c0_i32_1 = arith.constant 0 : i32
    %c0_i32_2 = arith.constant 0 : i32
    %c0_i32_3 = arith.constant 0 : i32
    return %c0_i32, %c0_i32_0, %c0_i32_1, %c0_i32_2 : i32, i32, i32, i32
  }
  func.func @transform_9(%arg0: i32) -> (i32, i32) {
    %c0_i32 = arith.constant 0 : i32
    %c0_i32_0 = arith.constant 0 : i32
    %c0_i32_1 = arith.constant 0 : i32
    return %c0_i32, %c0_i32_0 : i32, i32
  }
  func.func @transform_10(%arg0: i32) -> (i32, i32) {
    %c0_i32 = arith.constant 0 : i32
    %c0_i32_0 = arith.constant 0 : i32
    %c0_i32_1 = arith.constant 0 : i32
    return %c0_i32, %c0_i32_0 : i32, i32
  }
  func.func @transform_11(%arg0: i32) -> (i32, i32) {
    %c0_i32 = arith.constant 0 : i32
    %c0_i32_0 = arith.constant 0 : i32
    %c0_i32_1 = arith.constant 0 : i32
    return %c0_i32, %c0_i32_0 : i32, i32
  }
  func.func @transform_12(%arg0: i32) -> (i32, i32, i32) {
    %c0_i32 = arith.constant 0 : i32
    %c0_i32_0 = arith.constant 0 : i32
    %c0_i32_1 = arith.constant 0 : i32
    %c0_i32_2 = arith.constant 0 : i32
    return %c0_i32, %c0_i32_0, %c0_i32_1 : i32, i32, i32
  }
  func.func @transform_13(%arg0: i32) -> (i32, i32) {
    %c0_i32 = arith.constant 0 : i32
    %c0_i32_0 = arith.constant 0 : i32
    %c0_i32_1 = arith.constant 0 : i32
    return %c0_i32, %c0_i32_0 : i32, i32
  }
  func.func @transform_14(%arg0: i32) -> (i32, i32, i32) {
    %c0_i32 = arith.constant 0 : i32
    %c0_i32_0 = arith.constant 0 : i32
    %c0_i32_1 = arith.constant 0 : i32
    %c0_i32_2 = arith.constant 0 : i32
    return %c0_i32, %c0_i32_0, %c0_i32_1 : i32, i32, i32
  }
  func.func @transform_15(%arg0: i32) -> (i32, i32) {
    %c0_i32 = arith.constant 0 : i32
    %c0_i32_0 = arith.constant 0 : i32
    %c0_i32_1 = arith.constant 0 : i32
    return %c0_i32, %c0_i32_0 : i32, i32
  }
  func.func @transform_16(%arg0: i32) -> (i32, i32) {
    %c0_i32 = arith.constant 0 : i32
    %c0_i32_0 = arith.constant 0 : i32
    %c0_i32_1 = arith.constant 0 : i32
    return %c0_i32, %c0_i32_0 : i32, i32
  }
  func.func @transform_17(%arg0: i32) -> (i32, i32) {
    %c0_i32 = arith.constant 0 : i32
    %c0_i32_0 = arith.constant 0 : i32
    %c0_i32_1 = arith.constant 0 : i32
    return %c0_i32, %c0_i32_0 : i32, i32
  }
  func.func @transform_18(%arg0: i32) -> (i32, i32) {
    %c0_i32 = arith.constant 0 : i32
    %c0_i32_0 = arith.constant 0 : i32
    %c0_i32_1 = arith.constant 0 : i32
    return %c0_i32, %c0_i32_0 : i32, i32
  }
  func.func @transform_19(%arg0: i32) -> (i32, i32, i32) {
    %c0_i32 = arith.constant 0 : i32
    %c0_i32_0 = arith.constant 0 : i32
    %c0_i32_1 = arith.constant 0 : i32
    return %arg0, %c0_i32, %c0_i32_0 : i32, i32, i32
  }
}

</mosaic_0001>

<llo_original>
// kernel: tpu_custom_call.1
$region0: #{tpu_custom_call.1}
  #allocation0 [shape = 'u32[]', space=smem, size = 0x4, offset = 0x4, fixed_abs, tag = 'smem constant byte address 0x4 - core index']
  #allocation1 [shape = 'u32[144,128]{1,0:T(1,128)}', space=vmem, size = 0x12000, scoped, tag = 'internal scratch']
  %s0 = inlined_call_operand.hbm [shape: f32[2,8,128], index: 0, kind: input, shape index: {}]
  %s1 = inlined_call_operand.hbm [shape: f32[1,4,128], index: 1, kind: input, shape index: {}]
  %s2 = inlined_call_operand.hbm [shape: f32[1,128], index: 2, kind: input, shape index: {}]
  %s3 = inlined_call_operand.hbm [shape: f32[1,128], index: 3, kind: input, shape index: {}]
  %s4 = inlined_call_operand.vmem [shape: f32[3,128], index: 4, kind: input, shape index: {}]
  %s5 = inlined_call_operand.hbm [shape: f32[3,128], index: 5, kind: input, shape index: {}]
  %s6 = inlined_call_operand.hbm [shape: bf16[3,128,384], index: 6, kind: input, shape index: {}]
  %s7 = inlined_call_operand.hbm [shape: f32[3,384], index: 7, kind: input, shape index: {}]
  %s8 = inlined_call_operand.hbm [shape: bf16[3,8,16,128], index: 8, kind: input, shape index: {}]
  %s9 = inlined_call_operand.hbm [shape: f32[3,128], index: 9, kind: input, shape index: {}]
  %s10 = inlined_call_operand.hbm [shape: f32[3,128], index: 10, kind: input, shape index: {}]
  %s11 = inlined_call_operand.hbm [shape: f32[3,128], index: 11, kind: input, shape index: {}]
  %s12 = inlined_call_operand.hbm [shape: bf16[3,128,512], index: 12, kind: input, shape index: {}]
  %s13 = inlined_call_operand.hbm [shape: f32[3,512], index: 13, kind: input, shape index: {}]
  %s14 = inlined_call_operand.hbm [shape: bf16[3,512,128], index: 14, kind: input, shape index: {}]
  %s15 = inlined_call_operand.hbm [shape: f32[3,128], index: 15, kind: input, shape index: {}]
  %s16 = inlined_call_operand.hbm [shape: f32[1,128], index: 16, kind: input, shape index: {}]
  %s17 = inlined_call_operand.hbm [shape: f32[1,128], index: 17, kind: input, shape index: {}]
  %s18 = inlined_call_operand.vmem [shape: bf16[128,128], index: 18, kind: input, shape index: {}]
  %s19 = inlined_call_operand.hbm [shape: f32[2,4,128], index: 19, kind: output, shape index: {}]
  %s20 = sld [smem:[#allocation0]]
  $region177: #{tpu_custom_call.1} parent=0
    _
  %s22 = ssub.s32 1, %s20
  %s23 = scalar_select 0, %s22, %s20
  $region1: #{tpu_custom_call.1} parent=0
    #allocation2 [shape = 'u8[8192]{0}', space=vmem, size = 0x2000, scoped, tag = 'input window, operand 0']
    #allocation3 [shape = 's32[2]{0}', space=sflag, size = 0x8, scoped, tag = 'scoped memory for tpu_custom_call.1']
    #allocation4 [shape = 's32[2]{0}', space=sflag, size = 0x8, scoped, tag = 'scoped memory for tpu_custom_call.1']
    #allocation5 [shape = 'u8[2048]{0}', space=vmem, size = 0x800, scoped, tag = 'input window, operand 1, single buffered']
    #allocation6 [shape = 's32[1]{0}', space=sflag, size = 0x4, scoped, tag = 'scoped memory for tpu_custom_call.1']
    #allocation7 [shape = 'u8[512]{0}', space=vmem, size = 0x400, scoped, tag = 'input window, operand 2, single buffered']
    #allocation8 [shape = 'u8[512]{0}', space=vmem, size = 0x400, scoped, tag = 'input window, operand 3, single buffered']
    #allocation9 [shape = 's32[1]{0}', space=sflag, size = 0x4, scoped, tag = 'scoped memory for tpu_custom_call.1']
    #allocation10 [shape = 'u8[2048]{0}', space=vmem, size = 0x800, scoped, tag = 'input window, operand 5, single buffered']
    #allocation11 [shape = 'u8[294912]{0}', space=vmem, size = 0x48000, scoped, tag = 'input window, operand 6, single buffered']
    #allocation12 [shape = 's32[1]{0}', space=sflag, size = 0x4, scoped, tag = 'scoped memory for tpu_custom_call.1']
    #allocation13 [shape = 'u8[6144]{0}', space=vmem, size = 0x1800, scoped, tag = 'input window, operand 7, single buffered']
    #allocation14 [shape = 'u8[98304]{0}', space=vmem, size = 0x18000, scoped, tag = 'input window, operand 8, single buffered']
    #allocation15 [shape = 's32[1]{0}', space=sflag, size = 0x4, scoped, tag = 'scoped memory for tpu_custom_call.1']
    #allocation16 [shape = 'u8[2048]{0}', space=vmem, size = 0x800, scoped, tag = 'input window, operand 9, single buffered']
    #allocation17 [shape = 'u8[2048]{0}', space=vmem, size = 0x800, scoped, tag = 'input window, operand 10, single buffered']
    #allocation18 [shape = 's32[1]{0}', space=sflag, size = 0x4, scoped, tag = 'scoped memory for tpu_custom_call.1']
    #allocation19 [shape = 'u8[2048]{0}', space=vmem, size = 0x800, scoped, tag = 'input window, operand 11, single buffered']
    #allocation20 [shape = 'u8[393216]{0}', space=vmem, size = 0x60000, scoped, tag = 'input window, operand 12, single buffered']
    #allocation21 [shape = 's32[1]{0}', space=sflag, size = 0x4, scoped, tag = 'scoped memory for tpu_custom_call.1']
    #allocation22 [shape = 'u8[8192]{0}', space=vmem, size = 0x2000, scoped, tag = 'input window, operand 13, single buffered']
    #allocation23 [shape = 'u8[393216]{0}', space=vmem, size = 0x60000, scoped, tag = 'input window, operand 14, single buffered']
    #allocation24 [shape = 's32[1]{0}', space=sflag, size = 0x4, scoped, tag = 'scoped memory for tpu_custom_call.1']
    #allocation25 [shape = 'u8[2048]{0}', space=vmem, size = 0x800, scoped, tag = 'input window, operand 15, single buffered']
    #allocation26 [shape = 'u8[512]{0}', space=vmem, size = 0x400, scoped, tag = 'input window, operand 16, single buffered']
    #allocation27 [shape = 's32[1]{0}', space=sflag, size = 0x4, scoped, tag = 'scoped memory for tpu_custom_call.1']
    #allocation28 [shape = 'u8[512]{0}', space=vmem, size = 0x400, scoped, tag = 'input window, operand 17, single buffered']
    #allocation29 [shape = 'u8[4096]{0}', space=vmem, size = 0x1000, scoped, tag = 'output window, operand 0']
    %24 = vsyncpa [#allocation3], 0
    %s25 = scalar_lea.sflag [#allocation3], 1
    %26 = vsyncpa %s25, 0
    %27 = vsyncpa [#allocation6], 0
    %28 = vsyncpa [#allocation9], 0
    %29 = vsyncpa [#allocation12], 0
    %30 = vsyncpa [#allocation15], 0
    %31 = vsyncpa [#allocation18], 0
    %32 = vsyncpa [#allocation21], 0
    %33 = vsyncpa [#allocation24], 0
    %34 = vsyncpa [#allocation27], 0
    %35 = vsyncpa [#allocation4], 0
    %s36 = scalar_lea.sflag [#allocation4], 1
    %37 = vsyncpa %s36, 0
    loop: start=0, step=1, limit=4
    $region2: #{tpu_custom_call.1} parent=1 // loop_pre_header
      _
    $region3: #{tpu_custom_call.1} parent=1 // loop_header
      %s39 = sphi 0, %s43
      %p40 = scmp.ge.s32.totalorder %s39, 4
      %s49 = sphi 0, %s51
      %s52 = sphi 0, %s49
      %s53 = sphi 0, %s52
      %s69 = sphi 0, %s53
      %s73 = sphi 0, %s73
      %s75 = sphi 0, %s73
      %s76 = sphi 0, %s75
      %s90 = sphi 0, %s76
      %s94 = sphi 0, %s94
      %s96 = sphi 0, %s94
      %s97 = sphi 0, %s96
      %s111 = sphi 0, %s97
      %s115 = sphi 0, %s115
      %s117 = sphi 0, %s115
      %s118 = sphi 0, %s117
      %s132 = sphi 0, %s118
      %s136 = sphi 0, %s136
      %s138 = sphi 0, %s136
      %s139 = sphi 0, %s138
      %s153 = sphi 0, %s139
      %s157 = sphi 0, %s157
      %s159 = sphi 0, %s157
      %s160 = sphi 0, %s159
      %s174 = sphi 0, %s160
      %s178 = sphi 0, %s178
      %s180 = sphi 0, %s178
      %s181 = sphi 0, %s180
      %s195 = sphi 0, %s181
      %s199 = sphi 0, %s199
      %s201 = sphi 0, %s199
      %s202 = sphi 0, %s201
      %s216 = sphi 0, %s202
      %s220 = sphi 0, %s220
      %s222 = sphi 0, %s220
      %s223 = sphi 0, %s222
      %s237 = sphi 0, %s223
      %s241 = sphi 0, %s241
      %s243 = sphi 0, %s241
      %s244 = sphi 0, %s243
      %s258 = sphi 0, %s244
      %s262 = sphi 0, %s262
      %s264 = sphi 0, %s262
      %s265 = sphi 0, %s264
      %s279 = sphi 0, %s265
      %s283 = sphi 0, %s283
      %s285 = sphi 0, %s283
      %s286 = sphi 0, %s285
      %s300 = sphi 0, %s286
      %s304 = sphi 0, %s304
      %s306 = sphi 0, %s304
      %s307 = sphi 0, %s306
      %s321 = sphi 0, %s307
      %s325 = sphi 0, %s325
      %s327 = sphi 0, %s325
      %s328 = sphi 0, %s327
      %s342 = sphi 0, %s328
      %s346 = sphi 0, %s346
      %s348 = sphi 0, %s346
      %s349 = sphi 0, %s348
      %s363 = sphi 0, %s349
      %s367 = sphi 0, %s367
      %s369 = sphi 0, %s367
      %s370 = sphi 0, %s369
      %s384 = sphi 0, %s370
      %s388 = sphi 0, %s388
      %s390 = sphi 0, %s388
      %s391 = sphi 0, %s390
      %s405 = sphi 0, %s391
      %s409 = sphi 0, %s409
      %s411 = sphi 0, %s409
      %s412 = sphi 0, %s411
      %s426 = sphi 0, %s412
      %s430 = sphi 0, %s430
      %s432 = sphi 0, %s430
      %s433 = sphi 0, %s432
      %s447 = sphi 0, %s433
      %s453 = sphi 0, %s455
      %s456 = sphi 0, %s453
      %s457 = sphi 0, %s456
      %s473 = sphi 0, %s457
    $region4: #{tpu_custom_call.1} parent=1 // loop_header_branch
      %42 = sbr.rel (%p40) target = $region8
    $region5: #{tpu_custom_call.1} parent=1 // loop_body
      %s44 = ssub.s32 %s39, 1
      %s45 = ssub.s32 %s39, 2
      %s46 = sadd.s32 %s39, 1
      %s47 = ssub.s32 %s39, %s46
      %p48 = scmp.eq.s32.totalorder %s47, 0
      %s50 = sadd.s32 %s49, 1
      %s51 = scalar_select %p48, %s49, %s50
      %p54 = pneg %p48
      %p55 = scmp.eq.s32.totalorder %s39, 1
      %p56 = por %p54, %p55
      %p57 = scmp.ne.s32.totalorder %s49, %s52
      %p58 = scmp.eq.s32.totalorder %s39, 0
      %p59 = por %p57, %p58
      %p60 = scmp.ne.s32.totalorder %s49, %s52
      %p61 = scmp.eq.s32.totalorder %s44, 1
      %p62 = por %p60, %p61
      %p63 = scmp.ne.s32.totalorder %s52, %s53
      %p64 = scmp.eq.s32.totalorder %s44, 0
      %p65 = por %p63, %p64
      %p66 = scmp.ne.s32.totalorder %s52, %s53
      %p67 = scmp.eq.s32.totalorder %s45, 1
      %p68 = por %p66, %p67
      %p70 = scmp.ne.s32.totalorder %s53, %s69
      %p71 = scmp.eq.s32.totalorder %s45, 0
      %p72 = por %p70, %p71
      %s74 = sadd.s32 %s73, 1
      %p77 = scmp.eq.s32.totalorder %s39, 1
      %p78 = scmp.ne.s32.totalorder %s73, %s75
      %p79 = scmp.eq.s32.totalorder %s39, 0
      %p80 = por %p78, %p79
      %p81 = scmp.ne.s32.totalorder %s73, %s75
      %p82 = scmp.eq.s32.totalorder %s44, 1
      %p83 = por %p81, %p82
      %p84 = scmp.ne.s32.totalorder %s75, %s76
      %p85 = scmp.eq.s32.totalorder %s44, 0
      %p86 = por %p84, %p85
      %p87 = scmp.ne.s32.totalorder %s75, %s76
      %p88 = scmp.eq.s32.totalorder %s45, 1
      %p89 = por %p87, %p88
      %p91 = scmp.ne.s32.totalorder %s76, %s90
      %p92 = scmp.eq.s32.totalorder %s45, 0
      %p93 = por %p91, %p92
      %s95 = sadd.s32 %s94, 1
      %p98 = scmp.eq.s32.totalorder %s39, 1
      %p99 = scmp.ne.s32.totalorder %s94, %s96
      %p100 = scmp.eq.s32.totalorder %s39, 0
      %p101 = por %p99, %p100
      %p102 = scmp.ne.s32.totalorder %s94, %s96
      %p103 = scmp.eq.s32.totalorder %s44, 1
      %p104 = por %p102, %p103
      %p105 = scmp.ne.s32.totalorder %s96, %s97
      %p106 = scmp.eq.s32.totalorder %s44, 0
      %p107 = por %p105, %p106
      %p108 = scmp.ne.s32.totalorder %s96, %s97
      %p109 = scmp.eq.s32.totalorder %s45, 1
      %p110 = por %p108, %p109
      %p112 = scmp.ne.s32.totalorder %s97, %s111
      %p113 = scmp.eq.s32.totalorder %s45, 0
      %p114 = por %p112, %p113
      %s116 = sadd.s32 %s115, 1
      %p119 = scmp.eq.s32.totalorder %s39, 1
      %p120 = scmp.ne.s32.totalorder %s115, %s117
      %p121 = scmp.eq.s32.totalorder %s39, 0
      %p122 = por %p120, %p121
      %p123 = scmp.ne.s32.totalorder %s115, %s117
      %p124 = scmp.eq.s32.totalorder %s44, 1
      %p125 = por %p123, %p124
      %p126 = scmp.ne.s32.totalorder %s117, %s118
      %p127 = scmp.eq.s32.totalorder %s44, 0
      %p128 = por %p126, %p127
      %p129 = scmp.ne.s32.totalorder %s117, %s118
      %p130 = scmp.eq.s32.totalorder %s45, 1
      %p131 = por %p129, %p130
      %p133 = scmp.ne.s32.totalorder %s118, %s132
      %p134 = scmp.eq.s32.totalorder %s45, 0
      %p135 = por %p133, %p134
      %s137 = sadd.s32 %s136, 1
      %p140 = scmp.eq.s32.totalorder %s39, 1
      %p141 = scmp.ne.s32.totalorder %s136, %s138
      %p142 = scmp.eq.s32.totalorder %s39, 0
      %p143 = por %p141, %p142
      %p144 = scmp.ne.s32.totalorder %s136, %s138
      %p145 = scmp.eq.s32.totalorder %s44, 1
      %p146 = por %p144, %p145
      %p147 = scmp.ne.s32.totalorder %s138, %s139
      %p148 = scmp.eq.s32.totalorder %s44, 0
      %p149 = por %p147, %p148
      %p150 = scmp.ne.s32.totalorder %s138, %s139
      %p151 = scmp.eq.s32.totalorder %s45, 1
      %p152 = por %p150, %p151
      %p154 = scmp.ne.s32.totalorder %s139, %s153
      %p155 = scmp.eq.s32.totalorder %s45, 0
      %p156 = por %p154, %p155
      %s158 = sadd.s32 %s157, 1
      %p161 = scmp.eq.s32.totalorder %s39, 1
      %p162 = scmp.ne.s32.totalorder %s157, %s159
      %p163 = scmp.eq.s32.totalorder %s39, 0
      %p164 = por %p162, %p163
      %p165 = scmp.ne.s32.totalorder %s157, %s159
      %p166 = scmp.eq.s32.totalorder %s44, 1
      %p167 = por %p165, %p166
      %p168 = scmp.ne.s32.totalorder %s159, %s160
      %p169 = scmp.eq.s32.totalorder %s44, 0
      %p170 = por %p168, %p169
      %p171 = scmp.ne.s32.totalorder %s159, %s160
      %p172 = scmp.eq.s32.totalorder %s45, 1
      %p173 = por %p171, %p172
      %p175 = scmp.ne.s32.totalorder %s160, %s174
      %p176 = scmp.eq.s32.totalorder %s45, 0
      %p177 = por %p175, %p176
      %s179 = sadd.s32 %s178, 1
      %p182 = scmp.eq.s32.totalorder %s39, 1
      %p183 = scmp.ne.s32.totalorder %s178, %s180
      %p184 = scmp.eq.s32.totalorder %s39, 0
      %p185 = por %p183, %p184
      %p186 = scmp.ne.s32.totalorder %s178, %s180
      %p187 = scmp.eq.s32.totalorder %s44, 1
      %p188 = por %p186, %p187
      %p189 = scmp.ne.s32.totalorder %s180, %s181
      %p190 = scmp.eq.s32.totalorder %s44, 0
      %p191 = por %p189, %p190
      %p192 = scmp.ne.s32.totalorder %s180, %s181
      %p193 = scmp.eq.s32.totalorder %s45, 1
      %p194 = por %p192, %p193
      %p196 = scmp.ne.s32.totalorder %s181, %s195
      %p197 = scmp.eq.s32.totalorder %s45, 0
      %p198 = por %p196, %p197
      %s200 = sadd.s32 %s199, 1
      %p203 = scmp.eq.s32.totalorder %s39, 1
      %p204 = scmp.ne.s32.totalorder %s199, %s201
      %p205 = scmp.eq.s32.totalorder %s39, 0
      %p206 = por %p204, %p205
      %p207 = scmp.ne.s32.totalorder %s199, %s201
      %p208 = scmp.eq.s32.totalorder %s44, 1
      %p209 = por %p207, %p208
      %p210 = scmp.ne.s32.totalorder %s201, %s202
      %p211 = scmp.eq.s32.totalorder %s44, 0
      %p212 = por %p210, %p211
      %p213 = scmp.ne.s32.totalorder %s201, %s202
      %p214 = scmp.eq.s32.totalorder %s45, 1
      %p215 = por %p213, %p214
      %p217 = scmp.ne.s32.totalorder %s202, %s216
      %p218 = scmp.eq.s32.totalorder %s45, 0
      %p219 = por %p217, %p218
      %s221 = sadd.s32 %s220, 1
      %p224 = scmp.eq.s32.totalorder %s39, 1
      %p225 = scmp.ne.s32.totalorder %s220, %s222
      %p226 = scmp.eq.s32.totalorder %s39, 0
      %p227 = por %p225, %p226
      %p228 = scmp.ne.s32.totalorder %s220, %s222
      %p229 = scmp.eq.s32.totalorder %s44, 1
      %p230 = por %p228, %p229
      %p231 = scmp.ne.s32.totalorder %s222, %s223
      %p232 = scmp.eq.s32.totalorder %s44, 0
      %p233 = por %p231, %p232
      %p234 = scmp.ne.s32.totalorder %s222, %s223
      %p235 = scmp.eq.s32.totalorder %s45, 1
      %p236 = por %p234, %p235
      %p238 = scmp.ne.s32.totalorder %s223, %s237
      %p239 = scmp.eq.s32.totalorder %s45, 0
      %p240 = por %p238, %p239
      %s242 = sadd.s32 %s241, 1
      %p245 = scmp.eq.s32.totalorder %s39, 1
      %p246 = scmp.ne.s32.totalorder %s241, %s243
      %p247 = scmp.eq.s32.totalorder %s39, 0
      %p248 = por %p246, %p247
      %p249 = scmp.ne.s32.totalorder %s241, %s243
      %p250 = scmp.eq.s32.totalorder %s44, 1
      %p251 = por %p249, %p250
      %p252 = scmp.ne.s32.totalorder %s243, %s244
      %p253 = scmp.eq.s32.totalorder %s44, 0
      %p254 = por %p252, %p253
      %p255 = scmp.ne.s32.totalorder %s243, %s244
      %p256 = scmp.eq.s32.totalorder %s45, 1
      %p257 = por %p255, %p256
      %p259 = scmp.ne.s32.totalorder %s244, %s258
      %p260 = scmp.eq.s32.totalorder %s45, 0
      %p261 = por %p259, %p260
      %s263 = sadd.s32 %s262, 1
      %p266 = scmp.eq.s32.totalorder %s39, 1
      %p267 = scmp.ne.s32.totalorder %s262, %s264
      %p268 = scmp.eq.s32.totalorder %s39, 0
      %p269 = por %p267, %p268
      %p270 = scmp.ne.s32.totalorder %s262, %s264
      %p271 = scmp.eq.s32.totalorder %s44, 1
      %p272 = por %p270, %p271
      %p273 = scmp.ne.s32.totalorder %s264, %s265
      %p274 = scmp.eq.s32.totalorder %s44, 0
      %p275 = por %p273, %p274
      %p276 = scmp.ne.s32.totalorder %s264, %s265
      %p277 = scmp.eq.s32.totalorder %s45, 1
      %p278 = por %p276, %p277
      %p280 = scmp.ne.s32.totalorder %s265, %s279
      %p281 = scmp.eq.s32.totalorder %s45, 0
      %p282 = por %p280, %p281
      %s284 = sadd.s32 %s283, 1
      %p287 = scmp.eq.s32.totalorder %s39, 1
      %p288 = scmp.ne.s32.totalorder %s283, %s285
      %p289 = scmp.eq.s32.totalorder %s39, 0
      %p290 = por %p288, %p289
      %p291 = scmp.ne.s32.totalorder %s283, %s285
      %p292 = scmp.eq.s32.totalorder %s44, 1
      %p293 = por %p291, %p292
      %p294 = scmp.ne.s32.totalorder %s285, %s286
      %p295 = scmp.eq.s32.totalorder %s44, 0
      %p296 = por %p294, %p295
      %p297 = scmp.ne.s32.totalorder %s285, %s286
      %p298 = scmp.eq.s32.totalorder %s45, 1
      %p299 = por %p297, %p298
      %p301 = scmp.ne.s32.totalorder %s286, %s300
      %p302 = scmp.eq.s32.totalorder %s45, 0
      %p303 = por %p301, %p302
      %s305 = sadd.s32 %s304, 1
      %p308 = scmp.eq.s32.totalorder %s39, 1
      %p309 = scmp.ne.s32.totalorder %s304, %s306
      %p310 = scmp.eq.s32.totalorder %s39, 0
      %p311 = por %p309, %p310
      %p312 = scmp.ne.s32.totalorder %s304, %s306
      %p313 = scmp.eq.s32.totalorder %s44, 1
      %p314 = por %p312, %p313
      %p315 = scmp.ne.s32.totalorder %s306, %s307
      %p316 = scmp.eq.s32.totalorder %s44, 0
      %p317 = por %p315, %p316
      %p318 = scmp.ne.s32.totalorder %s306, %s307
      %p319 = scmp.eq.s32.totalorder %s45, 1
      %p320 = por %p318, %p319
      %p322 = scmp.ne.s32.totalorder %s307, %s321
      %p323 = scmp.eq.s32.totalorder %s45, 0
      %p324 = por %p322, %p323
      %s326 = sadd.s32 %s325, 1
      %p329 = scmp.eq.s32.totalorder %s39, 1
      %p330 = scmp.ne.s32.totalorder %s325, %s327
      %p331 = scmp.eq.s32.totalorder %s39, 0
      %p332 = por %p330, %p331
      %p333 = scmp.ne.s32.totalorder %s325, %s327
      %p334 = scmp.eq.s32.totalorder %s44, 1
      %p335 = por %p333, %p334
      %p336 = scmp.ne.s32.totalorder %s327, %s328
      %p337 = scmp.eq.s32.totalorder %s44, 0
      %p338 = por %p336, %p337
      %p339 = scmp.ne.s32.totalorder %s327, %s328
      %p340 = scmp.eq.s32.totalorder %s45, 1
      %p341 = por %p339, %p340
      %p343 = scmp.ne.s32.totalorder %s328, %s342
      %p344 = scmp.eq.s32.totalorder %s45, 0
      %p345 = por %p343, %p344
      %s347 = sadd.s32 %s346, 1
      %p350 = scmp.eq.s32.totalorder %s39, 1
      %p351 = scmp.ne.s32.totalorder %s346, %s348
      %p352 = scmp.eq.s32.totalorder %s39, 0
      %p353 = por %p351, %p352
      %p354 = scmp.ne.s32.totalorder %s346, %s348
      %p355 = scmp.eq.s32.totalorder %s44, 1
      %p356 = por %p354, %p355
      %p357 = scmp.ne.s32.totalorder %s348, %s349
      %p358 = scmp.eq.s32.totalorder %s44, 0
      %p359 = por %p357, %p358
      %p360 = scmp.ne.s32.totalorder %s348, %s349
      %p361 = scmp.eq.s32.totalorder %s45, 1
      %p362 = por %p360, %p361
      %p364 = scmp.ne.s32.totalorder %s349, %s363
      %p365 = scmp.eq.s32.totalorder %s45, 0
      %p366 = por %p364, %p365
      %s368 = sadd.s32 %s367, 1
      %p371 = scmp.eq.s32.totalorder %s39, 1
      %p372 = scmp.ne.s32.totalorder %s367, %s369
      %p373 = scmp.eq.s32.totalorder %s39, 0
      %p374 = por %p372, %p373
      %p375 = scmp.ne.s32.totalorder %s367, %s369
      %p376 = scmp.eq.s32.totalorder %s44, 1
      %p377 = por %p375, %p376
      %p378 = scmp.ne.s32.totalorder %s369, %s370
      %p379 = scmp.eq.s32.totalorder %s44, 0
      %p380 = por %p378, %p379
      %p381 = scmp.ne.s32.totalorder %s369, %s370
      %p382 = scmp.eq.s32.totalorder %s45, 1
      %p383 = por %p381, %p382
      %p385 = scmp.ne.s32.totalorder %s370, %s384
      %p386 = scmp.eq.s32.totalorder %s45, 0
      %p387 = por %p385, %p386
      %s389 = sadd.s32 %s388, 1
      %p392 = scmp.eq.s32.totalorder %s39, 1
      %p393 = scmp.ne.s32.totalorder %s388, %s390
      %p394 = scmp.eq.s32.totalorder %s39, 0
      %p395 = por %p393, %p394
      %p396 = scmp.ne.s32.totalorder %s388, %s390
      %p397 = scmp.eq.s32.totalorder %s44, 1
      %p398 = por %p396, %p397
      %p399 = scmp.ne.s32.totalorder %s390, %s391
      %p400 = scmp.eq.s32.totalorder %s44, 0
      %p401 = por %p399, %p400
      %p402 = scmp.ne.s32.totalorder %s390, %s391
      %p403 = scmp.eq.s32.totalorder %s45, 1
      %p404 = por %p402, %p403
      %p406 = scmp.ne.s32.totalorder %s391, %s405
      %p407 = scmp.eq.s32.totalorder %s45, 0
      %p408 = por %p406, %p407
      %s410 = sadd.s32 %s409, 1
      %p413 = scmp.eq.s32.totalorder %s39, 1
      %p414 = scmp.ne.s32.totalorder %s409, %s411
      %p415 = scmp.eq.s32.totalorder %s39, 0
      %p416 = por %p414, %p415
      %p417 = scmp.ne.s32.totalorder %s409, %s411
      %p418 = scmp.eq.s32.totalorder %s44, 1
      %p419 = por %p417, %p418
      %p420 = scmp.ne.s32.totalorder %s411, %s412
      %p421 = scmp.eq.s32.totalorder %s44, 0
      %p422 = por %p420, %p421
      %p423 = scmp.ne.s32.totalorder %s411, %s412
      %p424 = scmp.eq.s32.totalorder %s45, 1
      %p425 = por %p423, %p424
      %p427 = scmp.ne.s32.totalorder %s412, %s426
      %p428 = scmp.eq.s32.totalorder %s45, 0
      %p429 = por %p427, %p428
      %s431 = sadd.s32 %s430, 1
      %p434 = scmp.eq.s32.totalorder %s39, 1
      %p435 = scmp.ne.s32.totalorder %s430, %s432
      %p436 = scmp.eq.s32.totalorder %s39, 0
      %p437 = por %p435, %p436
      %p438 = scmp.ne.s32.totalorder %s430, %s432
      %p439 = scmp.eq.s32.totalorder %s44, 1
      %p440 = por %p438, %p439
      %p441 = scmp.ne.s32.totalorder %s432, %s433
      %p442 = scmp.eq.s32.totalorder %s44, 0
      %p443 = por %p441, %p442
      %p444 = scmp.ne.s32.totalorder %s432, %s433
      %p445 = scmp.eq.s32.totalorder %s45, 1
      %p446 = por %p444, %p445
      %p448 = scmp.ne.s32.totalorder %s433, %s447
      %p449 = scmp.eq.s32.totalorder %s45, 0
      %p450 = por %p448, %p449
      %s451 = ssub.s32 %s39, %s46
      %p452 = scmp.eq.s32.totalorder %s451, 0
      %s454 = sadd.s32 %s453, 1
      %s455 = scalar_select %p452, %s453, %s454
      %p458 = pneg %p452
      %p459 = scmp.eq.s32.totalorder %s39, 1
      %p460 = por %p458, %p459
      %p461 = scmp.ne.s32.totalorder %s453, %s456
      %p462 = scmp.eq.s32.totalorder %s39, 0
      %p463 = por %p461, %p462
      %p464 = scmp.ne.s32.totalorder %s453, %s456
      %p465 = scmp.eq.s32.totalorder %s44, 1
      %p466 = por %p464, %p465
      %p467 = scmp.ne.s32.totalorder %s456, %s457
      %p468 = scmp.eq.s32.totalorder %s44, 0
      %p469 = por %p467, %p468
      %p470 = scmp.ne.s32.totalorder %s456, %s457
      %p471 = scmp.eq.s32.totalorder %s45, 1
      %p472 = por %p470, %p471
      %p474 = scmp.ne.s32.totalorder %s457, %s473
      %p475 = scmp.eq.s32.totalorder %s45, 0
      %p476 = por %p474, %p475
      %p477 = scmp.le.s32.totalorder 1, %s39
      %p478 = scmp.lt.s32.totalorder %s39, 3
      %p479 = pnand %p477, %p478
      %p480 = pneg %p479
      // Predicated region
      $region9: #{tpu_custom_call.1} parent=5 // pred_check
        _
      $region10: #{tpu_custom_call.1} parent=5 // pred_check_branch
        %482 = sbr.rel (%p479) target = $region12
      $region11: #{tpu_custom_call.1} parent=5 // pred_region
        %s483 = ssub.s32 %s39, 1
        // Predicated region
        $region13: #{tpu_custom_call.1} parent=11 // pred_check
          %p484 = pneg %p86
        $region14: #{tpu_custom_call.1} parent=11 // pred_check_branch
          %486 = sbr.rel (%p484) target = $region16
        $region15: #{tpu_custom_call.1} parent=11 // pred_region
          %s488 = ssub.s32 64, 64
          %489 = vsyncadd [#allocation6], %s488
          %s491 = sshll.u32 [#allocation5], 4
          %s492 = int_to_ptr.vmem [resolvable:$true] %s491
          %494 = dma.hbm_to_vmem [thread:$0]  %s1, 64, %s492, [#allocation6]
        $region16: #{tpu_custom_call.1} parent=11 // pred_fallthru
          _
        // Predicated region
        $region17: #{tpu_custom_call.1} parent=11 // pred_check
          %p495 = pneg %p107
        $region18: #{tpu_custom_call.1} parent=11 // pred_check_branch
          %497 = sbr.rel (%p495) target = $region20
        $region19: #{tpu_custom_call.1} parent=11 // pred_region
          %s499 = ssub.s32 16, 16
          %500 = vsyncadd [#allocation6], %s499
          %s502 = sshll.u32 [#allocation7], 4
          %s503 = int_to_ptr.vmem [resolvable:$true] %s502
          %505 = dma.hbm_to_vmem [thread:$0]  %s2, 16, %s503, [#allocation6]
        $region20: #{tpu_custom_call.1} parent=11 // pred_fallthru
          _
        // Predicated region
        $region21: #{tpu_custom_call.1} parent=11 // pred_check
          %p506 = pneg %p128
        $region22: #{tpu_custom_call.1} parent=11 // pred_check_branch
          %508 = sbr.rel (%p506) target = $region24
        $region23: #{tpu_custom_call.1} parent=11 // pred_region
          %s510 = ssub.s32 16, 16
          %511 = vsyncadd [#allocation9], %s510
          %s513 = sshll.u32 [#allocation8], 4
          %s514 = int_to_ptr.vmem [resolvable:$true] %s513
          %516 = dma.hbm_to_vmem [thread:$0]  %s3, 16, %s514, [#allocation9]
        $region24: #{tpu_custom_call.1} parent=11 // pred_fallthru
          _
        // Predicated region
        $region25: #{tpu_custom_call.1} parent=11 // pred_check
          %p517 = pneg %p149
        $region26: #{tpu_custom_call.1} parent=11 // pred_check_branch
          %519 = sbr.rel (%p517) target = $region28
        $region27: #{tpu_custom_call.1} parent=11 // pred_region
          _
        $region28: #{tpu_custom_call.1} parent=11 // pred_fallthru
          _
        // Predicated region
        $region29: #{tpu_custom_call.1} parent=11 // pred_check
          %p520 = pneg %p170
        $region30: #{tpu_custom_call.1} parent=11 // pred_check_branch
          %522 = sbr.rel (%p520) target = $region32
        $region31: #{tpu_custom_call.1} parent=11 // pred_region
          %s524 = ssub.s32 64, 64
          %525 = vsyncadd [#allocation9], %s524
          %s527 = sshll.u32 [#allocation10], 4
          %s528 = int_to_ptr.vmem [resolvable:$true] %s527
          %530 = dma.hbm_to_vmem [thread:$0]  %s5, 64, %s528, [#allocation9]
        $region32: #{tpu_custom_call.1} parent=11 // pred_fallthru
          _
        // Predicated region
        $region33: #{tpu_custom_call.1} parent=11 // pred_check
          %p531 = pneg %p191
        $region34: #{tpu_custom_call.1} parent=11 // pred_check_branch
          %533 = sbr.rel (%p531) target = $region36
        $region35: #{tpu_custom_call.1} parent=11 // pred_region
          %s535 = ssub.s32 9216, 9216
          %536 = vsyncadd [#allocation12], %s535
          %s537 = sshll.u32 [#allocation11], 4
          %s538 = int_to_ptr.vmem [resolvable:$true] %s537
          %543 = dma.hbm_to_vmem [thread:$0]  %s6, 9216, %s538, [#allocation12], 192, 192, 12
        $region36: #{tpu_custom_call.1} parent=11 // pred_fallthru
          _
        // Predicated region
        $region37: #{tpu_custom_call.1} parent=11 // pred_check
          %p544 = pneg %p212
        $region38: #{tpu_custom_call.1} parent=11 // pred_check_branch
          %546 = sbr.rel (%p544) target = $region40
        $region39: #{tpu_custom_call.1} parent=11 // pred_region
          %s548 = ssub.s32 192, 192
          %549 = vsyncadd [#allocation12], %s548
          %s551 = sshll.u32 [#allocation13], 4
          %s552 = int_to_ptr.vmem [resolvable:$true] %s551
          %554 = dma.hbm_to_vmem [thread:$0]  %s7, 192, %s552, [#allocation12]
        $region40: #{tpu_custom_call.1} parent=11 // pred_fallthru
          _
        // Predicated region
        $region41: #{tpu_custom_call.1} parent=11 // pred_check
          %p555 = pneg %p233
        $region42: #{tpu_custom_call.1} parent=11 // pred_check_branch
          %557 = sbr.rel (%p555) target = $region44
        $region43: #{tpu_custom_call.1} parent=11 // pred_region
          %s559 = ssub.s32 3072, 3072
          %560 = vsyncadd [#allocation15], %s559
          %s561 = sshll.u32 [#allocation14], 4
          %s562 = int_to_ptr.vmem [resolvable:$true] %s561
          %567 = dma.hbm_to_vmem [thread:$0]  %s8, 3072, %s562, [#allocation15], 64, 64, 4
        $region44: #{tpu_custom_call.1} parent=11 // pred_fallthru
          _
        // Predicated region
        $region45: #{tpu_custom_call.1} parent=11 // pred_check
          %p568 = pneg %p254
        $region46: #{tpu_custom_call.1} parent=11 // pred_check_branch
          %570 = sbr.rel (%p568) target = $region48
        $region47: #{tpu_custom_call.1} parent=11 // pred_region
          %s572 = ssub.s32 64, 64
          %573 = vsyncadd [#allocation15], %s572
          %s575 = sshll.u32 [#allocation16], 4
          %s576 = int_to_ptr.vmem [resolvable:$true] %s575
          %578 = dma.hbm_to_vmem [thread:$0]  %s9, 64, %s576, [#allocation15]
        $region48: #{tpu_custom_call.1} parent=11 // pred_fallthru
          _
        // Predicated region
        $region49: #{tpu_custom_call.1} parent=11 // pred_check
          %p579 = pneg %p275
        $region50: #{tpu_custom_call.1} parent=11 // pred_check_branch
          %581 = sbr.rel (%p579) target = $region52
        $region51: #{tpu_custom_call.1} parent=11 // pred_region
          %s583 = ssub.s32 64, 64
          %584 = vsyncadd [#allocation18], %s583
          %s586 = sshll.u32 [#allocation17], 4
          %s587 = int_to_ptr.vmem [resolvable:$true] %s586
          %589 = dma.hbm_to_vmem [thread:$0]  %s10, 64, %s587, [#allocation18]
        $region52: #{tpu_custom_call.1} parent=11 // pred_fallthru
          _
        // Predicated region
        $region53: #{tpu_custom_call.1} parent=11 // pred_check
          %p590 = pneg %p296
        $region54: #{tpu_custom_call.1} parent=11 // pred_check_branch
          %592 = sbr.rel (%p590) target = $region56
        $region55: #{tpu_custom_call.1} parent=11 // pred_region
          %s594 = ssub.s32 64, 64
          %595 = vsyncadd [#allocation18], %s594
          %s597 = sshll.u32 [#allocation19], 4
          %s598 = int_to_ptr.vmem [resolvable:$true] %s597
          %600 = dma.hbm_to_vmem [thread:$0]  %s11, 64, %s598, [#allocation18]
        $region56: #{tpu_custom_call.1} parent=11 // pred_fallthru
          _
        // Predicated region
        $region57: #{tpu_custom_call.1} parent=11 // pred_check
          %p601 = pneg %p317
        $region58: #{tpu_custom_call.1} parent=11 // pred_check_branch
          %603 = sbr.rel (%p601) target = $region60
        $region59: #{tpu_custom_call.1} parent=11 // pred_region
          %s605 = ssub.s32 12288, 12288
          %606 = vsyncadd [#allocation21], %s605
          %s607 = sshll.u32 [#allocation20], 4
          %s608 = int_to_ptr.vmem [resolvable:$true] %s607
          %613 = dma.hbm_to_vmem [thread:$0]  %s12, 12288, %s608, [#allocation21], 256, 256, 16
        $region60: #{tpu_custom_call.1} parent=11 // pred_fallthru
          _
        // Predicated region
        $region61: #{tpu_custom_call.1} parent=11 // pred_check
          %p614 = pneg %p338
        $region62: #{tpu_custom_call.1} parent=11 // pred_check_branch
          %616 = sbr.rel (%p614) target = $region64
        $region63: #{tpu_custom_call.1} parent=11 // pred_region
          %s618 = ssub.s32 256, 256
          %619 = vsyncadd [#allocation21], %s618
          %s621 = sshll.u32 [#allocation22], 4
          %s622 = int_to_ptr.vmem [resolvable:$true] %s621
          %624 = dma.hbm_to_vmem [thread:$0]  %s13, 256, %s622, [#allocation21]
        $region64: #{tpu_custom_call.1} parent=11 // pred_fallthru
          _
        // Predicated region
        $region65: #{tpu_custom_call.1} parent=11 // pred_check
          %p625 = pneg %p359
        $region66: #{tpu_custom_call.1} parent=11 // pred_check_branch
          %627 = sbr.rel (%p625) target = $region68
        $region67: #{tpu_custom_call.1} parent=11 // pred_region
          %s629 = ssub.s32 12288, 12288
          %630 = vsyncadd [#allocation24], %s629
          %s631 = sshll.u32 [#allocation23], 4
          %s632 = int_to_ptr.vmem [resolvable:$true] %s631
          %637 = dma.hbm_to_vmem [thread:$0]  %s14, 12288, %s632, [#allocation24], 64, 64, 4
        $region68: #{tpu_custom_call.1} parent=11 // pred_fallthru
          _
        // Predicated region
        $region69: #{tpu_custom_call.1} parent=11 // pred_check
          %p638 = pneg %p380
        $region70: #{tpu_custom_call.1} parent=11 // pred_check_branch
          %640 = sbr.rel (%p638) target = $region72
        $region71: #{tpu_custom_call.1} parent=11 // pred_region
          %s642 = ssub.s32 64, 64
          %643 = vsyncadd [#allocation24], %s642
          %s645 = sshll.u32 [#allocation25], 4
          %s646 = int_to_ptr.vmem [resolvable:$true] %s645
          %648 = dma.hbm_to_vmem [thread:$0]  %s15, 64, %s646, [#allocation24]
        $region72: #{tpu_custom_call.1} parent=11 // pred_fallthru
          _
        // Predicated region
        $region73: #{tpu_custom_call.1} parent=11 // pred_check
          %p649 = pneg %p401
        $region74: #{tpu_custom_call.1} parent=11 // pred_check_branch
          %651 = sbr.rel (%p649) target = $region76
        $region75: #{tpu_custom_call.1} parent=11 // pred_region
          %s653 = ssub.s32 16, 16
          %654 = vsyncadd [#allocation27], %s653
          %s656 = sshll.u32 [#allocation26], 4
          %s657 = int_to_ptr.vmem [resolvable:$true] %s656
          %659 = dma.hbm_to_vmem [thread:$0]  %s16, 16, %s657, [#allocation27]
        $region76: #{tpu_custom_call.1} parent=11 // pred_fallthru
          _
        // Predicated region
        $region77: #{tpu_custom_call.1} parent=11 // pred_check
          %p660 = pneg %p422
        $region78: #{tpu_custom_call.1} parent=11 // pred_check_branch
          %662 = sbr.rel (%p660) target = $region80
        $region79: #{tpu_custom_call.1} parent=11 // pred_region
          %s664 = ssub.s32 16, 16
          %665 = vsyncadd [#allocation27], %s664
          %s667 = sshll.u32 [#allocation28], 4
          %s668 = int_to_ptr.vmem [resolvable:$true] %s667
          %670 = dma.hbm_to_vmem [thread:$0]  %s17, 16, %s668, [#allocation27]
        $region80: #{tpu_custom_call.1} parent=11 // pred_fallthru
          _
        // Predicated region
        $region81: #{tpu_custom_call.1} parent=11 // pred_check
          %p671 = pneg %p443
        $region82: #{tpu_custom_call.1} parent=11 // pred_check_branch
          %673 = sbr.rel (%p671) target = $region84
        $region83: #{tpu_custom_call.1} parent=11 // pred_region
          _
        $region84: #{tpu_custom_call.1} parent=11 // pred_fallthru
          _
      $region12: #{tpu_custom_call.1} parent=5 // pred_fallthru
        _
      %p674 = scmp.lt.s32.totalorder %s39, 2
      // Predicated region
      $region85: #{tpu_custom_call.1} parent=5 // pred_check
        %p675 = pneg %p674
      $region86: #{tpu_custom_call.1} parent=5 // pred_check_branch
        %677 = sbr.rel (%p675) target = $region88
      $region87: #{tpu_custom_call.1} parent=5 // pred_region
        // Predicated region
        $region89: #{tpu_custom_call.1} parent=87 // pred_check
          %p678 = pneg %p59
        $region90: #{tpu_custom_call.1} parent=87 // pred_check_branch
          %680 = sbr.rel (%p678) target = $region92
        $region91: #{tpu_custom_call.1} parent=87 // pred_region
          %s681 = sand.u32 %s49, 1
          %s682 = scalar_lea.sflag [#allocation3], %s681
          %s683 = sand.u32 %s49, 1
          %s684 = smul.addr %s683, 8
          %s685 = scalar_lea.vmem [#allocation2], %s684
          %s687 = ssub.s32 128, 128
          %688 = vsyncadd %s682, %s687
          %s689 = smul.addr %s39, 128
          %s690 = scalar_lea.hbm %s0, %s689
          %s692 = sshll.u32 %s685, 4
          %s693 = int_to_ptr.vmem [resolvable:$true] %s692
          %695 = dma.hbm_to_vmem [thread:$0]  %s690, 128, %s693, %s682
        $region92: #{tpu_custom_call.1} parent=87 // pred_fallthru
          _
      $region88: #{tpu_custom_call.1} parent=5 // pred_fallthru
        _
      %p696 = scmp.le.s32.totalorder 1, %s39
      %p697 = scmp.lt.s32.totalorder %s39, 3
      %p698 = pnand %p696, %p697
      %p699 = pneg %p698
      // Predicated region
      $region93: #{tpu_custom_call.1} parent=5 // pred_check
        _
      $region94: #{tpu_custom_call.1} parent=5 // pred_check_branch
        %701 = sbr.rel (%p698) target = $region96
      $region95: #{tpu_custom_call.1} parent=5 // pred_region
        %s702 = ssub.s32 %s39, 1
        %s703 = sand.u32 %s52, 1
        %s704 = scalar_lea.sflag [#allocation3], %s703
        %s705 = sand.u32 %s52, 1
        %s706 = smul.addr %s705, 8
        %s707 = scalar_lea.vmem [#allocation2], %s706
        // Predicated region
        $region97: #{tpu_custom_call.1} parent=95 // pred_check
          %p708 = pneg %p65
        $region98: #{tpu_custom_call.1} parent=95 // pred_check_branch
          %710 = sbr.rel (%p708) target = $region100
        $region99: #{tpu_custom_call.1} parent=95 // pred_region
          %711 = dma.done %s704, 128
        $region100: #{tpu_custom_call.1} parent=95 // pred_fallthru
          _
        // Predicated region
        $region101: #{tpu_custom_call.1} parent=95 // pred_check
          %p712 = pneg %p86
        $region102: #{tpu_custom_call.1} parent=95 // pred_check_branch
          %714 = sbr.rel (%p712) target = $region104
        $region103: #{tpu_custom_call.1} parent=95 // pred_region
          %715 = dma.done [#allocation6], 64
        $region104: #{tpu_custom_call.1} parent=95 // pred_fallthru
          _
        // Predicated region
        $region105: #{tpu_custom_call.1} parent=95 // pred_check
          %p716 = pneg %p107
        $region106: #{tpu_custom_call.1} parent=95 // pred_check_branch
          %718 = sbr.rel (%p716) target = $region108
        $region107: #{tpu_custom_call.1} parent=95 // pred_region
          %719 = dma.done [#allocation6], 16
        $region108: #{tpu_custom_call.1} parent=95 // pred_fallthru
          _
        // Predicated region
        $region109: #{tpu_custom_call.1} parent=95 // pred_check
          %p720 = pneg %p128
        $region110: #{tpu_custom_call.1} parent=95 // pred_check_branch
          %722 = sbr.rel (%p720) target = $region112
        $region111: #{tpu_custom_call.1} parent=95 // pred_region
          %723 = dma.done [#allocation9], 16
        $region112: #{tpu_custom_call.1} parent=95 // pred_fallthru
          _
        // Predicated region
        $region113: #{tpu_custom_call.1} parent=95 // pred_check
          %p724 = pneg %p170
        $region114: #{tpu_custom_call.1} parent=95 // pred_check_branch
          %726 = sbr.rel (%p724) target = $region116
        $region115: #{tpu_custom_call.1} parent=95 // pred_region
          %727 = dma.done [#allocation9], 64
        $region116: #{tpu_custom_call.1} parent=95 // pred_fallthru
          _
        // Predicated region
        $region117: #{tpu_custom_call.1} parent=95 // pred_check
          %p728 = pneg %p191
        $region118: #{tpu_custom_call.1} parent=95 // pred_check_branch
          %730 = sbr.rel (%p728) target = $region120
        $region119: #{tpu_custom_call.1} parent=95 // pred_region
          %731 = dma.done [#allocation12], 9216
        $region120: #{tpu_custom_call.1} parent=95 // pred_fallthru
          _
        // Predicated region
        $region121: #{tpu_custom_call.1} parent=95 // pred_check
          %p732 = pneg %p212
        $region122: #{tpu_custom_call.1} parent=95 // pred_check_branch
          %734 = sbr.rel (%p732) target = $region124
        $region123: #{tpu_custom_call.1} parent=95 // pred_region
          %735 = dma.done [#allocation12], 192
        $region124: #{tpu_custom_call.1} parent=95 // pred_fallthru
          _
        // Predicated region
        $region125: #{tpu_custom_call.1} parent=95 // pred_check
          %p736 = pneg %p233
        $region126: #{tpu_custom_call.1} parent=95 // pred_check_branch
          %738 = sbr.rel (%p736) target = $region128
        $region127: #{tpu_custom_call.1} parent=95 // pred_region
          %739 = dma.done [#allocation15], 3072
        $region128: #{tpu_custom_call.1} parent=95 // pred_fallthru
          _
        // Predicated region
        $region129: #{tpu_custom_call.1} parent=95 // pred_check
          %p740 = pneg %p254
        $region130: #{tpu_custom_call.1} parent=95 // pred_check_branch
          %742 = sbr.rel (%p740) target = $region132
        $region131: #{tpu_custom_call.1} parent=95 // pred_region
          %743 = dma.done [#allocation15], 64
        $region132: #{tpu_custom_call.1} parent=95 // pred_fallthru
          _
        // Predicated region
        $region133: #{tpu_custom_call.1} parent=95 // pred_check
          %p744 = pneg %p275
        $region134: #{tpu_custom_call.1} parent=95 // pred_check_branch
          %746 = sbr.rel (%p744) target = $region136
        $region135: #{tpu_custom_call.1} parent=95 // pred_region
          %747 = dma.done [#allocation18], 64
        $region136: #{tpu_custom_call.1} parent=95 // pred_fallthru
          _
        // Predicated region
        $region137: #{tpu_custom_call.1} parent=95 // pred_check
          %p748 = pneg %p296
        $region138: #{tpu_custom_call.1} parent=95 // pred_check_branch
          %750 = sbr.rel (%p748) target = $region140
        $region139: #{tpu_custom_call.1} parent=95 // pred_region
          %751 = dma.done [#allocation18], 64
        $region140: #{tpu_custom_call.1} parent=95 // pred_fallthru
          _
        // Predicated region
        $region141: #{tpu_custom_call.1} parent=95 // pred_check
          %p752 = pneg %p317
        $region142: #{tpu_custom_call.1} parent=95 // pred_check_branch
          %754 = sbr.rel (%p752) target = $region144
        $region143: #{tpu_custom_call.1} parent=95 // pred_region
          %755 = dma.done [#allocation21], 12288
        $region144: #{tpu_custom_call.1} parent=95 // pred_fallthru
          _
        // Predicated region
        $region145: #{tpu_custom_call.1} parent=95 // pred_check
          %p756 = pneg %p338
        $region146: #{tpu_custom_call.1} parent=95 // pred_check_branch
          %758 = sbr.rel (%p756) target = $region148
        $region147: #{tpu_custom_call.1} parent=95 // pred_region
          %759 = dma.done [#allocation21], 256
        $region148: #{tpu_custom_call.1} parent=95 // pred_fallthru
          _
        // Predicated region
        $region149: #{tpu_custom_call.1} parent=95 // pred_check
          %p760 = pneg %p359
        $region150: #{tpu_custom_call.1} parent=95 // pred_check_branch
          %762 = sbr.rel (%p760) target = $region152
        $region151: #{tpu_custom_call.1} parent=95 // pred_region
          %763 = dma.done [#allocation24], 12288
        $region152: #{tpu_custom_call.1} parent=95 // pred_fallthru
          _
        // Predicated region
        $region153: #{tpu_custom_call.1} parent=95 // pred_check
          %p764 = pneg %p380
        $region154: #{tpu_custom_call.1} parent=95 // pred_check_branch
          %766 = sbr.rel (%p764) target = $region156
        $region155: #{tpu_custom_call.1} parent=95 // pred_region
          %767 = dma.done [#allocation24], 64
        $region156: #{tpu_custom_call.1} parent=95 // pred_fallthru
          _
        // Predicated region
        $region157: #{tpu_custom_call.1} parent=95 // pred_check
          %p768 = pneg %p401
        $region158: #{tpu_custom_call.1} parent=95 // pred_check_branch
          %770 = sbr.rel (%p768) target = $region160
        $region159: #{tpu_custom_call.1} parent=95 // pred_region
          %771 = dma.done [#allocation27], 16
        $region160: #{tpu_custom_call.1} parent=95 // pred_fallthru
          _
        // Predicated region
        $region161: #{tpu_custom_call.1} parent=95 // pred_check
          %p772 = pneg %p422
        $region162: #{tpu_custom_call.1} parent=95 // pred_check_branch
          %774 = sbr.rel (%p772) target = $region164
        $region163: #{tpu_custom_call.1} parent=95 // pred_region
          %775 = dma.done [#allocation27], 16
        $region164: #{tpu_custom_call.1} parent=95 // pred_fallthru
          _
        %s776 = sand.u32 %s52, 1
        %s777 = scalar_lea.sflag [#allocation3], %s776
        %s778 = sand.u32 %s52, 1
        %s779 = smul.addr %s778, 8
        %s780 = scalar_lea.vmem [#allocation2], %s779
        %p781 = pneg %p65
        %p782 = pneg %p62
        %p783 = pneg %p86
        %p784 = pneg %p83
        %p785 = pneg %p107
        %p786 = pneg %p104
        %p787 = pneg %p128
        %p788 = pneg %p125
        %p789 = pneg %p149
        %p790 = pneg %p146
        %p791 = pneg %p170
        %p792 = pneg %p167
        %p793 = pneg %p191
        %p794 = pneg %p188
        %p795 = pneg %p212
        %p796 = pneg %p209
        %p797 = pneg %p233
        %p798 = pneg %p230
        %p799 = pneg %p254
        %p800 = pneg %p251
        %p801 = pneg %p275
        %p802 = pneg %p272
        %p803 = pneg %p296
        %p804 = pneg %p293
        %p805 = pneg %p317
        %p806 = pneg %p314
        %p807 = pneg %p338
        %p808 = pneg %p335
        %p809 = pneg %p359
        %p810 = pneg %p356
        %p811 = pneg %p380
        %p812 = pneg %p377
        %p813 = pneg %p401
        %p814 = pneg %p398
        %p815 = pneg %p422
        %p816 = pneg %p419
        %p817 = pneg %p443
        %p818 = pneg %p440
        %p819 = pneg %p469
        %p820 = pneg %p466
        %s821 = sand.u32 %s456, 1
        %s822 = scalar_lea.sflag [#allocation4], %s821
        %s823 = sand.u32 %s456, 1
        %s824 = smul.addr %s823, 4
        %s825 = scalar_lea.vmem [#allocation29], %s824
        %v827 = vld [vmem:[%s707] sm:$0xff]
        %v828 = vld [vmem:[#allocation5] sm:$0xf]
        %vm829 = vcmask 1043456
        %v830 = vsel %vm829, %v828, 0.0
        %v831 = vld [vmem:[#allocation7] sm:$0x1]
        %v832 = vld [vmem:[#allocation8] sm:$0x1]
        %833 = vadd.xlane.f32.xlu0 %v827
        %v834 = vpop.xlane.xlu0 %833
        %835 = vadd.xlane.f32.xlu0 %v830
        %v836 = vpop.xlane.xlu0 %835
        %v837 = vrcp.pop 128.0
        %v838 = vmul.f32 %v834, %v837
        %v839 = vmul.f32 %v836, %v837
        %v840 = vsub.f32 %v827, %v838
        %v841 = vsub.f32 %v830, %v839
        %v842 = vmul.f32 %v840, %v840
        %v843 = vmul.f32 %v841, %v841
        %844 = vadd.xlane.f32.xlu0 %v842
        %v845 = vpop.xlane.xlu0 %844
        %846 = vadd.xlane.f32.xlu0 %v843
        %v847 = vpop.xlane.xlu0 %846
        %v848 = vmul.f32 %v845, %v837
        %v849 = vmul.f32 %v847, %v837
        %v850 = vadd.f32 %v848, 1e-05
        %v851 = vadd.f32 %v849, 1e-05
        %v852 = vrsqrt.pop %v850
        %v853 = vrsqrt.pop %v851
        %v854 = vmul.f32 %v840, %v852
        %v855 = vmul.f32 %v841, %v853
        %v857 = vlaneseq
        %v858 = vshrl.u32 %v857, 7
        %v859 = vsub.s32 0, %v858
        %v860 = vrot.slane %v831, %v859
        %v862 = vmul.f32 %v854, %v860
        %v863 = vmul.f32 %v855, %v860
        %v865 = vlaneseq
        %v866 = vshrl.u32 %v865, 7
        %v867 = vsub.s32 0, %v866
        %v868 = vrot.slane %v832, %v867
        %v870 = vadd.f32 %v862, %v868
        %v871 = vadd.f32 %v863, %v868
        %v872 = vlaneseq
        %v873 = vand.u32 %v872, 127
        %vm874 = vcmp.lt.s32.totalorder %v873, 12
        %v875 = vld [vmem:[%s4] sm:$0x1]
        %v876 = vld [vmem:[#allocation10] sm:$0x1]
        %877 = vadd.xlane.f32.xlu0 %v870
        %v878 = vpop.xlane.xlu0 %877
        %879 = vadd.xlane.f32.xlu0 %v871
        %v880 = vpop.xlane.xlu0 %879
        %v881 = vmul.f32 %v878, %v837
        %v882 = vmul.f32 %v880, %v837
        %v883 = vsub.f32 %v870, %v881
        %v884 = vsub.f32 %v871, %v882
        %v885 = vmul.f32 %v883, %v883
        %v886 = vmul.f32 %v884, %v884
        %887 = vadd.xlane.f32.xlu0 %v885
        %v888 = vpop.xlane.xlu0 %887
        %889 = vadd.xlane.f32.xlu0 %v886
        %v890 = vpop.xlane.xlu0 %889
        %v891 = vmul.f32 %v888, %v837
        %v892 = vmul.f32 %v890, %v837
        %v893 = vadd.f32 %v891, 1e-05
        %v894 = vadd.f32 %v892, 1e-05
        %v895 = vrsqrt.pop %v893
        %v896 = vrsqrt.pop %v894
        %v897 = vmul.f32 %v883, %v895
        %v898 = vmul.f32 %v884, %v896
        %v899 = vlaneseq
        %v900 = vshrl.u32 %v899, 7
        %v901 = vsub.s32 0, %v900
        %v902 = vrot.slane %v875, %v901
        %v903 = vmul.f32 %v897, %v902
        %v904 = vmul.f32 %v898, %v902
        %v905 = vlaneseq
        %v906 = vshrl.u32 %v905, 7
        %v907 = vsub.s32 0, %v906
        %v908 = vrot.slane %v876, %v907
        %v909 = vadd.f32 %v903, %v908
        %v910 = vadd.f32 %v904, %v908
        %v911 = vpack.c.bf16 %v910, %v909
        %v912 = vld [vmem:[#allocation11] sm:$0xff]
        %v913 = vld [vmem:[#allocation11 + $0x8] sm:$0xf]
        %v914 = vld [vmem:[#allocation11 + $0xc] sm:$0xff]
        %v915 = vld [vmem:[#allocation11 + $0x14] sm:$0xf]
        %v916 = vld [vmem:[#allocation11 + $0x18] sm:$0xff]
        %v917 = vld [vmem:[#allocation11 + $0x20] sm:$0xf]
        %v918 = vld [vmem:[#allocation11 + $0x24] sm:$0xff]
        %v919 = vld [vmem:[#allocation11 + $0x2c] sm:$0xf]
        %v920 = vld [vmem:[#allocation11 + $0x30] sm:$0xff]
        %v921 = vld [vmem:[#allocation11 + $0x38] sm:$0xf]
        %v922 = vld [vmem:[#allocation11 + $0x3c] sm:$0xff]
        %v923 = vld [vmem:[#allocation11 + $0x44] sm:$0xf]
        %v924 = vld [vmem:[#allocation11 + $0x48] sm:$0xff]
        %v925 = vld [vmem:[#allocation11 + $0x50] sm:$0xf]
        %v926 = vld [vmem:[#allocation11 + $0x54] sm:$0xff]
        %v927 = vld [vmem:[#allocation11 + $0x5c] sm:$0xf]
        %v928 = vld [vmem:[#allocation11 + $0x60] sm:$0xff]
        %v929 = vld [vmem:[#allocation11 + $0x68] sm:$0xf]
        %v930 = vld [vmem:[#allocation11 + $0x6c] sm:$0xff]
        %v931 = vld [vmem:[#allocation11 + $0x74] sm:$0xf]
        %v932 = vld [vmem:[#allocation11 + $0x78] sm:$0xff]
        %v933 = vld [vmem:[#allocation11 + $0x80] sm:$0xf]
        %v934 = vld [vmem:[#allocation11 + $0x84] sm:$0xff]
        %v935 = vld [vmem:[#allocation11 + $0x8c] sm:$0xf]
        %v936 = vld [vmem:[#allocation11 + $0x90] sm:$0xff]
        %v937 = vld [vmem:[#allocation11 + $0x98] sm:$0xf]
        %v938 = vld [vmem:[#allocation11 + $0x9c] sm:$0xff]
        %v939 = vld [vmem:[#allocation11 + $0xa4] sm:$0xf]
        %v940 = vld [vmem:[#allocation11 + $0xa8] sm:$0xff]
        %v941 = vld [vmem:[#allocation11 + $0xb0] sm:$0xf]
        %v942 = vld [vmem:[#allocation11 + $0xb4] sm:$0xff]
        %v943 = vld [vmem:[#allocation11 + $0xbc] sm:$0xf]
        %v944 = vld [vmem:[#allocation13] ss:$4 sm:$0x7]
        %v946 = vlaneseq
        %v947 = vshrl.u32 %v946, 7
        %v948 = vsub.s32 0, %v947
        %v949 = vrot.slane %v944, %v948
        %v950 = vlaneseq
        %v951 = vshrl.u32 %v950, 7
        %v952 = vsub.s32 1, %v951
        %v953 = vrot.slane %v944, %v952
        %v954 = vlaneseq
        %v955 = vshrl.u32 %v954, 7
        %v956 = vsub.s32 2, %v955
        %v957 = vrot.slane %v944, %v956
        %v993 = vunpack.c.l.b16 %v912
        %v994 = vunpack.c.h.b16 %v912
        %v995 = vunpack.c.l.b16 %v913
        %v996 = vunpack.c.l.b16 %v914
        %v997 = vunpack.c.h.b16 %v914
        %v998 = vunpack.c.l.b16 %v915
        %v999 = vunpack.c.l.b16 %v916
        %v1000 = vunpack.c.h.b16 %v916
        %v1001 = vunpack.c.l.b16 %v917
        %v1002 = vunpack.c.l.b16 %v918
        %v1003 = vunpack.c.h.b16 %v918
        %v1004 = vunpack.c.l.b16 %v919
        %v1005 = vunpack.c.l.b16 %v920
        %v1006 = vunpack.c.h.b16 %v920
        %v1007 = vunpack.c.l.b16 %v921
        %v1008 = vunpack.c.l.b16 %v922
        %v1009 = vunpack.c.h.b16 %v922
        %v1010 = vunpack.c.l.b16 %v923
        %v1011 = vunpack.c.l.b16 %v924
        %v1012 = vunpack.c.h.b16 %v924
        %v1013 = vunpack.c.l.b16 %v925
        %v1014 = vunpack.c.l.b16 %v926
        %v1015 = vunpack.c.h.b16 %v926
        %v1016 = vunpack.c.l.b16 %v927
        %v1017 = vunpack.c.l.b16 %v928
        %v1018 = vunpack.c.h.b16 %v928
        %v1019 = vunpack.c.l.b16 %v929
        %v1020 = vunpack.c.l.b16 %v930
        %v1021 = vunpack.c.h.b16 %v930
        %v1022 = vunpack.c.l.b16 %v931
        %v1023 = vunpack.c.l.b16 %v932
        %v1024 = vunpack.c.h.b16 %v932
        %v1025 = vunpack.c.l.b16 %v933
        %v1026 = vunpack.c.l.b16 %v934
        %v1027 = vunpack.c.h.b16 %v934
        %v1028 = vunpack.c.l.b16 %v935
        %v1029 = vunpack.c.l.b16 %v936
        %v1030 = vunpack.c.h.b16 %v936
        %v1031 = vunpack.c.l.b16 %v937
        %v1032 = vunpack.c.l.b16 %v938
        %v1033 = vunpack.c.h.b16 %v938
        %v1034 = vunpack.c.l.b16 %v939
        %v1035 = vunpack.c.l.b16 %v940
        %v1036 = vunpack.c.h.b16 %v940
        %v1037 = vunpack.c.l.b16 %v941
        %v1038 = vunpack.c.l.b16 %v942
        %v1039 = vunpack.c.h.b16 %v942
        %v1040 = vunpack.c.l.b16 %v943
        %v1041 = vpack.c.b16 %v996, %v993
        %v1042 = vpack.c.b16 %v997, %v994
        %v1043 = vpack.c.b16 %v998, %v995
        %v1044 = vpack.c.b16 %v1002, %v999
        %v1045 = vpack.c.b16 %v1003, %v1000
        %v1046 = vpack.c.b16 %v1004, %v1001
        %v1047 = vpack.c.b16 %v1008, %v1005
        %v1048 = vpack.c.b16 %v1009, %v1006
        %v1049 = vpack.c.b16 %v1010, %v1007
        %v1050 = vpack.c.b16 %v1014, %v1011
        %v1051 = vpack.c.b16 %v1015, %v1012
        %v1052 = vpack.c.b16 %v1016, %v1013
        %v1053 = vpack.c.b16 %v1020, %v1017
        %v1054 = vpack.c.b16 %v1021, %v1018
        %v1055 = vpack.c.b16 %v1022, %v1019
        %v1056 = vpack.c.b16 %v1026, %v1023
        %v1057 = vpack.c.b16 %v1027, %v1024
        %v1058 = vpack.c.b16 %v1028, %v1025
        %v1059 = vpack.c.b16 %v1032, %v1029
        %v1060 = vpack.c.b16 %v1033, %v1030
        %v1061 = vpack.c.b16 %v1034, %v1031
        %v1062 = vpack.c.b16 %v1038, %v1035
        %v1063 = vpack.c.b16 %v1039, %v1036
        %v1064 = vpack.c.b16 %v1040, %v1037
        %1089 = vmatprep.subr.bf16.mxu0 %v1042
        %1090 = vmatpush1.bf16.msra.mxu0 %v1041
        %1091 = vmatprep.subr.bf16.mxu0 %v1045
        %1092 = vmatpush1.bf16.msra.mxu0 %v1044
        %1093 = vmatprep.subr.bf16.mxu0 %v1048
        %1094 = vmatpush1.bf16.msra.mxu0 %v1047
        %1095 = vmatprep.subr.bf16.mxu0 %v1051
        %1096 = vmatpush1.bf16.msra.mxu0 %v1050
        %1097 = vmatprep.subr.bf16.mxu0 %v1054
        %1098 = vmatpush1.bf16.msra.mxu0 %v1053
        %1099 = vmatprep.subr.bf16.mxu0 %v1057
        %1100 = vmatpush1.bf16.msra.mxu0 %v1056
        %1101 = vmatprep.subr.bf16.mxu0 %v1060
        %1102 = vmatpush1.bf16.msra.mxu0 %v1059
        %1103 = vmatprep.subr.bf16.mxu0 %v1063
        %1104 = vmatpush1.bf16.msra.mxu0 %v1062
        %1105 = vmatprep.subr.bf16.mxu0 0
        %1106 = vmatpush1.bf16.msra.mxu0 0
        %1107 = vmatprep.subr.bf16.mxu0 0
        %1108 = vmatpush1.bf16.msra.mxu0 0
        %1109 = vmatprep.subr.bf16.mxu0 0
        %1110 = vmatpush1.bf16.msra.mxu0 0
        %1111 = vmatprep.subr.bf16.mxu0 0
        %1112 = vmatpush1.bf16.msra.mxu0 0
        %1113 = vmatprep.subr.bf16.mxu0 0
        %1114 = vmatpush1.bf16.msra.mxu0 0
        %1115 = vmatprep.subr.bf16.mxu0 0
        %1116 = vmatpush1.bf16.msra.mxu0 0
        %1117 = vmatprep.subr.bf16.mxu0 0
        %1118 = vmatpush1.bf16.msra.mxu0 0
        %1119 = vmatprep.subr.bf16.mxu0 0
        %1120 = vmatpush1.bf16.msra.mxu0 0
        %1121 = vmatprep.mubr.bf16.mxu0 0
        %1122 = vmatmul.mubr.bf16.gmra.mrb[0].mxu0 %v911
        %v1123 = vpop.f32.mrb[0].mxu0
        %v1124 = vadd.f32 %v949, %v1123
        %v1125 = vpop.f32.mrb[0].mxu0
        %v1126 = vadd.f32 %v953, %v1125
        %v1127 = vpop.f32.mrb[0].mxu0
        %v1128 = vadd.f32 %v949, %v1127
        %v1129 = vpop.f32.mrb[0].mxu0
        %v1130 = vadd.f32 %v953, %v1129
        %1131 = vdwg.mxu0
        %1132 = vmatprep.subr.bf16.mxu0 0
        %1133 = vmatpush1.bf16.msra.mxu0 %v1043
        %1134 = vmatprep.subr.bf16.mxu0 0
        %1135 = vmatpush1.bf16.msra.mxu0 %v1046
        %1136 = vmatprep.subr.bf16.mxu0 0
        %1137 = vmatpush1.bf16.msra.mxu0 %v1049
        %1138 = vmatprep.subr.bf16.mxu0 0
        %1139 = vmatpush1.bf16.msra.mxu0 %v1052
        %1140 = vmatprep.subr.bf16.mxu0 0
        %1141 = vmatpush1.bf16.msra.mxu0 %v1055
        %1142 = vmatprep.subr.bf16.mxu0 0
        %1143 = vmatpush1.bf16.msra.mxu0 %v1058
        %1144 = vmatprep.subr.bf16.mxu0 0
        %1145 = vmatpush1.bf16.msra.mxu0 %v1061
        %1146 = vmatprep.subr.bf16.mxu0 0
        %1147 = vmatpush1.bf16.msra.mxu0 %v1064
        %1148 = vmatprep.subr.bf16.mxu0 0
        %1149 = vmatpush1.bf16.msra.mxu0 0
        %1150 = vmatprep.subr.bf16.mxu0 0
        %1151 = vmatpush1.bf16.msra.mxu0 0
        %1152 = vmatprep.subr.bf16.mxu0 0
        %1153 = vmatpush1.bf16.msra.mxu0 0
        %1154 = vmatprep.subr.bf16.mxu0 0
        %1155 = vmatpush1.bf16.msra.mxu0 0
        %1156 = vmatprep.subr.bf16.mxu0 0
        %1157 = vmatpush1.bf16.msra.mxu0 0
        %1158 = vmatprep.subr.bf16.mxu0 0
        %1159 = vmatpush1.bf16.msra.mxu0 0
        %1160 = vmatprep.subr.bf16.mxu0 0
        %1161 = vmatpush1.bf16.msra.mxu0 0
        %1162 = vmatprep.subr.bf16.mxu0 0
        %1163 = vmatpush1.bf16.msra.mxu0 0
        %1164 = vmatprep.mubr.bf16.mxu0 0
        %1165 = vmatmul.mubr.bf16.gmra.mrb[0].mxu0 %v911
        %v1166 = vpop.f32.mrb[0].mxu0
        %v1167 = vadd.f32 %v957, %v1166
        %v1168 = vpop.f32.mrb[0].mxu0
        %v1169 = vpop.f32.mrb[0].mxu0
        %v1170 = vadd.f32 %v957, %v1169
        %v1171 = vpop.f32.mrb[0].mxu0
        %1172 = vdwg.mxu0
        %1175 = vrot.lane.b32.xlu0 %v1124, 112
        %v1176 = vpop.permute.xlu0 %1175
        %1177 = vrot.lane.b32.xlu0 %v1128, 112
        %v1178 = vpop.permute.xlu0 %1177
        %1181 = vrot.lane.b32.xlu0 %v1124, 96
        %v1182 = vpop.permute.xlu0 %1181
        %1183 = vrot.lane.b32.xlu0 %v1128, 96
        %v1184 = vpop.permute.xlu0 %1183
        %1187 = vrot.lane.b32.xlu0 %v1124, 80
        %v1188 = vpop.permute.xlu0 %1187
        %1189 = vrot.lane.b32.xlu0 %v1128, 80
        %v1190 = vpop.permute.xlu0 %1189
        %1193 = vrot.lane.b32.xlu0 %v1124, 64
        %v1194 = vpop.permute.xlu0 %1193
        %1195 = vrot.lane.b32.xlu0 %v1128, 64
        %v1196 = vpop.permute.xlu0 %1195
        %1199 = vrot.lane.b32.xlu0 %v1124, 48
        %v1200 = vpop.permute.xlu0 %1199
        %1201 = vrot.lane.b32.xlu0 %v1128, 48
        %v1202 = vpop.permute.xlu0 %1201
        %1205 = vrot.lane.b32.xlu0 %v1124, 32
        %v1206 = vpop.permute.xlu0 %1205
        %1207 = vrot.lane.b32.xlu0 %v1128, 32
        %v1208 = vpop.permute.xlu0 %1207
        %1211 = vrot.lane.b32.xlu0 %v1124, 16
        %v1212 = vpop.permute.xlu0 %1211
        %1213 = vrot.lane.b32.xlu0 %v1128, 16
        %v1214 = vpop.permute.xlu0 %1213
        %v1217 = vmul.f32 %v1124, 0.25
        %v1218 = vmul.f32 %v1128, 0.25
        %v1219 = vmul.f32 %v1176, 0.25
        %v1220 = vmul.f32 %v1178, 0.25
        %v1221 = vmul.f32 %v1182, 0.25
        %v1222 = vmul.f32 %v1184, 0.25
        %v1223 = vmul.f32 %v1188, 0.25
        %v1224 = vmul.f32 %v1190, 0.25
        %v1225 = vmul.f32 %v1194, 0.25
        %v1226 = vmul.f32 %v1196, 0.25
        %v1227 = vmul.f32 %v1200, 0.25
        %v1228 = vmul.f32 %v1202, 0.25
        %v1229 = vmul.f32 %v1206, 0.25
        %v1230 = vmul.f32 %v1208, 0.25
        %v1231 = vmul.f32 %v1212, 0.25
        %v1232 = vmul.f32 %v1214, 0.25
        %1235 = vrot.lane.b32.xlu0 %v1126, 112
        %v1236 = vpop.permute.xlu0 %1235
        %1237 = vrot.lane.b32.xlu0 %v1130, 112
        %v1238 = vpop.permute.xlu0 %1237
        %1241 = vrot.lane.b32.xlu0 %v1126, 96
        %v1242 = vpop.permute.xlu0 %1241
        %1243 = vrot.lane.b32.xlu0 %v1130, 96
        %v1244 = vpop.permute.xlu0 %1243
        %1247 = vrot.lane.b32.xlu0 %v1126, 80
        %v1248 = vpop.permute.xlu0 %1247
        %1249 = vrot.lane.b32.xlu0 %v1130, 80
        %v1250 = vpop.permute.xlu0 %1249
        %1253 = vrot.lane.b32.xlu0 %v1126, 64
        %v1254 = vpop.permute.xlu0 %1253
        %1255 = vrot.lane.b32.xlu0 %v1130, 64
        %v1256 = vpop.permute.xlu0 %1255
        %1259 = vrot.lane.b32.xlu0 %v1126, 48
        %v1260 = vpop.permute.xlu0 %1259
        %1261 = vrot.lane.b32.xlu0 %v1130, 48
        %v1262 = vpop.permute.xlu0 %1261
        %1265 = vrot.lane.b32.xlu0 %v1126, 32
        %v1266 = vpop.permute.xlu0 %1265
        %1267 = vrot.lane.b32.xlu0 %v1130, 32
        %v1268 = vpop.permute.xlu0 %1267
        %1271 = vrot.lane.b32.xlu0 %v1126, 16
        %v1272 = vpop.permute.xlu0 %1271
        %1273 = vrot.lane.b32.xlu0 %v1130, 16
        %v1274 = vpop.permute.xlu0 %1273
        %1279 = vrot.lane.b32.xlu0 %v1167, 112
        %v1280 = vpop.permute.xlu0 %1279
        %1281 = vrot.lane.b32.xlu0 %v1170, 112
        %v1282 = vpop.permute.xlu0 %1281
        %1285 = vrot.lane.b32.xlu0 %v1167, 96
        %v1286 = vpop.permute.xlu0 %1285
        %1287 = vrot.lane.b32.xlu0 %v1170, 96
        %v1288 = vpop.permute.xlu0 %1287
        %1291 = vrot.lane.b32.xlu0 %v1167, 80
        %v1292 = vpop.permute.xlu0 %1291
        %1293 = vrot.lane.b32.xlu0 %v1170, 80
        %v1294 = vpop.permute.xlu0 %1293
        %1297 = vrot.lane.b32.xlu0 %v1167, 64
        %v1298 = vpop.permute.xlu0 %1297
        %1299 = vrot.lane.b32.xlu0 %v1170, 64
        %v1300 = vpop.permute.xlu0 %1299
        %1303 = vrot.lane.b32.xlu0 %v1167, 48
        %v1304 = vpop.permute.xlu0 %1303
        %1305 = vrot.lane.b32.xlu0 %v1170, 48
        %v1306 = vpop.permute.xlu0 %1305
        %1309 = vrot.lane.b32.xlu0 %v1167, 32
        %v1310 = vpop.permute.xlu0 %1309
        %1311 = vrot.lane.b32.xlu0 %v1170, 32
        %v1312 = vpop.permute.xlu0 %1311
        %1315 = vrot.lane.b32.xlu0 %v1167, 16
        %v1316 = vpop.permute.xlu0 %1315
        %1317 = vrot.lane.b32.xlu0 %v1170, 16
        %v1318 = vpop.permute.xlu0 %1317
        %v1321 = vpack.c.bf16 %v1218, %v1217
        %v1322 = vpack.c.bf16 %v1220, %v1219
        %v1323 = vpack.c.bf16 %v1222, %v1221
        %v1324 = vpack.c.bf16 %v1224, %v1223
        %v1325 = vpack.c.bf16 %v1226, %v1225
        %v1326 = vpack.c.bf16 %v1228, %v1227
        %v1327 = vpack.c.bf16 %v1230, %v1229
        %v1328 = vpack.c.bf16 %v1232, %v1231
        %v1329 = vpack.c.bf16 %v1130, %v1126
        %v1330 = vpack.c.bf16 %v1238, %v1236
        %v1331 = vpack.c.bf16 %v1244, %v1242
        %v1332 = vpack.c.bf16 %v1250, %v1248
        %v1333 = vpack.c.bf16 %v1256, %v1254
        %v1334 = vpack.c.bf16 %v1262, %v1260
        %v1335 = vpack.c.bf16 %v1268, %v1266
        %v1336 = vpack.c.bf16 %v1274, %v1272
        %vm1337 = vcmask 130048
        %v1339 = vsel %vm1337, %v1321, 0
        %v1342 = vsel %vm1337, %v1329, 0
        %1344 = vmatprep.subr.bf16.mxu0 0
        %1345 = vmatpush1.bf16.xpose.msra.mxu0 %v1342
        %1346 = vmatprep.subr.bf16.mxu0 0
        %1347 = vmatpush1.bf16.xpose.msra.mxu0 0
        %1348 = vmatprep.subr.bf16.mxu0 0
        %1349 = vmatpush1.bf16.xpose.msra.mxu0 0
        %1350 = vmatprep.subr.bf16.mxu0 0
        %1351 = vmatpush1.bf16.xpose.msra.mxu0 0
        %1352 = vmatprep.subr.bf16.mxu0 0
        %1353 = vmatpush1.bf16.xpose.msra.mxu0 0
        %1354 = vmatprep.subr.bf16.mxu0 0
        %1355 = vmatpush1.bf16.xpose.msra.mxu0 0
        %1356 = vmatprep.subr.bf16.mxu0 0
        %1357 = vmatpush1.bf16.xpose.msra.mxu0 0
        %1358 = vmatprep.subr.bf16.mxu0 0
        %1359 = vmatpush1.bf16.xpose.msra.mxu0 0
        %1360 = vmatprep.subr.bf16.mxu0 0
        %1361 = vmatpush1.bf16.xpose.msra.mxu0 0
        %1362 = vmatprep.subr.bf16.mxu0 0
        %1363 = vmatpush1.bf16.xpose.msra.mxu0 0
        %1364 = vmatprep.subr.bf16.mxu0 0
        %1365 = vmatpush1.bf16.xpose.msra.mxu0 0
        %1366 = vmatprep.subr.bf16.mxu0 0
        %1367 = vmatpush1.bf16.xpose.msra.mxu0 0
        %1368 = vmatprep.subr.bf16.mxu0 0
        %1369 = vmatpush1.bf16.xpose.msra.mxu0 0
        %1370 = vmatprep.subr.bf16.mxu0 0
        %1371 = vmatpush1.bf16.xpose.msra.mxu0 0
        %1372 = vmatprep.subr.bf16.mxu0 0
        %1373 = vmatpush1.bf16.xpose.msra.mxu0 0
        %1374 = vmatprep.subr.bf16.mxu0 0
        %1375 = vmatpush1.bf16.xpose.msra.mxu0 0
        %1376 = vmatprep.mubr.bf16.mxu0 0
        %1377 = vmatmul.mubr.bf16.gmra.mrb[0].mxu0 %v1339
        %v1378 = vpop.f32.mrb[0].mxu0
        %v1379 = vadd.f32 0.0, %v1378
        %v1380 = vpop.f32.mrb[0].mxu0
        %v1381 = vpop.f32.mrb[0].mxu0
        %v1382 = vadd.f32 0.0, %v1381
        %v1383 = vpop.f32.mrb[0].mxu0
        %1384 = vdwg.mxu0
        %v1386 = vsel %vm1337, %v1322, 0
        %v1389 = vsel %vm1337, %v1330, 0
        %1391 = vmatprep.subr.bf16.mxu0 0
        %1392 = vmatpush1.bf16.xpose.msra.mxu0 %v1389
        %1393 = vmatprep.subr.bf16.mxu0 0
        %1394 = vmatpush1.bf16.xpose.msra.mxu0 0
        %1395 = vmatprep.subr.bf16.mxu0 0
        %1396 = vmatpush1.bf16.xpose.msra.mxu0 0
        %1397 = vmatprep.subr.bf16.mxu0 0
        %1398 = vmatpush1.bf16.xpose.msra.mxu0 0
        %1399 = vmatprep.subr.bf16.mxu0 0
        %1400 = vmatpush1.bf16.xpose.msra.mxu0 0
        %1401 = vmatprep.subr.bf16.mxu0 0
        %1402 = vmatpush1.bf16.xpose.msra.mxu0 0
        %1403 = vmatprep.subr.bf16.mxu0 0
        %1404 = vmatpush1.bf16.xpose.msra.mxu0 0
        %1405 = vmatprep.subr.bf16.mxu0 0
        %1406 = vmatpush1.bf16.xpose.msra.mxu0 0
        %1407 = vmatprep.subr.bf16.mxu0 0
        %1408 = vmatpush1.bf16.xpose.msra.mxu0 0
        %1409 = vmatprep.subr.bf16.mxu0 0
        %1410 = vmatpush1.bf16.xpose.msra.mxu0 0
        %1411 = vmatprep.subr.bf16.mxu0 0
        %1412 = vmatpush1.bf16.xpose.msra.mxu0 0
        %1413 = vmatprep.subr.bf16.mxu0 0
        %1414 = vmatpush1.bf16.xpose.msra.mxu0 0
        %1415 = vmatprep.subr.bf16.mxu0 0
        %1416 = vmatpush1.bf16.xpose.msra.mxu0 0
        %1417 = vmatprep.subr.bf16.mxu0 0
        %1418 = vmatpush1.bf16.xpose.msra.mxu0 0
        %1419 = vmatprep.subr.bf16.mxu0 0
        %1420 = vmatpush1.bf16.xpose.msra.mxu0 0
        %1421 = vmatprep.subr.bf16.mxu0 0
        %1422 = vmatpush1.bf16.xpose.msra.mxu0 0
        %1423 = vmatprep.mubr.bf16.mxu0 0
        %1424 = vmatmul.mubr.bf16.gmra.mrb[0].mxu0 %v1386
        %v1425 = vpop.f32.mrb[0].mxu0
        %v1426 = vadd.f32 0.0, %v1425
        %v1427 = vpop.f32.mrb[0].mxu0
        %v1428 = vpop.f32.mrb[0].mxu0
        %v1429 = vadd.f32 0.0, %v1428
        %v1430 = vpop.f32.mrb[0].mxu0
        %1431 = vdwg.mxu0
        %v1433 = vsel %vm1337, %v1323, 0
        %v1436 = vsel %vm1337, %v1331, 0
        %1438 = vmatprep.subr.bf16.mxu0 0
        %1439 = vmatpush1.bf16.xpose.msra.mxu0 %v1436
        %1440 = vmatprep.subr.bf16.mxu0 0
        %1441 = vmatpush1.bf16.xpose.msra.mxu0 0
        %1442 = vmatprep.subr.bf16.mxu0 0
        %1443 = vmatpush1.bf16.xpose.msra.mxu0 0
        %1444 = vmatprep.subr.bf16.mxu0 0
        %1445 = vmatpush1.bf16.xpose.msra.mxu0 0
        %1446 = vmatprep.subr.bf16.mxu0 0
        %1447 = vmatpush1.bf16.xpose.msra.mxu0 0
        %1448 = vmatprep.subr.bf16.mxu0 0
        %1449 = vmatpush1.bf16.xpose.msra.mxu0 0
        %1450 = vmatprep.subr.bf16.mxu0 0
        %1451 = vmatpush1.bf16.xpose.msra.mxu0 0
        %1452 = vmatprep.subr.bf16.mxu0 0
        %1453 = vmatpush1.bf16.xpose.msra.mxu0 0
        %1454 = vmatprep.subr.bf16.mxu0 0
        %1455 = vmatpush1.bf16.xpose.msra.mxu0 0
        %1456 = vmatprep.subr.bf16.mxu0 0
        %1457 = vmatpush1.bf16.xpose.msra.mxu0 0
        %1458 = vmatprep.subr.bf16.mxu0 0
        %1459 = vmatpush1.bf16.xpose.msra.mxu0 0
        %1460 = vmatprep.subr.bf16.mxu0 0
        %1461 = vmatpush1.bf16.xpose.msra.mxu0 0
        %1462 = vmatprep.subr.bf16.mxu0 0
        %1463 = vmatpush1.bf16.xpose.msra.mxu0 0
        %1464 = vmatprep.subr.bf16.mxu0 0
        %1465 = vmatpush1.bf16.xpose.msra.mxu0 0
        %1466 = vmatprep.subr.bf16.mxu0 0
        %1467 = vmatpush1.bf16.xpose.msra.mxu0 0
        %1468 = vmatprep.subr.bf16.mxu0 0
        %1469 = vmatpush1.bf16.xpose.msra.mxu0 0
        %1470 = vmatprep.mubr.bf16.mxu0 0
        %1471 = vmatmul.mubr.bf16.gmra.mrb[0].mxu0 %v1433
        %v1472 = vpop.f32.mrb[0].mxu0
        %v1473 = vadd.f32 0.0, %v1472
        %v1474 = vpop.f32.mrb[0].mxu0
        %v1475 = vpop.f32.mrb[0].mxu0
        %v1476 = vadd.f32 0.0, %v1475
        %v1477 = vpop.f32.mrb[0].mxu0
        %1478 = vdwg.mxu0
        %v1480 = vsel %vm1337, %v1324, 0
        %v1483 = vsel %vm1337, %v1332, 0
        %1485 = vmatprep.subr.bf16.mxu0 0
        %1486 = vmatpush1.bf16.xpose.msra.mxu0 %v1483
        %1487 = vmatprep.subr.bf16.mxu0 0
        %1488 = vmatpush1.bf16.xpose.msra.mxu0 0
        %1489 = vmatprep.subr.bf16.mxu0 0
        %1490 = vmatpush1.bf16.xpose.msra.mxu0 0
        %1491 = vmatprep.subr.bf16.mxu0 0
        %1492 = vmatpush1.bf16.xpose.msra.mxu0 0
        %1493 = vmatprep.subr.bf16.mxu0 0
        %1494 = vmatpush1.bf16.xpose.msra.mxu0 0
        %1495 = vmatprep.subr.bf16.mxu0 0
        %1496 = vmatpush1.bf16.xpose.msra.mxu0 0
        %1497 = vmatprep.subr.bf16.mxu0 0
        %1498 = vmatpush1.bf16.xpose.msra.mxu0 0
        %1499 = vmatprep.subr.bf16.mxu0 0
        %1500 = vmatpush1.bf16.xpose.msra.mxu0 0
        %1501 = vmatprep.subr.bf16.mxu0 0
        %1502 = vmatpush1.bf16.xpose.msra.mxu0 0
        %1503 = vmatprep.subr.bf16.mxu0 0
        %1504 = vmatpush1.bf16.xpose.msra.mxu0 0
        %1505 = vmatprep.subr.bf16.mxu0 0
        %1506 = vmatpush1.bf16.xpose.msra.mxu0 0
        %1507 = vmatprep.subr.bf16.mxu0 0
        %1508 = vmatpush1.bf16.xpose.msra.mxu0 0
        %1509 = vmatprep.subr.bf16.mxu0 0
        %1510 = vmatpush1.bf16.xpose.msra.mxu0 0
        %1511 = vmatprep.subr.bf16.mxu0 0
        %1512 = vmatpush1.bf16.xpose.msra.mxu0 0
        %1513 = vmatprep.subr.bf16.mxu0 0
        %1514 = vmatpush1.bf16.xpose.msra.mxu0 0
        %1515 = vmatprep.subr.bf16.mxu0 0
        %1516 = vmatpush1.bf16.xpose.msra.mxu0 0
        %1517 = vmatprep.mubr.bf16.mxu0 0
        %1518 = vmatmul.mubr.bf16.gmra.mrb[0].mxu0 %v1480
        %v1519 = vpop.f32.mrb[0].mxu0
        %v1520 = vadd.f32 0.0, %v1519
        %v1521 = vpop.f32.mrb[0].mxu0
        %v1522 = vpop.f32.mrb[0].mxu0
        %v1523 = vadd.f32 0.0, %v1522
        %v1524 = vpop.f32.mrb[0].mxu0
        %1525 = vdwg.mxu0
        %v1527 = vsel %vm1337, %v1325, 0
        %v1530 = vsel %vm1337, %v1333, 0
        %1532 = vmatprep.subr.bf16.mxu0 0
        %1533 = vmatpush1.bf16.xpose.msra.mxu0 %v1530
        %1534 = vmatprep.subr.bf16.mxu0 0
        %1535 = vmatpush1.bf16.xpose.msra.mxu0 0
        %1536 = vmatprep.subr.bf16.mxu0 0
        %1537 = vmatpush1.bf16.xpose.msra.mxu0 0
        %1538 = vmatprep.subr.bf16.mxu0 0
        %1539 = vmatpush1.bf16.xpose.msra.mxu0 0
        %1540 = vmatprep.subr.bf16.mxu0 0
        %1541 = vmatpush1.bf16.xpose.msra.mxu0 0
        %1542 = vmatprep.subr.bf16.mxu0 0
        %1543 = vmatpush1.bf16.xpose.msra.mxu0 0
        %1544 = vmatprep.subr.bf16.mxu0 0
        %1545 = vmatpush1.bf16.xpose.msra.mxu0 0
        %1546 = vmatprep.subr.bf16.mxu0 0
        %1547 = vmatpush1.bf16.xpose.msra.mxu0 0
        %1548 = vmatprep.subr.bf16.mxu0 0
        %1549 = vmatpush1.bf16.xpose.msra.mxu0 0
        %1550 = vmatprep.subr.bf16.mxu0 0
        %1551 = vmatpush1.bf16.xpose.msra.mxu0 0
        %1552 = vmatprep.subr.bf16.mxu0 0
        %1553 = vmatpush1.bf16.xpose.msra.mxu0 0
        %1554 = vmatprep.subr.bf16.mxu0 0
        %1555 = vmatpush1.bf16.xpose.msra.mxu0 0
        %1556 = vmatprep.subr.bf16.mxu0 0
        %1557 = vmatpush1.bf16.xpose.msra.mxu0 0
        %1558 = vmatprep.subr.bf16.mxu0 0
        %1559 = vmatpush1.bf16.xpose.msra.mxu0 0
        %1560 = vmatprep.subr.bf16.mxu0 0
        %1561 = vmatpush1.bf16.xpose.msra.mxu0 0
        %1562 = vmatprep.subr.bf16.mxu0 0
        %1563 = vmatpush1.bf16.xpose.msra.mxu0 0
        %1564 = vmatprep.mubr.bf16.mxu0 0
        %1565 = vmatmul.mubr.bf16.gmra.mrb[0].mxu0 %v1527
        %v1566 = vpop.f32.mrb[0].mxu0
        %v1567 = vadd.f32 0.0, %v1566
        %v1568 = vpop.f32.mrb[0].mxu0
        %v1569 = vpop.f32.mrb[0].mxu0
        %v1570 = vadd.f32 0.0, %v1569
        %v1571 = vpop.f32.mrb[0].mxu0
        %1572 = vdwg.mxu0
        %v1574 = vsel %vm1337, %v1326, 0
        %v1577 = vsel %vm1337, %v1334, 0
        %1579 = vmatprep.subr.bf16.mxu0 0
        %1580 = vmatpush1.bf16.xpose.msra.mxu0 %v1577
        %1581 = vmatprep.subr.bf16.mxu0 0
        %1582 = vmatpush1.bf16.xpose.msra.mxu0 0
        %1583 = vmatprep.subr.bf16.mxu0 0
        %1584 = vmatpush1.bf16.xpose.msra.mxu0 0
        %1585 = vmatprep.subr.bf16.mxu0 0
        %1586 = vmatpush1.bf16.xpose.msra.mxu0 0
        %1587 = vmatprep.subr.bf16.mxu0 0
        %1588 = vmatpush1.bf16.xpose.msra.mxu0 0
        %1589 = vmatprep.subr.bf16.mxu0 0
        %1590 = vmatpush1.bf16.xpose.msra.mxu0 0
        %1591 = vmatprep.subr.bf16.mxu0 0
        %1592 = vmatpush1.bf16.xpose.msra.mxu0 0
        %1593 = vmatprep.subr.bf16.mxu0 0
        %1594 = vmatpush1.bf16.xpose.msra.mxu0 0
        %1595 = vmatprep.subr.bf16.mxu0 0
        %1596 = vmatpush1.bf16.xpose.msra.mxu0 0
        %1597 = vmatprep.subr.bf16.mxu0 0
        %1598 = vmatpush1.bf16.xpose.msra.mxu0 0
        %1599 = vmatprep.subr.bf16.mxu0 0
        %1600 = vmatpush1.bf16.xpose.msra.mxu0 0
        %1601 = vmatprep.subr.bf16.mxu0 0
        %1602 = vmatpush1.bf16.xpose.msra.mxu0 0
        %1603 = vmatprep.subr.bf16.mxu0 0
        %1604 = vmatpush1.bf16.xpose.msra.mxu0 0
        %1605 = vmatprep.subr.bf16.mxu0 0
        %1606 = vmatpush1.bf16.xpose.msra.mxu0 0
        %1607 = vmatprep.subr.bf16.mxu0 0
        %1608 = vmatpush1.bf16.xpose.msra.mxu0 0
        %1609 = vmatprep.subr.bf16.mxu0 0
        %1610 = vmatpush1.bf16.xpose.msra.mxu0 0
        %1611 = vmatprep.mubr.bf16.mxu0 0
        %1612 = vmatmul.mubr.bf16.gmra.mrb[0].mxu0 %v1574
        %v1613 = vpop.f32.mrb[0].mxu0
        %v1614 = vadd.f32 0.0, %v1613
        %v1615 = vpop.f32.mrb[0].mxu0
        %v1616 = vpop.f32.mrb[0].mxu0
        %v1617 = vadd.f32 0.0, %v1616
        %v1618 = vpop.f32.mrb[0].mxu0
        %1619 = vdwg.mxu0
        %v1621 = vsel %vm1337, %v1327, 0
        %v1624 = vsel %vm1337, %v1335, 0
        %1626 = vmatprep.subr.bf16.mxu0 0
        %1627 = vmatpush1.bf16.xpose.msra.mxu0 %v1624
        %1628 = vmatprep.subr.bf16.mxu0 0
        %1629 = vmatpush1.bf16.xpose.msra.mxu0 0
        %1630 = vmatprep.subr.bf16.mxu0 0
        %1631 = vmatpush1.bf16.xpose.msra.mxu0 0
        %1632 = vmatprep.subr.bf16.mxu0 0
        %1633 = vmatpush1.bf16.xpose.msra.mxu0 0
        %1634 = vmatprep.subr.bf16.mxu0 0
        %1635 = vmatpush1.bf16.xpose.msra.mxu0 0
        %1636 = vmatprep.subr.bf16.mxu0 0
        %1637 = vmatpush1.bf16.xpose.msra.mxu0 0
        %1638 = vmatprep.subr.bf16.mxu0 0
        %1639 = vmatpush1.bf16.xpose.msra.mxu0 0
        %1640 = vmatprep.subr.bf16.mxu0 0
        %1641 = vmatpush1.bf16.xpose.msra.mxu0 0
        %1642 = vmatprep.subr.bf16.mxu0 0
        %1643 = vmatpush1.bf16.xpose.msra.mxu0 0
        %1644 = vmatprep.subr.bf16.mxu0 0
        %1645 = vmatpush1.bf16.xpose.msra.mxu0 0
        %1646 = vmatprep.subr.bf16.mxu0 0
        %1647 = vmatpush1.bf16.xpose.msra.mxu0 0
        %1648 = vmatprep.subr.bf16.mxu0 0
        %1649 = vmatpush1.bf16.xpose.msra.mxu0 0
        %1650 = vmatprep.subr.bf16.mxu0 0
        %1651 = vmatpush1.bf16.xpose.msra.mxu0 0
        %1652 = vmatprep.subr.bf16.mxu0 0
        %1653 = vmatpush1.bf16.xpose.msra.mxu0 0
        %1654 = vmatprep.subr.bf16.mxu0 0
        %1655 = vmatpush1.bf16.xpose.msra.mxu0 0
        %1656 = vmatprep.subr.bf16.mxu0 0
        %1657 = vmatpush1.bf16.xpose.msra.mxu0 0
        %1658 = vmatprep.mubr.bf16.mxu0 0
        %1659 = vmatmul.mubr.bf16.gmra.mrb[0].mxu0 %v1621
        %v1660 = vpop.f32.mrb[0].mxu0
        %v1661 = vadd.f32 0.0, %v1660
        %v1662 = vpop.f32.mrb[0].mxu0
        %v1663 = vpop.f32.mrb[0].mxu0
        %v1664 = vadd.f32 0.0, %v1663
        %v1665 = vpop.f32.mrb[0].mxu0
        %1666 = vdwg.mxu0
        %v1668 = vsel %vm1337, %v1328, 0
        %v1671 = vsel %vm1337, %v1336, 0
        %1673 = vmatprep.subr.bf16.mxu0 0
        %1674 = vmatpush1.bf16.xpose.msra.mxu0 %v1671
        %1675 = vmatprep.subr.bf16.mxu0 0
        %1676 = vmatpush1.bf16.xpose.msra.mxu0 0
        %1677 = vmatprep.subr.bf16.mxu0 0
        %1678 = vmatpush1.bf16.xpose.msra.mxu0 0
        %1679 = vmatprep.subr.bf16.mxu0 0
        %1680 = vmatpush1.bf16.xpose.msra.mxu0 0
        %1681 = vmatprep.subr.bf16.mxu0 0
        %1682 = vmatpush1.bf16.xpose.msra.mxu0 0
        %1683 = vmatprep.subr.bf16.mxu0 0
        %1684 = vmatpush1.bf16.xpose.msra.mxu0 0
        %1685 = vmatprep.subr.bf16.mxu0 0
        %1686 = vmatpush1.bf16.xpose.msra.mxu0 0
        %1687 = vmatprep.subr.bf16.mxu0 0
        %1688 = vmatpush1.bf16.xpose.msra.mxu0 0
        %1689 = vmatprep.subr.bf16.mxu0 0
        %1690 = vmatpush1.bf16.xpose.msra.mxu0 0
        %1691 = vmatprep.subr.bf16.mxu0 0
        %1692 = vmatpush1.bf16.xpose.msra.mxu0 0
        %1693 = vmatprep.subr.bf16.mxu0 0
        %1694 = vmatpush1.bf16.xpose.msra.mxu0 0
        %1695 = vmatprep.subr.bf16.mxu0 0
        %1696 = vmatpush1.bf16.xpose.msra.mxu0 0
        %1697 = vmatprep.subr.bf16.mxu0 0
        %1698 = vmatpush1.bf16.xpose.msra.mxu0 0
        %1699 = vmatprep.subr.bf16.mxu0 0
        %1700 = vmatpush1.bf16.xpose.msra.mxu0 0
        %1701 = vmatprep.subr.bf16.mxu0 0
        %1702 = vmatpush1.bf16.xpose.msra.mxu0 0
        %1703 = vmatprep.subr.bf16.mxu0 0
        %1704 = vmatpush1.bf16.xpose.msra.mxu0 0
        %1705 = vmatprep.mubr.bf16.mxu0 0
        %1706 = vmatmul.mubr.bf16.gmra.mrb[0].mxu0 %v1668
        %v1707 = vpop.f32.mrb[0].mxu0
        %v1708 = vadd.f32 0.0, %v1707
        %v1709 = vpop.f32.mrb[0].mxu0
        %v1710 = vpop.f32.mrb[0].mxu0
        %v1711 = vadd.f32 0.0, %v1710
        %v1712 = vpop.f32.mrb[0].mxu0
        %1713 = vdwg.mxu0
        %v1714 = vsel %vm874, 1, 0
        %vm1715 = vcmp.eq.s32.totalorder %v1714, 1
        %v1716 = vsel %vm1715, %v1379, -1e+30
        %v1717 = vsel %vm1715, %v1382, -1e+30
        %v1718 = vsel %vm1715, %v1426, -1e+30
        %v1719 = vsel %vm1715, %v1429, -1e+30
        %v1720 = vsel %vm1715, %v1473, -1e+30
        %v1721 = vsel %vm1715, %v1476, -1e+30
        %v1722 = vsel %vm1715, %v1520, -1e+30
        %v1723 = vsel %vm1715, %v1523, -1e+30
        %v1724 = vsel %vm1715, %v1567, -1e+30
        %v1725 = vsel %vm1715, %v1570, -1e+30
        %v1726 = vsel %vm1715, %v1614, -1e+30
        %v1727 = vsel %vm1715, %v1617, -1e+30
        %v1728 = vsel %vm1715, %v1661, -1e+30
        %v1729 = vsel %vm1715, %v1664, -1e+30
        %v1730 = vsel %vm1715, %v1708, -1e+30
        %v1731 = vsel %vm1715, %v1711, -1e+30
        %v1732 = vsel %vm1337, %v1716, -inf
        %1733 = vmax.xlane.f32.xlu0 %v1732
        %v1734 = vpop.xlane.xlu0 %1733
        %v1735 = vsel %vm1337, %v1717, -inf
        %1736 = vmax.xlane.f32.xlu0 %v1735
        %v1737 = vpop.xlane.xlu0 %1736
        %v1738 = vsel %vm1337, %v1718, -inf
        %1739 = vmax.xlane.f32.xlu0 %v1738
        %v1740 = vpop.xlane.xlu0 %1739
        %v1741 = vsel %vm1337, %v1719, -inf
        %1742 = vmax.xlane.f32.xlu0 %v1741
        %v1743 = vpop.xlane.xlu0 %1742
        %v1744 = vsel %vm1337, %v1720, -inf
        %1745 = vmax.xlane.f32.xlu0 %v1744
        %v1746 = vpop.xlane.xlu0 %1745
        %v1747 = vsel %vm1337, %v1721, -inf
        %1748 = vmax.xlane.f32.xlu0 %v1747
        %v1749 = vpop.xlane.xlu0 %1748
        %v1750 = vsel %vm1337, %v1722, -inf
        %1751 = vmax.xlane.f32.xlu0 %v1750
        %v1752 = vpop.xlane.xlu0 %1751
        %v1753 = vsel %vm1337, %v1723, -inf
        %1754 = vmax.xlane.f32.xlu0 %v1753
        %v1755 = vpop.xlane.xlu0 %1754
        %v1756 = vsel %vm1337, %v1724, -inf
        %1757 = vmax.xlane.f32.xlu0 %v1756
        %v1758 = vpop.xlane.xlu0 %1757
        %v1759 = vsel %vm1337, %v1725, -inf
        %1760 = vmax.xlane.f32.xlu0 %v1759
        %v1761 = vpop.xlane.xlu0 %1760
        %v1762 = vsel %vm1337, %v1726, -inf
        %1763 = vmax.xlane.f32.xlu0 %v1762
        %v1764 = vpop.xlane.xlu0 %1763
        %v1765 = vsel %vm1337, %v1727, -inf
        %1766 = vmax.xlane.f32.xlu0 %v1765
        %v1767 = vpop.xlane.xlu0 %1766
        %v1768 = vsel %vm1337, %v1728, -inf
        %1769 = vmax.xlane.f32.xlu0 %v1768
        %v1770 = vpop.xlane.xlu0 %1769
        %v1771 = vsel %vm1337, %v1729, -inf
        %1772 = vmax.xlane.f32.xlu0 %v1771
        %v1773 = vpop.xlane.xlu0 %1772
        %v1774 = vsel %vm1337, %v1730, -inf
        %1775 = vmax.xlane.f32.xlu0 %v1774
        %v1776 = vpop.xlane.xlu0 %1775
        %v1777 = vsel %vm1337, %v1731, -inf
        %1778 = vmax.xlane.f32.xlu0 %v1777
        %v1779 = vpop.xlane.xlu0 %1778
        %v1780 = vsub.f32 %v1716, %v1734
        %v1781 = vsub.f32 %v1717, %v1737
        %v1782 = vsub.f32 %v1718, %v1740
        %v1783 = vsub.f32 %v1719, %v1743
        %v1784 = vsub.f32 %v1720, %v1746
        %v1785 = vsub.f32 %v1721, %v1749
        %v1786 = vsub.f32 %v1722, %v1752
        %v1787 = vsub.f32 %v1723, %v1755
        %v1788 = vsub.f32 %v1724, %v1758
        %v1789 = vsub.f32 %v1725, %v1761
        %v1790 = vsub.f32 %v1726, %v1764
        %v1791 = vsub.f32 %v1727, %v1767
        %v1792 = vsub.f32 %v1728, %v1770
        %v1793 = vsub.f32 %v1729, %v1773
        %v1794 = vsub.f32 %v1730, %v1776
        %v1795 = vsub.f32 %v1731, %v1779
        %v1796 = vmul.f32 %v1780, 1.442695
        %v1797 = vpow.pop %v1796
        %v1798 = vmul.f32 %v1781, 1.442695
        %v1799 = vpow.pop %v1798
        %v1800 = vmul.f32 %v1782, 1.442695
        %v1801 = vpow.pop %v1800
        %v1802 = vmul.f32 %v1783, 1.442695
        %v1803 = vpow.pop %v1802
        %v1804 = vmul.f32 %v1784, 1.442695
        %v1805 = vpow.pop %v1804
        %v1806 = vmul.f32 %v1785, 1.442695
        %v1807 = vpow.pop %v1806
        %v1808 = vmul.f32 %v1786, 1.442695
        %v1809 = vpow.pop %v1808
        %v1810 = vmul.f32 %v1787, 1.442695
        %v1811 = vpow.pop %v1810
        %v1812 = vmul.f32 %v1788, 1.442695
        %v1813 = vpow.pop %v1812
        %v1814 = vmul.f32 %v1789, 1.442695
        %v1815 = vpow.pop %v1814
        %v1816 = vmul.f32 %v1790, 1.442695
        %v1817 = vpow.pop %v1816
        %v1818 = vmul.f32 %v1791, 1.442695
        %v1819 = vpow.pop %v1818
        %v1820 = vmul.f32 %v1792, 1.442695
        %v1821 = vpow.pop %v1820
        %v1822 = vmul.f32 %v1793, 1.442695
        %v1823 = vpow.pop %v1822
        %v1824 = vmul.f32 %v1794, 1.442695
        %v1825 = vpow.pop %v1824
        %v1826 = vmul.f32 %v1795, 1.442695
        %v1827 = vpow.pop %v1826
        %v1828 = vsel %vm1337, %v1797, 0.0
        %1829 = vadd.xlane.f32.xlu0 %v1828
        %v1830 = vpop.xlane.xlu0 %1829
        %v1831 = vsel %vm1337, %v1799, 0.0
        %1832 = vadd.xlane.f32.xlu0 %v1831
        %v1833 = vpop.xlane.xlu0 %1832
        %v1834 = vsel %vm1337, %v1801, 0.0
        %1835 = vadd.xlane.f32.xlu0 %v1834
        %v1836 = vpop.xlane.xlu0 %1835
        %v1837 = vsel %vm1337, %v1803, 0.0
        %1838 = vadd.xlane.f32.xlu0 %v1837
        %v1839 = vpop.xlane.xlu0 %1838
        %v1840 = vsel %vm1337, %v1805, 0.0
        %1841 = vadd.xlane.f32.xlu0 %v1840
        %v1842 = vpop.xlane.xlu0 %1841
        %v1843 = vsel %vm1337, %v1807, 0.0
        %1844 = vadd.xlane.f32.xlu0 %v1843
        %v1845 = vpop.xlane.xlu0 %1844
        %v1846 = vsel %vm1337, %v1809, 0.0
        %1847 = vadd.xlane.f32.xlu0 %v1846
        %v1848 = vpop.xlane.xlu0 %1847
        %v1849 = vsel %vm1337, %v1811, 0.0
        %1850 = vadd.xlane.f32.xlu0 %v1849
        %v1851 = vpop.xlane.xlu0 %1850
        %v1852 = vsel %vm1337, %v1813, 0.0
        %1853 = vadd.xlane.f32.xlu0 %v1852
        %v1854 = vpop.xlane.xlu0 %1853
        %v1855 = vsel %vm1337, %v1815, 0.0
        %1856 = vadd.xlane.f32.xlu0 %v1855
        %v1857 = vpop.xlane.xlu0 %1856
        %v1858 = vsel %vm1337, %v1817, 0.0
        %1859 = vadd.xlane.f32.xlu0 %v1858
        %v1860 = vpop.xlane.xlu0 %1859
        %v1861 = vsel %vm1337, %v1819, 0.0
        %1862 = vadd.xlane.f32.xlu0 %v1861
        %v1863 = vpop.xlane.xlu0 %1862
        %v1864 = vsel %vm1337, %v1821, 0.0
        %1865 = vadd.xlane.f32.xlu0 %v1864
        %v1866 = vpop.xlane.xlu0 %1865
        %v1867 = vsel %vm1337, %v1823, 0.0
        %1868 = vadd.xlane.f32.xlu0 %v1867
        %v1869 = vpop.xlane.xlu0 %1868
        %v1870 = vsel %vm1337, %v1825, 0.0
        %1871 = vadd.xlane.f32.xlu0 %v1870
        %v1872 = vpop.xlane.xlu0 %1871
        %v1873 = vsel %vm1337, %v1827, 0.0
        %1874 = vadd.xlane.f32.xlu0 %v1873
        %v1875 = vpop.xlane.xlu0 %1874
        %v1876 = vrcp.pop %v1830
        %v1877 = vrcp.pop %v1833
        %v1878 = vrcp.pop %v1836
        %v1879 = vrcp.pop %v1839
        %v1880 = vrcp.pop %v1842
        %v1881 = vrcp.pop %v1845
        %v1882 = vrcp.pop %v1848
        %v1883 = vrcp.pop %v1851
        %v1884 = vrcp.pop %v1854
        %v1885 = vrcp.pop %v1857
        %v1886 = vrcp.pop %v1860
        %v1887 = vrcp.pop %v1863
        %v1888 = vrcp.pop %v1866
        %v1889 = vrcp.pop %v1869
        %v1890 = vrcp.pop %v1872
        %v1891 = vrcp.pop %v1875
        %v1892 = vmul.f32 %v1797, %v1876
        %v1893 = vmul.f32 %v1799, %v1877
        %v1894 = vmul.f32 %v1801, %v1878
        %v1895 = vmul.f32 %v1803, %v1879
        %v1896 = vmul.f32 %v1805, %v1880
        %v1897 = vmul.f32 %v1807, %v1881
        %v1898 = vmul.f32 %v1809, %v1882
        %v1899 = vmul.f32 %v1811, %v1883
        %v1900 = vmul.f32 %v1813, %v1884
        %v1901 = vmul.f32 %v1815, %v1885
        %v1902 = vmul.f32 %v1817, %v1886
        %v1903 = vmul.f32 %v1819, %v1887
        %v1904 = vmul.f32 %v1821, %v1888
        %v1905 = vmul.f32 %v1823, %v1889
        %v1906 = vmul.f32 %v1825, %v1890
        %v1907 = vmul.f32 %v1827, %v1891
        %v1908 = vpack.c.bf16 %v1893, %v1892
        %v1909 = vpack.c.bf16 %v1895, %v1894
        %v1910 = vpack.c.bf16 %v1897, %v1896
        %v1911 = vpack.c.bf16 %v1899, %v1898
        %v1912 = vpack.c.bf16 %v1901, %v1900
        %v1913 = vpack.c.bf16 %v1903, %v1902
        %v1914 = vpack.c.bf16 %v1905, %v1904
        %v1915 = vpack.c.bf16 %v1907, %v1906
        %v1916 = vpack.c.bf16 %v1170, %v1167
        %v1917 = vpack.c.bf16 %v1282, %v1280
        %v1918 = vpack.c.bf16 %v1288, %v1286
        %v1919 = vpack.c.bf16 %v1294, %v1292
        %v1920 = vpack.c.bf16 %v1300, %v1298
        %v1921 = vpack.c.bf16 %v1306, %v1304
        %v1922 = vpack.c.bf16 %v1312, %v1310
        %v1923 = vpack.c.bf16 %v1318, %v1316
        %v1925 = vsel %vm1337, %v1908, 0
        %1927 = vmatprep.subr.bf16.mxu0 0
        %1928 = vmatpush1.bf16.msra.mxu0 %v1916
        %1929 = vmatprep.subr.bf16.mxu0 0
        %1930 = vmatpush1.bf16.msra.mxu0 0
        %1931 = vmatprep.subr.bf16.mxu0 0
        %1932 = vmatpush1.bf16.msra.mxu0 0
        %1933 = vmatprep.subr.bf16.mxu0 0
        %1934 = vmatpush1.bf16.msra.mxu0 0
        %1935 = vmatprep.subr.bf16.mxu0 0
        %1936 = vmatpush1.bf16.msra.mxu0 0
        %1937 = vmatprep.subr.bf16.mxu0 0
        %1938 = vmatpush1.bf16.msra.mxu0 0
        %1939 = vmatprep.subr.bf16.mxu0 0
        %1940 = vmatpush1.bf16.msra.mxu0 0
        %1941 = vmatprep.subr.bf16.mxu0 0
        %1942 = vmatpush1.bf16.msra.mxu0 0
        %1943 = vmatprep.subr.bf16.mxu0 0
        %1944 = vmatpush1.bf16.msra.mxu0 0
        %1945 = vmatprep.subr.bf16.mxu0 0
        %1946 = vmatpush1.bf16.msra.mxu0 0
        %1947 = vmatprep.subr.bf16.mxu0 0
        %1948 = vmatpush1.bf16.msra.mxu0 0
        %1949 = vmatprep.subr.bf16.mxu0 0
        %1950 = vmatpush1.bf16.msra.mxu0 0
        %1951 = vmatprep.subr.bf16.mxu0 0
        %1952 = vmatpush1.bf16.msra.mxu0 0
        %1953 = vmatprep.subr.bf16.mxu0 0
        %1954 = vmatpush1.bf16.msra.mxu0 0
        %1955 = vmatprep.subr.bf16.mxu0 0
        %1956 = vmatpush1.bf16.msra.mxu0 0
        %1957 = vmatprep.subr.bf16.mxu0 0
        %1958 = vmatpush1.bf16.msra.mxu0 0
        %1959 = vmatprep.mubr.bf16.mxu0 0
        %1960 = vmatmul.mubr.bf16.gmra.mrb[0].mxu0 %v1925
        %v1961 = vpop.f32.mrb[0].mxu0
        %v1962 = vadd.f32 0.0, %v1961
        %v1963 = vpop.f32.mrb[0].mxu0
        %v1964 = vpop.f32.mrb[0].mxu0
        %v1965 = vadd.f32 0.0, %v1964
        %v1966 = vpop.f32.mrb[0].mxu0
        %1967 = vdwg.mxu0
        %v1969 = vsel %vm1337, %v1909, 0
        %1971 = vmatprep.subr.bf16.mxu0 0
        %1972 = vmatpush1.bf16.msra.mxu0 %v1917
        %1973 = vmatprep.subr.bf16.mxu0 0
        %1974 = vmatpush1.bf16.msra.mxu0 0
        %1975 = vmatprep.subr.bf16.mxu0 0
        %1976 = vmatpush1.bf16.msra.mxu0 0
        %1977 = vmatprep.subr.bf16.mxu0 0
        %1978 = vmatpush1.bf16.msra.mxu0 0
        %1979 = vmatprep.subr.bf16.mxu0 0
        %1980 = vmatpush1.bf16.msra.mxu0 0
        %1981 = vmatprep.subr.bf16.mxu0 0
        %1982 = vmatpush1.bf16.msra.mxu0 0
        %1983 = vmatprep.subr.bf16.mxu0 0
        %1984 = vmatpush1.bf16.msra.mxu0 0
        %1985 = vmatprep.subr.bf16.mxu0 0
        %1986 = vmatpush1.bf16.msra.mxu0 0
        %1987 = vmatprep.subr.bf16.mxu0 0
        %1988 = vmatpush1.bf16.msra.mxu0 0
        %1989 = vmatprep.subr.bf16.mxu0 0
        %1990 = vmatpush1.bf16.msra.mxu0 0
        %1991 = vmatprep.subr.bf16.mxu0 0
        %1992 = vmatpush1.bf16.msra.mxu0 0
        %1993 = vmatprep.subr.bf16.mxu0 0
        %1994 = vmatpush1.bf16.msra.mxu0 0
        %1995 = vmatprep.subr.bf16.mxu0 0
        %1996 = vmatpush1.bf16.msra.mxu0 0
        %1997 = vmatprep.subr.bf16.mxu0 0
        %1998 = vmatpush1.bf16.msra.mxu0 0
        %1999 = vmatprep.subr.bf16.mxu0 0
        %2000 = vmatpush1.bf16.msra.mxu0 0
        %2001 = vmatprep.subr.bf16.mxu0 0
        %2002 = vmatpush1.bf16.msra.mxu0 0
        %2003 = vmatprep.mubr.bf16.mxu0 0
        %2004 = vmatmul.mubr.bf16.gmra.mrb[0].mxu0 %v1969
        %v2005 = vpop.f32.mrb[0].mxu0
        %v2006 = vadd.f32 0.0, %v2005
        %v2007 = vpop.f32.mrb[0].mxu0
        %v2008 = vpop.f32.mrb[0].mxu0
        %v2009 = vadd.f32 0.0, %v2008
        %v2010 = vpop.f32.mrb[0].mxu0
        %2011 = vdwg.mxu0
        %v2013 = vsel %vm1337, %v1910, 0
        %2015 = vmatprep.subr.bf16.mxu0 0
        %2016 = vmatpush1.bf16.msra.mxu0 %v1918
        %2017 = vmatprep.subr.bf16.mxu0 0
        %2018 = vmatpush1.bf16.msra.mxu0 0
        %2019 = vmatprep.subr.bf16.mxu0 0
        %2020 = vmatpush1.bf16.msra.mxu0 0
        %2021 = vmatprep.subr.bf16.mxu0 0
        %2022 = vmatpush1.bf16.msra.mxu0 0
        %2023 = vmatprep.subr.bf16.mxu0 0
        %2024 = vmatpush1.bf16.msra.mxu0 0
        %2025 = vmatprep.subr.bf16.mxu0 0
        %2026 = vmatpush1.bf16.msra.mxu0 0
        %2027 = vmatprep.subr.bf16.mxu0 0
        %2028 = vmatpush1.bf16.msra.mxu0 0
        %2029 = vmatprep.subr.bf16.mxu0 0
        %2030 = vmatpush1.bf16.msra.mxu0 0
        %2031 = vmatprep.subr.bf16.mxu0 0
        %2032 = vmatpush1.bf16.msra.mxu0 0
        %2033 = vmatprep.subr.bf16.mxu0 0
        %2034 = vmatpush1.bf16.msra.mxu0 0
        %2035 = vmatprep.subr.bf16.mxu0 0
        %2036 = vmatpush1.bf16.msra.mxu0 0
        %2037 = vmatprep.subr.bf16.mxu0 0
        %2038 = vmatpush1.bf16.msra.mxu0 0
        %2039 = vmatprep.subr.bf16.mxu0 0
        %2040 = vmatpush1.bf16.msra.mxu0 0
        %2041 = vmatprep.subr.bf16.mxu0 0
        %2042 = vmatpush1.bf16.msra.mxu0 0
        %2043 = vmatprep.subr.bf16.mxu0 0
        %2044 = vmatpush1.bf16.msra.mxu0 0
        %2045 = vmatprep.subr.bf16.mxu0 0
        %2046 = vmatpush1.bf16.msra.mxu0 0
        %2047 = vmatprep.mubr.bf16.mxu0 0
        %2048 = vmatmul.mubr.bf16.gmra.mrb[0].mxu0 %v2013
        %v2049 = vpop.f32.mrb[0].mxu0
        %v2050 = vadd.f32 0.0, %v2049
        %v2051 = vpop.f32.mrb[0].mxu0
        %v2052 = vpop.f32.mrb[0].mxu0
        %v2053 = vadd.f32 0.0, %v2052
        %v2054 = vpop.f32.mrb[0].mxu0
        %2055 = vdwg.mxu0
        %v2057 = vsel %vm1337, %v1911, 0
        %2059 = vmatprep.subr.bf16.mxu0 0
        %2060 = vmatpush1.bf16.msra.mxu0 %v1919
        %2061 = vmatprep.subr.bf16.mxu0 0
        %2062 = vmatpush1.bf16.msra.mxu0 0
        %2063 = vmatprep.subr.bf16.mxu0 0
        %2064 = vmatpush1.bf16.msra.mxu0 0
        %2065 = vmatprep.subr.bf16.mxu0 0
        %2066 = vmatpush1.bf16.msra.mxu0 0
        %2067 = vmatprep.subr.bf16.mxu0 0
        %2068 = vmatpush1.bf16.msra.mxu0 0
        %2069 = vmatprep.subr.bf16.mxu0 0
        %2070 = vmatpush1.bf16.msra.mxu0 0
        %2071 = vmatprep.subr.bf16.mxu0 0
        %2072 = vmatpush1.bf16.msra.mxu0 0
        %2073 = vmatprep.subr.bf16.mxu0 0
        %2074 = vmatpush1.bf16.msra.mxu0 0
        %2075 = vmatprep.subr.bf16.mxu0 0
        %2076 = vmatpush1.bf16.msra.mxu0 0
        %2077 = vmatprep.subr.bf16.mxu0 0
        %2078 = vmatpush1.bf16.msra.mxu0 0
        %2079 = vmatprep.subr.bf16.mxu0 0
        %2080 = vmatpush1.bf16.msra.mxu0 0
        %2081 = vmatprep.subr.bf16.mxu0 0
        %2082 = vmatpush1.bf16.msra.mxu0 0
        %2083 = vmatprep.subr.bf16.mxu0 0
        %2084 = vmatpush1.bf16.msra.mxu0 0
        %2085 = vmatprep.subr.bf16.mxu0 0
        %2086 = vmatpush1.bf16.msra.mxu0 0
        %2087 = vmatprep.subr.bf16.mxu0 0
        %2088 = vmatpush1.bf16.msra.mxu0 0
        %2089 = vmatprep.subr.bf16.mxu0 0
        %2090 = vmatpush1.bf16.msra.mxu0 0
        %2091 = vmatprep.mubr.bf16.mxu0 0
        %2092 = vmatmul.mubr.bf16.gmra.mrb[0].mxu0 %v2057
        %v2093 = vpop.f32.mrb[0].mxu0
        %v2094 = vadd.f32 0.0, %v2093
        %v2095 = vpop.f32.mrb[0].mxu0
        %v2096 = vpop.f32.mrb[0].mxu0
        %v2097 = vadd.f32 0.0, %v2096
        %v2098 = vpop.f32.mrb[0].mxu0
        %2099 = vdwg.mxu0
        %v2101 = vsel %vm1337, %v1912, 0
        %2103 = vmatprep.subr.bf16.mxu0 0
        %2104 = vmatpush1.bf16.msra.mxu0 %v1920
        %2105 = vmatprep.subr.bf16.mxu0 0
        %2106 = vmatpush1.bf16.msra.mxu0 0
        %2107 = vmatprep.subr.bf16.mxu0 0
        %2108 = vmatpush1.bf16.msra.mxu0 0
        %2109 = vmatprep.subr.bf16.mxu0 0
        %2110 = vmatpush1.bf16.msra.mxu0 0
        %2111 = vmatprep.subr.bf16.mxu0 0
        %2112 = vmatpush1.bf16.msra.mxu0 0
        %2113 = vmatprep.subr.bf16.mxu0 0
        %2114 = vmatpush1.bf16.msra.mxu0 0
        %2115 = vmatprep.subr.bf16.mxu0 0
        %2116 = vmatpush1.bf16.msra.mxu0 0
        %2117 = vmatprep.subr.bf16.mxu0 0
        %2118 = vmatpush1.bf16.msra.mxu0 0
        %2119 = vmatprep.subr.bf16.mxu0 0
        %2120 = vmatpush1.bf16.msra.mxu0 0
        %2121 = vmatprep.subr.bf16.mxu0 0
        %2122 = vmatpush1.bf16.msra.mxu0 0
        %2123 = vmatprep.subr.bf16.mxu0 0
        %2124 = vmatpush1.bf16.msra.mxu0 0
        %2125 = vmatprep.subr.bf16.mxu0 0
        %2126 = vmatpush1.bf16.msra.mxu0 0
        %2127 = vmatprep.subr.bf16.mxu0 0
        %2128 = vmatpush1.bf16.msra.mxu0 0
        %2129 = vmatprep.subr.bf16.mxu0 0
        %2130 = vmatpush1.bf16.msra.mxu0 0
        %2131 = vmatprep.subr.bf16.mxu0 0
        %2132 = vmatpush1.bf16.msra.mxu0 0
        %2133 = vmatprep.subr.bf16.mxu0 0
        %2134 = vmatpush1.bf16.msra.mxu0 0
        %2135 = vmatprep.mubr.bf16.mxu0 0
        %2136 = vmatmul.mubr.bf16.gmra.mrb[0].mxu0 %v2101
        %v2137 = vpop.f32.mrb[0].mxu0
        %v2138 = vadd.f32 0.0, %v2137
        %v2139 = vpop.f32.mrb[0].mxu0
        %v2140 = vpop.f32.mrb[0].mxu0
        %v2141 = vadd.f32 0.0, %v2140
        %v2142 = vpop.f32.mrb[0].mxu0
        %2143 = vdwg.mxu0
        %v2145 = vsel %vm1337, %v1913, 0
        %2147 = vmatprep.subr.bf16.mxu0 0
        %2148 = vmatpush1.bf16.msra.mxu0 %v1921
        %2149 = vmatprep.subr.bf16.mxu0 0
        %2150 = vmatpush1.bf16.msra.mxu0 0
        %2151 = vmatprep.subr.bf16.mxu0 0
        %2152 = vmatpush1.bf16.msra.mxu0 0
        %2153 = vmatprep.subr.bf16.mxu0 0
        %2154 = vmatpush1.bf16.msra.mxu0 0
        %2155 = vmatprep.subr.bf16.mxu0 0
        %2156 = vmatpush1.bf16.msra.mxu0 0
        %2157 = vmatprep.subr.bf16.mxu0 0
        %2158 = vmatpush1.bf16.msra.mxu0 0
        %2159 = vmatprep.subr.bf16.mxu0 0
        %2160 = vmatpush1.bf16.msra.mxu0 0
        %2161 = vmatprep.subr.bf16.mxu0 0
        %2162 = vmatpush1.bf16.msra.mxu0 0
        %2163 = vmatprep.subr.bf16.mxu0 0
        %2164 = vmatpush1.bf16.msra.mxu0 0
        %2165 = vmatprep.subr.bf16.mxu0 0
        %2166 = vmatpush1.bf16.msra.mxu0 0
        %2167 = vmatprep.subr.bf16.mxu0 0
        %2168 = vmatpush1.bf16.msra.mxu0 0
        %2169 = vmatprep.subr.bf16.mxu0 0
        %2170 = vmatpush1.bf16.msra.mxu0 0
        %2171 = vmatprep.subr.bf16.mxu0 0
        %2172 = vmatpush1.bf16.msra.mxu0 0
        %2173 = vmatprep.subr.bf16.mxu0 0
        %2174 = vmatpush1.bf16.msra.mxu0 0
        %2175 = vmatprep.subr.bf16.mxu0 0
        %2176 = vmatpush1.bf16.msra.mxu0 0
        %2177 = vmatprep.subr.bf16.mxu0 0
        %2178 = vmatpush1.bf16.msra.mxu0 0
        %2179 = vmatprep.mubr.bf16.mxu0 0
        %2180 = vmatmul.mubr.bf16.gmra.mrb[0].mxu0 %v2145
        %v2181 = vpop.f32.mrb[0].mxu0
        %v2182 = vadd.f32 0.0, %v2181
        %v2183 = vpop.f32.mrb[0].mxu0
        %v2184 = vpop.f32.mrb[0].mxu0
        %v2185 = vadd.f32 0.0, %v2184
        %v2186 = vpop.f32.mrb[0].mxu0
        %2187 = vdwg.mxu0
        %v2189 = vsel %vm1337, %v1914, 0
        %2191 = vmatprep.subr.bf16.mxu0 0
        %2192 = vmatpush1.bf16.msra.mxu0 %v1922
        %2193 = vmatprep.subr.bf16.mxu0 0
        %2194 = vmatpush1.bf16.msra.mxu0 0
        %2195 = vmatprep.subr.bf16.mxu0 0
        %2196 = vmatpush1.bf16.msra.mxu0 0
        %2197 = vmatprep.subr.bf16.mxu0 0
        %2198 = vmatpush1.bf16.msra.mxu0 0
        %2199 = vmatprep.subr.bf16.mxu0 0
        %2200 = vmatpush1.bf16.msra.mxu0 0
        %2201 = vmatprep.subr.bf16.mxu0 0
        %2202 = vmatpush1.bf16.msra.mxu0 0
        %2203 = vmatprep.subr.bf16.mxu0 0
        %2204 = vmatpush1.bf16.msra.mxu0 0
        %2205 = vmatprep.subr.bf16.mxu0 0
        %2206 = vmatpush1.bf16.msra.mxu0 0
        %2207 = vmatprep.subr.bf16.mxu0 0
        %2208 = vmatpush1.bf16.msra.mxu0 0
        %2209 = vmatprep.subr.bf16.mxu0 0
        %2210 = vmatpush1.bf16.msra.mxu0 0
        %2211 = vmatprep.subr.bf16.mxu0 0
        %2212 = vmatpush1.bf16.msra.mxu0 0
        %2213 = vmatprep.subr.bf16.mxu0 0
        %2214 = vmatpush1.bf16.msra.mxu0 0
        %2215 = vmatprep.subr.bf16.mxu0 0
        %2216 = vmatpush1.bf16.msra.mxu0 0
        %2217 = vmatprep.subr.bf16.mxu0 0
        %2218 = vmatpush1.bf16.msra.mxu0 0
        %2219 = vmatprep.subr.bf16.mxu0 0
        %2220 = vmatpush1.bf16.msra.mxu0 0
        %2221 = vmatprep.subr.bf16.mxu0 0
        %2222 = vmatpush1.bf16.msra.mxu0 0
        %2223 = vmatprep.mubr.bf16.mxu0 0
        %2224 = vmatmul.mubr.bf16.gmra.mrb[0].mxu0 %v2189
        %v2225 = vpop.f32.mrb[0].mxu0
        %v2226 = vadd.f32 0.0, %v2225
        %v2227 = vpop.f32.mrb[0].mxu0
        %v2228 = vpop.f32.mrb[0].mxu0
        %v2229 = vadd.f32 0.0, %v2228
        %v2230 = vpop.f32.mrb[0].mxu0
        %2231 = vdwg.mxu0
        %v2233 = vsel %vm1337, %v1915, 0
        %2235 = vmatprep.subr.bf16.mxu0 0
        %2236 = vmatpush1.bf16.msra.mxu0 %v1923
        %2237 = vmatprep.subr.bf16.mxu0 0
        %2238 = vmatpush1.bf16.msra.mxu0 0
        %2239 = vmatprep.subr.bf16.mxu0 0
        %2240 = vmatpush1.bf16.msra.mxu0 0
        %2241 = vmatprep.subr.bf16.mxu0 0
        %2242 = vmatpush1.bf16.msra.mxu0 0
        %2243 = vmatprep.subr.bf16.mxu0 0
        %2244 = vmatpush1.bf16.msra.mxu0 0
        %2245 = vmatprep.subr.bf16.mxu0 0
        %2246 = vmatpush1.bf16.msra.mxu0 0
        %2247 = vmatprep.subr.bf16.mxu0 0
        %2248 = vmatpush1.bf16.msra.mxu0 0
        %2249 = vmatprep.subr.bf16.mxu0 0
        %2250 = vmatpush1.bf16.msra.mxu0 0
        %2251 = vmatprep.subr.bf16.mxu0 0
        %2252 = vmatpush1.bf16.msra.mxu0 0
        %2253 = vmatprep.subr.bf16.mxu0 0
        %2254 = vmatpush1.bf16.msra.mxu0 0
        %2255 = vmatprep.subr.bf16.mxu0 0
        %2256 = vmatpush1.bf16.msra.mxu0 0
        %2257 = vmatprep.subr.bf16.mxu0 0
        %2258 = vmatpush1.bf16.msra.mxu0 0
        %2259 = vmatprep.subr.bf16.mxu0 0
        %2260 = vmatpush1.bf16.msra.mxu0 0
        %2261 = vmatprep.subr.bf16.mxu0 0
        %2262 = vmatpush1.bf16.msra.mxu0 0
        %2263 = vmatprep.subr.bf16.mxu0 0
        %2264 = vmatpush1.bf16.msra.mxu0 0
        %2265 = vmatprep.subr.bf16.mxu0 0
        %2266 = vmatpush1.bf16.msra.mxu0 0
        %2267 = vmatprep.mubr.bf16.mxu0 0
        %2268 = vmatmul.mubr.bf16.gmra.mrb[0].mxu0 %v2233
        %v2269 = vpop.f32.mrb[0].mxu0
        %v2270 = vadd.f32 0.0, %v2269
        %v2271 = vpop.f32.mrb[0].mxu0
        %v2272 = vpop.f32.mrb[0].mxu0
        %v2273 = vadd.f32 0.0, %v2272
        %v2274 = vpop.f32.mrb[0].mxu0
        %2275 = vdwg.mxu0
        %v2276 = vpack.c.bf16 %v1965, %v1962
        %v2277 = vpack.c.bf16 %v2009, %v2006
        %v2278 = vpack.c.bf16 %v2053, %v2050
        %v2279 = vpack.c.bf16 %v2097, %v2094
        %v2280 = vpack.c.bf16 %v2141, %v2138
        %v2281 = vpack.c.bf16 %v2185, %v2182
        %v2282 = vpack.c.bf16 %v2229, %v2226
        %v2283 = vpack.c.bf16 %v2273, %v2270
        %v2284 = vld [vmem:[#allocation14] sm:$0xf]
        %v2285 = vld [vmem:[#allocation14 + $0x4] sm:$0xf]
        %v2286 = vld [vmem:[#allocation14 + $0x8] sm:$0xf]
        %v2287 = vld [vmem:[#allocation14 + $0xc] sm:$0xf]
        %v2288 = vld [vmem:[#allocation14 + $0x10] sm:$0xf]
        %v2289 = vld [vmem:[#allocation14 + $0x14] sm:$0xf]
        %v2290 = vld [vmem:[#allocation14 + $0x18] sm:$0xf]
        %v2291 = vld [vmem:[#allocation14 + $0x1c] sm:$0xf]
        %v2292 = vld [vmem:[#allocation14 + $0x20] sm:$0xf]
        %v2293 = vld [vmem:[#allocation14 + $0x24] sm:$0xf]
        %v2294 = vld [vmem:[#allocation14 + $0x28] sm:$0xf]
        %v2295 = vld [vmem:[#allocation14 + $0x2c] sm:$0xf]
        %v2296 = vld [vmem:[#allocation14 + $0x30] sm:$0xf]
        %v2297 = vld [vmem:[#allocation14 + $0x34] sm:$0xf]
        %v2298 = vld [vmem:[#allocation14 + $0x38] sm:$0xf]
        %v2299 = vld [vmem:[#allocation14 + $0x3c] sm:$0xf]
        %v2302 = vunpack.c.l.b16 %v2284
        %v2303 = vunpack.c.l.b16 %v2285
        %v2304 = vpack.c.b16 %v2303, %v2302
        %v2307 = vsel %vm1337, %v2276, 0
        %2309 = vmatprep.subr.bf16.mxu0 0
        %2310 = vmatpush1.bf16.msra.mxu0 %v2304
        %2311 = vmatprep.subr.bf16.mxu0 0
        %2312 = vmatpush1.bf16.msra.mxu0 0
        %2313 = vmatprep.subr.bf16.mxu0 0
        %2314 = vmatpush1.bf16.msra.mxu0 0
        %2315 = vmatprep.subr.bf16.mxu0 0
        %2316 = vmatpush1.bf16.msra.mxu0 0
        %2317 = vmatprep.subr.bf16.mxu0 0
        %2318 = vmatpush1.bf16.msra.mxu0 0
        %2319 = vmatprep.subr.bf16.mxu0 0
        %2320 = vmatpush1.bf16.msra.mxu0 0
        %2321 = vmatprep.subr.bf16.mxu0 0
        %2322 = vmatpush1.bf16.msra.mxu0 0
        %2323 = vmatprep.subr.bf16.mxu0 0
        %2324 = vmatpush1.bf16.msra.mxu0 0
        %2325 = vmatprep.subr.bf16.mxu0 0
        %2326 = vmatpush1.bf16.msra.mxu0 0
        %2327 = vmatprep.subr.bf16.mxu0 0
        %2328 = vmatpush1.bf16.msra.mxu0 0
        %2329 = vmatprep.subr.bf16.mxu0 0
        %2330 = vmatpush1.bf16.msra.mxu0 0
        %2331 = vmatprep.subr.bf16.mxu0 0
        %2332 = vmatpush1.bf16.msra.mxu0 0
        %2333 = vmatprep.subr.bf16.mxu0 0
        %2334 = vmatpush1.bf16.msra.mxu0 0
        %2335 = vmatprep.subr.bf16.mxu0 0
        %2336 = vmatpush1.bf16.msra.mxu0 0
        %2337 = vmatprep.subr.bf16.mxu0 0
        %2338 = vmatpush1.bf16.msra.mxu0 0
        %2339 = vmatprep.subr.bf16.mxu0 0
        %2340 = vmatpush1.bf16.msra.mxu0 0
        %2341 = vmatprep.mubr.bf16.mxu0 0
        %2342 = vmatmul.mubr.bf16.gmra.mrb[0].mxu0 %v2307
        %v2343 = vpop.f32.mrb[0].mxu0
        %v2344 = vadd.f32 0.0, %v2343
        %v2345 = vpop.f32.mrb[0].mxu0
        %v2346 = vpop.f32.mrb[0].mxu0
        %v2347 = vadd.f32 0.0, %v2346
        %v2348 = vpop.f32.mrb[0].mxu0
        %2349 = vdwg.mxu0
        %v2352 = vunpack.c.l.b16 %v2286
        %v2353 = vunpack.c.l.b16 %v2287
        %v2354 = vpack.c.b16 %v2353, %v2352
        %v2357 = vsel %vm1337, %v2277, 0
        %2359 = vmatprep.subr.bf16.mxu0 0
        %2360 = vmatpush1.bf16.msra.mxu0 %v2354
        %2361 = vmatprep.subr.bf16.mxu0 0
        %2362 = vmatpush1.bf16.msra.mxu0 0
        %2363 = vmatprep.subr.bf16.mxu0 0
        %2364 = vmatpush1.bf16.msra.mxu0 0
        %2365 = vmatprep.subr.bf16.mxu0 0
        %2366 = vmatpush1.bf16.msra.mxu0 0
        %2367 = vmatprep.subr.bf16.mxu0 0
        %2368 = vmatpush1.bf16.msra.mxu0 0
        %2369 = vmatprep.subr.bf16.mxu0 0
        %2370 = vmatpush1.bf16.msra.mxu0 0
        %2371 = vmatprep.subr.bf16.mxu0 0
        %2372 = vmatpush1.bf16.msra.mxu0 0
        %2373 = vmatprep.subr.bf16.mxu0 0
        %2374 = vmatpush1.bf16.msra.mxu0 0
        %2375 = vmatprep.subr.bf16.mxu0 0
        %2376 = vmatpush1.bf16.msra.mxu0 0
        %2377 = vmatprep.subr.bf16.mxu0 0
        %2378 = vmatpush1.bf16.msra.mxu0 0
        %2379 = vmatprep.subr.bf16.mxu0 0
        %2380 = vmatpush1.bf16.msra.mxu0 0
        %2381 = vmatprep.subr.bf16.mxu0 0
        %2382 = vmatpush1.bf16.msra.mxu0 0
        %2383 = vmatprep.subr.bf16.mxu0 0
        %2384 = vmatpush1.bf16.msra.mxu0 0
        %2385 = vmatprep.subr.bf16.mxu0 0
        %2386 = vmatpush1.bf16.msra.mxu0 0
        %2387 = vmatprep.subr.bf16.mxu0 0
        %2388 = vmatpush1.bf16.msra.mxu0 0
        %2389 = vmatprep.subr.bf16.mxu0 0
        %2390 = vmatpush1.bf16.msra.mxu0 0
        %2391 = vmatprep.mubr.bf16.mxu0 0
        %2392 = vmatmul.mubr.bf16.gmra.mrb[0].mxu0 %v2357
        %v2393 = vpop.f32.mrb[0].mxu0
        %v2394 = vadd.f32 0.0, %v2393
        %v2395 = vpop.f32.mrb[0].mxu0
        %v2396 = vpop.f32.mrb[0].mxu0
        %v2397 = vadd.f32 0.0, %v2396
        %v2398 = vpop.f32.mrb[0].mxu0
        %2399 = vdwg.mxu0
        %v2402 = vunpack.c.l.b16 %v2288
        %v2403 = vunpack.c.l.b16 %v2289
        %v2404 = vpack.c.b16 %v2403, %v2402
        %v2407 = vsel %vm1337, %v2278, 0
        %2409 = vmatprep.subr.bf16.mxu0 0
        %2410 = vmatpush1.bf16.msra.mxu0 %v2404
        %2411 = vmatprep.subr.bf16.mxu0 0
        %2412 = vmatpush1.bf16.msra.mxu0 0
        %2413 = vmatprep.subr.bf16.mxu0 0
        %2414 = vmatpush1.bf16.msra.mxu0 0
        %2415 = vmatprep.subr.bf16.mxu0 0
        %2416 = vmatpush1.bf16.msra.mxu0 0
        %2417 = vmatprep.subr.bf16.mxu0 0
        %2418 = vmatpush1.bf16.msra.mxu0 0
        %2419 = vmatprep.subr.bf16.mxu0 0
        %2420 = vmatpush1.bf16.msra.mxu0 0
        %2421 = vmatprep.subr.bf16.mxu0 0
        %2422 = vmatpush1.bf16.msra.mxu0 0
        %2423 = vmatprep.subr.bf16.mxu0 0
        %2424 = vmatpush1.bf16.msra.mxu0 0
        %2425 = vmatprep.subr.bf16.mxu0 0
        %2426 = vmatpush1.bf16.msra.mxu0 0
        %2427 = vmatprep.subr.bf16.mxu0 0
        %2428 = vmatpush1.bf16.msra.mxu0 0
        %2429 = vmatprep.subr.bf16.mxu0 0
        %2430 = vmatpush1.bf16.msra.mxu0 0
        %2431 = vmatprep.subr.bf16.mxu0 0
        %2432 = vmatpush1.bf16.msra.mxu0 0
        %2433 = vmatprep.subr.bf16.mxu0 0
        %2434 = vmatpush1.bf16.msra.mxu0 0
        %2435 = vmatprep.subr.bf16.mxu0 0
        %2436 = vmatpush1.bf16.msra.mxu0 0
        %2437 = vmatprep.subr.bf16.mxu0 0
        %2438 = vmatpush1.bf16.msra.mxu0 0
        %2439 = vmatprep.subr.bf16.mxu0 0
        %2440 = vmatpush1.bf16.msra.mxu0 0
        %2441 = vmatprep.mubr.bf16.mxu0 0
        %2442 = vmatmul.mubr.bf16.gmra.mrb[0].mxu0 %v2407
        %v2443 = vpop.f32.mrb[0].mxu0
        %v2444 = vadd.f32 0.0, %v2443
        %v2445 = vpop.f32.mrb[0].mxu0
        %v2446 = vpop.f32.mrb[0].mxu0
        %v2447 = vadd.f32 0.0, %v2446
        %v2448 = vpop.f32.mrb[0].mxu0
        %2449 = vdwg.mxu0
        %v2452 = vunpack.c.l.b16 %v2290
        %v2453 = vunpack.c.l.b16 %v2291
        %v2454 = vpack.c.b16 %v2453, %v2452
        %v2457 = vsel %vm1337, %v2279, 0
        %2459 = vmatprep.subr.bf16.mxu0 0
        %2460 = vmatpush1.bf16.msra.mxu0 %v2454
        %2461 = vmatprep.subr.bf16.mxu0 0
        %2462 = vmatpush1.bf16.msra.mxu0 0
        %2463 = vmatprep.subr.bf16.mxu0 0
        %2464 = vmatpush1.bf16.msra.mxu0 0
        %2465 = vmatprep.subr.bf16.mxu0 0
        %2466 = vmatpush1.bf16.msra.mxu0 0
        %2467 = vmatprep.subr.bf16.mxu0 0
        %2468 = vmatpush1.bf16.msra.mxu0 0
        %2469 = vmatprep.subr.bf16.mxu0 0
        %2470 = vmatpush1.bf16.msra.mxu0 0
        %2471 = vmatprep.subr.bf16.mxu0 0
        %2472 = vmatpush1.bf16.msra.mxu0 0
        %2473 = vmatprep.subr.bf16.mxu0 0
        %2474 = vmatpush1.bf16.msra.mxu0 0
        %2475 = vmatprep.subr.bf16.mxu0 0
        %2476 = vmatpush1.bf16.msra.mxu0 0
        %2477 = vmatprep.subr.bf16.mxu0 0
        %2478 = vmatpush1.bf16.msra.mxu0 0
        %2479 = vmatprep.subr.bf16.mxu0 0
        %2480 = vmatpush1.bf16.msra.mxu0 0
        %2481 = vmatprep.subr.bf16.mxu0 0
        %2482 = vmatpush1.bf16.msra.mxu0 0
        %2483 = vmatprep.subr.bf16.mxu0 0
        %2484 = vmatpush1.bf16.msra.mxu0 0
        %2485 = vmatprep.subr.bf16.mxu0 0
        %2486 = vmatpush1.bf16.msra.mxu0 0
        %2487 = vmatprep.subr.bf16.mxu0 0
        %2488 = vmatpush1.bf16.msra.mxu0 0
        %2489 = vmatprep.subr.bf16.mxu0 0
        %2490 = vmatpush1.bf16.msra.mxu0 0
        %2491 = vmatprep.mubr.bf16.mxu0 0
        %2492 = vmatmul.mubr.bf16.gmra.mrb[0].mxu0 %v2457
        %v2493 = vpop.f32.mrb[0].mxu0
        %v2494 = vadd.f32 0.0, %v2493
        %v2495 = vpop.f32.mrb[0].mxu0
        %v2496 = vpop.f32.mrb[0].mxu0
        %v2497 = vadd.f32 0.0, %v2496
        %v2498 = vpop.f32.mrb[0].mxu0
        %2499 = vdwg.mxu0
        %v2502 = vunpack.c.l.b16 %v2292
        %v2503 = vunpack.c.l.b16 %v2293
        %v2504 = vpack.c.b16 %v2503, %v2502
        %v2507 = vsel %vm1337, %v2280, 0
        %2509 = vmatprep.subr.bf16.mxu0 0
        %2510 = vmatpush1.bf16.msra.mxu0 %v2504
        %2511 = vmatprep.subr.bf16.mxu0 0
        %2512 = vmatpush1.bf16.msra.mxu0 0
        %2513 = vmatprep.subr.bf16.mxu0 0
        %2514 = vmatpush1.bf16.msra.mxu0 0
        %2515 = vmatprep.subr.bf16.mxu0 0
        %2516 = vmatpush1.bf16.msra.mxu0 0
        %2517 = vmatprep.subr.bf16.mxu0 0
        %2518 = vmatpush1.bf16.msra.mxu0 0
        %2519 = vmatprep.subr.bf16.mxu0 0
        %2520 = vmatpush1.bf16.msra.mxu0 0
        %2521 = vmatprep.subr.bf16.mxu0 0
        %2522 = vmatpush1.bf16.msra.mxu0 0
        %2523 = vmatprep.subr.bf16.mxu0 0
        %2524 = vmatpush1.bf16.msra.mxu0 0
        %2525 = vmatprep.subr.bf16.mxu0 0
        %2526 = vmatpush1.bf16.msra.mxu0 0
        %2527 = vmatprep.subr.bf16.mxu0 0
        %2528 = vmatpush1.bf16.msra.mxu0 0
        %2529 = vmatprep.subr.bf16.mxu0 0
        %2530 = vmatpush1.bf16.msra.mxu0 0
        %2531 = vmatprep.subr.bf16.mxu0 0
        %2532 = vmatpush1.bf16.msra.mxu0 0
        %2533 = vmatprep.subr.bf16.mxu0 0
        %2534 = vmatpush1.bf16.msra.mxu0 0
        %2535 = vmatprep.subr.bf16.mxu0 0
        %2536 = vmatpush1.bf16.msra.mxu0 0
        %2537 = vmatprep.subr.bf16.mxu0 0
        %2538 = vmatpush1.bf16.msra.mxu0 0
        %2539 = vmatprep.subr.bf16.mxu0 0
        %2540 = vmatpush1.bf16.msra.mxu0 0
        %2541 = vmatprep.mubr.bf16.mxu0 0
        %2542 = vmatmul.mubr.bf16.gmra.mrb[0].mxu0 %v2507
        %v2543 = vpop.f32.mrb[0].mxu0
        %v2544 = vadd.f32 0.0, %v2543
        %v2545 = vpop.f32.mrb[0].mxu0
        %v2546 = vpop.f32.mrb[0].mxu0
        %v2547 = vadd.f32 0.0, %v2546
        %v2548 = vpop.f32.mrb[0].mxu0
        %2549 = vdwg.mxu0
        %v2552 = vunpack.c.l.b16 %v2294
        %v2553 = vunpack.c.l.b16 %v2295
        %v2554 = vpack.c.b16 %v2553, %v2552
        %v2557 = vsel %vm1337, %v2281, 0
        %2559 = vmatprep.subr.bf16.mxu0 0
        %2560 = vmatpush1.bf16.msra.mxu0 %v2554
        %2561 = vmatprep.subr.bf16.mxu0 0
        %2562 = vmatpush1.bf16.msra.mxu0 0
        %2563 = vmatprep.subr.bf16.mxu0 0
        %2564 = vmatpush1.bf16.msra.mxu0 0
        %2565 = vmatprep.subr.bf16.mxu0 0
        %2566 = vmatpush1.bf16.msra.mxu0 0
        %2567 = vmatprep.subr.bf16.mxu0 0
        %2568 = vmatpush1.bf16.msra.mxu0 0
        %2569 = vmatprep.subr.bf16.mxu0 0
        %2570 = vmatpush1.bf16.msra.mxu0 0
        %2571 = vmatprep.subr.bf16.mxu0 0
        %2572 = vmatpush1.bf16.msra.mxu0 0
        %2573 = vmatprep.subr.bf16.mxu0 0
        %2574 = vmatpush1.bf16.msra.mxu0 0
        %2575 = vmatprep.subr.bf16.mxu0 0
        %2576 = vmatpush1.bf16.msra.mxu0 0
        %2577 = vmatprep.subr.bf16.mxu0 0
        %2578 = vmatpush1.bf16.msra.mxu0 0
        %2579 = vmatprep.subr.bf16.mxu0 0
        %2580 = vmatpush1.bf16.msra.mxu0 0
        %2581 = vmatprep.subr.bf16.mxu0 0
        %2582 = vmatpush1.bf16.msra.mxu0 0
        %2583 = vmatprep.subr.bf16.mxu0 0
        %2584 = vmatpush1.bf16.msra.mxu0 0
        %2585 = vmatprep.subr.bf16.mxu0 0
        %2586 = vmatpush1.bf16.msra.mxu0 0
        %2587 = vmatprep.subr.bf16.mxu0 0
        %2588 = vmatpush1.bf16.msra.mxu0 0
        %2589 = vmatprep.subr.bf16.mxu0 0
        %2590 = vmatpush1.bf16.msra.mxu0 0
        %2591 = vmatprep.mubr.bf16.mxu0 0
        %2592 = vmatmul.mubr.bf16.gmra.mrb[0].mxu0 %v2557
        %v2593 = vpop.f32.mrb[0].mxu0
        %v2594 = vadd.f32 0.0, %v2593
        %v2595 = vpop.f32.mrb[0].mxu0
        %v2596 = vpop.f32.mrb[0].mxu0
        %v2597 = vadd.f32 0.0, %v2596
        %v2598 = vpop.f32.mrb[0].mxu0
        %2599 = vdwg.mxu0
        %v2602 = vunpack.c.l.b16 %v2296
        %v2603 = vunpack.c.l.b16 %v2297
        %v2604 = vpack.c.b16 %v2603, %v2602
        %v2607 = vsel %vm1337, %v2282, 0
        %2609 = vmatprep.subr.bf16.mxu0 0
        %2610 = vmatpush1.bf16.msra.mxu0 %v2604
        %2611 = vmatprep.subr.bf16.mxu0 0
        %2612 = vmatpush1.bf16.msra.mxu0 0
        %2613 = vmatprep.subr.bf16.mxu0 0
        %2614 = vmatpush1.bf16.msra.mxu0 0
        %2615 = vmatprep.subr.bf16.mxu0 0
        %2616 = vmatpush1.bf16.msra.mxu0 0
        %2617 = vmatprep.subr.bf16.mxu0 0
        %2618 = vmatpush1.bf16.msra.mxu0 0
        %2619 = vmatprep.subr.bf16.mxu0 0
        %2620 = vmatpush1.bf16.msra.mxu0 0
        %2621 = vmatprep.subr.bf16.mxu0 0
        %2622 = vmatpush1.bf16.msra.mxu0 0
        %2623 = vmatprep.subr.bf16.mxu0 0
        %2624 = vmatpush1.bf16.msra.mxu0 0
        %2625 = vmatprep.subr.bf16.mxu0 0
        %2626 = vmatpush1.bf16.msra.mxu0 0
        %2627 = vmatprep.subr.bf16.mxu0 0
        %2628 = vmatpush1.bf16.msra.mxu0 0
        %2629 = vmatprep.subr.bf16.mxu0 0
        %2630 = vmatpush1.bf16.msra.mxu0 0
        %2631 = vmatprep.subr.bf16.mxu0 0
        %2632 = vmatpush1.bf16.msra.mxu0 0
        %2633 = vmatprep.subr.bf16.mxu0 0
        %2634 = vmatpush1.bf16.msra.mxu0 0
        %2635 = vmatprep.subr.bf16.mxu0 0
        %2636 = vmatpush1.bf16.msra.mxu0 0
        %2637 = vmatprep.subr.bf16.mxu0 0
        %2638 = vmatpush1.bf16.msra.mxu0 0
        %2639 = vmatprep.subr.bf16.mxu0 0
        %2640 = vmatpush1.bf16.msra.mxu0 0
        %2641 = vmatprep.mubr.bf16.mxu0 0
        %2642 = vmatmul.mubr.bf16.gmra.mrb[0].mxu0 %v2607
        %v2643 = vpop.f32.mrb[0].mxu0
        %v2644 = vadd.f32 0.0, %v2643
        %v2645 = vpop.f32.mrb[0].mxu0
        %v2646 = vpop.f32.mrb[0].mxu0
        %v2647 = vadd.f32 0.0, %v2646
        %v2648 = vpop.f32.mrb[0].mxu0
        %2649 = vdwg.mxu0
        %v2652 = vunpack.c.l.b16 %v2298
        %v2653 = vunpack.c.l.b16 %v2299
        %v2654 = vpack.c.b16 %v2653, %v2652
        %v2657 = vsel %vm1337, %v2283, 0
        %2659 = vmatprep.subr.bf16.mxu0 0
        %2660 = vmatpush1.bf16.msra.mxu0 %v2654
        %2661 = vmatprep.subr.bf16.mxu0 0
        %2662 = vmatpush1.bf16.msra.mxu0 0
        %2663 = vmatprep.subr.bf16.mxu0 0
        %2664 = vmatpush1.bf16.msra.mxu0 0
        %2665 = vmatprep.subr.bf16.mxu0 0
        %2666 = vmatpush1.bf16.msra.mxu0 0
        %2667 = vmatprep.subr.bf16.mxu0 0
        %2668 = vmatpush1.bf16.msra.mxu0 0
        %2669 = vmatprep.subr.bf16.mxu0 0
        %2670 = vmatpush1.bf16.msra.mxu0 0
        %2671 = vmatprep.subr.bf16.mxu0 0
        %2672 = vmatpush1.bf16.msra.mxu0 0
        %2673 = vmatprep.subr.bf16.mxu0 0
        %2674 = vmatpush1.bf16.msra.mxu0 0
        %2675 = vmatprep.subr.bf16.mxu0 0
        %2676 = vmatpush1.bf16.msra.mxu0 0
        %2677 = vmatprep.subr.bf16.mxu0 0
        %2678 = vmatpush1.bf16.msra.mxu0 0
        %2679 = vmatprep.subr.bf16.mxu0 0
        %2680 = vmatpush1.bf16.msra.mxu0 0
        %2681 = vmatprep.subr.bf16.mxu0 0
        %2682 = vmatpush1.bf16.msra.mxu0 0
        %2683 = vmatprep.subr.bf16.mxu0 0
        %2684 = vmatpush1.bf16.msra.mxu0 0
        %2685 = vmatprep.subr.bf16.mxu0 0
        %2686 = vmatpush1.bf16.msra.mxu0 0
        %2687 = vmatprep.subr.bf16.mxu0 0
        %2688 = vmatpush1.bf16.msra.mxu0 0
        %2689 = vmatprep.subr.bf16.mxu0 0
        %2690 = vmatpush1.bf16.msra.mxu0 0
        %2691 = vmatprep.mubr.bf16.mxu0 0
        %2692 = vmatmul.mubr.bf16.gmra.mrb[0].mxu0 %v2657
        %v2693 = vpop.f32.mrb[0].mxu0
        %v2694 = vadd.f32 0.0, %v2693
        %v2695 = vpop.f32.mrb[0].mxu0
        %v2696 = vpop.f32.mrb[0].mxu0
        %v2697 = vadd.f32 0.0, %v2696
        %v2698 = vpop.f32.mrb[0].mxu0
        %2699 = vdwg.mxu0
        %v2700 = vadd.f32 %v2344, %v2394
        %v2701 = vadd.f32 %v2700, %v2444
        %v2702 = vadd.f32 %v2701, %v2494
        %v2703 = vadd.f32 %v2702, %v2544
        %v2704 = vadd.f32 %v2703, %v2594
        %v2705 = vadd.f32 %v2704, %v2644
        %v2706 = vadd.f32 %v2705, %v2694
        %v2707 = vadd.f32 %v2347, %v2397
        %v2708 = vadd.f32 %v2707, %v2447
        %v2709 = vadd.f32 %v2708, %v2497
        %v2710 = vadd.f32 %v2709, %v2547
        %v2711 = vadd.f32 %v2710, %v2597
        %v2712 = vadd.f32 %v2711, %v2647
        %v2713 = vadd.f32 %v2712, %v2697
        %v2714 = vadd.f32 %v870, %v2706
        %v2715 = vadd.f32 %v871, %v2713
        %v2716 = vld [vmem:[#allocation16] sm:$0x1]
        %v2717 = vlaneseq
        %v2718 = vshrl.u32 %v2717, 7
        %v2719 = vsub.s32 0, %v2718
        %v2720 = vrot.slane %v2716, %v2719
        %v2721 = vadd.f32 %v2714, %v2720
        %v2722 = vadd.f32 %v2715, %v2720
        %v2723 = vld [vmem:[#allocation17] sm:$0x1]
        %v2724 = vld [vmem:[#allocation19] sm:$0x1]
        %2725 = vadd.xlane.f32.xlu0 %v2721
        %v2726 = vpop.xlane.xlu0 %2725
        %2727 = vadd.xlane.f32.xlu0 %v2722
        %v2728 = vpop.xlane.xlu0 %2727
        %v2729 = vmul.f32 %v2726, %v837
        %v2730 = vmul.f32 %v2728, %v837
        %v2731 = vsub.f32 %v2721, %v2729
        %v2732 = vsub.f32 %v2722, %v2730
        %v2733 = vmul.f32 %v2731, %v2731
        %v2734 = vmul.f32 %v2732, %v2732
        %2735 = vadd.xlane.f32.xlu0 %v2733
        %v2736 = vpop.xlane.xlu0 %2735
        %2737 = vadd.xlane.f32.xlu0 %v2734
        %v2738 = vpop.xlane.xlu0 %2737
        %v2739 = vmul.f32 %v2736, %v837
        %v2740 = vmul.f32 %v2738, %v837
        %v2741 = vadd.f32 %v2739, 1e-05
        %v2742 = vadd.f32 %v2740, 1e-05
        %v2743 = vrsqrt.pop %v2741
        %v2744 = vrsqrt.pop %v2742
        %v2745 = vmul.f32 %v2731, %v2743
        %v2746 = vmul.f32 %v2732, %v2744
        %v2747 = vlaneseq
        %v2748 = vshrl.u32 %v2747, 7
        %v2749 = vsub.s32 0, %v2748
        %v2750 = vrot.slane %v2723, %v2749
        %v2751 = vmul.f32 %v2745, %v2750
        %v2752 = vmul.f32 %v2746, %v2750
        %v2753 = vlaneseq
        %v2754 = vshrl.u32 %v2753, 7
        %v2755 = vsub.s32 0, %v2754
        %v2756 = vrot.slane %v2724, %v2755
        %v2757 = vadd.f32 %v2751, %v2756
        %v2758 = vadd.f32 %v2752, %v2756
        %v2759 = vpack.c.bf16 %v2758, %v2757
        %v2760 = vld [vmem:[#allocation20] sm:$0xff]
        %v2761 = vld [vmem:[#allocation20 + $0x8] sm:$0xff]
        %v2762 = vld [vmem:[#allocation20 + $0x10] sm:$0xff]
        %v2763 = vld [vmem:[#allocation20 + $0x18] sm:$0xff]
        %v2764 = vld [vmem:[#allocation20 + $0x20] sm:$0xff]
        %v2765 = vld [vmem:[#allocation20 + $0x28] sm:$0xff]
        %v2766 = vld [vmem:[#allocation20 + $0x30] sm:$0xff]
        %v2767 = vld [vmem:[#allocation20 + $0x38] sm:$0xff]
        %v2768 = vld [vmem:[#allocation20 + $0x40] sm:$0xff]
        %v2769 = vld [vmem:[#allocation20 + $0x48] sm:$0xff]
        %v2770 = vld [vmem:[#allocation20 + $0x50] sm:$0xff]
        %v2771 = vld [vmem:[#allocation20 + $0x58] sm:$0xff]
        %v2772 = vld [vmem:[#allocation20 + $0x60] sm:$0xff]
        %v2773 = vld [vmem:[#allocation20 + $0x68] sm:$0xff]
        %v2774 = vld [vmem:[#allocation20 + $0x70] sm:$0xff]
        %v2775 = vld [vmem:[#allocation20 + $0x78] sm:$0xff]
        %v2776 = vld [vmem:[#allocation20 + $0x80] sm:$0xff]
        %v2777 = vld [vmem:[#allocation20 + $0x88] sm:$0xff]
        %v2778 = vld [vmem:[#allocation20 + $0x90] sm:$0xff]
        %v2779 = vld [vmem:[#allocation20 + $0x98] sm:$0xff]
        %v2780 = vld [vmem:[#allocation20 + $0xa0] sm:$0xff]
        %v2781 = vld [vmem:[#allocation20 + $0xa8] sm:$0xff]
        %v2782 = vld [vmem:[#allocation20 + $0xb0] sm:$0xff]
        %v2783 = vld [vmem:[#allocation20 + $0xb8] sm:$0xff]
        %v2784 = vld [vmem:[#allocation20 + $0xc0] sm:$0xff]
        %v2785 = vld [vmem:[#allocation20 + $0xc8] sm:$0xff]
        %v2786 = vld [vmem:[#allocation20 + $0xd0] sm:$0xff]
        %v2787 = vld [vmem:[#allocation20 + $0xd8] sm:$0xff]
        %v2788 = vld [vmem:[#allocation20 + $0xe0] sm:$0xff]
        %v2789 = vld [vmem:[#allocation20 + $0xe8] sm:$0xff]
        %v2790 = vld [vmem:[#allocation20 + $0xf0] sm:$0xff]
        %v2791 = vld [vmem:[#allocation20 + $0xf8] sm:$0xff]
        %v2792 = vld [vmem:[#allocation22] ss:$4 sm:$0xf]
        %v2794 = vlaneseq
        %v2795 = vshrl.u32 %v2794, 7
        %v2796 = vsub.s32 0, %v2795
        %v2797 = vrot.slane %v2792, %v2796
        %v2798 = vlaneseq
        %v2799 = vshrl.u32 %v2798, 7
        %v2800 = vsub.s32 1, %v2799
        %v2801 = vrot.slane %v2792, %v2800
        %v2802 = vlaneseq
        %v2803 = vshrl.u32 %v2802, 7
        %v2804 = vsub.s32 2, %v2803
        %v2805 = vrot.slane %v2792, %v2804
        %v2806 = vlaneseq
        %v2807 = vshrl.u32 %v2806, 7
        %v2808 = vsub.s32 3, %v2807
        %v2809 = vrot.slane %v2792, %v2808
        %v2846 = vunpack.c.l.b16 %v2760
        %v2847 = vunpack.c.h.b16 %v2760
        %v2848 = vunpack.c.l.b16 %v2761
        %v2849 = vunpack.c.h.b16 %v2761
        %v2850 = vunpack.c.l.b16 %v2762
        %v2851 = vunpack.c.h.b16 %v2762
        %v2852 = vunpack.c.l.b16 %v2763
        %v2853 = vunpack.c.h.b16 %v2763
        %v2854 = vunpack.c.l.b16 %v2764
        %v2855 = vunpack.c.h.b16 %v2764
        %v2856 = vunpack.c.l.b16 %v2765
        %v2857 = vunpack.c.h.b16 %v2765
        %v2858 = vunpack.c.l.b16 %v2766
        %v2859 = vunpack.c.h.b16 %v2766
        %v2860 = vunpack.c.l.b16 %v2767
        %v2861 = vunpack.c.h.b16 %v2767
        %v2862 = vunpack.c.l.b16 %v2768
        %v2863 = vunpack.c.h.b16 %v2768
        %v2864 = vunpack.c.l.b16 %v2769
        %v2865 = vunpack.c.h.b16 %v2769
        %v2866 = vunpack.c.l.b16 %v2770
        %v2867 = vunpack.c.h.b16 %v2770
        %v2868 = vunpack.c.l.b16 %v2771
        %v2869 = vunpack.c.h.b16 %v2771
        %v2870 = vunpack.c.l.b16 %v2772
        %v2871 = vunpack.c.h.b16 %v2772
        %v2872 = vunpack.c.l.b16 %v2773
        %v2873 = vunpack.c.h.b16 %v2773
        %v2874 = vunpack.c.l.b16 %v2774
        %v2875 = vunpack.c.h.b16 %v2774
        %v2876 = vunpack.c.l.b16 %v2775
        %v2877 = vunpack.c.h.b16 %v2775
        %v2878 = vunpack.c.l.b16 %v2776
        %v2879 = vunpack.c.h.b16 %v2776
        %v2880 = vunpack.c.l.b16 %v2777
        %v2881 = vunpack.c.h.b16 %v2777
        %v2882 = vunpack.c.l.b16 %v2778
        %v2883 = vunpack.c.h.b16 %v2778
        %v2884 = vunpack.c.l.b16 %v2779
        %v2885 = vunpack.c.h.b16 %v2779
        %v2886 = vunpack.c.l.b16 %v2780
        %v2887 = vunpack.c.h.b16 %v2780
        %v2888 = vunpack.c.l.b16 %v2781
        %v2889 = vunpack.c.h.b16 %v2781
        %v2890 = vunpack.c.l.b16 %v2782
        %v2891 = vunpack.c.h.b16 %v2782
        %v2892 = vunpack.c.l.b16 %v2783
        %v2893 = vunpack.c.h.b16 %v2783
        %v2894 = vunpack.c.l.b16 %v2784
        %v2895 = vunpack.c.h.b16 %v2784
        %v2896 = vunpack.c.l.b16 %v2785
        %v2897 = vunpack.c.h.b16 %v2785
        %v2898 = vunpack.c.l.b16 %v2786
        %v2899 = vunpack.c.h.b16 %v2786
        %v2900 = vunpack.c.l.b16 %v2787
        %v2901 = vunpack.c.h.b16 %v2787
        %v2902 = vunpack.c.l.b16 %v2788
        %v2903 = vunpack.c.h.b16 %v2788
        %v2904 = vunpack.c.l.b16 %v2789
        %v2905 = vunpack.c.h.b16 %v2789
        %v2906 = vunpack.c.l.b16 %v2790
        %v2907 = vunpack.c.h.b16 %v2790
        %v2908 = vunpack.c.l.b16 %v2791
        %v2909 = vunpack.c.h.b16 %v2791
        %v2910 = vpack.c.b16 %v2850, %v2846
        %v2911 = vpack.c.b16 %v2851, %v2847
        %v2912 = vpack.c.b16 %v2852, %v2848
        %v2913 = vpack.c.b16 %v2853, %v2849
        %v2914 = vpack.c.b16 %v2858, %v2854
        %v2915 = vpack.c.b16 %v2859, %v2855
        %v2916 = vpack.c.b16 %v2860, %v2856
        %v2917 = vpack.c.b16 %v2861, %v2857
        %v2918 = vpack.c.b16 %v2866, %v2862
        %v2919 = vpack.c.b16 %v2867, %v2863
        %v2920 = vpack.c.b16 %v2868, %v2864
        %v2921 = vpack.c.b16 %v2869, %v2865
        %v2922 = vpack.c.b16 %v2874, %v2870
        %v2923 = vpack.c.b16 %v2875, %v2871
        %v2924 = vpack.c.b16 %v2876, %v2872
        %v2925 = vpack.c.b16 %v2877, %v2873
        %v2926 = vpack.c.b16 %v2882, %v2878
        %v2927 = vpack.c.b16 %v2883, %v2879
        %v2928 = vpack.c.b16 %v2884, %v2880
        %v2929 = vpack.c.b16 %v2885, %v2881
        %v2930 = vpack.c.b16 %v2890, %v2886
        %v2931 = vpack.c.b16 %v2891, %v2887
        %v2932 = vpack.c.b16 %v2892, %v2888
        %v2933 = vpack.c.b16 %v2893, %v2889
        %v2934 = vpack.c.b16 %v2898, %v2894
        %v2935 = vpack.c.b16 %v2899, %v2895
        %v2936 = vpack.c.b16 %v2900, %v2896
        %v2937 = vpack.c.b16 %v2901, %v2897
        %v2938 = vpack.c.b16 %v2906, %v2902
        %v2939 = vpack.c.b16 %v2907, %v2903
        %v2940 = vpack.c.b16 %v2908, %v2904
        %v2941 = vpack.c.b16 %v2909, %v2905
        %2974 = vmatprep.subr.bf16.mxu0 %v2911
        %2975 = vmatpush1.bf16.msra.mxu0 %v2910
        %2976 = vmatprep.subr.bf16.mxu0 %v2915
        %2977 = vmatpush1.bf16.msra.mxu0 %v2914
        %2978 = vmatprep.subr.bf16.mxu0 %v2919
        %2979 = vmatpush1.bf16.msra.mxu0 %v2918
        %2980 = vmatprep.subr.bf16.mxu0 %v2923
        %2981 = vmatpush1.bf16.msra.mxu0 %v2922
        %2982 = vmatprep.subr.bf16.mxu0 %v2927
        %2983 = vmatpush1.bf16.msra.mxu0 %v2926
        %2984 = vmatprep.subr.bf16.mxu0 %v2931
        %2985 = vmatpush1.bf16.msra.mxu0 %v2930
        %2986 = vmatprep.subr.bf16.mxu0 %v2935
        %2987 = vmatpush1.bf16.msra.mxu0 %v2934
        %2988 = vmatprep.subr.bf16.mxu0 %v2939
        %2989 = vmatpush1.bf16.msra.mxu0 %v2938
        %2990 = vmatprep.subr.bf16.mxu0 0
        %2991 = vmatpush1.bf16.msra.mxu0 0
        %2992 = vmatprep.subr.bf16.mxu0 0
        %2993 = vmatpush1.bf16.msra.mxu0 0
        %2994 = vmatprep.subr.bf16.mxu0 0
        %2995 = vmatpush1.bf16.msra.mxu0 0
        %2996 = vmatprep.subr.bf16.mxu0 0
        %2997 = vmatpush1.bf16.msra.mxu0 0
        %2998 = vmatprep.subr.bf16.mxu0 0
        %2999 = vmatpush1.bf16.msra.mxu0 0
        %3000 = vmatprep.subr.bf16.mxu0 0
        %3001 = vmatpush1.bf16.msra.mxu0 0
        %3002 = vmatprep.subr.bf16.mxu0 0
        %3003 = vmatpush1.bf16.msra.mxu0 0
        %3004 = vmatprep.subr.bf16.mxu0 0
        %3005 = vmatpush1.bf16.msra.mxu0 0
        %3006 = vmatprep.mubr.bf16.mxu0 0
        %3007 = vmatmul.mubr.bf16.gmra.mrb[0].mxu0 %v2759
        %v3008 = vpop.f32.mrb[0].mxu0
        %v3009 = vadd.f32 %v2797, %v3008
        %v3010 = vpop.f32.mrb[0].mxu0
        %v3011 = vadd.f32 %v2801, %v3010
        %v3012 = vpop.f32.mrb[0].mxu0
        %v3013 = vadd.f32 %v2797, %v3012
        %v3014 = vpop.f32.mrb[0].mxu0
        %v3015 = vadd.f32 %v2801, %v3014
        %3016 = vdwg.mxu0
        %3017 = vmatprep.subr.bf16.mxu0 %v2913
        %3018 = vmatpush1.bf16.msra.mxu0 %v2912
        %3019 = vmatprep.subr.bf16.mxu0 %v2917
        %3020 = vmatpush1.bf16.msra.mxu0 %v2916
        %3021 = vmatprep.subr.bf16.mxu0 %v2921
        %3022 = vmatpush1.bf16.msra.mxu0 %v2920
        %3023 = vmatprep.subr.bf16.mxu0 %v2925
        %3024 = vmatpush1.bf16.msra.mxu0 %v2924
        %3025 = vmatprep.subr.bf16.mxu0 %v2929
        %3026 = vmatpush1.bf16.msra.mxu0 %v2928
        %3027 = vmatprep.subr.bf16.mxu0 %v2933
        %3028 = vmatpush1.bf16.msra.mxu0 %v2932
        %3029 = vmatprep.subr.bf16.mxu0 %v2937
        %3030 = vmatpush1.bf16.msra.mxu0 %v2936
        %3031 = vmatprep.subr.bf16.mxu0 %v2941
        %3032 = vmatpush1.bf16.msra.mxu0 %v2940
        %3033 = vmatprep.subr.bf16.mxu0 0
        %3034 = vmatpush1.bf16.msra.mxu0 0
        %3035 = vmatprep.subr.bf16.mxu0 0
        %3036 = vmatpush1.bf16.msra.mxu0 0
        %3037 = vmatprep.subr.bf16.mxu0 0
        %3038 = vmatpush1.bf16.msra.mxu0 0
        %3039 = vmatprep.subr.bf16.mxu0 0
        %3040 = vmatpush1.bf16.msra.mxu0 0
        %3041 = vmatprep.subr.bf16.mxu0 0
        %3042 = vmatpush1.bf16.msra.mxu0 0
        %3043 = vmatprep.subr.bf16.mxu0 0
        %3044 = vmatpush1.bf16.msra.mxu0 0
        %3045 = vmatprep.subr.bf16.mxu0 0
        %3046 = vmatpush1.bf16.msra.mxu0 0
        %3047 = vmatprep.subr.bf16.mxu0 0
        %3048 = vmatpush1.bf16.msra.mxu0 0
        %3049 = vmatprep.mubr.bf16.mxu0 0
        %3050 = vmatmul.mubr.bf16.gmra.mrb[0].mxu0 %v2759
        %v3051 = vpop.f32.mrb[0].mxu0
        %v3052 = vadd.f32 %v2805, %v3051
        %v3053 = vpop.f32.mrb[0].mxu0
        %v3054 = vadd.f32 %v2809, %v3053
        %v3055 = vpop.f32.mrb[0].mxu0
        %v3056 = vadd.f32 %v2805, %v3055
        %v3057 = vpop.f32.mrb[0].mxu0
        %v3058 = vadd.f32 %v2809, %v3057
        %3059 = vdwg.mxu0
        %v3060 = vmul.f32 %v3009, 1.702
        %v3061 = vmul.f32 %v3011, 1.702
        %v3062 = vmul.f32 %v3052, 1.702
        %v3063 = vmul.f32 %v3054, 1.702
        %v3064 = vmul.f32 %v3013, 1.702
        %v3065 = vmul.f32 %v3015, 1.702
        %v3066 = vmul.f32 %v3056, 1.702
        %v3067 = vmul.f32 %v3058, 1.702
        %v3068 = vxor.u32 %v3060, 2147483648
        %v3069 = vxor.u32 %v3061, 2147483648
        %v3070 = vxor.u32 %v3062, 2147483648
        %v3071 = vxor.u32 %v3063, 2147483648
        %v3072 = vxor.u32 %v3064, 2147483648
        %v3073 = vxor.u32 %v3065, 2147483648
        %v3074 = vxor.u32 %v3066, 2147483648
        %v3075 = vxor.u32 %v3067, 2147483648
        %v3076 = vmul.f32 %v3068, 1.442695
        %v3077 = vpow.pop %v3076
        %v3078 = vmul.f32 %v3069, 1.442695
        %v3079 = vpow.pop %v3078
        %v3080 = vmul.f32 %v3070, 1.442695
        %v3081 = vpow.pop %v3080
        %v3082 = vmul.f32 %v3071, 1.442695
        %v3083 = vpow.pop %v3082
        %v3084 = vmul.f32 %v3072, 1.442695
        %v3085 = vpow.pop %v3084
        %v3086 = vmul.f32 %v3073, 1.442695
        %v3087 = vpow.pop %v3086
        %v3088 = vmul.f32 %v3074, 1.442695
        %v3089 = vpow.pop %v3088
        %v3090 = vmul.f32 %v3075, 1.442695
        %v3091 = vpow.pop %v3090
        %v3092 = vadd.f32 %v3077, 1.0
        %v3093 = vadd.f32 %v3079, 1.0
        %v3094 = vadd.f32 %v3081, 1.0
        %v3095 = vadd.f32 %v3083, 1.0
        %v3096 = vadd.f32 %v3085, 1.0
        %v3097 = vadd.f32 %v3087, 1.0
        %v3098 = vadd.f32 %v3089, 1.0
        %v3099 = vadd.f32 %v3091, 1.0
        %v3100 = vrcp.pop %v3092
        %v3101 = vmul.f32 1.0, %v3100
        %v3102 = vrcp.pop %v3093
        %v3103 = vmul.f32 1.0, %v3102
        %v3104 = vrcp.pop %v3094
        %v3105 = vmul.f32 1.0, %v3104
        %v3106 = vrcp.pop %v3095
        %v3107 = vmul.f32 1.0, %v3106
        %v3108 = vrcp.pop %v3096
        %v3109 = vmul.f32 1.0, %v3108
        %v3110 = vrcp.pop %v3097
        %v3111 = vmul.f32 1.0, %v3110
        %v3112 = vrcp.pop %v3098
        %v3113 = vmul.f32 1.0, %v3112
        %v3114 = vrcp.pop %v3099
        %v3115 = vmul.f32 1.0, %v3114
        %v3116 = vmul.f32 %v3009, %v3101
        %v3117 = vmul.f32 %v3011, %v3103
        %v3118 = vmul.f32 %v3052, %v3105
        %v3119 = vmul.f32 %v3054, %v3107
        %v3120 = vmul.f32 %v3013, %v3109
        %v3121 = vmul.f32 %v3015, %v3111
        %v3122 = vmul.f32 %v3056, %v3113
        %v3123 = vmul.f32 %v3058, %v3115
        %v3124 = vpack.c.bf16 %v3120, %v3116
        %v3125 = vpack.c.bf16 %v3121, %v3117
        %v3126 = vpack.c.bf16 %v3122, %v3118
        %v3127 = vpack.c.bf16 %v3123, %v3119
        %v3128 = vld [vmem:[#allocation23] sm:$0xf]
        %v3129 = vld [vmem:[#allocation23 + $0x4] sm:$0xf]
        %v3130 = vld [vmem:[#allocation23 + $0x8] sm:$0xf]
        %v3131 = vld [vmem:[#allocation23 + $0xc] sm:$0xf]
        %v3132 = vld [vmem:[#allocation23 + $0x10] sm:$0xf]
        %v3133 = vld [vmem:[#allocation23 + $0x14] sm:$0xf]
        %v3134 = vld [vmem:[#allocation23 + $0x18] sm:$0xf]
        %v3135 = vld [vmem:[#allocation23 + $0x1c] sm:$0xf]
        %v3136 = vld [vmem:[#allocation23 + $0x20] sm:$0xf]
        %v3137 = vld [vmem:[#allocation23 + $0x24] sm:$0xf]
        %v3138 = vld [vmem:[#allocation23 + $0x28] sm:$0xf]
        %v3139 = vld [vmem:[#allocation23 + $0x2c] sm:$0xf]
        %v3140 = vld [vmem:[#allocation23 + $0x30] sm:$0xf]
        %v3141 = vld [vmem:[#allocation23 + $0x34] sm:$0xf]
        %v3142 = vld [vmem:[#allocation23 + $0x38] sm:$0xf]
        %v3143 = vld [vmem:[#allocation23 + $0x3c] sm:$0xf]
        %v3144 = vld [vmem:[#allocation23 + $0x40] sm:$0xf]
        %v3145 = vld [vmem:[#allocation23 + $0x44] sm:$0xf]
        %v3146 = vld [vmem:[#allocation23 + $0x48] sm:$0xf]
        %v3147 = vld [vmem:[#allocation23 + $0x4c] sm:$0xf]
        %v3148 = vld [vmem:[#allocation23 + $0x50] sm:$0xf]
        %v3149 = vld [vmem:[#allocation23 + $0x54] sm:$0xf]
        %v3150 = vld [vmem:[#allocation23 + $0x58] sm:$0xf]
        %v3151 = vld [vmem:[#allocation23 + $0x5c] sm:$0xf]
        %v3152 = vld [vmem:[#allocation23 + $0x60] sm:$0xf]
        %v3153 = vld [vmem:[#allocation23 + $0x64] sm:$0xf]
        %v3154 = vld [vmem:[#allocation23 + $0x68] sm:$0xf]
        %v3155 = vld [vmem:[#allocation23 + $0x6c] sm:$0xf]
        %v3156 = vld [vmem:[#allocation23 + $0x70] sm:$0xf]
        %v3157 = vld [vmem:[#allocation23 + $0x74] sm:$0xf]
        %v3158 = vld [vmem:[#allocation23 + $0x78] sm:$0xf]
        %v3159 = vld [vmem:[#allocation23 + $0x7c] sm:$0xf]
        %v3160 = vld [vmem:[#allocation23 + $0x80] sm:$0xf]
        %v3161 = vld [vmem:[#allocation23 + $0x84] sm:$0xf]
        %v3162 = vld [vmem:[#allocation23 + $0x88] sm:$0xf]
        %v3163 = vld [vmem:[#allocation23 + $0x8c] sm:$0xf]
        %v3164 = vld [vmem:[#allocation23 + $0x90] sm:$0xf]
        %v3165 = vld [vmem:[#allocation23 + $0x94] sm:$0xf]
        %v3166 = vld [vmem:[#allocation23 + $0x98] sm:$0xf]
        %v3167 = vld [vmem:[#allocation23 + $0x9c] sm:$0xf]
        %v3168 = vld [vmem:[#allocation23 + $0xa0] sm:$0xf]
        %v3169 = vld [vmem:[#allocation23 + $0xa4] sm:$0xf]
        %v3170 = vld [vmem:[#allocation23 + $0xa8] sm:$0xf]
        %v3171 = vld [vmem:[#allocation23 + $0xac] sm:$0xf]
        %v3172 = vld [vmem:[#allocation23 + $0xb0] sm:$0xf]
        %v3173 = vld [vmem:[#allocation23 + $0xb4] sm:$0xf]
        %v3174 = vld [vmem:[#allocation23 + $0xb8] sm:$0xf]
        %v3175 = vld [vmem:[#allocation23 + $0xbc] sm:$0xf]
        %v3176 = vld [vmem:[#allocation23 + $0xc0] sm:$0xf]
        %v3177 = vld [vmem:[#allocation23 + $0xc4] sm:$0xf]
        %v3178 = vld [vmem:[#allocation23 + $0xc8] sm:$0xf]
        %v3179 = vld [vmem:[#allocation23 + $0xcc] sm:$0xf]
        %v3180 = vld [vmem:[#allocation23 + $0xd0] sm:$0xf]
        %v3181 = vld [vmem:[#allocation23 + $0xd4] sm:$0xf]
        %v3182 = vld [vmem:[#allocation23 + $0xd8] sm:$0xf]
        %v3183 = vld [vmem:[#allocation23 + $0xdc] sm:$0xf]
        %v3184 = vld [vmem:[#allocation23 + $0xe0] sm:$0xf]
        %v3185 = vld [vmem:[#allocation23 + $0xe4] sm:$0xf]
        %v3186 = vld [vmem:[#allocation23 + $0xe8] sm:$0xf]
        %v3187 = vld [vmem:[#allocation23 + $0xec] sm:$0xf]
        %v3188 = vld [vmem:[#allocation23 + $0xf0] sm:$0xf]
        %v3189 = vld [vmem:[#allocation23 + $0xf4] sm:$0xf]
        %v3190 = vld [vmem:[#allocation23 + $0xf8] sm:$0xf]
        %v3191 = vld [vmem:[#allocation23 + $0xfc] sm:$0xf]
        %v3192 = vld [vmem:[#allocation25] sm:$0x1]
        %v3193 = vlaneseq
        %v3194 = vshrl.u32 %v3193, 7
        %v3195 = vsub.s32 0, %v3194
        %v3196 = vrot.slane %v3192, %v3195
        %v3261 = vunpack.c.l.b16 %v3128
        %v3262 = vunpack.c.l.b16 %v3129
        %v3263 = vunpack.c.l.b16 %v3130
        %v3264 = vunpack.c.l.b16 %v3131
        %v3265 = vunpack.c.l.b16 %v3132
        %v3266 = vunpack.c.l.b16 %v3133
        %v3267 = vunpack.c.l.b16 %v3134
        %v3268 = vunpack.c.l.b16 %v3135
        %v3269 = vunpack.c.l.b16 %v3136
        %v3270 = vunpack.c.l.b16 %v3137
        %v3271 = vunpack.c.l.b16 %v3138
        %v3272 = vunpack.c.l.b16 %v3139
        %v3273 = vunpack.c.l.b16 %v3140
        %v3274 = vunpack.c.l.b16 %v3141
        %v3275 = vunpack.c.l.b16 %v3142
        %v3276 = vunpack.c.l.b16 %v3143
        %v3277 = vunpack.c.l.b16 %v3144
        %v3278 = vunpack.c.l.b16 %v3145
        %v3279 = vunpack.c.l.b16 %v3146
        %v3280 = vunpack.c.l.b16 %v3147
        %v3281 = vunpack.c.l.b16 %v3148
        %v3282 = vunpack.c.l.b16 %v3149
        %v3283 = vunpack.c.l.b16 %v3150
        %v3284 = vunpack.c.l.b16 %v3151
        %v3285 = vunpack.c.l.b16 %v3152
        %v3286 = vunpack.c.l.b16 %v3153
        %v3287 = vunpack.c.l.b16 %v3154
        %v3288 = vunpack.c.l.b16 %v3155
        %v3289 = vunpack.c.l.b16 %v3156
        %v3290 = vunpack.c.l.b16 %v3157
        %v3291 = vunpack.c.l.b16 %v3158
        %v3292 = vunpack.c.l.b16 %v3159
        %v3293 = vunpack.c.l.b16 %v3160
        %v3294 = vunpack.c.l.b16 %v3161
        %v3295 = vunpack.c.l.b16 %v3162
        %v3296 = vunpack.c.l.b16 %v3163
        %v3297 = vunpack.c.l.b16 %v3164
        %v3298 = vunpack.c.l.b16 %v3165
        %v3299 = vunpack.c.l.b16 %v3166
        %v3300 = vunpack.c.l.b16 %v3167
        %v3301 = vunpack.c.l.b16 %v3168
        %v3302 = vunpack.c.l.b16 %v3169
        %v3303 = vunpack.c.l.b16 %v3170
        %v3304 = vunpack.c.l.b16 %v3171
        %v3305 = vunpack.c.l.b16 %v3172
        %v3306 = vunpack.c.l.b16 %v3173
        %v3307 = vunpack.c.l.b16 %v3174
        %v3308 = vunpack.c.l.b16 %v3175
        %v3309 = vunpack.c.l.b16 %v3176
        %v3310 = vunpack.c.l.b16 %v3177
        %v3311 = vunpack.c.l.b16 %v3178
        %v3312 = vunpack.c.l.b16 %v3179
        %v3313 = vunpack.c.l.b16 %v3180
        %v3314 = vunpack.c.l.b16 %v3181
        %v3315 = vunpack.c.l.b16 %v3182
        %v3316 = vunpack.c.l.b16 %v3183
        %v3317 = vunpack.c.l.b16 %v3184
        %v3318 = vunpack.c.l.b16 %v3185
        %v3319 = vunpack.c.l.b16 %v3186
        %v3320 = vunpack.c.l.b16 %v3187
        %v3321 = vunpack.c.l.b16 %v3188
        %v3322 = vunpack.c.l.b16 %v3189
        %v3323 = vunpack.c.l.b16 %v3190
        %v3324 = vunpack.c.l.b16 %v3191
        %v3325 = vpack.c.b16 %v3262, %v3261
        %v3326 = vpack.c.b16 %v3264, %v3263
        %v3327 = vpack.c.b16 %v3266, %v3265
        %v3328 = vpack.c.b16 %v3268, %v3267
        %v3329 = vpack.c.b16 %v3270, %v3269
        %v3330 = vpack.c.b16 %v3272, %v3271
        %v3331 = vpack.c.b16 %v3274, %v3273
        %v3332 = vpack.c.b16 %v3276, %v3275
        %v3333 = vpack.c.b16 %v3278, %v3277
        %v3334 = vpack.c.b16 %v3280, %v3279
        %v3335 = vpack.c.b16 %v3282, %v3281
        %v3336 = vpack.c.b16 %v3284, %v3283
        %v3337 = vpack.c.b16 %v3286, %v3285
        %v3338 = vpack.c.b16 %v3288, %v3287
        %v3339 = vpack.c.b16 %v3290, %v3289
        %v3340 = vpack.c.b16 %v3292, %v3291
        %v3341 = vpack.c.b16 %v3294, %v3293
        %v3342 = vpack.c.b16 %v3296, %v3295
        %v3343 = vpack.c.b16 %v3298, %v3297
        %v3344 = vpack.c.b16 %v3300, %v3299
        %v3345 = vpack.c.b16 %v3302, %v3301
        %v3346 = vpack.c.b16 %v3304, %v3303
        %v3347 = vpack.c.b16 %v3306, %v3305
        %v3348 = vpack.c.b16 %v3308, %v3307
        %v3349 = vpack.c.b16 %v3310, %v3309
        %v3350 = vpack.c.b16 %v3312, %v3311
        %v3351 = vpack.c.b16 %v3314, %v3313
        %v3352 = vpack.c.b16 %v3316, %v3315
        %v3353 = vpack.c.b16 %v3318, %v3317
        %v3354 = vpack.c.b16 %v3320, %v3319
        %v3355 = vpack.c.b16 %v3322, %v3321
        %v3356 = vpack.c.b16 %v3324, %v3323
        %3389 = vmatprep.subr.bf16.mxu0 0
        %3390 = vmatpush1.bf16.msra.mxu0 %v3325
        %3391 = vmatprep.subr.bf16.mxu0 0
        %3392 = vmatpush1.bf16.msra.mxu0 %v3326
        %3393 = vmatprep.subr.bf16.mxu0 0
        %3394 = vmatpush1.bf16.msra.mxu0 %v3327
        %3395 = vmatprep.subr.bf16.mxu0 0
        %3396 = vmatpush1.bf16.msra.mxu0 %v3328
        %3397 = vmatprep.subr.bf16.mxu0 0
        %3398 = vmatpush1.bf16.msra.mxu0 %v3329
        %3399 = vmatprep.subr.bf16.mxu0 0
        %3400 = vmatpush1.bf16.msra.mxu0 %v3330
        %3401 = vmatprep.subr.bf16.mxu0 0
        %3402 = vmatpush1.bf16.msra.mxu0 %v3331
        %3403 = vmatprep.subr.bf16.mxu0 0
        %3404 = vmatpush1.bf16.msra.mxu0 %v3332
        %3405 = vmatprep.subr.bf16.mxu0 0
        %3406 = vmatpush1.bf16.msra.mxu0 %v3333
        %3407 = vmatprep.subr.bf16.mxu0 0
        %3408 = vmatpush1.bf16.msra.mxu0 %v3334
        %3409 = vmatprep.subr.bf16.mxu0 0
        %3410 = vmatpush1.bf16.msra.mxu0 %v3335
        %3411 = vmatprep.subr.bf16.mxu0 0
        %3412 = vmatpush1.bf16.msra.mxu0 %v3336
        %3413 = vmatprep.subr.bf16.mxu0 0
        %3414 = vmatpush1.bf16.msra.mxu0 %v3337
        %3415 = vmatprep.subr.bf16.mxu0 0
        %3416 = vmatpush1.bf16.msra.mxu0 %v3338
        %3417 = vmatprep.subr.bf16.mxu0 0
        %3418 = vmatpush1.bf16.msra.mxu0 %v3339
        %3419 = vmatprep.subr.bf16.mxu0 0
        %3420 = vmatpush1.bf16.msra.mxu0 %v3340
        %3421 = vmatprep.mubr.bf16.mxu0 %v3125
        %3422 = vmatmul.mubr.bf16.gmra.mrb[0].mxu0 %v3124
        %v3423 = vpop.f32.mrb[0].mxu0
        %v3424 = vadd.f32 %v3196, %v3423
        %v3425 = vpop.f32.mrb[0].mxu0
        %v3426 = vpop.f32.mrb[0].mxu0
        %v3427 = vadd.f32 %v3196, %v3426
        %v3428 = vpop.f32.mrb[0].mxu0
        %3429 = vdwg.mxu0
        %3430 = vmatprep.subr.bf16.mxu0 0
        %3431 = vmatpush1.bf16.msra.mxu0 %v3341
        %3432 = vmatprep.subr.bf16.mxu0 0
        %3433 = vmatpush1.bf16.msra.mxu0 %v3342
        %3434 = vmatprep.subr.bf16.mxu0 0
        %3435 = vmatpush1.bf16.msra.mxu0 %v3343
        %3436 = vmatprep.subr.bf16.mxu0 0
        %3437 = vmatpush1.bf16.msra.mxu0 %v3344
        %3438 = vmatprep.subr.bf16.mxu0 0
        %3439 = vmatpush1.bf16.msra.mxu0 %v3345
        %3440 = vmatprep.subr.bf16.mxu0 0
        %3441 = vmatpush1.bf16.msra.mxu0 %v3346
        %3442 = vmatprep.subr.bf16.mxu0 0
        %3443 = vmatpush1.bf16.msra.mxu0 %v3347
        %3444 = vmatprep.subr.bf16.mxu0 0
        %3445 = vmatpush1.bf16.msra.mxu0 %v3348
        %3446 = vmatprep.subr.bf16.mxu0 0
        %3447 = vmatpush1.bf16.msra.mxu0 %v3349
        %3448 = vmatprep.subr.bf16.mxu0 0
        %3449 = vmatpush1.bf16.msra.mxu0 %v3350
        %3450 = vmatprep.subr.bf16.mxu0 0
        %3451 = vmatpush1.bf16.msra.mxu0 %v3351
        %3452 = vmatprep.subr.bf16.mxu0 0
        %3453 = vmatpush1.bf16.msra.mxu0 %v3352
        %3454 = vmatprep.subr.bf16.mxu0 0
        %3455 = vmatpush1.bf16.msra.mxu0 %v3353
        %3456 = vmatprep.subr.bf16.mxu0 0
        %3457 = vmatpush1.bf16.msra.mxu0 %v3354
        %3458 = vmatprep.subr.bf16.mxu0 0
        %3459 = vmatpush1.bf16.msra.mxu0 %v3355
        %3460 = vmatprep.subr.bf16.mxu0 0
        %3461 = vmatpush1.bf16.msra.mxu0 %v3356
        %3462 = vmatprep.mubr.bf16.mxu0 %v3127
        %3463 = vmatmul.mubr.bf16.gmra.mrb[0].mxu0 %v3126
        %v3464 = vpop.f32.mrb[0].mxu0
        %v3465 = vadd.f32 %v3424, %v3464
        %v3466 = vpop.f32.mrb[0].mxu0
        %v3467 = vpop.f32.mrb[0].mxu0
        %v3468 = vadd.f32 %v3427, %v3467
        %v3469 = vpop.f32.mrb[0].mxu0
        %3470 = vdwg.mxu0
        %v3471 = vadd.f32 %v2721, %v3465
        %v3472 = vadd.f32 %v2722, %v3468
        %v3473 = vld [vmem:[%s4 + $0x1] sm:$0x1]
        %v3474 = vld [vmem:[#allocation10 + $0x1] sm:$0x1]
        %3475 = vadd.xlane.f32.xlu0 %v3471
        %v3476 = vpop.xlane.xlu0 %3475
        %3477 = vadd.xlane.f32.xlu0 %v3472
        %v3478 = vpop.xlane.xlu0 %3477
        %v3479 = vmul.f32 %v3476, %v837
        %v3480 = vmul.f32 %v3478, %v837
        %v3481 = vsub.f32 %v3471, %v3479
        %v3482 = vsub.f32 %v3472, %v3480
        %v3483 = vmul.f32 %v3481, %v3481
        %v3484 = vmul.f32 %v3482, %v3482
        %3485 = vadd.xlane.f32.xlu0 %v3483
        %v3486 = vpop.xlane.xlu0 %3485
        %3487 = vadd.xlane.f32.xlu0 %v3484
        %v3488 = vpop.xlane.xlu0 %3487
        %v3489 = vmul.f32 %v3486, %v837
        %v3490 = vmul.f32 %v3488, %v837
        %v3491 = vadd.f32 %v3489, 1e-05
        %v3492 = vadd.f32 %v3490, 1e-05
        %v3493 = vrsqrt.pop %v3491
        %v3494 = vrsqrt.pop %v3492
        %v3495 = vmul.f32 %v3481, %v3493
        %v3496 = vmul.f32 %v3482, %v3494
        %v3497 = vlaneseq
        %v3498 = vshrl.u32 %v3497, 7
        %v3499 = vsub.s32 0, %v3498
        %v3500 = vrot.slane %v3473, %v3499
        %v3501 = vmul.f32 %v3495, %v3500
        %v3502 = vmul.f32 %v3496, %v3500
        %v3503 = vlaneseq
        %v3504 = vshrl.u32 %v3503, 7
        %v3505 = vsub.s32 0, %v3504
        %v3506 = vrot.slane %v3474, %v3505
        %v3507 = vadd.f32 %v3501, %v3506
        %v3508 = vadd.f32 %v3502, %v3506
        %v3509 = vpack.c.bf16 %v3508, %v3507
        %s3510 = scalar_lea.vmem [#allocation11], 192
        %v3511 = vld [vmem:[%s3510] sm:$0xff]
        %v3512 = vld [vmem:[%s3510 + $0x8] sm:$0xf]
        %v3513 = vld [vmem:[%s3510 + $0xc] sm:$0xff]
        %v3514 = vld [vmem:[%s3510 + $0x14] sm:$0xf]
        %v3515 = vld [vmem:[%s3510 + $0x18] sm:$0xff]
        %v3516 = vld [vmem:[%s3510 + $0x20] sm:$0xf]
        %v3517 = vld [vmem:[%s3510 + $0x24] sm:$0xff]
        %v3518 = vld [vmem:[%s3510 + $0x2c] sm:$0xf]
        %v3519 = vld [vmem:[%s3510 + $0x30] sm:$0xff]
        %v3520 = vld [vmem:[%s3510 + $0x38] sm:$0xf]
        %v3521 = vld [vmem:[%s3510 + $0x3c] sm:$0xff]
        %v3522 = vld [vmem:[%s3510 + $0x44] sm:$0xf]
        %v3523 = vld [vmem:[%s3510 + $0x48] sm:$0xff]
        %v3524 = vld [vmem:[%s3510 + $0x50] sm:$0xf]
        %v3525 = vld [vmem:[%s3510 + $0x54] sm:$0xff]
        %v3526 = vld [vmem:[%s3510 + $0x5c] sm:$0xf]
        %v3527 = vld [vmem:[%s3510 + $0x60] sm:$0xff]
        %v3528 = vld [vmem:[%s3510 + $0x68] sm:$0xf]
        %v3529 = vld [vmem:[%s3510 + $0x6c] sm:$0xff]
        %v3530 = vld [vmem:[%s3510 + $0x74] sm:$0xf]
        %v3531 = vld [vmem:[%s3510 + $0x78] sm:$0xff]
        %v3532 = vld [vmem:[%s3510 + $0x80] sm:$0xf]
        %v3533 = vld [vmem:[%s3510 + $0x84] sm:$0xff]
        %v3534 = vld [vmem:[%s3510 + $0x8c] sm:$0xf]
        %v3535 = vld [vmem:[%s3510 + $0x90] sm:$0xff]
        %v3536 = vld [vmem:[%s3510 + $0x98] sm:$0xf]
        %v3537 = vld [vmem:[%s3510 + $0x9c] sm:$0xff]
        %v3538 = vld [vmem:[%s3510 + $0xa4] sm:$0xf]
        %v3539 = vld [vmem:[%s3510 + $0xa8] sm:$0xff]
        %v3540 = vld [vmem:[%s3510 + $0xb0] sm:$0xf]
        %v3541 = vld [vmem:[%s3510 + $0xb4] sm:$0xff]
        %v3542 = vld [vmem:[%s3510 + $0xbc] sm:$0xf]
        %s3543 = scalar_lea.vmem [#allocation13], 1
        %v3544 = vld [vmem:[%s3543] ss:$4 sm:$0x7]
        %v3546 = vlaneseq
        %v3547 = vshrl.u32 %v3546, 7
        %v3548 = vsub.s32 0, %v3547
        %v3549 = vrot.slane %v3544, %v3548
        %v3550 = vlaneseq
        %v3551 = vshrl.u32 %v3550, 7
        %v3552 = vsub.s32 1, %v3551
        %v3553 = vrot.slane %v3544, %v3552
        %v3554 = vlaneseq
        %v3555 = vshrl.u32 %v3554, 7
        %v3556 = vsub.s32 2, %v3555
        %v3557 = vrot.slane %v3544, %v3556
        %v3593 = vunpack.c.l.b16 %v3511
        %v3594 = vunpack.c.h.b16 %v3511
        %v3595 = vunpack.c.l.b16 %v3512
        %v3596 = vunpack.c.l.b16 %v3513
        %v3597 = vunpack.c.h.b16 %v3513
        %v3598 = vunpack.c.l.b16 %v3514
        %v3599 = vunpack.c.l.b16 %v3515
        %v3600 = vunpack.c.h.b16 %v3515
        %v3601 = vunpack.c.l.b16 %v3516
        %v3602 = vunpack.c.l.b16 %v3517
        %v3603 = vunpack.c.h.b16 %v3517
        %v3604 = vunpack.c.l.b16 %v3518
        %v3605 = vunpack.c.l.b16 %v3519
        %v3606 = vunpack.c.h.b16 %v3519
        %v3607 = vunpack.c.l.b16 %v3520
        %v3608 = vunpack.c.l.b16 %v3521
        %v3609 = vunpack.c.h.b16 %v3521
        %v3610 = vunpack.c.l.b16 %v3522
        %v3611 = vunpack.c.l.b16 %v3523
        %v3612 = vunpack.c.h.b16 %v3523
        %v3613 = vunpack.c.l.b16 %v3524
        %v3614 = vunpack.c.l.b16 %v3525
        %v3615 = vunpack.c.h.b16 %v3525
        %v3616 = vunpack.c.l.b16 %v3526
        %v3617 = vunpack.c.l.b16 %v3527
        %v3618 = vunpack.c.h.b16 %v3527
        %v3619 = vunpack.c.l.b16 %v3528
        %v3620 = vunpack.c.l.b16 %v3529
        %v3621 = vunpack.c.h.b16 %v3529
        %v3622 = vunpack.c.l.b16 %v3530
        %v3623 = vunpack.c.l.b16 %v3531
        %v3624 = vunpack.c.h.b16 %v3531
        %v3625 = vunpack.c.l.b16 %v3532
        %v3626 = vunpack.c.l.b16 %v3533
        %v3627 = vunpack.c.h.b16 %v3533
        %v3628 = vunpack.c.l.b16 %v3534
        %v3629 = vunpack.c.l.b16 %v3535
        %v3630 = vunpack.c.h.b16 %v3535
        %v3631 = vunpack.c.l.b16 %v3536
        %v3632 = vunpack.c.l.b16 %v3537
        %v3633 = vunpack.c.h.b16 %v3537
        %v3634 = vunpack.c.l.b16 %v3538
        %v3635 = vunpack.c.l.b16 %v3539
        %v3636 = vunpack.c.h.b16 %v3539
        %v3637 = vunpack.c.l.b16 %v3540
        %v3638 = vunpack.c.l.b16 %v3541
        %v3639 = vunpack.c.h.b16 %v3541
        %v3640 = vunpack.c.l.b16 %v3542
        %v3641 = vpack.c.b16 %v3596, %v3593
        %v3642 = vpack.c.b16 %v3597, %v3594
        %v3643 = vpack.c.b16 %v3598, %v3595
        %v3644 = vpack.c.b16 %v3602, %v3599
        %v3645 = vpack.c.b16 %v3603, %v3600
        %v3646 = vpack.c.b16 %v3604, %v3601
        %v3647 = vpack.c.b16 %v3608, %v3605
        %v3648 = vpack.c.b16 %v3609, %v3606
        %v3649 = vpack.c.b16 %v3610, %v3607
        %v3650 = vpack.c.b16 %v3614, %v3611
        %v3651 = vpack.c.b16 %v3615, %v3612
        %v3652 = vpack.c.b16 %v3616, %v3613
        %v3653 = vpack.c.b16 %v3620, %v3617
        %v3654 = vpack.c.b16 %v3621, %v3618
        %v3655 = vpack.c.b16 %v3622, %v3619
        %v3656 = vpack.c.b16 %v3626, %v3623
        %v3657 = vpack.c.b16 %v3627, %v3624
        %v3658 = vpack.c.b16 %v3628, %v3625
        %v3659 = vpack.c.b16 %v3632, %v3629
        %v3660 = vpack.c.b16 %v3633, %v3630
        %v3661 = vpack.c.b16 %v3634, %v3631
        %v3662 = vpack.c.b16 %v3638, %v3635
        %v3663 = vpack.c.b16 %v3639, %v3636
        %v3664 = vpack.c.b16 %v3640, %v3637
        %3689 = vmatprep.subr.bf16.mxu0 %v3642
        %3690 = vmatpush1.bf16.msra.mxu0 %v3641
        %3691 = vmatprep.subr.bf16.mxu0 %v3645
        %3692 = vmatpush1.bf16.msra.mxu0 %v3644
        %3693 = vmatprep.subr.bf16.mxu0 %v3648
        %3694 = vmatpush1.bf16.msra.mxu0 %v3647
        %3695 = vmatprep.subr.bf16.mxu0 %v3651
        %3696 = vmatpush1.bf16.msra.mxu0 %v3650
        %3697 = vmatprep.subr.bf16.mxu0 %v3654
        %3698 = vmatpush1.bf16.msra.mxu0 %v3653
        %3699 = vmatprep.subr.bf16.mxu0 %v3657
        %3700 = vmatpush1.bf16.msra.mxu0 %v3656
        %3701 = vmatprep.subr.bf16.mxu0 %v3660
        %3702 = vmatpush1.bf16.msra.mxu0 %v3659
        %3703 = vmatprep.subr.bf16.mxu0 %v3663
        %3704 = vmatpush1.bf16.msra.mxu0 %v3662
        %3705 = vmatprep.subr.bf16.mxu0 0
        %3706 = vmatpush1.bf16.msra.mxu0 0
        %3707 = vmatprep.subr.bf16.mxu0 0
        %3708 = vmatpush1.bf16.msra.mxu0 0
        %3709 = vmatprep.subr.bf16.mxu0 0
        %3710 = vmatpush1.bf16.msra.mxu0 0
        %3711 = vmatprep.subr.bf16.mxu0 0
        %3712 = vmatpush1.bf16.msra.mxu0 0
        %3713 = vmatprep.subr.bf16.mxu0 0
        %3714 = vmatpush1.bf16.msra.mxu0 0
        %3715 = vmatprep.subr.bf16.mxu0 0
        %3716 = vmatpush1.bf16.msra.mxu0 0
        %3717 = vmatprep.subr.bf16.mxu0 0
        %3718 = vmatpush1.bf16.msra.mxu0 0
        %3719 = vmatprep.subr.bf16.mxu0 0
        %3720 = vmatpush1.bf16.msra.mxu0 0
        %3721 = vmatprep.mubr.bf16.mxu0 0
        %3722 = vmatmul.mubr.bf16.gmra.mrb[0].mxu0 %v3509
        %v3723 = vpop.f32.mrb[0].mxu0
        %v3724 = vadd.f32 %v3549, %v3723
        %v3725 = vpop.f32.mrb[0].mxu0
        %v3726 = vadd.f32 %v3553, %v3725
        %v3727 = vpop.f32.mrb[0].mxu0
        %v3728 = vadd.f32 %v3549, %v3727
        %v3729 = vpop.f32.mrb[0].mxu0
        %v3730 = vadd.f32 %v3553, %v3729
        %3731 = vdwg.mxu0
        %3732 = vmatprep.subr.bf16.mxu0 0
        %3733 = vmatpush1.bf16.msra.mxu0 %v3643
        %3734 = vmatprep.subr.bf16.mxu0 0
        %3735 = vmatpush1.bf16.msra.mxu0 %v3646
        %3736 = vmatprep.subr.bf16.mxu0 0
        %3737 = vmatpush1.bf16.msra.mxu0 %v3649
        %3738 = vmatprep.subr.bf16.mxu0 0
        %3739 = vmatpush1.bf16.msra.mxu0 %v3652
        %3740 = vmatprep.subr.bf16.mxu0 0
        %3741 = vmatpush1.bf16.msra.mxu0 %v3655
        %3742 = vmatprep.subr.bf16.mxu0 0
        %3743 = vmatpush1.bf16.msra.mxu0 %v3658
        %3744 = vmatprep.subr.bf16.mxu0 0
        %3745 = vmatpush1.bf16.msra.mxu0 %v3661
        %3746 = vmatprep.subr.bf16.mxu0 0
        %3747 = vmatpush1.bf16.msra.mxu0 %v3664
        %3748 = vmatprep.subr.bf16.mxu0 0
        %3749 = vmatpush1.bf16.msra.mxu0 0
        %3750 = vmatprep.subr.bf16.mxu0 0
        %3751 = vmatpush1.bf16.msra.mxu0 0
        %3752 = vmatprep.subr.bf16.mxu0 0
        %3753 = vmatpush1.bf16.msra.mxu0 0
        %3754 = vmatprep.subr.bf16.mxu0 0
        %3755 = vmatpush1.bf16.msra.mxu0 0
        %3756 = vmatprep.subr.bf16.mxu0 0
        %3757 = vmatpush1.bf16.msra.mxu0 0
        %3758 = vmatprep.subr.bf16.mxu0 0
        %3759 = vmatpush1.bf16.msra.mxu0 0
        %3760 = vmatprep.subr.bf16.mxu0 0
        %3761 = vmatpush1.bf16.msra.mxu0 0
        %3762 = vmatprep.subr.bf16.mxu0 0
        %3763 = vmatpush1.bf16.msra.mxu0 0
        %3764 = vmatprep.mubr.bf16.mxu0 0
        %3765 = vmatmul.mubr.bf16.gmra.mrb[0].mxu0 %v3509
        %v3766 = vpop.f32.mrb[0].mxu0
        %v3767 = vadd.f32 %v3557, %v3766
        %v3768 = vpop.f32.mrb[0].mxu0
        %v3769 = vpop.f32.mrb[0].mxu0
        %v3770 = vadd.f32 %v3557, %v3769
        %v3771 = vpop.f32.mrb[0].mxu0
        %3772 = vdwg.mxu0
        %3775 = vrot.lane.b32.xlu0 %v3724, 112
        %v3776 = vpop.permute.xlu0 %3775
        %3777 = vrot.lane.b32.xlu0 %v3728, 112
        %v3778 = vpop.permute.xlu0 %3777
        %3781 = vrot.lane.b32.xlu0 %v3724, 96
        %v3782 = vpop.permute.xlu0 %3781
        %3783 = vrot.lane.b32.xlu0 %v3728, 96
        %v3784 = vpop.permute.xlu0 %3783
        %3787 = vrot.lane.b32.xlu0 %v3724, 80
        %v3788 = vpop.permute.xlu0 %3787
        %3789 = vrot.lane.b32.xlu0 %v3728, 80
        %v3790 = vpop.permute.xlu0 %3789
        %3793 = vrot.lane.b32.xlu0 %v3724, 64
        %v3794 = vpop.permute.xlu0 %3793
        %3795 = vrot.lane.b32.xlu0 %v3728, 64
        %v3796 = vpop.permute.xlu0 %3795
        %3799 = vrot.lane.b32.xlu0 %v3724, 48
        %v3800 = vpop.permute.xlu0 %3799
        %3801 = vrot.lane.b32.xlu0 %v3728, 48
        %v3802 = vpop.permute.xlu0 %3801
        %3805 = vrot.lane.b32.xlu0 %v3724, 32
        %v3806 = vpop.permute.xlu0 %3805
        %3807 = vrot.lane.b32.xlu0 %v3728, 32
        %v3808 = vpop.permute.xlu0 %3807
        %3811 = vrot.lane.b32.xlu0 %v3724, 16
        %v3812 = vpop.permute.xlu0 %3811
        %3813 = vrot.lane.b32.xlu0 %v3728, 16
        %v3814 = vpop.permute.xlu0 %3813
        %v3817 = vmul.f32 %v3724, 0.25
        %v3818 = vmul.f32 %v3728, 0.25
        %v3819 = vmul.f32 %v3776, 0.25
        %v3820 = vmul.f32 %v3778, 0.25
        %v3821 = vmul.f32 %v3782, 0.25
        %v3822 = vmul.f32 %v3784, 0.25
        %v3823 = vmul.f32 %v3788, 0.25
        %v3824 = vmul.f32 %v3790, 0.25
        %v3825 = vmul.f32 %v3794, 0.25
        %v3826 = vmul.f32 %v3796, 0.25
        %v3827 = vmul.f32 %v3800, 0.25
        %v3828 = vmul.f32 %v3802, 0.25
        %v3829 = vmul.f32 %v3806, 0.25
        %v3830 = vmul.f32 %v3808, 0.25
        %v3831 = vmul.f32 %v3812, 0.25
        %v3832 = vmul.f32 %v3814, 0.25
        %3835 = vrot.lane.b32.xlu0 %v3726, 112
        %v3836 = vpop.permute.xlu0 %3835
        %3837 = vrot.lane.b32.xlu0 %v3730, 112
        %v3838 = vpop.permute.xlu0 %3837
        %3841 = vrot.lane.b32.xlu0 %v3726, 96
        %v3842 = vpop.permute.xlu0 %3841
        %3843 = vrot.lane.b32.xlu0 %v3730, 96
        %v3844 = vpop.permute.xlu0 %3843
        %3847 = vrot.lane.b32.xlu0 %v3726, 80
        %v3848 = vpop.permute.xlu0 %3847
        %3849 = vrot.lane.b32.xlu0 %v3730, 80
        %v3850 = vpop.permute.xlu0 %3849
        %3853 = vrot.lane.b32.xlu0 %v3726, 64
        %v3854 = vpop.permute.xlu0 %3853
        %3855 = vrot.lane.b32.xlu0 %v3730, 64
        %v3856 = vpop.permute.xlu0 %3855
        %3859 = vrot.lane.b32.xlu0 %v3726, 48
        %v3860 = vpop.permute.xlu0 %3859
        %3861 = vrot.lane.b32.xlu0 %v3730, 48
        %v3862 = vpop.permute.xlu0 %3861
        %3865 = vrot.lane.b32.xlu0 %v3726, 32
        %v3866 = vpop.permute.xlu0 %3865
        %3867 = vrot.lane.b32.xlu0 %v3730, 32
        %v3868 = vpop.permute.xlu0 %3867
        %3871 = vrot.lane.b32.xlu0 %v3726, 16
        %v3872 = vpop.permute.xlu0 %3871
        %3873 = vrot.lane.b32.xlu0 %v3730, 16
        %v3874 = vpop.permute.xlu0 %3873
        %3879 = vrot.lane.b32.xlu0 %v3767, 112
        %v3880 = vpop.permute.xlu0 %3879
        %3881 = vrot.lane.b32.xlu0 %v3770, 112
        %v3882 = vpop.permute.xlu0 %3881
        %3885 = vrot.lane.b32.xlu0 %v3767, 96
        %v3886 = vpop.permute.xlu0 %3885
        %3887 = vrot.lane.b32.xlu0 %v3770, 96
        %v3888 = vpop.permute.xlu0 %3887
        %3891 = vrot.lane.b32.xlu0 %v3767, 80
        %v3892 = vpop.permute.xlu0 %3891
        %3893 = vrot.lane.b32.xlu0 %v3770, 80
        %v3894 = vpop.permute.xlu0 %3893
        %3897 = vrot.lane.b32.xlu0 %v3767, 64
        %v3898 = vpop.permute.xlu0 %3897
        %3899 = vrot.lane.b32.xlu0 %v3770, 64
        %v3900 = vpop.permute.xlu0 %3899
        %3903 = vrot.lane.b32.xlu0 %v3767, 48
        %v3904 = vpop.permute.xlu0 %3903
        %3905 = vrot.lane.b32.xlu0 %v3770, 48
        %v3906 = vpop.permute.xlu0 %3905
        %3909 = vrot.lane.b32.xlu0 %v3767, 32
        %v3910 = vpop.permute.xlu0 %3909
        %3911 = vrot.lane.b32.xlu0 %v3770, 32
        %v3912 = vpop.permute.xlu0 %3911
        %3915 = vrot.lane.b32.xlu0 %v3767, 16
        %v3916 = vpop.permute.xlu0 %3915
        %3917 = vrot.lane.b32.xlu0 %v3770, 16
        %v3918 = vpop.permute.xlu0 %3917
        %v3921 = vpack.c.bf16 %v3818, %v3817
        %v3922 = vpack.c.bf16 %v3820, %v3819
        %v3923 = vpack.c.bf16 %v3822, %v3821
        %v3924 = vpack.c.bf16 %v3824, %v3823
        %v3925 = vpack.c.bf16 %v3826, %v3825
        %v3926 = vpack.c.bf16 %v3828, %v3827
        %v3927 = vpack.c.bf16 %v3830, %v3829
        %v3928 = vpack.c.bf16 %v3832, %v3831
        %v3929 = vpack.c.bf16 %v3730, %v3726
        %v3930 = vpack.c.bf16 %v3838, %v3836
        %v3931 = vpack.c.bf16 %v3844, %v3842
        %v3932 = vpack.c.bf16 %v3850, %v3848
        %v3933 = vpack.c.bf16 %v3856, %v3854
        %v3934 = vpack.c.bf16 %v3862, %v3860
        %v3935 = vpack.c.bf16 %v3868, %v3866
        %v3936 = vpack.c.bf16 %v3874, %v3872
        %v3938 = vsel %vm1337, %v3921, 0
        %v3941 = vsel %vm1337, %v3929, 0
        %3943 = vmatprep.subr.bf16.mxu0 0
        %3944 = vmatpush1.bf16.xpose.msra.mxu0 %v3941
        %3945 = vmatprep.subr.bf16.mxu0 0
        %3946 = vmatpush1.bf16.xpose.msra.mxu0 0
        %3947 = vmatprep.subr.bf16.mxu0 0
        %3948 = vmatpush1.bf16.xpose.msra.mxu0 0
        %3949 = vmatprep.subr.bf16.mxu0 0
        %3950 = vmatpush1.bf16.xpose.msra.mxu0 0
        %3951 = vmatprep.subr.bf16.mxu0 0
        %3952 = vmatpush1.bf16.xpose.msra.mxu0 0
        %3953 = vmatprep.subr.bf16.mxu0 0
        %3954 = vmatpush1.bf16.xpose.msra.mxu0 0
        %3955 = vmatprep.subr.bf16.mxu0 0
        %3956 = vmatpush1.bf16.xpose.msra.mxu0 0
        %3957 = vmatprep.subr.bf16.mxu0 0
        %3958 = vmatpush1.bf16.xpose.msra.mxu0 0
        %3959 = vmatprep.subr.bf16.mxu0 0
        %3960 = vmatpush1.bf16.xpose.msra.mxu0 0
        %3961 = vmatprep.subr.bf16.mxu0 0
        %3962 = vmatpush1.bf16.xpose.msra.mxu0 0
        %3963 = vmatprep.subr.bf16.mxu0 0
        %3964 = vmatpush1.bf16.xpose.msra.mxu0 0
        %3965 = vmatprep.subr.bf16.mxu0 0
        %3966 = vmatpush1.bf16.xpose.msra.mxu0 0
        %3967 = vmatprep.subr.bf16.mxu0 0
        %3968 = vmatpush1.bf16.xpose.msra.mxu0 0
        %3969 = vmatprep.subr.bf16.mxu0 0
        %3970 = vmatpush1.bf16.xpose.msra.mxu0 0
        %3971 = vmatprep.subr.bf16.mxu0 0
        %3972 = vmatpush1.bf16.xpose.msra.mxu0 0
        %3973 = vmatprep.subr.bf16.mxu0 0
        %3974 = vmatpush1.bf16.xpose.msra.mxu0 0
        %3975 = vmatprep.mubr.bf16.mxu0 0
        %3976 = vmatmul.mubr.bf16.gmra.mrb[0].mxu0 %v3938
        %v3977 = vpop.f32.mrb[0].mxu0
        %v3978 = vadd.f32 0.0, %v3977
        %v3979 = vpop.f32.mrb[0].mxu0
        %v3980 = vpop.f32.mrb[0].mxu0
        %v3981 = vadd.f32 0.0, %v3980
        %v3982 = vpop.f32.mrb[0].mxu0
        %3983 = vdwg.mxu0
        %v3985 = vsel %vm1337, %v3922, 0
        %v3988 = vsel %vm1337, %v3930, 0
        %3990 = vmatprep.subr.bf16.mxu0 0
        %3991 = vmatpush1.bf16.xpose.msra.mxu0 %v3988
        %3992 = vmatprep.subr.bf16.mxu0 0
        %3993 = vmatpush1.bf16.xpose.msra.mxu0 0
        %3994 = vmatprep.subr.bf16.mxu0 0
        %3995 = vmatpush1.bf16.xpose.msra.mxu0 0
        %3996 = vmatprep.subr.bf16.mxu0 0
        %3997 = vmatpush1.bf16.xpose.msra.mxu0 0
        %3998 = vmatprep.subr.bf16.mxu0 0
        %3999 = vmatpush1.bf16.xpose.msra.mxu0 0
        %4000 = vmatprep.subr.bf16.mxu0 0
        %4001 = vmatpush1.bf16.xpose.msra.mxu0 0
        %4002 = vmatprep.subr.bf16.mxu0 0
        %4003 = vmatpush1.bf16.xpose.msra.mxu0 0
        %4004 = vmatprep.subr.bf16.mxu0 0
        %4005 = vmatpush1.bf16.xpose.msra.mxu0 0
        %4006 = vmatprep.subr.bf16.mxu0 0
        %4007 = vmatpush1.bf16.xpose.msra.mxu0 0
        %4008 = vmatprep.subr.bf16.mxu0 0
        %4009 = vmatpush1.bf16.xpose.msra.mxu0 0
        %4010 = vmatprep.subr.bf16.mxu0 0
        %4011 = vmatpush1.bf16.xpose.msra.mxu0 0
        %4012 = vmatprep.subr.bf16.mxu0 0
        %4013 = vmatpush1.bf16.xpose.msra.mxu0 0
        %4014 = vmatprep.subr.bf16.mxu0 0
        %4015 = vmatpush1.bf16.xpose.msra.mxu0 0
        %4016 = vmatprep.subr.bf16.mxu0 0
        %4017 = vmatpush1.bf16.xpose.msra.mxu0 0
        %4018 = vmatprep.subr.bf16.mxu0 0
        %4019 = vmatpush1.bf16.xpose.msra.mxu0 0
        %4020 = vmatprep.subr.bf16.mxu0 0
        %4021 = vmatpush1.bf16.xpose.msra.mxu0 0
        %4022 = vmatprep.mubr.bf16.mxu0 0
        %4023 = vmatmul.mubr.bf16.gmra.mrb[0].mxu0 %v3985
        %v4024 = vpop.f32.mrb[0].mxu0
        %v4025 = vadd.f32 0.0, %v4024
        %v4026 = vpop.f32.mrb[0].mxu0
        %v4027 = vpop.f32.mrb[0].mxu0
        %v4028 = vadd.f32 0.0, %v4027
        %v4029 = vpop.f32.mrb[0].mxu0
        %4030 = vdwg.mxu0
        %v4032 = vsel %vm1337, %v3923, 0
        %v4035 = vsel %vm1337, %v3931, 0
        %4037 = vmatprep.subr.bf16.mxu0 0
        %4038 = vmatpush1.bf16.xpose.msra.mxu0 %v4035
        %4039 = vmatprep.subr.bf16.mxu0 0
        %4040 = vmatpush1.bf16.xpose.msra.mxu0 0
        %4041 = vmatprep.subr.bf16.mxu0 0
        %4042 = vmatpush1.bf16.xpose.msra.mxu0 0
        %4043 = vmatprep.subr.bf16.mxu0 0
        %4044 = vmatpush1.bf16.xpose.msra.mxu0 0
        %4045 = vmatprep.subr.bf16.mxu0 0
        %4046 = vmatpush1.bf16.xpose.msra.mxu0 0
        %4047 = vmatprep.subr.bf16.mxu0 0
        %4048 = vmatpush1.bf16.xpose.msra.mxu0 0
        %4049 = vmatprep.subr.bf16.mxu0 0
        %4050 = vmatpush1.bf16.xpose.msra.mxu0 0
        %4051 = vmatprep.subr.bf16.mxu0 0
        %4052 = vmatpush1.bf16.xpose.msra.mxu0 0
        %4053 = vmatprep.subr.bf16.mxu0 0
        %4054 = vmatpush1.bf16.xpose.msra.mxu0 0
        %4055 = vmatprep.subr.bf16.mxu0 0
        %4056 = vmatpush1.bf16.xpose.msra.mxu0 0
        %4057 = vmatprep.subr.bf16.mxu0 0
        %4058 = vmatpush1.bf16.xpose.msra.mxu0 0
        %4059 = vmatprep.subr.bf16.mxu0 0
        %4060 = vmatpush1.bf16.xpose.msra.mxu0 0
        %4061 = vmatprep.subr.bf16.mxu0 0
        %4062 = vmatpush1.bf16.xpose.msra.mxu0 0
        %4063 = vmatprep.subr.bf16.mxu0 0
        %4064 = vmatpush1.bf16.xpose.msra.mxu0 0
        %4065 = vmatprep.subr.bf16.mxu0 0
        %4066 = vmatpush1.bf16.xpose.msra.mxu0 0
        %4067 = vmatprep.subr.bf16.mxu0 0
        %4068 = vmatpush1.bf16.xpose.msra.mxu0 0
        %4069 = vmatprep.mubr.bf16.mxu0 0
        %4070 = vmatmul.mubr.bf16.gmra.mrb[0].mxu0 %v4032
        %v4071 = vpop.f32.mrb[0].mxu0
        %v4072 = vadd.f32 0.0, %v4071
        %v4073 = vpop.f32.mrb[0].mxu0
        %v4074 = vpop.f32.mrb[0].mxu0
        %v4075 = vadd.f32 0.0, %v4074
        %v4076 = vpop.f32.mrb[0].mxu0
        %4077 = vdwg.mxu0
        %v4079 = vsel %vm1337, %v3924, 0
        %v4082 = vsel %vm1337, %v3932, 0
        %4084 = vmatprep.subr.bf16.mxu0 0
        %4085 = vmatpush1.bf16.xpose.msra.mxu0 %v4082
        %4086 = vmatprep.subr.bf16.mxu0 0
        %4087 = vmatpush1.bf16.xpose.msra.mxu0 0
        %4088 = vmatprep.subr.bf16.mxu0 0
        %4089 = vmatpush1.bf16.xpose.msra.mxu0 0
        %4090 = vmatprep.subr.bf16.mxu0 0
        %4091 = vmatpush1.bf16.xpose.msra.mxu0 0
        %4092 = vmatprep.subr.bf16.mxu0 0
        %4093 = vmatpush1.bf16.xpose.msra.mxu0 0
        %4094 = vmatprep.subr.bf16.mxu0 0
        %4095 = vmatpush1.bf16.xpose.msra.mxu0 0
        %4096 = vmatprep.subr.bf16.mxu0 0
        %4097 = vmatpush1.bf16.xpose.msra.mxu0 0
        %4098 = vmatprep.subr.bf16.mxu0 0
        %4099 = vmatpush1.bf16.xpose.msra.mxu0 0
        %4100 = vmatprep.subr.bf16.mxu0 0
        %4101 = vmatpush1.bf16.xpose.msra.mxu0 0
        %4102 = vmatprep.subr.bf16.mxu0 0
        %4103 = vmatpush1.bf16.xpose.msra.mxu0 0
        %4104 = vmatprep.subr.bf16.mxu0 0
        %4105 = vmatpush1.bf16.xpose.msra.mxu0 0
        %4106 = vmatprep.subr.bf16.mxu0 0
        %4107 = vmatpush1.bf16.xpose.msra.mxu0 0
        %4108 = vmatprep.subr.bf16.mxu0 0
        %4109 = vmatpush1.bf16.xpose.msra.mxu0 0
        %4110 = vmatprep.subr.bf16.mxu0 0
        %4111 = vmatpush1.bf16.xpose.msra.mxu0 0
        %4112 = vmatprep.subr.bf16.mxu0 0
        %4113 = vmatpush1.bf16.xpose.msra.mxu0 0
        %4114 = vmatprep.subr.bf16.mxu0 0
        %4115 = vmatpush1.bf16.xpose.msra.mxu0 0
        %4116 = vmatprep.mubr.bf16.mxu0 0
        %4117 = vmatmul.mubr.bf16.gmra.mrb[0].mxu0 %v4079
        %v4118 = vpop.f32.mrb[0].mxu0
        %v4119 = vadd.f32 0.0, %v4118
        %v4120 = vpop.f32.mrb[0].mxu0
        %v4121 = vpop.f32.mrb[0].mxu0
        %v4122 = vadd.f32 0.0, %v4121
        %v4123 = vpop.f32.mrb[0].mxu0
        %4124 = vdwg.mxu0
        %v4126 = vsel %vm1337, %v3925, 0
        %v4129 = vsel %vm1337, %v3933, 0
        %4131 = vmatprep.subr.bf16.mxu0 0
        %4132 = vmatpush1.bf16.xpose.msra.mxu0 %v4129
        %4133 = vmatprep.subr.bf16.mxu0 0
        %4134 = vmatpush1.bf16.xpose.msra.mxu0 0
        %4135 = vmatprep.subr.bf16.mxu0 0
        %4136 = vmatpush1.bf16.xpose.msra.mxu0 0
        %4137 = vmatprep.subr.bf16.mxu0 0
        %4138 = vmatpush1.bf16.xpose.msra.mxu0 0
        %4139 = vmatprep.subr.bf16.mxu0 0
        %4140 = vmatpush1.bf16.xpose.msra.mxu0 0
        %4141 = vmatprep.subr.bf16.mxu0 0
        %4142 = vmatpush1.bf16.xpose.msra.mxu0 0
        %4143 = vmatprep.subr.bf16.mxu0 0
        %4144 = vmatpush1.bf16.xpose.msra.mxu0 0
        %4145 = vmatprep.subr.bf16.mxu0 0
        %4146 = vmatpush1.bf16.xpose.msra.mxu0 0
        %4147 = vmatprep.subr.bf16.mxu0 0
        %4148 = vmatpush1.bf16.xpose.msra.mxu0 0
        %4149 = vmatprep.subr.bf16.mxu0 0
        %4150 = vmatpush1.bf16.xpose.msra.mxu0 0
        %4151 = vmatprep.subr.bf16.mxu0 0
        %4152 = vmatpush1.bf16.xpose.msra.mxu0 0
        %4153 = vmatprep.subr.bf16.mxu0 0
        %4154 = vmatpush1.bf16.xpose.msra.mxu0 0
        %4155 = vmatprep.subr.bf16.mxu0 0
        %4156 = vmatpush1.bf16.xpose.msra.mxu0 0
        %4157 = vmatprep.subr.bf16.mxu0 0
        %4158 = vmatpush1.bf16.xpose.msra.mxu0 0
        %4159 = vmatprep.subr.bf16.mxu0 0
        %4160 = vmatpush1.bf16.xpose.msra.mxu0 0
        %4161 = vmatprep.subr.bf16.mxu0 0
        %4162 = vmatpush1.bf16.xpose.msra.mxu0 0
        %4163 = vmatprep.mubr.bf16.mxu0 0
        %4164 = vmatmul.mubr.bf16.gmra.mrb[0].mxu0 %v4126
        %v4165 = vpop.f32.mrb[0].mxu0
        %v4166 = vadd.f32 0.0, %v4165
        %v4167 = vpop.f32.mrb[0].mxu0
        %v4168 = vpop.f32.mrb[0].mxu0
        %v4169 = vadd.f32 0.0, %v4168
        %v4170 = vpop.f32.mrb[0].mxu0
        %4171 = vdwg.mxu0
        %v4173 = vsel %vm1337, %v3926, 0
        %v4176 = vsel %vm1337, %v3934, 0
        %4178 = vmatprep.subr.bf16.mxu0 0
        %4179 = vmatpush1.bf16.xpose.msra.mxu0 %v4176
        %4180 = vmatprep.subr.bf16.mxu0 0
        %4181 = vmatpush1.bf16.xpose.msra.mxu0 0
        %4182 = vmatprep.subr.bf16.mxu0 0
        %4183 = vmatpush1.bf16.xpose.msra.mxu0 0
        %4184 = vmatprep.subr.bf16.mxu0 0
        %4185 = vmatpush1.bf16.xpose.msra.mxu0 0
        %4186 = vmatprep.subr.bf16.mxu0 0
        %4187 = vmatpush1.bf16.xpose.msra.mxu0 0
        %4188 = vmatprep.subr.bf16.mxu0 0
        %4189 = vmatpush1.bf16.xpose.msra.mxu0 0
        %4190 = vmatprep.subr.bf16.mxu0 0
        %4191 = vmatpush1.bf16.xpose.msra.mxu0 0
        %4192 = vmatprep.subr.bf16.mxu0 0
        %4193 = vmatpush1.bf16.xpose.msra.mxu0 0
        %4194 = vmatprep.subr.bf16.mxu0 0
        %4195 = vmatpush1.bf16.xpose.msra.mxu0 0
        %4196 = vmatprep.subr.bf16.mxu0 0
        %4197 = vmatpush1.bf16.xpose.msra.mxu0 0
        %4198 = vmatprep.subr.bf16.mxu0 0
        %4199 = vmatpush1.bf16.xpose.msra.mxu0 0
        %4200 = vmatprep.subr.bf16.mxu0 0
        %4201 = vmatpush1.bf16.xpose.msra.mxu0 0
        %4202 = vmatprep.subr.bf16.mxu0 0
        %4203 = vmatpush1.bf16.xpose.msra.mxu0 0
        %4204 = vmatprep.subr.bf16.mxu0 0
        %4205 = vmatpush1.bf16.xpose.msra.mxu0 0
        %4206 = vmatprep.subr.bf16.mxu0 0
        %4207 = vmatpush1.bf16.xpose.msra.mxu0 0
        %4208 = vmatprep.subr.bf16.mxu0 0
        %4209 = vmatpush1.bf16.xpose.msra.mxu0 0
        %4210 = vmatprep.mubr.bf16.mxu0 0
        %4211 = vmatmul.mubr.bf16.gmra.mrb[0].mxu0 %v4173
        %v4212 = vpop.f32.mrb[0].mxu0
        %v4213 = vadd.f32 0.0, %v4212
        %v4214 = vpop.f32.mrb[0].mxu0
        %v4215 = vpop.f32.mrb[0].mxu0
        %v4216 = vadd.f32 0.0, %v4215
        %v4217 = vpop.f32.mrb[0].mxu0
        %4218 = vdwg.mxu0
        %v4220 = vsel %vm1337, %v3927, 0
        %v4223 = vsel %vm1337, %v3935, 0
        %4225 = vmatprep.subr.bf16.mxu0 0
        %4226 = vmatpush1.bf16.xpose.msra.mxu0 %v4223
        %4227 = vmatprep.subr.bf16.mxu0 0
        %4228 = vmatpush1.bf16.xpose.msra.mxu0 0
        %4229 = vmatprep.subr.bf16.mxu0 0
        %4230 = vmatpush1.bf16.xpose.msra.mxu0 0
        %4231 = vmatprep.subr.bf16.mxu0 0
        %4232 = vmatpush1.bf16.xpose.msra.mxu0 0
        %4233 = vmatprep.subr.bf16.mxu0 0
        %4234 = vmatpush1.bf16.xpose.msra.mxu0 0
        %4235 = vmatprep.subr.bf16.mxu0 0
        %4236 = vmatpush1.bf16.xpose.msra.mxu0 0
        %4237 = vmatprep.subr.bf16.mxu0 0
        %4238 = vmatpush1.bf16.xpose.msra.mxu0 0
        %4239 = vmatprep.subr.bf16.mxu0 0
        %4240 = vmatpush1.bf16.xpose.msra.mxu0 0
        %4241 = vmatprep.subr.bf16.mxu0 0
        %4242 = vmatpush1.bf16.xpose.msra.mxu0 0
        %4243 = vmatprep.subr.bf16.mxu0 0
        %4244 = vmatpush1.bf16.xpose.msra.mxu0 0
        %4245 = vmatprep.subr.bf16.mxu0 0
        %4246 = vmatpush1.bf16.xpose.msra.mxu0 0
        %4247 = vmatprep.subr.bf16.mxu0 0
        %4248 = vmatpush1.bf16.xpose.msra.mxu0 0
        %4249 = vmatprep.subr.bf16.mxu0 0
        %4250 = vmatpush1.bf16.xpose.msra.mxu0 0
        %4251 = vmatprep.subr.bf16.mxu0 0
        %4252 = vmatpush1.bf16.xpose.msra.mxu0 0
        %4253 = vmatprep.subr.bf16.mxu0 0
        %4254 = vmatpush1.bf16.xpose.msra.mxu0 0
        %4255 = vmatprep.subr.bf16.mxu0 0
        %4256 = vmatpush1.bf16.xpose.msra.mxu0 0
        %4257 = vmatprep.mubr.bf16.mxu0 0
        %4258 = vmatmul.mubr.bf16.gmra.mrb[0].mxu0 %v4220
        %v4259 = vpop.f32.mrb[0].mxu0
        %v4260 = vadd.f32 0.0, %v4259
        %v4261 = vpop.f32.mrb[0].mxu0
        %v4262 = vpop.f32.mrb[0].mxu0
        %v4263 = vadd.f32 0.0, %v4262
        %v4264 = vpop.f32.mrb[0].mxu0
        %4265 = vdwg.mxu0
        %v4267 = vsel %vm1337, %v3928, 0
        %v4270 = vsel %vm1337, %v3936, 0
        %4272 = vmatprep.subr.bf16.mxu0 0
        %4273 = vmatpush1.bf16.xpose.msra.mxu0 %v4270
        %4274 = vmatprep.subr.bf16.mxu0 0
        %4275 = vmatpush1.bf16.xpose.msra.mxu0 0
        %4276 = vmatprep.subr.bf16.mxu0 0
        %4277 = vmatpush1.bf16.xpose.msra.mxu0 0
        %4278 = vmatprep.subr.bf16.mxu0 0
        %4279 = vmatpush1.bf16.xpose.msra.mxu0 0
        %4280 = vmatprep.subr.bf16.mxu0 0
        %4281 = vmatpush1.bf16.xpose.msra.mxu0 0
        %4282 = vmatprep.subr.bf16.mxu0 0
        %4283 = vmatpush1.bf16.xpose.msra.mxu0 0
        %4284 = vmatprep.subr.bf16.mxu0 0
        %4285 = vmatpush1.bf16.xpose.msra.mxu0 0
        %4286 = vmatprep.subr.bf16.mxu0 0
        %4287 = vmatpush1.bf16.xpose.msra.mxu0 0
        %4288 = vmatprep.subr.bf16.mxu0 0
        %4289 = vmatpush1.bf16.xpose.msra.mxu0 0
        %4290 = vmatprep.subr.bf16.mxu0 0
        %4291 = vmatpush1.bf16.xpose.msra.mxu0 0
        %4292 = vmatprep.subr.bf16.mxu0 0
        %4293 = vmatpush1.bf16.xpose.msra.mxu0 0
        %4294 = vmatprep.subr.bf16.mxu0 0
        %4295 = vmatpush1.bf16.xpose.msra.mxu0 0
        %4296 = vmatprep.subr.bf16.mxu0 0
        %4297 = vmatpush1.bf16.xpose.msra.mxu0 0
        %4298 = vmatprep.subr.bf16.mxu0 0
        %4299 = vmatpush1.bf16.xpose.msra.mxu0 0
        %4300 = vmatprep.subr.bf16.mxu0 0
        %4301 = vmatpush1.bf16.xpose.msra.mxu0 0
        %4302 = vmatprep.subr.bf16.mxu0 0
        %4303 = vmatpush1.bf16.xpose.msra.mxu0 0
        %4304 = vmatprep.mubr.bf16.mxu0 0
        %4305 = vmatmul.mubr.bf16.gmra.mrb[0].mxu0 %v4267
        %v4306 = vpop.f32.mrb[0].mxu0
        %v4307 = vadd.f32 0.0, %v4306
        %v4308 = vpop.f32.mrb[0].mxu0
        %v4309 = vpop.f32.mrb[0].mxu0
        %v4310 = vadd.f32 0.0, %v4309
        %v4311 = vpop.f32.mrb[0].mxu0
        %4312 = vdwg.mxu0
        %v4313 = vsel %vm1715, %v3978, -1e+30
        %v4314 = vsel %vm1715, %v3981, -1e+30
        %v4315 = vsel %vm1715, %v4025, -1e+30
        %v4316 = vsel %vm1715, %v4028, -1e+30
        %v4317 = vsel %vm1715, %v4072, -1e+30
        %v4318 = vsel %vm1715, %v4075, -1e+30
        %v4319 = vsel %vm1715, %v4119, -1e+30
        %v4320 = vsel %vm1715, %v4122, -1e+30
        %v4321 = vsel %vm1715, %v4166, -1e+30
        %v4322 = vsel %vm1715, %v4169, -1e+30
        %v4323 = vsel %vm1715, %v4213, -1e+30
        %v4324 = vsel %vm1715, %v4216, -1e+30
        %v4325 = vsel %vm1715, %v4260, -1e+30
        %v4326 = vsel %vm1715, %v4263, -1e+30
        %v4327 = vsel %vm1715, %v4307, -1e+30
        %v4328 = vsel %vm1715, %v4310, -1e+30
        %v4329 = vsel %vm1337, %v4313, -inf
        %4330 = vmax.xlane.f32.xlu0 %v4329
        %v4331 = vpop.xlane.xlu0 %4330
        %v4332 = vsel %vm1337, %v4314, -inf
        %4333 = vmax.xlane.f32.xlu0 %v4332
        %v4334 = vpop.xlane.xlu0 %4333
        %v4335 = vsel %vm1337, %v4315, -inf
        %4336 = vmax.xlane.f32.xlu0 %v4335
        %v4337 = vpop.xlane.xlu0 %4336
        %v4338 = vsel %vm1337, %v4316, -inf
        %4339 = vmax.xlane.f32.xlu0 %v4338
        %v4340 = vpop.xlane.xlu0 %4339
        %v4341 = vsel %vm1337, %v4317, -inf
        %4342 = vmax.xlane.f32.xlu0 %v4341
        %v4343 = vpop.xlane.xlu0 %4342
        %v4344 = vsel %vm1337, %v4318, -inf
        %4345 = vmax.xlane.f32.xlu0 %v4344
        %v4346 = vpop.xlane.xlu0 %4345
        %v4347 = vsel %vm1337, %v4319, -inf
        %4348 = vmax.xlane.f32.xlu0 %v4347
        %v4349 = vpop.xlane.xlu0 %4348
        %v4350 = vsel %vm1337, %v4320, -inf
        %4351 = vmax.xlane.f32.xlu0 %v4350
        %v4352 = vpop.xlane.xlu0 %4351
        %v4353 = vsel %vm1337, %v4321, -inf
        %4354 = vmax.xlane.f32.xlu0 %v4353
        %v4355 = vpop.xlane.xlu0 %4354
        %v4356 = vsel %vm1337, %v4322, -inf
        %4357 = vmax.xlane.f32.xlu0 %v4356
        %v4358 = vpop.xlane.xlu0 %4357
        %v4359 = vsel %vm1337, %v4323, -inf
        %4360 = vmax.xlane.f32.xlu0 %v4359
        %v4361 = vpop.xlane.xlu0 %4360
        %v4362 = vsel %vm1337, %v4324, -inf
        %4363 = vmax.xlane.f32.xlu0 %v4362
        %v4364 = vpop.xlane.xlu0 %4363
        %v4365 = vsel %vm1337, %v4325, -inf
        %4366 = vmax.xlane.f32.xlu0 %v4365
        %v4367 = vpop.xlane.xlu0 %4366
        %v4368 = vsel %vm1337, %v4326, -inf
        %4369 = vmax.xlane.f32.xlu0 %v4368
        %v4370 = vpop.xlane.xlu0 %4369
        %v4371 = vsel %vm1337, %v4327, -inf
        %4372 = vmax.xlane.f32.xlu0 %v4371
        %v4373 = vpop.xlane.xlu0 %4372
        %v4374 = vsel %vm1337, %v4328, -inf
        %4375 = vmax.xlane.f32.xlu0 %v4374
        %v4376 = vpop.xlane.xlu0 %4375
        %v4377 = vsub.f32 %v4313, %v4331
        %v4378 = vsub.f32 %v4314, %v4334
        %v4379 = vsub.f32 %v4315, %v4337
        %v4380 = vsub.f32 %v4316, %v4340
        %v4381 = vsub.f32 %v4317, %v4343
        %v4382 = vsub.f32 %v4318, %v4346
        %v4383 = vsub.f32 %v4319, %v4349
        %v4384 = vsub.f32 %v4320, %v4352
        %v4385 = vsub.f32 %v4321, %v4355
        %v4386 = vsub.f32 %v4322, %v4358
        %v4387 = vsub.f32 %v4323, %v4361
        %v4388 = vsub.f32 %v4324, %v4364
        %v4389 = vsub.f32 %v4325, %v4367
        %v4390 = vsub.f32 %v4326, %v4370
        %v4391 = vsub.f32 %v4327, %v4373
        %v4392 = vsub.f32 %v4328, %v4376
        %v4393 = vmul.f32 %v4377, 1.442695
        %v4394 = vpow.pop %v4393
        %v4395 = vmul.f32 %v4378, 1.442695
        %v4396 = vpow.pop %v4395
        %v4397 = vmul.f32 %v4379, 1.442695
        %v4398 = vpow.pop %v4397
        %v4399 = vmul.f32 %v4380, 1.442695
        %v4400 = vpow.pop %v4399
        %v4401 = vmul.f32 %v4381, 1.442695
        %v4402 = vpow.pop %v4401
        %v4403 = vmul.f32 %v4382, 1.442695
        %v4404 = vpow.pop %v4403
        %v4405 = vmul.f32 %v4383, 1.442695
        %v4406 = vpow.pop %v4405
        %v4407 = vmul.f32 %v4384, 1.442695
        %v4408 = vpow.pop %v4407
        %v4409 = vmul.f32 %v4385, 1.442695
        %v4410 = vpow.pop %v4409
        %v4411 = vmul.f32 %v4386, 1.442695
        %v4412 = vpow.pop %v4411
        %v4413 = vmul.f32 %v4387, 1.442695
        %v4414 = vpow.pop %v4413
        %v4415 = vmul.f32 %v4388, 1.442695
        %v4416 = vpow.pop %v4415
        %v4417 = vmul.f32 %v4389, 1.442695
        %v4418 = vpow.pop %v4417
        %v4419 = vmul.f32 %v4390, 1.442695
        %v4420 = vpow.pop %v4419
        %v4421 = vmul.f32 %v4391, 1.442695
        %v4422 = vpow.pop %v4421
        %v4423 = vmul.f32 %v4392, 1.442695
        %v4424 = vpow.pop %v4423
        %v4425 = vsel %vm1337, %v4394, 0.0
        %4426 = vadd.xlane.f32.xlu0 %v4425
        %v4427 = vpop.xlane.xlu0 %4426
        %v4428 = vsel %vm1337, %v4396, 0.0
        %4429 = vadd.xlane.f32.xlu0 %v4428
        %v4430 = vpop.xlane.xlu0 %4429
        %v4431 = vsel %vm1337, %v4398, 0.0
        %4432 = vadd.xlane.f32.xlu0 %v4431
        %v4433 = vpop.xlane.xlu0 %4432
        %v4434 = vsel %vm1337, %v4400, 0.0
        %4435 = vadd.xlane.f32.xlu0 %v4434
        %v4436 = vpop.xlane.xlu0 %4435
        %v4437 = vsel %vm1337, %v4402, 0.0
        %4438 = vadd.xlane.f32.xlu0 %v4437
        %v4439 = vpop.xlane.xlu0 %4438
        %v4440 = vsel %vm1337, %v4404, 0.0
        %4441 = vadd.xlane.f32.xlu0 %v4440
        %v4442 = vpop.xlane.xlu0 %4441
        %v4443 = vsel %vm1337, %v4406, 0.0
        %4444 = vadd.xlane.f32.xlu0 %v4443
        %v4445 = vpop.xlane.xlu0 %4444
        %v4446 = vsel %vm1337, %v4408, 0.0
        %4447 = vadd.xlane.f32.xlu0 %v4446
        %v4448 = vpop.xlane.xlu0 %4447
        %v4449 = vsel %vm1337, %v4410, 0.0
        %4450 = vadd.xlane.f32.xlu0 %v4449
        %v4451 = vpop.xlane.xlu0 %4450
        %v4452 = vsel %vm1337, %v4412, 0.0
        %4453 = vadd.xlane.f32.xlu0 %v4452
        %v4454 = vpop.xlane.xlu0 %4453
        %v4455 = vsel %vm1337, %v4414, 0.0
        %4456 = vadd.xlane.f32.xlu0 %v4455
        %v4457 = vpop.xlane.xlu0 %4456
        %v4458 = vsel %vm1337, %v4416, 0.0
        %4459 = vadd.xlane.f32.xlu0 %v4458
        %v4460 = vpop.xlane.xlu0 %4459
        %v4461 = vsel %vm1337, %v4418, 0.0
        %4462 = vadd.xlane.f32.xlu0 %v4461
        %v4463 = vpop.xlane.xlu0 %4462
        %v4464 = vsel %vm1337, %v4420, 0.0
        %4465 = vadd.xlane.f32.xlu0 %v4464
        %v4466 = vpop.xlane.xlu0 %4465
        %v4467 = vsel %vm1337, %v4422, 0.0
        %4468 = vadd.xlane.f32.xlu0 %v4467
        %v4469 = vpop.xlane.xlu0 %4468
        %v4470 = vsel %vm1337, %v4424, 0.0
        %4471 = vadd.xlane.f32.xlu0 %v4470
        %v4472 = vpop.xlane.xlu0 %4471
        %v4473 = vrcp.pop %v4427
        %v4474 = vrcp.pop %v4430
        %v4475 = vrcp.pop %v4433
        %v4476 = vrcp.pop %v4436
        %v4477 = vrcp.pop %v4439
        %v4478 = vrcp.pop %v4442
        %v4479 = vrcp.pop %v4445
        %v4480 = vrcp.pop %v4448
        %v4481 = vrcp.pop %v4451
        %v4482 = vrcp.pop %v4454
        %v4483 = vrcp.pop %v4457
        %v4484 = vrcp.pop %v4460
        %v4485 = vrcp.pop %v4463
        %v4486 = vrcp.pop %v4466
        %v4487 = vrcp.pop %v4469
        %v4488 = vrcp.pop %v4472
        %v4489 = vmul.f32 %v4394, %v4473
        %v4490 = vmul.f32 %v4396, %v4474
        %v4491 = vmul.f32 %v4398, %v4475
        %v4492 = vmul.f32 %v4400, %v4476
        %v4493 = vmul.f32 %v4402, %v4477
        %v4494 = vmul.f32 %v4404, %v4478
        %v4495 = vmul.f32 %v4406, %v4479
        %v4496 = vmul.f32 %v4408, %v4480
        %v4497 = vmul.f32 %v4410, %v4481
        %v4498 = vmul.f32 %v4412, %v4482
        %v4499 = vmul.f32 %v4414, %v4483
        %v4500 = vmul.f32 %v4416, %v4484
        %v4501 = vmul.f32 %v4418, %v4485
        %v4502 = vmul.f32 %v4420, %v4486
        %v4503 = vmul.f32 %v4422, %v4487
        %v4504 = vmul.f32 %v4424, %v4488
        %v4505 = vpack.c.bf16 %v4490, %v4489
        %v4506 = vpack.c.bf16 %v4492, %v4491
        %v4507 = vpack.c.bf16 %v4494, %v4493
        %v4508 = vpack.c.bf16 %v4496, %v4495
        %v4509 = vpack.c.bf16 %v4498, %v4497
        %v4510 = vpack.c.bf16 %v4500, %v4499
        %v4511 = vpack.c.bf16 %v4502, %v4501
        %v4512 = vpack.c.bf16 %v4504, %v4503
        %v4513 = vpack.c.bf16 %v3770, %v3767
        %v4514 = vpack.c.bf16 %v3882, %v3880
        %v4515 = vpack.c.bf16 %v3888, %v3886
        %v4516 = vpack.c.bf16 %v3894, %v3892
        %v4517 = vpack.c.bf16 %v3900, %v3898
        %v4518 = vpack.c.bf16 %v3906, %v3904
        %v4519 = vpack.c.bf16 %v3912, %v3910
        %v4520 = vpack.c.bf16 %v3918, %v3916
        %v4522 = vsel %vm1337, %v4505, 0
        %4524 = vmatprep.subr.bf16.mxu0 0
        %4525 = vmatpush1.bf16.msra.mxu0 %v4513
        %4526 = vmatprep.subr.bf16.mxu0 0
        %4527 = vmatpush1.bf16.msra.mxu0 0
        %4528 = vmatprep.subr.bf16.mxu0 0
        %4529 = vmatpush1.bf16.msra.mxu0 0
        %4530 = vmatprep.subr.bf16.mxu0 0
        %4531 = vmatpush1.bf16.msra.mxu0 0
        %4532 = vmatprep.subr.bf16.mxu0 0
        %4533 = vmatpush1.bf16.msra.mxu0 0
        %4534 = vmatprep.subr.bf16.mxu0 0
        %4535 = vmatpush1.bf16.msra.mxu0 0
        %4536 = vmatprep.subr.bf16.mxu0 0
        %4537 = vmatpush1.bf16.msra.mxu0 0
        %4538 = vmatprep.subr.bf16.mxu0 0
        %4539 = vmatpush1.bf16.msra.mxu0 0
        %4540 = vmatprep.subr.bf16.mxu0 0
        %4541 = vmatpush1.bf16.msra.mxu0 0
        %4542 = vmatprep.subr.bf16.mxu0 0
        %4543 = vmatpush1.bf16.msra.mxu0 0
        %4544 = vmatprep.subr.bf16.mxu0 0
        %4545 = vmatpush1.bf16.msra.mxu0 0
        %4546 = vmatprep.subr.bf16.mxu0 0
        %4547 = vmatpush1.bf16.msra.mxu0 0
        %4548 = vmatprep.subr.bf16.mxu0 0
        %4549 = vmatpush1.bf16.msra.mxu0 0
        %4550 = vmatprep.subr.bf16.mxu0 0
        %4551 = vmatpush1.bf16.msra.mxu0 0
        %4552 = vmatprep.subr.bf16.mxu0 0
        %4553 = vmatpush1.bf16.msra.mxu0 0
        %4554 = vmatprep.subr.bf16.mxu0 0
        %4555 = vmatpush1.bf16.msra.mxu0 0
        %4556 = vmatprep.mubr.bf16.mxu0 0
        %4557 = vmatmul.mubr.bf16.gmra.mrb[0].mxu0 %v4522
        %v4558 = vpop.f32.mrb[0].mxu0
        %v4559 = vadd.f32 0.0, %v4558
        %v4560 = vpop.f32.mrb[0].mxu0
        %v4561 = vpop.f32.mrb[0].mxu0
        %v4562 = vadd.f32 0.0, %v4561
        %v4563 = vpop.f32.mrb[0].mxu0
        %4564 = vdwg.mxu0
        %v4566 = vsel %vm1337, %v4506, 0
        %4568 = vmatprep.subr.bf16.mxu0 0
        %4569 = vmatpush1.bf16.msra.mxu0 %v4514
        %4570 = vmatprep.subr.bf16.mxu0 0
        %4571 = vmatpush1.bf16.msra.mxu0 0
        %4572 = vmatprep.subr.bf16.mxu0 0
        %4573 = vmatpush1.bf16.msra.mxu0 0
        %4574 = vmatprep.subr.bf16.mxu0 0
        %4575 = vmatpush1.bf16.msra.mxu0 0
        %4576 = vmatprep.subr.bf16.mxu0 0
        %4577 = vmatpush1.bf16.msra.mxu0 0
        %4578 = vmatprep.subr.bf16.mxu0 0
        %4579 = vmatpush1.bf16.msra.mxu0 0
        %4580 = vmatprep.subr.bf16.mxu0 0
        %4581 = vmatpush1.bf16.msra.mxu0 0
        %4582 = vmatprep.subr.bf16.mxu0 0
        %4583 = vmatpush1.bf16.msra.mxu0 0
        %4584 = vmatprep.subr.bf16.mxu0 0
        %4585 = vmatpush1.bf16.msra.mxu0 0
        %4586 = vmatprep.subr.bf16.mxu0 0
        %4587 = vmatpush1.bf16.msra.mxu0 0
        %4588 = vmatprep.subr.bf16.mxu0 0
        %4589 = vmatpush1.bf16.msra.mxu0 0
        %4590 = vmatprep.subr.bf16.mxu0 0
        %4591 = vmatpush1.bf16.msra.mxu0 0
        %4592 = vmatprep.subr.bf16.mxu0 0
        %4593 = vmatpush1.bf16.msra.mxu0 0
        %4594 = vmatprep.subr.bf16.mxu0 0
        %4595 = vmatpush1.bf16.msra.mxu0 0
        %4596 = vmatprep.subr.bf16.mxu0 0
        %4597 = vmatpush1.bf16.msra.mxu0 0
        %4598 = vmatprep.subr.bf16.mxu0 0
        %4599 = vmatpush1.bf16.msra.mxu0 0
        %4600 = vmatprep.mubr.bf16.mxu0 0
        %4601 = vmatmul.mubr.bf16.gmra.mrb[0].mxu0 %v4566
        %v4602 = vpop.f32.mrb[0].mxu0
        %v4603 = vadd.f32 0.0, %v4602
        %v4604 = vpop.f32.mrb[0].mxu0
        %v4605 = vpop.f32.mrb[0].mxu0
        %v4606 = vadd.f32 0.0, %v4605
        %v4607 = vpop.f32.mrb[0].mxu0
        %4608 = vdwg.mxu0
        %v4610 = vsel %vm1337, %v4507, 0
        %4612 = vmatprep.subr.bf16.mxu0 0
        %4613 = vmatpush1.bf16.msra.mxu0 %v4515
        %4614 = vmatprep.subr.bf16.mxu0 0
        %4615 = vmatpush1.bf16.msra.mxu0 0
        %4616 = vmatprep.subr.bf16.mxu0 0
        %4617 = vmatpush1.bf16.msra.mxu0 0
        %4618 = vmatprep.subr.bf16.mxu0 0
        %4619 = vmatpush1.bf16.msra.mxu0 0
        %4620 = vmatprep.subr.bf16.mxu0 0
        %4621 = vmatpush1.bf16.msra.mxu0 0
        %4622 = vmatprep.subr.bf16.mxu0 0
        %4623 = vmatpush1.bf16.msra.mxu0 0
        %4624 = vmatprep.subr.bf16.mxu0 0
        %4625 = vmatpush1.bf16.msra.mxu0 0
        %4626 = vmatprep.subr.bf16.mxu0 0
        %4627 = vmatpush1.bf16.msra.mxu0 0
        %4628 = vmatprep.subr.bf16.mxu0 0
        %4629 = vmatpush1.bf16.msra.mxu0 0
        %4630 = vmatprep.subr.bf16.mxu0 0
        %4631 = vmatpush1.bf16.msra.mxu0 0
        %4632 = vmatprep.subr.bf16.mxu0 0
        %4633 = vmatpush1.bf16.msra.mxu0 0
        %4634 = vmatprep.subr.bf16.mxu0 0
        %4635 = vmatpush1.bf16.msra.mxu0 0
        %4636 = vmatprep.subr.bf16.mxu0 0
        %4637 = vmatpush1.bf16.msra.mxu0 0
        %4638 = vmatprep.subr.bf16.mxu0 0
        %4639 = vmatpush1.bf16.msra.mxu0 0
        %4640 = vmatprep.subr.bf16.mxu0 0
        %4641 = vmatpush1.bf16.msra.mxu0 0
        %4642 = vmatprep.subr.bf16.mxu0 0
        %4643 = vmatpush1.bf16.msra.mxu0 0
        %4644 = vmatprep.mubr.bf16.mxu0 0
        %4645 = vmatmul.mubr.bf16.gmra.mrb[0].mxu0 %v4610
        %v4646 = vpop.f32.mrb[0].mxu0
        %v4647 = vadd.f32 0.0, %v4646
        %v4648 = vpop.f32.mrb[0].mxu0
        %v4649 = vpop.f32.mrb[0].mxu0
        %v4650 = vadd.f32 0.0, %v4649
        %v4651 = vpop.f32.mrb[0].mxu0
        %4652 = vdwg.mxu0
        %v4654 = vsel %vm1337, %v4508, 0
        %4656 = vmatprep.subr.bf16.mxu0 0
        %4657 = vmatpush1.bf16.msra.mxu0 %v4516
        %4658 = vmatprep.subr.bf16.mxu0 0
        %4659 = vmatpush1.bf16.msra.mxu0 0
        %4660 = vmatprep.subr.bf16.mxu0 0
        %4661 = vmatpush1.bf16.msra.mxu0 0
        %4662 = vmatprep.subr.bf16.mxu0 0
        %4663 = vmatpush1.bf16.msra.mxu0 0
        %4664 = vmatprep.subr.bf16.mxu0 0
        %4665 = vmatpush1.bf16.msra.mxu0 0
        %4666 = vmatprep.subr.bf16.mxu0 0
        %4667 = vmatpush1.bf16.msra.mxu0 0
        %4668 = vmatprep.subr.bf16.mxu0 0
        %4669 = vmatpush1.bf16.msra.mxu0 0
        %4670 = vmatprep.subr.bf16.mxu0 0
        %4671 = vmatpush1.bf16.msra.mxu0 0
        %4672 = vmatprep.subr.bf16.mxu0 0
        %4673 = vmatpush1.bf16.msra.mxu0 0
        %4674 = vmatprep.subr.bf16.mxu0 0
        %4675 = vmatpush1.bf16.msra.mxu0 0
        %4676 = vmatprep.subr.bf16.mxu0 0
        %4677 = vmatpush1.bf16.msra.mxu0 0
        %4678 = vmatprep.subr.bf16.mxu0 0
        %4679 = vmatpush1.bf16.msra.mxu0 0
        %4680 = vmatprep.subr.bf16.mxu0 0
        %4681 = vmatpush1.bf16.msra.mxu0 0
        %4682 = vmatprep.subr.bf16.mxu0 0
        %4683 = vmatpush1.bf16.msra.mxu0 0
        %4684 = vmatprep.subr.bf16.mxu0 0
        %4685 = vmatpush1.bf16.msra.mxu0 0
        %4686 = vmatprep.subr.bf16.mxu0 0
        %4687 = vmatpush1.bf16.msra.mxu0 0
        %4688 = vmatprep.mubr.bf16.mxu0 0
        %4689 = vmatmul.mubr.bf16.gmra.mrb[0].mxu0 %v4654
        %v4690 = vpop.f32.mrb[0].mxu0
        %v4691 = vadd.f32 0.0, %v4690
        %v4692 = vpop.f32.mrb[0].mxu0
        %v4693 = vpop.f32.mrb[0].mxu0
        %v4694 = vadd.f32 0.0, %v4693
        %v4695 = vpop.f32.mrb[0].mxu0
        %4696 = vdwg.mxu0
        %v4698 = vsel %vm1337, %v4509, 0
        %4700 = vmatprep.subr.bf16.mxu0 0
        %4701 = vmatpush1.bf16.msra.mxu0 %v4517
        %4702 = vmatprep.subr.bf16.mxu0 0
        %4703 = vmatpush1.bf16.msra.mxu0 0
        %4704 = vmatprep.subr.bf16.mxu0 0
        %4705 = vmatpush1.bf16.msra.mxu0 0
        %4706 = vmatprep.subr.bf16.mxu0 0
        %4707 = vmatpush1.bf16.msra.mxu0 0
        %4708 = vmatprep.subr.bf16.mxu0 0
        %4709 = vmatpush1.bf16.msra.mxu0 0
        %4710 = vmatprep.subr.bf16.mxu0 0
        %4711 = vmatpush1.bf16.msra.mxu0 0
        %4712 = vmatprep.subr.bf16.mxu0 0
        %4713 = vmatpush1.bf16.msra.mxu0 0
        %4714 = vmatprep.subr.bf16.mxu0 0
        %4715 = vmatpush1.bf16.msra.mxu0 0
        %4716 = vmatprep.subr.bf16.mxu0 0
        %4717 = vmatpush1.bf16.msra.mxu0 0
        %4718 = vmatprep.subr.bf16.mxu0 0
        %4719 = vmatpush1.bf16.msra.mxu0 0
        %4720 = vmatprep.subr.bf16.mxu0 0
        %4721 = vmatpush1.bf16.msra.mxu0 0
        %4722 = vmatprep.subr.bf16.mxu0 0
        %4723 = vmatpush1.bf16.msra.mxu0 0
        %4724 = vmatprep.subr.bf16.mxu0 0
        %4725 = vmatpush1.bf16.msra.mxu0 0
        %4726 = vmatprep.subr.bf16.mxu0 0
        %4727 = vmatpush1.bf16.msra.mxu0 0
        %4728 = vmatprep.subr.bf16.mxu0 0
        %4729 = vmatpush1.bf16.msra.mxu0 0
        %4730 = vmatprep.subr.bf16.mxu0 0
        %4731 = vmatpush1.bf16.msra.mxu0 0
        %4732 = vmatprep.mubr.bf16.mxu0 0
        %4733 = vmatmul.mubr.bf16.gmra.mrb[0].mxu0 %v4698
        %v4734 = vpop.f32.mrb[0].mxu0
        %v4735 = vadd.f32 0.0, %v4734
        %v4736 = vpop.f32.mrb[0].mxu0
        %v4737 = vpop.f32.mrb[0].mxu0
        %v4738 = vadd.f32 0.0, %v4737
        %v4739 = vpop.f32.mrb[0].mxu0
        %4740 = vdwg.mxu0
        %v4742 = vsel %vm1337, %v4510, 0
        %4744 = vmatprep.subr.bf16.mxu0 0
        %4745 = vmatpush1.bf16.msra.mxu0 %v4518
        %4746 = vmatprep.subr.bf16.mxu0 0
        %4747 = vmatpush1.bf16.msra.mxu0 0
        %4748 = vmatprep.subr.bf16.mxu0 0
        %4749 = vmatpush1.bf16.msra.mxu0 0
        %4750 = vmatprep.subr.bf16.mxu0 0
        %4751 = vmatpush1.bf16.msra.mxu0 0
        %4752 = vmatprep.subr.bf16.mxu0 0
        %4753 = vmatpush1.bf16.msra.mxu0 0
        %4754 = vmatprep.subr.bf16.mxu0 0
        %4755 = vmatpush1.bf16.msra.mxu0 0
        %4756 = vmatprep.subr.bf16.mxu0 0
        %4757 = vmatpush1.bf16.msra.mxu0 0
        %4758 = vmatprep.subr.bf16.mxu0 0
        %4759 = vmatpush1.bf16.msra.mxu0 0
        %4760 = vmatprep.subr.bf16.mxu0 0
        %4761 = vmatpush1.bf16.msra.mxu0 0
        %4762 = vmatprep.subr.bf16.mxu0 0
        %4763 = vmatpush1.bf16.msra.mxu0 0
        %4764 = vmatprep.subr.bf16.mxu0 0
        %4765 = vmatpush1.bf16.msra.mxu0 0
        %4766 = vmatprep.subr.bf16.mxu0 0
        %4767 = vmatpush1.bf16.msra.mxu0 0
        %4768 = vmatprep.subr.bf16.mxu0 0
        %4769 = vmatpush1.bf16.msra.mxu0 0
        %4770 = vmatprep.subr.bf16.mxu0 0
        %4771 = vmatpush1.bf16.msra.mxu0 0
        %4772 = vmatprep.subr.bf16.mxu0 0
        %4773 = vmatpush1.bf16.msra.mxu0 0
        %4774 = vmatprep.subr.bf16.mxu0 0
        %4775 = vmatpush1.bf16.msra.mxu0 0
        %4776 = vmatprep.mubr.bf16.mxu0 0
        %4777 = vmatmul.mubr.bf16.gmra.mrb[0].mxu0 %v4742
        %v4778 = vpop.f32.mrb[0].mxu0
        %v4779 = vadd.f32 0.0, %v4778
        %v4780 = vpop.f32.mrb[0].mxu0
        %v4781 = vpop.f32.mrb[0].mxu0
        %v4782 = vadd.f32 0.0, %v4781
        %v4783 = vpop.f32.mrb[0].mxu0
        %4784 = vdwg.mxu0
        %v4786 = vsel %vm1337, %v4511, 0
        %4788 = vmatprep.subr.bf16.mxu0 0
        %4789 = vmatpush1.bf16.msra.mxu0 %v4519
        %4790 = vmatprep.subr.bf16.mxu0 0
        %4791 = vmatpush1.bf16.msra.mxu0 0
        %4792 = vmatprep.subr.bf16.mxu0 0
        %4793 = vmatpush1.bf16.msra.mxu0 0
        %4794 = vmatprep.subr.bf16.mxu0 0
        %4795 = vmatpush1.bf16.msra.mxu0 0
        %4796 = vmatprep.subr.bf16.mxu0 0
        %4797 = vmatpush1.bf16.msra.mxu0 0
        %4798 = vmatprep.subr.bf16.mxu0 0
        %4799 = vmatpush1.bf16.msra.mxu0 0
        %4800 = vmatprep.subr.bf16.mxu0 0
        %4801 = vmatpush1.bf16.msra.mxu0 0
        %4802 = vmatprep.subr.bf16.mxu0 0
        %4803 = vmatpush1.bf16.msra.mxu0 0
        %4804 = vmatprep.subr.bf16.mxu0 0
        %4805 = vmatpush1.bf16.msra.mxu0 0
        %4806 = vmatprep.subr.bf16.mxu0 0
        %4807 = vmatpush1.bf16.msra.mxu0 0
        %4808 = vmatprep.subr.bf16.mxu0 0
        %4809 = vmatpush1.bf16.msra.mxu0 0
        %4810 = vmatprep.subr.bf16.mxu0 0
        %4811 = vmatpush1.bf16.msra.mxu0 0
        %4812 = vmatprep.subr.bf16.mxu0 0
        %4813 = vmatpush1.bf16.msra.mxu0 0
        %4814 = vmatprep.subr.bf16.mxu0 0
        %4815 = vmatpush1.bf16.msra.mxu0 0
        %4816 = vmatprep.subr.bf16.mxu0 0
        %4817 = vmatpush1.bf16.msra.mxu0 0
        %4818 = vmatprep.subr.bf16.mxu0 0
        %4819 = vmatpush1.bf16.msra.mxu0 0
        %4820 = vmatprep.mubr.bf16.mxu0 0
        %4821 = vmatmul.mubr.bf16.gmra.mrb[0].mxu0 %v4786
        %v4822 = vpop.f32.mrb[0].mxu0
        %v4823 = vadd.f32 0.0, %v4822
        %v4824 = vpop.f32.mrb[0].mxu0
        %v4825 = vpop.f32.mrb[0].mxu0
        %v4826 = vadd.f32 0.0, %v4825
        %v4827 = vpop.f32.mrb[0].mxu0
        %4828 = vdwg.mxu0
        %v4830 = vsel %vm1337, %v4512, 0
        %4832 = vmatprep.subr.bf16.mxu0 0
        %4833 = vmatpush1.bf16.msra.mxu0 %v4520
        %4834 = vmatprep.subr.bf16.mxu0 0
        %4835 = vmatpush1.bf16.msra.mxu0 0
        %4836 = vmatprep.subr.bf16.mxu0 0
        %4837 = vmatpush1.bf16.msra.mxu0 0
        %4838 = vmatprep.subr.bf16.mxu0 0
        %4839 = vmatpush1.bf16.msra.mxu0 0
        %4840 = vmatprep.subr.bf16.mxu0 0
        %4841 = vmatpush1.bf16.msra.mxu0 0
        %4842 = vmatprep.subr.bf16.mxu0 0
        %4843 = vmatpush1.bf16.msra.mxu0 0
        %4844 = vmatprep.subr.bf16.mxu0 0
        %4845 = vmatpush1.bf16.msra.mxu0 0
        %4846 = vmatprep.subr.bf16.mxu0 0
        %4847 = vmatpush1.bf16.msra.mxu0 0
        %4848 = vmatprep.subr.bf16.mxu0 0
        %4849 = vmatpush1.bf16.msra.mxu0 0
        %4850 = vmatprep.subr.bf16.mxu0 0
        %4851 = vmatpush1.bf16.msra.mxu0 0
        %4852 = vmatprep.subr.bf16.mxu0 0
        %4853 = vmatpush1.bf16.msra.mxu0 0
        %4854 = vmatprep.subr.bf16.mxu0 0
        %4855 = vmatpush1.bf16.msra.mxu0 0
        %4856 = vmatprep.subr.bf16.mxu0 0
        %4857 = vmatpush1.bf16.msra.mxu0 0
        %4858 = vmatprep.subr.bf16.mxu0 0
        %4859 = vmatpush1.bf16.msra.mxu0 0
        %4860 = vmatprep.subr.bf16.mxu0 0
        %4861 = vmatpush1.bf16.msra.mxu0 0
        %4862 = vmatprep.subr.bf16.mxu0 0
        %4863 = vmatpush1.bf16.msra.mxu0 0
        %4864 = vmatprep.mubr.bf16.mxu0 0
        %4865 = vmatmul.mubr.bf16.gmra.mrb[0].mxu0 %v4830
        %v4866 = vpop.f32.mrb[0].mxu0
        %v4867 = vadd.f32 0.0, %v4866
        %v4868 = vpop.f32.mrb[0].mxu0
        %v4869 = vpop.f32.mrb[0].mxu0
        %v4870 = vadd.f32 0.0, %v4869
        %v4871 = vpop.f32.mrb[0].mxu0
        %4872 = vdwg.mxu0
        %v4873 = vpack.c.bf16 %v4562, %v4559
        %v4874 = vpack.c.bf16 %v4606, %v4603
        %v4875 = vpack.c.bf16 %v4650, %v4647
        %v4876 = vpack.c.bf16 %v4694, %v4691
        %v4877 = vpack.c.bf16 %v4738, %v4735
        %v4878 = vpack.c.bf16 %v4782, %v4779
        %v4879 = vpack.c.bf16 %v4826, %v4823
        %v4880 = vpack.c.bf16 %v4870, %v4867
        %s4881 = scalar_lea.vmem [#allocation14], 64
        %v4882 = vld [vmem:[%s4881] sm:$0xf]
        %v4883 = vld [vmem:[%s4881 + $0x4] sm:$0xf]
        %v4884 = vld [vmem:[%s4881 + $0x8] sm:$0xf]
        %v4885 = vld [vmem:[%s4881 + $0xc] sm:$0xf]
        %v4886 = vld [vmem:[%s4881 + $0x10] sm:$0xf]
        %v4887 = vld [vmem:[%s4881 + $0x14] sm:$0xf]
        %v4888 = vld [vmem:[%s4881 + $0x18] sm:$0xf]
        %v4889 = vld [vmem:[%s4881 + $0x1c] sm:$0xf]
        %v4890 = vld [vmem:[%s4881 + $0x20] sm:$0xf]
        %v4891 = vld [vmem:[%s4881 + $0x24] sm:$0xf]
        %v4892 = vld [vmem:[%s4881 + $0x28] sm:$0xf]
        %v4893 = vld [vmem:[%s4881 + $0x2c] sm:$0xf]
        %v4894 = vld [vmem:[%s4881 + $0x30] sm:$0xf]
        %v4895 = vld [vmem:[%s4881 + $0x34] sm:$0xf]
        %v4896 = vld [vmem:[%s4881 + $0x38] sm:$0xf]
        %v4897 = vld [vmem:[%s4881 + $0x3c] sm:$0xf]
        %v4900 = vunpack.c.l.b16 %v4882
        %v4901 = vunpack.c.l.b16 %v4883
        %v4902 = vpack.c.b16 %v4901, %v4900
        %v4905 = vsel %vm1337, %v4873, 0
        %4907 = vmatprep.subr.bf16.mxu0 0
        %4908 = vmatpush1.bf16.msra.mxu0 %v4902
        %4909 = vmatprep.subr.bf16.mxu0 0
        %4910 = vmatpush1.bf16.msra.mxu0 0
        %4911 = vmatprep.subr.bf16.mxu0 0
        %4912 = vmatpush1.bf16.msra.mxu0 0
        %4913 = vmatprep.subr.bf16.mxu0 0
        %4914 = vmatpush1.bf16.msra.mxu0 0
        %4915 = vmatprep.subr.bf16.mxu0 0
        %4916 = vmatpush1.bf16.msra.mxu0 0
        %4917 = vmatprep.subr.bf16.mxu0 0
        %4918 = vmatpush1.bf16.msra.mxu0 0
        %4919 = vmatprep.subr.bf16.mxu0 0
        %4920 = vmatpush1.bf16.msra.mxu0 0
        %4921 = vmatprep.subr.bf16.mxu0 0
        %4922 = vmatpush1.bf16.msra.mxu0 0
        %4923 = vmatprep.subr.bf16.mxu0 0
        %4924 = vmatpush1.bf16.msra.mxu0 0
        %4925 = vmatprep.subr.bf16.mxu0 0
        %4926 = vmatpush1.bf16.msra.mxu0 0
        %4927 = vmatprep.subr.bf16.mxu0 0
        %4928 = vmatpush1.bf16.msra.mxu0 0
        %4929 = vmatprep.subr.bf16.mxu0 0
        %4930 = vmatpush1.bf16.msra.mxu0 0
        %4931 = vmatprep.subr.bf16.mxu0 0
        %4932 = vmatpush1.bf16.msra.mxu0 0
        %4933 = vmatprep.subr.bf16.mxu0 0
        %4934 = vmatpush1.bf16.msra.mxu0 0
        %4935 = vmatprep.subr.bf16.mxu0 0
        %4936 = vmatpush1.bf16.msra.mxu0 0
        %4937 = vmatprep.subr.bf16.mxu0 0
        %4938 = vmatpush1.bf16.msra.mxu0 0
        %4939 = vmatprep.mubr.bf16.mxu0 0
        %4940 = vmatmul.mubr.bf16.gmra.mrb[0].mxu0 %v4905
        %v4941 = vpop.f32.mrb[0].mxu0
        %v4942 = vadd.f32 0.0, %v4941
        %v4943 = vpop.f32.mrb[0].mxu0
        %v4944 = vpop.f32.mrb[0].mxu0
        %v4945 = vadd.f32 0.0, %v4944
        %v4946 = vpop.f32.mrb[0].mxu0
        %4947 = vdwg.mxu0
        %v4950 = vunpack.c.l.b16 %v4884
        %v4951 = vunpack.c.l.b16 %v4885
        %v4952 = vpack.c.b16 %v4951, %v4950
        %v4955 = vsel %vm1337, %v4874, 0
        %4957 = vmatprep.subr.bf16.mxu0 0
        %4958 = vmatpush1.bf16.msra.mxu0 %v4952
        %4959 = vmatprep.subr.bf16.mxu0 0
        %4960 = vmatpush1.bf16.msra.mxu0 0
        %4961 = vmatprep.subr.bf16.mxu0 0
        %4962 = vmatpush1.bf16.msra.mxu0 0
        %4963 = vmatprep.subr.bf16.mxu0 0
        %4964 = vmatpush1.bf16.msra.mxu0 0
        %4965 = vmatprep.subr.bf16.mxu0 0
        %4966 = vmatpush1.bf16.msra.mxu0 0
        %4967 = vmatprep.subr.bf16.mxu0 0
        %4968 = vmatpush1.bf16.msra.mxu0 0
        %4969 = vmatprep.subr.bf16.mxu0 0
        %4970 = vmatpush1.bf16.msra.mxu0 0
        %4971 = vmatprep.subr.bf16.mxu0 0
        %4972 = vmatpush1.bf16.msra.mxu0 0
        %4973 = vmatprep.subr.bf16.mxu0 0
        %4974 = vmatpush1.bf16.msra.mxu0 0
        %4975 = vmatprep.subr.bf16.mxu0 0
        %4976 = vmatpush1.bf16.msra.mxu0 0
        %4977 = vmatprep.subr.bf16.mxu0 0
        %4978 = vmatpush1.bf16.msra.mxu0 0
        %4979 = vmatprep.subr.bf16.mxu0 0
        %4980 = vmatpush1.bf16.msra.mxu0 0
        %4981 = vmatprep.subr.bf16.mxu0 0
        %4982 = vmatpush1.bf16.msra.mxu0 0
        %4983 = vmatprep.subr.bf16.mxu0 0
        %4984 = vmatpush1.bf16.msra.mxu0 0
        %4985 = vmatprep.subr.bf16.mxu0 0
        %4986 = vmatpush1.bf16.msra.mxu0 0
        %4987 = vmatprep.subr.bf16.mxu0 0
        %4988 = vmatpush1.bf16.msra.mxu0 0
        %4989 = vmatprep.mubr.bf16.mxu0 0
        %4990 = vmatmul.mubr.bf16.gmra.mrb[0].mxu0 %v4955
        %v4991 = vpop.f32.mrb[0].mxu0
        %v4992 = vadd.f32 0.0, %v4991
        %v4993 = vpop.f32.mrb[0].mxu0
        %v4994 = vpop.f32.mrb[0].mxu0
        %v4995 = vadd.f32 0.0, %v4994
        %v4996 = vpop.f32.mrb[0].mxu0
        %4997 = vdwg.mxu0
        %v5000 = vunpack.c.l.b16 %v4886
        %v5001 = vunpack.c.l.b16 %v4887
        %v5002 = vpack.c.b16 %v5001, %v5000
        %v5005 = vsel %vm1337, %v4875, 0
        %5007 = vmatprep.subr.bf16.mxu0 0
        %5008 = vmatpush1.bf16.msra.mxu0 %v5002
        %5009 = vmatprep.subr.bf16.mxu0 0
        %5010 = vmatpush1.bf16.msra.mxu0 0
        %5011 = vmatprep.subr.bf16.mxu0 0
        %5012 = vmatpush1.bf16.msra.mxu0 0
        %5013 = vmatprep.subr.bf16.mxu0 0
        %5014 = vmatpush1.bf16.msra.mxu0 0
        %5015 = vmatprep.subr.bf16.mxu0 0
        %5016 = vmatpush1.bf16.msra.mxu0 0
        %5017 = vmatprep.subr.bf16.mxu0 0
        %5018 = vmatpush1.bf16.msra.mxu0 0
        %5019 = vmatprep.subr.bf16.mxu0 0
        %5020 = vmatpush1.bf16.msra.mxu0 0
        %5021 = vmatprep.subr.bf16.mxu0 0
        %5022 = vmatpush1.bf16.msra.mxu0 0
        %5023 = vmatprep.subr.bf16.mxu0 0
        %5024 = vmatpush1.bf16.msra.mxu0 0
        %5025 = vmatprep.subr.bf16.mxu0 0
        %5026 = vmatpush1.bf16.msra.mxu0 0
        %5027 = vmatprep.subr.bf16.mxu0 0
        %5028 = vmatpush1.bf16.msra.mxu0 0
        %5029 = vmatprep.subr.bf16.mxu0 0
        %5030 = vmatpush1.bf16.msra.mxu0 0
        %5031 = vmatprep.subr.bf16.mxu0 0
        %5032 = vmatpush1.bf16.msra.mxu0 0
        %5033 = vmatprep.subr.bf16.mxu0 0
        %5034 = vmatpush1.bf16.msra.mxu0 0
        %5035 = vmatprep.subr.bf16.mxu0 0
        %5036 = vmatpush1.bf16.msra.mxu0 0
        %5037 = vmatprep.subr.bf16.mxu0 0
        %5038 = vmatpush1.bf16.msra.mxu0 0
        %5039 = vmatprep.mubr.bf16.mxu0 0
        %5040 = vmatmul.mubr.bf16.gmra.mrb[0].mxu0 %v5005
        %v5041 = vpop.f32.mrb[0].mxu0
        %v5042 = vadd.f32 0.0, %v5041
        %v5043 = vpop.f32.mrb[0].mxu0
        %v5044 = vpop.f32.mrb[0].mxu0
        %v5045 = vadd.f32 0.0, %v5044
        %v5046 = vpop.f32.mrb[0].mxu0
        %5047 = vdwg.mxu0
        %v5050 = vunpack.c.l.b16 %v4888
        %v5051 = vunpack.c.l.b16 %v4889
        %v5052 = vpack.c.b16 %v5051, %v5050
        %v5055 = vsel %vm1337, %v4876, 0
        %5057 = vmatprep.subr.bf16.mxu0 0
        %5058 = vmatpush1.bf16.msra.mxu0 %v5052
        %5059 = vmatprep.subr.bf16.mxu0 0
        %5060 = vmatpush1.bf16.msra.mxu0 0
        %5061 = vmatprep.subr.bf16.mxu0 0
        %5062 = vmatpush1.bf16.msra.mxu0 0
        %5063 = vmatprep.subr.bf16.mxu0 0
        %5064 = vmatpush1.bf16.msra.mxu0 0
        %5065 = vmatprep.subr.bf16.mxu0 0
        %5066 = vmatpush1.bf16.msra.mxu0 0
        %5067 = vmatprep.subr.bf16.mxu0 0
        %5068 = vmatpush1.bf16.msra.mxu0 0
        %5069 = vmatprep.subr.bf16.mxu0 0
        %5070 = vmatpush1.bf16.msra.mxu0 0
        %5071 = vmatprep.subr.bf16.mxu0 0
        %5072 = vmatpush1.bf16.msra.mxu0 0
        %5073 = vmatprep.subr.bf16.mxu0 0
        %5074 = vmatpush1.bf16.msra.mxu0 0
        %5075 = vmatprep.subr.bf16.mxu0 0
        %5076 = vmatpush1.bf16.msra.mxu0 0
        %5077 = vmatprep.subr.bf16.mxu0 0
        %5078 = vmatpush1.bf16.msra.mxu0 0
        %5079 = vmatprep.subr.bf16.mxu0 0
        %5080 = vmatpush1.bf16.msra.mxu0 0
        %5081 = vmatprep.subr.bf16.mxu0 0
        %5082 = vmatpush1.bf16.msra.mxu0 0
        %5083 = vmatprep.subr.bf16.mxu0 0
        %5084 = vmatpush1.bf16.msra.mxu0 0
        %5085 = vmatprep.subr.bf16.mxu0 0
        %5086 = vmatpush1.bf16.msra.mxu0 0
        %5087 = vmatprep.subr.bf16.mxu0 0
        %5088 = vmatpush1.bf16.msra.mxu0 0
        %5089 = vmatprep.mubr.bf16.mxu0 0
        %5090 = vmatmul.mubr.bf16.gmra.mrb[0].mxu0 %v5055
        %v5091 = vpop.f32.mrb[0].mxu0
        %v5092 = vadd.f32 0.0, %v5091
        %v5093 = vpop.f32.mrb[0].mxu0
        %v5094 = vpop.f32.mrb[0].mxu0
        %v5095 = vadd.f32 0.0, %v5094
        %v5096 = vpop.f32.mrb[0].mxu0
        %5097 = vdwg.mxu0
        %v5100 = vunpack.c.l.b16 %v4890
        %v5101 = vunpack.c.l.b16 %v4891
        %v5102 = vpack.c.b16 %v5101, %v5100
        %v5105 = vsel %vm1337, %v4877, 0
        %5107 = vmatprep.subr.bf16.mxu0 0
        %5108 = vmatpush1.bf16.msra.mxu0 %v5102
        %5109 = vmatprep.subr.bf16.mxu0 0
        %5110 = vmatpush1.bf16.msra.mxu0 0
        %5111 = vmatprep.subr.bf16.mxu0 0
        %5112 = vmatpush1.bf16.msra.mxu0 0
        %5113 = vmatprep.subr.bf16.mxu0 0
        %5114 = vmatpush1.bf16.msra.mxu0 0
        %5115 = vmatprep.subr.bf16.mxu0 0
        %5116 = vmatpush1.bf16.msra.mxu0 0
        %5117 = vmatprep.subr.bf16.mxu0 0
        %5118 = vmatpush1.bf16.msra.mxu0 0
        %5119 = vmatprep.subr.bf16.mxu0 0
        %5120 = vmatpush1.bf16.msra.mxu0 0
        %5121 = vmatprep.subr.bf16.mxu0 0
        %5122 = vmatpush1.bf16.msra.mxu0 0
        %5123 = vmatprep.subr.bf16.mxu0 0
        %5124 = vmatpush1.bf16.msra.mxu0 0
        %5125 = vmatprep.subr.bf16.mxu0 0
        %5126 = vmatpush1.bf16.msra.mxu0 0
        %5127 = vmatprep.subr.bf16.mxu0 0
        %5128 = vmatpush1.bf16.msra.mxu0 0
        %5129 = vmatprep.subr.bf16.mxu0 0
        %5130 = vmatpush1.bf16.msra.mxu0 0
        %5131 = vmatprep.subr.bf16.mxu0 0
        %5132 = vmatpush1.bf16.msra.mxu0 0
        %5133 = vmatprep.subr.bf16.mxu0 0
        %5134 = vmatpush1.bf16.msra.mxu0 0
        %5135 = vmatprep.subr.bf16.mxu0 0
        %5136 = vmatpush1.bf16.msra.mxu0 0
        %5137 = vmatprep.subr.bf16.mxu0 0
        %5138 = vmatpush1.bf16.msra.mxu0 0
        %5139 = vmatprep.mubr.bf16.mxu0 0
        %5140 = vmatmul.mubr.bf16.gmra.mrb[0].mxu0 %v5105
        %v5141 = vpop.f32.mrb[0].mxu0
        %v5142 = vadd.f32 0.0, %v5141
        %v5143 = vpop.f32.mrb[0].mxu0
        %v5144 = vpop.f32.mrb[0].mxu0
        %v5145 = vadd.f32 0.0, %v5144
        %v5146 = vpop.f32.mrb[0].mxu0
        %5147 = vdwg.mxu0
        %v5150 = vunpack.c.l.b16 %v4892
        %v5151 = vunpack.c.l.b16 %v4893
        %v5152 = vpack.c.b16 %v5151, %v5150
        %v5155 = vsel %vm1337, %v4878, 0
        %5157 = vmatprep.subr.bf16.mxu0 0
        %5158 = vmatpush1.bf16.msra.mxu0 %v5152
        %5159 = vmatprep.subr.bf16.mxu0 0
        %5160 = vmatpush1.bf16.msra.mxu0 0
        %5161 = vmatprep.subr.bf16.mxu0 0
        %5162 = vmatpush1.bf16.msra.mxu0 0
        %5163 = vmatprep.subr.bf16.mxu0 0
        %5164 = vmatpush1.bf16.msra.mxu0 0
        %5165 = vmatprep.subr.bf16.mxu0 0
        %5166 = vmatpush1.bf16.msra.mxu0 0
        %5167 = vmatprep.subr.bf16.mxu0 0
        %5168 = vmatpush1.bf16.msra.mxu0 0
        %5169 = vmatprep.subr.bf16.mxu0 0
        %5170 = vmatpush1.bf16.msra.mxu0 0
        %5171 = vmatprep.subr.bf16.mxu0 0
        %5172 = vmatpush1.bf16.msra.mxu0 0
        %5173 = vmatprep.subr.bf16.mxu0 0
        %5174 = vmatpush1.bf16.msra.mxu0 0
        %5175 = vmatprep.subr.bf16.mxu0 0
        %5176 = vmatpush1.bf16.msra.mxu0 0
        %5177 = vmatprep.subr.bf16.mxu0 0
        %5178 = vmatpush1.bf16.msra.mxu0 0
        %5179 = vmatprep.subr.bf16.mxu0 0
        %5180 = vmatpush1.bf16.msra.mxu0 0
        %5181 = vmatprep.subr.bf16.mxu0 0
        %5182 = vmatpush1.bf16.msra.mxu0 0
        %5183 = vmatprep.subr.bf16.mxu0 0
        %5184 = vmatpush1.bf16.msra.mxu0 0
        %5185 = vmatprep.subr.bf16.mxu0 0
        %5186 = vmatpush1.bf16.msra.mxu0 0
        %5187 = vmatprep.subr.bf16.mxu0 0
        %5188 = vmatpush1.bf16.msra.mxu0 0
        %5189 = vmatprep.mubr.bf16.mxu0 0
        %5190 = vmatmul.mubr.bf16.gmra.mrb[0].mxu0 %v5155
        %v5191 = vpop.f32.mrb[0].mxu0
        %v5192 = vadd.f32 0.0, %v5191
        %v5193 = vpop.f32.mrb[0].mxu0
        %v5194 = vpop.f32.mrb[0].mxu0
        %v5195 = vadd.f32 0.0, %v5194
        %v5196 = vpop.f32.mrb[0].mxu0
        %5197 = vdwg.mxu0
        %v5200 = vunpack.c.l.b16 %v4894
        %v5201 = vunpack.c.l.b16 %v4895
        %v5202 = vpack.c.b16 %v5201, %v5200
        %v5205 = vsel %vm1337, %v4879, 0
        %5207 = vmatprep.subr.bf16.mxu0 0
        %5208 = vmatpush1.bf16.msra.mxu0 %v5202
        %5209 = vmatprep.subr.bf16.mxu0 0
        %5210 = vmatpush1.bf16.msra.mxu0 0
        %5211 = vmatprep.subr.bf16.mxu0 0
        %5212 = vmatpush1.bf16.msra.mxu0 0
        %5213 = vmatprep.subr.bf16.mxu0 0
        %5214 = vmatpush1.bf16.msra.mxu0 0
        %5215 = vmatprep.subr.bf16.mxu0 0
        %5216 = vmatpush1.bf16.msra.mxu0 0
        %5217 = vmatprep.subr.bf16.mxu0 0
        %5218 = vmatpush1.bf16.msra.mxu0 0
        %5219 = vmatprep.subr.bf16.mxu0 0
        %5220 = vmatpush1.bf16.msra.mxu0 0
        %5221 = vmatprep.subr.bf16.mxu0 0
        %5222 = vmatpush1.bf16.msra.mxu0 0
        %5223 = vmatprep.subr.bf16.mxu0 0
        %5224 = vmatpush1.bf16.msra.mxu0 0
        %5225 = vmatprep.subr.bf16.mxu0 0
        %5226 = vmatpush1.bf16.msra.mxu0 0
        %5227 = vmatprep.subr.bf16.mxu0 0
        %5228 = vmatpush1.bf16.msra.mxu0 0
        %5229 = vmatprep.subr.bf16.mxu0 0
        %5230 = vmatpush1.bf16.msra.mxu0 0
        %5231 = vmatprep.subr.bf16.mxu0 0
        %5232 = vmatpush1.bf16.msra.mxu0 0
        %5233 = vmatprep.subr.bf16.mxu0 0
        %5234 = vmatpush1.bf16.msra.mxu0 0
        %5235 = vmatprep.subr.bf16.mxu0 0
        %5236 = vmatpush1.bf16.msra.mxu0 0
        %5237 = vmatprep.subr.bf16.mxu0 0
        %5238 = vmatpush1.bf16.msra.mxu0 0
        %5239 = vmatprep.mubr.bf16.mxu0 0
        %5240 = vmatmul.mubr.bf16.gmra.mrb[0].mxu0 %v5205
        %v5241 = vpop.f32.mrb[0].mxu0
        %v5242 = vadd.f32 0.0, %v5241
        %v5243 = vpop.f32.mrb[0].mxu0
        %v5244 = vpop.f32.mrb[0].mxu0
        %v5245 = vadd.f32 0.0, %v5244
        %v5246 = vpop.f32.mrb[0].mxu0
        %5247 = vdwg.mxu0
        %v5250 = vunpack.c.l.b16 %v4896
        %v5251 = vunpack.c.l.b16 %v4897
        %v5252 = vpack.c.b16 %v5251, %v5250
        %v5255 = vsel %vm1337, %v4880, 0
        %5257 = vmatprep.subr.bf16.mxu0 0
        %5258 = vmatpush1.bf16.msra.mxu0 %v5252
        %5259 = vmatprep.subr.bf16.mxu0 0
        %5260 = vmatpush1.bf16.msra.mxu0 0
        %5261 = vmatprep.subr.bf16.mxu0 0
        %5262 = vmatpush1.bf16.msra.mxu0 0
        %5263 = vmatprep.subr.bf16.mxu0 0
        %5264 = vmatpush1.bf16.msra.mxu0 0
        %5265 = vmatprep.subr.bf16.mxu0 0
        %5266 = vmatpush1.bf16.msra.mxu0 0
        %5267 = vmatprep.subr.bf16.mxu0 0
        %5268 = vmatpush1.bf16.msra.mxu0 0
        %5269 = vmatprep.subr.bf16.mxu0 0
        %5270 = vmatpush1.bf16.msra.mxu0 0
        %5271 = vmatprep.subr.bf16.mxu0 0
        %5272 = vmatpush1.bf16.msra.mxu0 0
        %5273 = vmatprep.subr.bf16.mxu0 0
        %5274 = vmatpush1.bf16.msra.mxu0 0
        %5275 = vmatprep.subr.bf16.mxu0 0
        %5276 = vmatpush1.bf16.msra.mxu0 0
        %5277 = vmatprep.subr.bf16.mxu0 0
        %5278 = vmatpush1.bf16.msra.mxu0 0
        %5279 = vmatprep.subr.bf16.mxu0 0
        %5280 = vmatpush1.bf16.msra.mxu0 0
        %5281 = vmatprep.subr.bf16.mxu0 0
        %5282 = vmatpush1.bf16.msra.mxu0 0
        %5283 = vmatprep.subr.bf16.mxu0 0
        %5284 = vmatpush1.bf16.msra.mxu0 0
        %5285 = vmatprep.subr.bf16.mxu0 0
        %5286 = vmatpush1.bf16.msra.mxu0 0
        %5287 = vmatprep.subr.bf16.mxu0 0
        %5288 = vmatpush1.bf16.msra.mxu0 0
        %5289 = vmatprep.mubr.bf16.mxu0 0
        %5290 = vmatmul.mubr.bf16.gmra.mrb[0].mxu0 %v5255
        %v5291 = vpop.f32.mrb[0].mxu0
        %v5292 = vadd.f32 0.0, %v5291
        %v5293 = vpop.f32.mrb[0].mxu0
        %v5294 = vpop.f32.mrb[0].mxu0
        %v5295 = vadd.f32 0.0, %v5294
        %v5296 = vpop.f32.mrb[0].mxu0
        %5297 = vdwg.mxu0
        %v5298 = vadd.f32 %v4942, %v4992
        %v5299 = vadd.f32 %v5298, %v5042
        %v5300 = vadd.f32 %v5299, %v5092
        %v5301 = vadd.f32 %v5300, %v5142
        %v5302 = vadd.f32 %v5301, %v5192
        %v5303 = vadd.f32 %v5302, %v5242
        %v5304 = vadd.f32 %v5303, %v5292
        %v5305 = vadd.f32 %v4945, %v4995
        %v5306 = vadd.f32 %v5305, %v5045
        %v5307 = vadd.f32 %v5306, %v5095
        %v5308 = vadd.f32 %v5307, %v5145
        %v5309 = vadd.f32 %v5308, %v5195
        %v5310 = vadd.f32 %v5309, %v5245
        %v5311 = vadd.f32 %v5310, %v5295
        %v5312 = vadd.f32 %v3471, %v5304
        %v5313 = vadd.f32 %v3472, %v5311
        %v5314 = vld [vmem:[#allocation16 + $0x1] sm:$0x1]
        %v5315 = vlaneseq
        %v5316 = vshrl.u32 %v5315, 7
        %v5317 = vsub.s32 0, %v5316
        %v5318 = vrot.slane %v5314, %v5317
        %v5319 = vadd.f32 %v5312, %v5318
        %v5320 = vadd.f32 %v5313, %v5318
        %v5321 = vld [vmem:[#allocation17 + $0x1] sm:$0x1]
        %v5322 = vld [vmem:[#allocation19 + $0x1] sm:$0x1]
        %5323 = vadd.xlane.f32.xlu0 %v5319
        %v5324 = vpop.xlane.xlu0 %5323
        %5325 = vadd.xlane.f32.xlu0 %v5320
        %v5326 = vpop.xlane.xlu0 %5325
        %v5327 = vmul.f32 %v5324, %v837
        %v5328 = vmul.f32 %v5326, %v837
        %v5329 = vsub.f32 %v5319, %v5327
        %v5330 = vsub.f32 %v5320, %v5328
        %v5331 = vmul.f32 %v5329, %v5329
        %v5332 = vmul.f32 %v5330, %v5330
        %5333 = vadd.xlane.f32.xlu0 %v5331
        %v5334 = vpop.xlane.xlu0 %5333
        %5335 = vadd.xlane.f32.xlu0 %v5332
        %v5336 = vpop.xlane.xlu0 %5335
        %v5337 = vmul.f32 %v5334, %v837
        %v5338 = vmul.f32 %v5336, %v837
        %v5339 = vadd.f32 %v5337, 1e-05
        %v5340 = vadd.f32 %v5338, 1e-05
        %v5341 = vrsqrt.pop %v5339
        %v5342 = vrsqrt.pop %v5340
        %v5343 = vmul.f32 %v5329, %v5341
        %v5344 = vmul.f32 %v5330, %v5342
        %v5345 = vlaneseq
        %v5346 = vshrl.u32 %v5345, 7
        %v5347 = vsub.s32 0, %v5346
        %v5348 = vrot.slane %v5321, %v5347
        %v5349 = vmul.f32 %v5343, %v5348
        %v5350 = vmul.f32 %v5344, %v5348
        %v5351 = vlaneseq
        %v5352 = vshrl.u32 %v5351, 7
        %v5353 = vsub.s32 0, %v5352
        %v5354 = vrot.slane %v5322, %v5353
        %v5355 = vadd.f32 %v5349, %v5354
        %v5356 = vadd.f32 %v5350, %v5354
        %v5357 = vpack.c.bf16 %v5356, %v5355
        %s5358 = scalar_lea.vmem [#allocation20], 256
        %v5359 = vld [vmem:[%s5358] sm:$0xff]
        %v5360 = vld [vmem:[%s5358 + $0x8] sm:$0xff]
        %v5361 = vld [vmem:[%s5358 + $0x10] sm:$0xff]
        %v5362 = vld [vmem:[%s5358 + $0x18] sm:$0xff]
        %v5363 = vld [vmem:[%s5358 + $0x20] sm:$0xff]
        %v5364 = vld [vmem:[%s5358 + $0x28] sm:$0xff]
        %v5365 = vld [vmem:[%s5358 + $0x30] sm:$0xff]
        %v5366 = vld [vmem:[%s5358 + $0x38] sm:$0xff]
        %v5367 = vld [vmem:[%s5358 + $0x40] sm:$0xff]
        %v5368 = vld [vmem:[%s5358 + $0x48] sm:$0xff]
        %v5369 = vld [vmem:[%s5358 + $0x50] sm:$0xff]
        %v5370 = vld [vmem:[%s5358 + $0x58] sm:$0xff]
        %v5371 = vld [vmem:[%s5358 + $0x60] sm:$0xff]
        %v5372 = vld [vmem:[%s5358 + $0x68] sm:$0xff]
        %v5373 = vld [vmem:[%s5358 + $0x70] sm:$0xff]
        %v5374 = vld [vmem:[%s5358 + $0x78] sm:$0xff]
        %v5375 = vld [vmem:[%s5358 + $0x80] sm:$0xff]
        %v5376 = vld [vmem:[%s5358 + $0x88] sm:$0xff]
        %v5377 = vld [vmem:[%s5358 + $0x90] sm:$0xff]
        %v5378 = vld [vmem:[%s5358 + $0x98] sm:$0xff]
        %v5379 = vld [vmem:[%s5358 + $0xa0] sm:$0xff]
        %v5380 = vld [vmem:[%s5358 + $0xa8] sm:$0xff]
        %v5381 = vld [vmem:[%s5358 + $0xb0] sm:$0xff]
        %v5382 = vld [vmem:[%s5358 + $0xb8] sm:$0xff]
        %v5383 = vld [vmem:[%s5358 + $0xc0] sm:$0xff]
        %v5384 = vld [vmem:[%s5358 + $0xc8] sm:$0xff]
        %v5385 = vld [vmem:[%s5358 + $0xd0] sm:$0xff]
        %v5386 = vld [vmem:[%s5358 + $0xd8] sm:$0xff]
        %v5387 = vld [vmem:[%s5358 + $0xe0] sm:$0xff]
        %v5388 = vld [vmem:[%s5358 + $0xe8] sm:$0xff]
        %v5389 = vld [vmem:[%s5358 + $0xf0] sm:$0xff]
        %v5390 = vld [vmem:[%s5358 + $0xf8] sm:$0xff]
        %s5391 = scalar_lea.vmem [#allocation22], 1
        %v5392 = vld [vmem:[%s5391] ss:$4 sm:$0xf]
        %v5394 = vlaneseq
        %v5395 = vshrl.u32 %v5394, 7
        %v5396 = vsub.s32 0, %v5395
        %v5397 = vrot.slane %v5392, %v5396
        %v5398 = vlaneseq
        %v5399 = vshrl.u32 %v5398, 7
        %v5400 = vsub.s32 1, %v5399
        %v5401 = vrot.slane %v5392, %v5400
        %v5402 = vlaneseq
        %v5403 = vshrl.u32 %v5402, 7
        %v5404 = vsub.s32 2, %v5403
        %v5405 = vrot.slane %v5392, %v5404
        %v5406 = vlaneseq
        %v5407 = vshrl.u32 %v5406, 7
        %v5408 = vsub.s32 3, %v5407
        %v5409 = vrot.slane %v5392, %v5408
        %v5446 = vunpack.c.l.b16 %v5359
        %v5447 = vunpack.c.h.b16 %v5359
        %v5448 = vunpack.c.l.b16 %v5360
        %v5449 = vunpack.c.h.b16 %v5360
        %v5450 = vunpack.c.l.b16 %v5361
        %v5451 = vunpack.c.h.b16 %v5361
        %v5452 = vunpack.c.l.b16 %v5362
        %v5453 = vunpack.c.h.b16 %v5362
        %v5454 = vunpack.c.l.b16 %v5363
        %v5455 = vunpack.c.h.b16 %v5363
        %v5456 = vunpack.c.l.b16 %v5364
        %v5457 = vunpack.c.h.b16 %v5364
        %v5458 = vunpack.c.l.b16 %v5365
        %v5459 = vunpack.c.h.b16 %v5365
        %v5460 = vunpack.c.l.b16 %v5366
        %v5461 = vunpack.c.h.b16 %v5366
        %v5462 = vunpack.c.l.b16 %v5367
        %v5463 = vunpack.c.h.b16 %v5367
        %v5464 = vunpack.c.l.b16 %v5368
        %v5465 = vunpack.c.h.b16 %v5368
        %v5466 = vunpack.c.l.b16 %v5369
        %v5467 = vunpack.c.h.b16 %v5369
        %v5468 = vunpack.c.l.b16 %v5370
        %v5469 = vunpack.c.h.b16 %v5370
        %v5470 = vunpack.c.l.b16 %v5371
        %v5471 = vunpack.c.h.b16 %v5371
        %v5472 = vunpack.c.l.b16 %v5372
        %v5473 = vunpack.c.h.b16 %v5372
        %v5474 = vunpack.c.l.b16 %v5373
        %v5475 = vunpack.c.h.b16 %v5373
        %v5476 = vunpack.c.l.b16 %v5374
        %v5477 = vunpack.c.h.b16 %v5374
        %v5478 = vunpack.c.l.b16 %v5375
        %v5479 = vunpack.c.h.b16 %v5375
        %v5480 = vunpack.c.l.b16 %v5376
        %v5481 = vunpack.c.h.b16 %v5376
        %v5482 = vunpack.c.l.b16 %v5377
        %v5483 = vunpack.c.h.b16 %v5377
        %v5484 = vunpack.c.l.b16 %v5378
        %v5485 = vunpack.c.h.b16 %v5378
        %v5486 = vunpack.c.l.b16 %v5379
        %v5487 = vunpack.c.h.b16 %v5379
        %v5488 = vunpack.c.l.b16 %v5380
        %v5489 = vunpack.c.h.b16 %v5380
        %v5490 = vunpack.c.l.b16 %v5381
        %v5491 = vunpack.c.h.b16 %v5381
        %v5492 = vunpack.c.l.b16 %v5382
        %v5493 = vunpack.c.h.b16 %v5382
        %v5494 = vunpack.c.l.b16 %v5383
        %v5495 = vunpack.c.h.b16 %v5383
        %v5496 = vunpack.c.l.b16 %v5384
        %v5497 = vunpack.c.h.b16 %v5384
        %v5498 = vunpack.c.l.b16 %v5385
        %v5499 = vunpack.c.h.b16 %v5385
        %v5500 = vunpack.c.l.b16 %v5386
        %v5501 = vunpack.c.h.b16 %v5386
        %v5502 = vunpack.c.l.b16 %v5387
        %v5503 = vunpack.c.h.b16 %v5387
        %v5504 = vunpack.c.l.b16 %v5388
        %v5505 = vunpack.c.h.b16 %v5388
        %v5506 = vunpack.c.l.b16 %v5389
        %v5507 = vunpack.c.h.b16 %v5389
        %v5508 = vunpack.c.l.b16 %v5390
        %v5509 = vunpack.c.h.b16 %v5390
        %v5510 = vpack.c.b16 %v5450, %v5446
        %v5511 = vpack.c.b16 %v5451, %v5447
        %v5512 = vpack.c.b16 %v5452, %v5448
        %v5513 = vpack.c.b16 %v5453, %v5449
        %v5514 = vpack.c.b16 %v5458, %v5454
        %v5515 = vpack.c.b16 %v5459, %v5455
        %v5516 = vpack.c.b16 %v5460, %v5456
        %v5517 = vpack.c.b16 %v5461, %v5457
        %v5518 = vpack.c.b16 %v5466, %v5462
        %v5519 = vpack.c.b16 %v5467, %v5463
        %v5520 = vpack.c.b16 %v5468, %v5464
        %v5521 = vpack.c.b16 %v5469, %v5465
        %v5522 = vpack.c.b16 %v5474, %v5470
        %v5523 = vpack.c.b16 %v5475, %v5471
        %v5524 = vpack.c.b16 %v5476, %v5472
        %v5525 = vpack.c.b16 %v5477, %v5473
        %v5526 = vpack.c.b16 %v5482, %v5478
        %v5527 = vpack.c.b16 %v5483, %v5479
        %v5528 = vpack.c.b16 %v5484, %v5480
        %v5529 = vpack.c.b16 %v5485, %v5481
        %v5530 = vpack.c.b16 %v5490, %v5486
        %v5531 = vpack.c.b16 %v5491, %v5487
        %v5532 = vpack.c.b16 %v5492, %v5488
        %v5533 = vpack.c.b16 %v5493, %v5489
        %v5534 = vpack.c.b16 %v5498, %v5494
        %v5535 = vpack.c.b16 %v5499, %v5495
        %v5536 = vpack.c.b16 %v5500, %v5496
        %v5537 = vpack.c.b16 %v5501, %v5497
        %v5538 = vpack.c.b16 %v5506, %v5502
        %v5539 = vpack.c.b16 %v5507, %v5503
        %v5540 = vpack.c.b16 %v5508, %v5504
        %v5541 = vpack.c.b16 %v5509, %v5505
        %5574 = vmatprep.subr.bf16.mxu0 %v5511
        %5575 = vmatpush1.bf16.msra.mxu0 %v5510
        %5576 = vmatprep.subr.bf16.mxu0 %v5515
        %5577 = vmatpush1.bf16.msra.mxu0 %v5514
        %5578 = vmatprep.subr.bf16.mxu0 %v5519
        %5579 = vmatpush1.bf16.msra.mxu0 %v5518
        %5580 = vmatprep.subr.bf16.mxu0 %v5523
        %5581 = vmatpush1.bf16.msra.mxu0 %v5522
        %5582 = vmatprep.subr.bf16.mxu0 %v5527
        %5583 = vmatpush1.bf16.msra.mxu0 %v5526
        %5584 = vmatprep.subr.bf16.mxu0 %v5531
        %5585 = vmatpush1.bf16.msra.mxu0 %v5530
        %5586 = vmatprep.subr.bf16.mxu0 %v5535
        %5587 = vmatpush1.bf16.msra.mxu0 %v5534
        %5588 = vmatprep.subr.bf16.mxu0 %v5539
        %5589 = vmatpush1.bf16.msra.mxu0 %v5538
        %5590 = vmatprep.subr.bf16.mxu0 0
        %5591 = vmatpush1.bf16.msra.mxu0 0
        %5592 = vmatprep.subr.bf16.mxu0 0
        %5593 = vmatpush1.bf16.msra.mxu0 0
        %5594 = vmatprep.subr.bf16.mxu0 0
        %5595 = vmatpush1.bf16.msra.mxu0 0
        %5596 = vmatprep.subr.bf16.mxu0 0
        %5597 = vmatpush1.bf16.msra.mxu0 0
        %5598 = vmatprep.subr.bf16.mxu0 0
        %5599 = vmatpush1.bf16.msra.mxu0 0
        %5600 = vmatprep.subr.bf16.mxu0 0
        %5601 = vmatpush1.bf16.msra.mxu0 0
        %5602 = vmatprep.subr.bf16.mxu0 0
        %5603 = vmatpush1.bf16.msra.mxu0 0
        %5604 = vmatprep.subr.bf16.mxu0 0
        %5605 = vmatpush1.bf16.msra.mxu0 0
        %5606 = vmatprep.mubr.bf16.mxu0 0
        %5607 = vmatmul.mubr.bf16.gmra.mrb[0].mxu0 %v5357
        %v5608 = vpop.f32.mrb[0].mxu0
        %v5609 = vadd.f32 %v5397, %v5608
        %v5610 = vpop.f32.mrb[0].mxu0
        %v5611 = vadd.f32 %v5401, %v5610
        %v5612 = vpop.f32.mrb[0].mxu0
        %v5613 = vadd.f32 %v5397, %v5612
        %v5614 = vpop.f32.mrb[0].mxu0
        %v5615 = vadd.f32 %v5401, %v5614
        %5616 = vdwg.mxu0
        %5617 = vmatprep.subr.bf16.mxu0 %v5513
        %5618 = vmatpush1.bf16.msra.mxu0 %v5512
        %5619 = vmatprep.subr.bf16.mxu0 %v5517
        %5620 = vmatpush1.bf16.msra.mxu0 %v5516
        %5621 = vmatprep.subr.bf16.mxu0 %v5521
        %5622 = vmatpush1.bf16.msra.mxu0 %v5520
        %5623 = vmatprep.subr.bf16.mxu0 %v5525
        %5624 = vmatpush1.bf16.msra.mxu0 %v5524
        %5625 = vmatprep.subr.bf16.mxu0 %v5529
        %5626 = vmatpush1.bf16.msra.mxu0 %v5528
        %5627 = vmatprep.subr.bf16.mxu0 %v5533
        %5628 = vmatpush1.bf16.msra.mxu0 %v5532
        %5629 = vmatprep.subr.bf16.mxu0 %v5537
        %5630 = vmatpush1.bf16.msra.mxu0 %v5536
        %5631 = vmatprep.subr.bf16.mxu0 %v5541
        %5632 = vmatpush1.bf16.msra.mxu0 %v5540
        %5633 = vmatprep.subr.bf16.mxu0 0
        %5634 = vmatpush1.bf16.msra.mxu0 0
        %5635 = vmatprep.subr.bf16.mxu0 0
        %5636 = vmatpush1.bf16.msra.mxu0 0
        %5637 = vmatprep.subr.bf16.mxu0 0
        %5638 = vmatpush1.bf16.msra.mxu0 0
        %5639 = vmatprep.subr.bf16.mxu0 0
        %5640 = vmatpush1.bf16.msra.mxu0 0
        %5641 = vmatprep.subr.bf16.mxu0 0
        %5642 = vmatpush1.bf16.msra.mxu0 0
        %5643 = vmatprep.subr.bf16.mxu0 0
        %5644 = vmatpush1.bf16.msra.mxu0 0
        %5645 = vmatprep.subr.bf16.mxu0 0
        %5646 = vmatpush1.bf16.msra.mxu0 0
        %5647 = vmatprep.subr.bf16.mxu0 0
        %5648 = vmatpush1.bf16.msra.mxu0 0
        %5649 = vmatprep.mubr.bf16.mxu0 0
        %5650 = vmatmul.mubr.bf16.gmra.mrb[0].mxu0 %v5357
        %v5651 = vpop.f32.mrb[0].mxu0
        %v5652 = vadd.f32 %v5405, %v5651
        %v5653 = vpop.f32.mrb[0].mxu0
        %v5654 = vadd.f32 %v5409, %v5653
        %v5655 = vpop.f32.mrb[0].mxu0
        %v5656 = vadd.f32 %v5405, %v5655
        %v5657 = vpop.f32.mrb[0].mxu0
        %v5658 = vadd.f32 %v5409, %v5657
        %5659 = vdwg.mxu0
        %v5660 = vmul.f32 %v5609, 1.702
        %v5661 = vmul.f32 %v5611, 1.702
        %v5662 = vmul.f32 %v5652, 1.702
        %v5663 = vmul.f32 %v5654, 1.702
        %v5664 = vmul.f32 %v5613, 1.702
        %v5665 = vmul.f32 %v5615, 1.702
        %v5666 = vmul.f32 %v5656, 1.702
        %v5667 = vmul.f32 %v5658, 1.702
        %v5668 = vxor.u32 %v5660, 2147483648
        %v5669 = vxor.u32 %v5661, 2147483648
        %v5670 = vxor.u32 %v5662, 2147483648
        %v5671 = vxor.u32 %v5663, 2147483648
        %v5672 = vxor.u32 %v5664, 2147483648
        %v5673 = vxor.u32 %v5665, 2147483648
        %v5674 = vxor.u32 %v5666, 2147483648
        %v5675 = vxor.u32 %v5667, 2147483648
        %v5676 = vmul.f32 %v5668, 1.442695
        %v5677 = vpow.pop %v5676
        %v5678 = vmul.f32 %v5669, 1.442695
        %v5679 = vpow.pop %v5678
        %v5680 = vmul.f32 %v5670, 1.442695
        %v5681 = vpow.pop %v5680
        %v5682 = vmul.f32 %v5671, 1.442695
        %v5683 = vpow.pop %v5682
        %v5684 = vmul.f32 %v5672, 1.442695
        %v5685 = vpow.pop %v5684
        %v5686 = vmul.f32 %v5673, 1.442695
        %v5687 = vpow.pop %v5686
        %v5688 = vmul.f32 %v5674, 1.442695
        %v5689 = vpow.pop %v5688
        %v5690 = vmul.f32 %v5675, 1.442695
        %v5691 = vpow.pop %v5690
        %v5692 = vadd.f32 %v5677, 1.0
        %v5693 = vadd.f32 %v5679, 1.0
        %v5694 = vadd.f32 %v5681, 1.0
        %v5695 = vadd.f32 %v5683, 1.0
        %v5696 = vadd.f32 %v5685, 1.0
        %v5697 = vadd.f32 %v5687, 1.0
        %v5698 = vadd.f32 %v5689, 1.0
        %v5699 = vadd.f32 %v5691, 1.0
        %v5700 = vrcp.pop %v5692
        %v5701 = vmul.f32 1.0, %v5700
        %v5702 = vrcp.pop %v5693
        %v5703 = vmul.f32 1.0, %v5702
        %v5704 = vrcp.pop %v5694
        %v5705 = vmul.f32 1.0, %v5704
        %v5706 = vrcp.pop %v5695
        %v5707 = vmul.f32 1.0, %v5706
        %v5708 = vrcp.pop %v5696
        %v5709 = vmul.f32 1.0, %v5708
        %v5710 = vrcp.pop %v5697
        %v5711 = vmul.f32 1.0, %v5710
        %v5712 = vrcp.pop %v5698
        %v5713 = vmul.f32 1.0, %v5712
        %v5714 = vrcp.pop %v5699
        %v5715 = vmul.f32 1.0, %v5714
        %v5716 = vmul.f32 %v5609, %v5701
        %v5717 = vmul.f32 %v5611, %v5703
        %v5718 = vmul.f32 %v5652, %v5705
        %v5719 = vmul.f32 %v5654, %v5707
        %v5720 = vmul.f32 %v5613, %v5709
        %v5721 = vmul.f32 %v5615, %v5711
        %v5722 = vmul.f32 %v5656, %v5713
        %v5723 = vmul.f32 %v5658, %v5715
        %v5724 = vpack.c.bf16 %v5720, %v5716
        %v5725 = vpack.c.bf16 %v5721, %v5717
        %v5726 = vpack.c.bf16 %v5722, %v5718
        %v5727 = vpack.c.bf16 %v5723, %v5719
        %s5728 = scalar_lea.vmem [#allocation23], 256
        %v5729 = vld [vmem:[%s5728] sm:$0xf]
        %v5730 = vld [vmem:[%s5728 + $0x4] sm:$0xf]
        %v5731 = vld [vmem:[%s5728 + $0x8] sm:$0xf]
        %v5732 = vld [vmem:[%s5728 + $0xc] sm:$0xf]
        %v5733 = vld [vmem:[%s5728 + $0x10] sm:$0xf]
        %v5734 = vld [vmem:[%s5728 + $0x14] sm:$0xf]
        %v5735 = vld [vmem:[%s5728 + $0x18] sm:$0xf]
        %v5736 = vld [vmem:[%s5728 + $0x1c] sm:$0xf]
        %v5737 = vld [vmem:[%s5728 + $0x20] sm:$0xf]
        %v5738 = vld [vmem:[%s5728 + $0x24] sm:$0xf]
        %v5739 = vld [vmem:[%s5728 + $0x28] sm:$0xf]
        %v5740 = vld [vmem:[%s5728 + $0x2c] sm:$0xf]
        %v5741 = vld [vmem:[%s5728 + $0x30] sm:$0xf]
        %v5742 = vld [vmem:[%s5728 + $0x34] sm:$0xf]
        %v5743 = vld [vmem:[%s5728 + $0x38] sm:$0xf]
        %v5744 = vld [vmem:[%s5728 + $0x3c] sm:$0xf]
        %v5745 = vld [vmem:[%s5728 + $0x40] sm:$0xf]
        %v5746 = vld [vmem:[%s5728 + $0x44] sm:$0xf]
        %v5747 = vld [vmem:[%s5728 + $0x48] sm:$0xf]
        %v5748 = vld [vmem:[%s5728 + $0x4c] sm:$0xf]
        %v5749 = vld [vmem:[%s5728 + $0x50] sm:$0xf]
        %v5750 = vld [vmem:[%s5728 + $0x54] sm:$0xf]
        %v5751 = vld [vmem:[%s5728 + $0x58] sm:$0xf]
        %v5752 = vld [vmem:[%s5728 + $0x5c] sm:$0xf]
        %v5753 = vld [vmem:[%s5728 + $0x60] sm:$0xf]
        %v5754 = vld [vmem:[%s5728 + $0x64] sm:$0xf]
        %v5755 = vld [vmem:[%s5728 + $0x68] sm:$0xf]
        %v5756 = vld [vmem:[%s5728 + $0x6c] sm:$0xf]
        %v5757 = vld [vmem:[%s5728 + $0x70] sm:$0xf]
        %v5758 = vld [vmem:[%s5728 + $0x74] sm:$0xf]
        %v5759 = vld [vmem:[%s5728 + $0x78] sm:$0xf]
        %v5760 = vld [vmem:[%s5728 + $0x7c] sm:$0xf]
        %v5761 = vld [vmem:[%s5728 + $0x80] sm:$0xf]
        %v5762 = vld [vmem:[%s5728 + $0x84] sm:$0xf]
        %v5763 = vld [vmem:[%s5728 + $0x88] sm:$0xf]
        %v5764 = vld [vmem:[%s5728 + $0x8c] sm:$0xf]
        %v5765 = vld [vmem:[%s5728 + $0x90] sm:$0xf]
        %v5766 = vld [vmem:[%s5728 + $0x94] sm:$0xf]
        %v5767 = vld [vmem:[%s5728 + $0x98] sm:$0xf]
        %v5768 = vld [vmem:[%s5728 + $0x9c] sm:$0xf]
        %v5769 = vld [vmem:[%s5728 + $0xa0] sm:$0xf]
        %v5770 = vld [vmem:[%s5728 + $0xa4] sm:$0xf]
        %v5771 = vld [vmem:[%s5728 + $0xa8] sm:$0xf]
        %v5772 = vld [vmem:[%s5728 + $0xac] sm:$0xf]
        %v5773 = vld [vmem:[%s5728 + $0xb0] sm:$0xf]
        %v5774 = vld [vmem:[%s5728 + $0xb4] sm:$0xf]
        %v5775 = vld [vmem:[%s5728 + $0xb8] sm:$0xf]
        %v5776 = vld [vmem:[%s5728 + $0xbc] sm:$0xf]
        %v5777 = vld [vmem:[%s5728 + $0xc0] sm:$0xf]
        %v5778 = vld [vmem:[%s5728 + $0xc4] sm:$0xf]
        %v5779 = vld [vmem:[%s5728 + $0xc8] sm:$0xf]
        %v5780 = vld [vmem:[%s5728 + $0xcc] sm:$0xf]
        %v5781 = vld [vmem:[%s5728 + $0xd0] sm:$0xf]
        %v5782 = vld [vmem:[%s5728 + $0xd4] sm:$0xf]
        %v5783 = vld [vmem:[%s5728 + $0xd8] sm:$0xf]
        %v5784 = vld [vmem:[%s5728 + $0xdc] sm:$0xf]
        %v5785 = vld [vmem:[%s5728 + $0xe0] sm:$0xf]
        %v5786 = vld [vmem:[%s5728 + $0xe4] sm:$0xf]
        %v5787 = vld [vmem:[%s5728 + $0xe8] sm:$0xf]
        %v5788 = vld [vmem:[%s5728 + $0xec] sm:$0xf]
        %v5789 = vld [vmem:[%s5728 + $0xf0] sm:$0xf]
        %v5790 = vld [vmem:[%s5728 + $0xf4] sm:$0xf]
        %v5791 = vld [vmem:[%s5728 + $0xf8] sm:$0xf]
        %v5792 = vld [vmem:[%s5728 + $0xfc] sm:$0xf]
        %v5793 = vld [vmem:[#allocation25 + $0x1] sm:$0x1]
        %v5794 = vlaneseq
        %v5795 = vshrl.u32 %v5794, 7
        %v5796 = vsub.s32 0, %v5795
        %v5797 = vrot.slane %v5793, %v5796
        %v5862 = vunpack.c.l.b16 %v5729
        %v5863 = vunpack.c.l.b16 %v5730
        %v5864 = vunpack.c.l.b16 %v5731
        %v5865 = vunpack.c.l.b16 %v5732
        %v5866 = vunpack.c.l.b16 %v5733
        %v5867 = vunpack.c.l.b16 %v5734
        %v5868 = vunpack.c.l.b16 %v5735
        %v5869 = vunpack.c.l.b16 %v5736
        %v5870 = vunpack.c.l.b16 %v5737
        %v5871 = vunpack.c.l.b16 %v5738
        %v5872 = vunpack.c.l.b16 %v5739
        %v5873 = vunpack.c.l.b16 %v5740
        %v5874 = vunpack.c.l.b16 %v5741
        %v5875 = vunpack.c.l.b16 %v5742
        %v5876 = vunpack.c.l.b16 %v5743
        %v5877 = vunpack.c.l.b16 %v5744
        %v5878 = vunpack.c.l.b16 %v5745
        %v5879 = vunpack.c.l.b16 %v5746
        %v5880 = vunpack.c.l.b16 %v5747
        %v5881 = vunpack.c.l.b16 %v5748
        %v5882 = vunpack.c.l.b16 %v5749
        %v5883 = vunpack.c.l.b16 %v5750
        %v5884 = vunpack.c.l.b16 %v5751
        %v5885 = vunpack.c.l.b16 %v5752
        %v5886 = vunpack.c.l.b16 %v5753
        %v5887 = vunpack.c.l.b16 %v5754
        %v5888 = vunpack.c.l.b16 %v5755
        %v5889 = vunpack.c.l.b16 %v5756
        %v5890 = vunpack.c.l.b16 %v5757
        %v5891 = vunpack.c.l.b16 %v5758
        %v5892 = vunpack.c.l.b16 %v5759
        %v5893 = vunpack.c.l.b16 %v5760
        %v5894 = vunpack.c.l.b16 %v5761
        %v5895 = vunpack.c.l.b16 %v5762
        %v5896 = vunpack.c.l.b16 %v5763
        %v5897 = vunpack.c.l.b16 %v5764
        %v5898 = vunpack.c.l.b16 %v5765
        %v5899 = vunpack.c.l.b16 %v5766
        %v5900 = vunpack.c.l.b16 %v5767
        %v5901 = vunpack.c.l.b16 %v5768
        %v5902 = vunpack.c.l.b16 %v5769
        %v5903 = vunpack.c.l.b16 %v5770
        %v5904 = vunpack.c.l.b16 %v5771
        %v5905 = vunpack.c.l.b16 %v5772
        %v5906 = vunpack.c.l.b16 %v5773
        %v5907 = vunpack.c.l.b16 %v5774
        %v5908 = vunpack.c.l.b16 %v5775
        %v5909 = vunpack.c.l.b16 %v5776
        %v5910 = vunpack.c.l.b16 %v5777
        %v5911 = vunpack.c.l.b16 %v5778
        %v5912 = vunpack.c.l.b16 %v5779
        %v5913 = vunpack.c.l.b16 %v5780
        %v5914 = vunpack.c.l.b16 %v5781
        %v5915 = vunpack.c.l.b16 %v5782
        %v5916 = vunpack.c.l.b16 %v5783
        %v5917 = vunpack.c.l.b16 %v5784
        %v5918 = vunpack.c.l.b16 %v5785
        %v5919 = vunpack.c.l.b16 %v5786
        %v5920 = vunpack.c.l.b16 %v5787
        %v5921 = vunpack.c.l.b16 %v5788
        %v5922 = vunpack.c.l.b16 %v5789
        %v5923 = vunpack.c.l.b16 %v5790
        %v5924 = vunpack.c.l.b16 %v5791
        %v5925 = vunpack.c.l.b16 %v5792
        %v5926 = vpack.c.b16 %v5863, %v5862
        %v5927 = vpack.c.b16 %v5865, %v5864
        %v5928 = vpack.c.b16 %v5867, %v5866
        %v5929 = vpack.c.b16 %v5869, %v5868
        %v5930 = vpack.c.b16 %v5871, %v5870
        %v5931 = vpack.c.b16 %v5873, %v5872
        %v5932 = vpack.c.b16 %v5875, %v5874
        %v5933 = vpack.c.b16 %v5877, %v5876
        %v5934 = vpack.c.b16 %v5879, %v5878
        %v5935 = vpack.c.b16 %v5881, %v5880
        %v5936 = vpack.c.b16 %v5883, %v5882
        %v5937 = vpack.c.b16 %v5885, %v5884
        %v5938 = vpack.c.b16 %v5887, %v5886
        %v5939 = vpack.c.b16 %v5889, %v5888
        %v5940 = vpack.c.b16 %v5891, %v5890
        %v5941 = vpack.c.b16 %v5893, %v5892
        %v5942 = vpack.c.b16 %v5895, %v5894
        %v5943 = vpack.c.b16 %v5897, %v5896
        %v5944 = vpack.c.b16 %v5899, %v5898
        %v5945 = vpack.c.b16 %v5901, %v5900
        %v5946 = vpack.c.b16 %v5903, %v5902
        %v5947 = vpack.c.b16 %v5905, %v5904
        %v5948 = vpack.c.b16 %v5907, %v5906
        %v5949 = vpack.c.b16 %v5909, %v5908
        %v5950 = vpack.c.b16 %v5911, %v5910
        %v5951 = vpack.c.b16 %v5913, %v5912
        %v5952 = vpack.c.b16 %v5915, %v5914
        %v5953 = vpack.c.b16 %v5917, %v5916
        %v5954 = vpack.c.b16 %v5919, %v5918
        %v5955 = vpack.c.b16 %v5921, %v5920
        %v5956 = vpack.c.b16 %v5923, %v5922
        %v5957 = vpack.c.b16 %v5925, %v5924
        %5990 = vmatprep.subr.bf16.mxu0 0
        %5991 = vmatpush1.bf16.msra.mxu0 %v5926
        %5992 = vmatprep.subr.bf16.mxu0 0
        %5993 = vmatpush1.bf16.msra.mxu0 %v5927
        %5994 = vmatprep.subr.bf16.mxu0 0
        %5995 = vmatpush1.bf16.msra.mxu0 %v5928
        %5996 = vmatprep.subr.bf16.mxu0 0
        %5997 = vmatpush1.bf16.msra.mxu0 %v5929
        %5998 = vmatprep.subr.bf16.mxu0 0
        %5999 = vmatpush1.bf16.msra.mxu0 %v5930
        %6000 = vmatprep.subr.bf16.mxu0 0
        %6001 = vmatpush1.bf16.msra.mxu0 %v5931
        %6002 = vmatprep.subr.bf16.mxu0 0
        %6003 = vmatpush1.bf16.msra.mxu0 %v5932
        %6004 = vmatprep.subr.bf16.mxu0 0
        %6005 = vmatpush1.bf16.msra.mxu0 %v5933
        %6006 = vmatprep.subr.bf16.mxu0 0
        %6007 = vmatpush1.bf16.msra.mxu0 %v5934
        %6008 = vmatprep.subr.bf16.mxu0 0
        %6009 = vmatpush1.bf16.msra.mxu0 %v5935
        %6010 = vmatprep.subr.bf16.mxu0 0
        %6011 = vmatpush1.bf16.msra.mxu0 %v5936
        %6012 = vmatprep.subr.bf16.mxu0 0
        %6013 = vmatpush1.bf16.msra.mxu0 %v5937
        %6014 = vmatprep.subr.bf16.mxu0 0
        %6015 = vmatpush1.bf16.msra.mxu0 %v5938
        %6016 = vmatprep.subr.bf16.mxu0 0
        %6017 = vmatpush1.bf16.msra.mxu0 %v5939
        %6018 = vmatprep.subr.bf16.mxu0 0
        %6019 = vmatpush1.bf16.msra.mxu0 %v5940
        %6020 = vmatprep.subr.bf16.mxu0 0
        %6021 = vmatpush1.bf16.msra.mxu0 %v5941
        %6022 = vmatprep.mubr.bf16.mxu0 %v5725
        %6023 = vmatmul.mubr.bf16.gmra.mrb[0].mxu0 %v5724
        %v6024 = vpop.f32.mrb[0].mxu0
        %v6025 = vadd.f32 %v5797, %v6024
        %v6026 = vpop.f32.mrb[0].mxu0
        %v6027 = vpop.f32.mrb[0].mxu0
        %v6028 = vadd.f32 %v5797, %v6027
        %v6029 = vpop.f32.mrb[0].mxu0
        %6030 = vdwg.mxu0
        %6031 = vmatprep.subr.bf16.mxu0 0
        %6032 = vmatpush1.bf16.msra.mxu0 %v5942
        %6033 = vmatprep.subr.bf16.mxu0 0
        %6034 = vmatpush1.bf16.msra.mxu0 %v5943
        %6035 = vmatprep.subr.bf16.mxu0 0
        %6036 = vmatpush1.bf16.msra.mxu0 %v5944
        %6037 = vmatprep.subr.bf16.mxu0 0
        %6038 = vmatpush1.bf16.msra.mxu0 %v5945
        %6039 = vmatprep.subr.bf16.mxu0 0
        %6040 = vmatpush1.bf16.msra.mxu0 %v5946
        %6041 = vmatprep.subr.bf16.mxu0 0
        %6042 = vmatpush1.bf16.msra.mxu0 %v5947
        %6043 = vmatprep.subr.bf16.mxu0 0
        %6044 = vmatpush1.bf16.msra.mxu0 %v5948
        %6045 = vmatprep.subr.bf16.mxu0 0
        %6046 = vmatpush1.bf16.msra.mxu0 %v5949
        %6047 = vmatprep.subr.bf16.mxu0 0
        %6048 = vmatpush1.bf16.msra.mxu0 %v5950
        %6049 = vmatprep.subr.bf16.mxu0 0
        %6050 = vmatpush1.bf16.msra.mxu0 %v5951
        %6051 = vmatprep.subr.bf16.mxu0 0
        %6052 = vmatpush1.bf16.msra.mxu0 %v5952
        %6053 = vmatprep.subr.bf16.mxu0 0
        %6054 = vmatpush1.bf16.msra.mxu0 %v5953
        %6055 = vmatprep.subr.bf16.mxu0 0
        %6056 = vmatpush1.bf16.msra.mxu0 %v5954
        %6057 = vmatprep.subr.bf16.mxu0 0
        %6058 = vmatpush1.bf16.msra.mxu0 %v5955
        %6059 = vmatprep.subr.bf16.mxu0 0
        %6060 = vmatpush1.bf16.msra.mxu0 %v5956
        %6061 = vmatprep.subr.bf16.mxu0 0
        %6062 = vmatpush1.bf16.msra.mxu0 %v5957
        %6063 = vmatprep.mubr.bf16.mxu0 %v5727
        %6064 = vmatmul.mubr.bf16.gmra.mrb[0].mxu0 %v5726
        %v6065 = vpop.f32.mrb[0].mxu0
        %v6066 = vadd.f32 %v6025, %v6065
        %v6067 = vpop.f32.mrb[0].mxu0
        %v6068 = vpop.f32.mrb[0].mxu0
        %v6069 = vadd.f32 %v6028, %v6068
        %v6070 = vpop.f32.mrb[0].mxu0
        %6071 = vdwg.mxu0
        %v6072 = vadd.f32 %v5319, %v6066
        %v6073 = vadd.f32 %v5320, %v6069
        %v6074 = vld [vmem:[%s4 + $0x2] sm:$0x1]
        %v6075 = vld [vmem:[#allocation10 + $0x2] sm:$0x1]
        %6076 = vadd.xlane.f32.xlu0 %v6072
        %v6077 = vpop.xlane.xlu0 %6076
        %6078 = vadd.xlane.f32.xlu0 %v6073
        %v6079 = vpop.xlane.xlu0 %6078
        %v6080 = vmul.f32 %v6077, %v837
        %v6081 = vmul.f32 %v6079, %v837
        %v6082 = vsub.f32 %v6072, %v6080
        %v6083 = vsub.f32 %v6073, %v6081
        %v6084 = vmul.f32 %v6082, %v6082
        %v6085 = vmul.f32 %v6083, %v6083
        %6086 = vadd.xlane.f32.xlu0 %v6084
        %v6087 = vpop.xlane.xlu0 %6086
        %6088 = vadd.xlane.f32.xlu0 %v6085
        %v6089 = vpop.xlane.xlu0 %6088
        %v6090 = vmul.f32 %v6087, %v837
        %v6091 = vmul.f32 %v6089, %v837
        %v6092 = vadd.f32 %v6090, 1e-05
        %v6093 = vadd.f32 %v6091, 1e-05
        %v6094 = vrsqrt.pop %v6092
        %v6095 = vrsqrt.pop %v6093
        %v6096 = vmul.f32 %v6082, %v6094
        %v6097 = vmul.f32 %v6083, %v6095
        %v6098 = vlaneseq
        %v6099 = vshrl.u32 %v6098, 7
        %v6100 = vsub.s32 0, %v6099
        %v6101 = vrot.slane %v6074, %v6100
        %v6102 = vmul.f32 %v6096, %v6101
        %v6103 = vmul.f32 %v6097, %v6101
        %v6104 = vlaneseq
        %v6105 = vshrl.u32 %v6104, 7
        %v6106 = vsub.s32 0, %v6105
        %v6107 = vrot.slane %v6075, %v6106
        %v6108 = vadd.f32 %v6102, %v6107
        %v6109 = vadd.f32 %v6103, %v6107
        %v6110 = vpack.c.bf16 %v6109, %v6108
        %s6111 = scalar_lea.vmem [#allocation11], 384
        %v6112 = vld [vmem:[%s6111] sm:$0xff]
        %v6113 = vld [vmem:[%s6111 + $0x8] sm:$0xf]
        %v6114 = vld [vmem:[%s6111 + $0xc] sm:$0xff]
        %v6115 = vld [vmem:[%s6111 + $0x14] sm:$0xf]
        %v6116 = vld [vmem:[%s6111 + $0x18] sm:$0xff]
        %v6117 = vld [vmem:[%s6111 + $0x20] sm:$0xf]
        %v6118 = vld [vmem:[%s6111 + $0x24] sm:$0xff]
        %v6119 = vld [vmem:[%s6111 + $0x2c] sm:$0xf]
        %v6120 = vld [vmem:[%s6111 + $0x30] sm:$0xff]
        %v6121 = vld [vmem:[%s6111 + $0x38] sm:$0xf]
        %v6122 = vld [vmem:[%s6111 + $0x3c] sm:$0xff]
        %v6123 = vld [vmem:[%s6111 + $0x44] sm:$0xf]
        %v6124 = vld [vmem:[%s6111 + $0x48] sm:$0xff]
        %v6125 = vld [vmem:[%s6111 + $0x50] sm:$0xf]
        %v6126 = vld [vmem:[%s6111 + $0x54] sm:$0xff]
        %v6127 = vld [vmem:[%s6111 + $0x5c] sm:$0xf]
        %v6128 = vld [vmem:[%s6111 + $0x60] sm:$0xff]
        %v6129 = vld [vmem:[%s6111 + $0x68] sm:$0xf]
        %v6130 = vld [vmem:[%s6111 + $0x6c] sm:$0xff]
        %v6131 = vld [vmem:[%s6111 + $0x74] sm:$0xf]
        %v6132 = vld [vmem:[%s6111 + $0x78] sm:$0xff]
        %v6133 = vld [vmem:[%s6111 + $0x80] sm:$0xf]
        %v6134 = vld [vmem:[%s6111 + $0x84] sm:$0xff]
        %v6135 = vld [vmem:[%s6111 + $0x8c] sm:$0xf]
        %v6136 = vld [vmem:[%s6111 + $0x90] sm:$0xff]
        %v6137 = vld [vmem:[%s6111 + $0x98] sm:$0xf]
        %v6138 = vld [vmem:[%s6111 + $0x9c] sm:$0xff]
        %v6139 = vld [vmem:[%s6111 + $0xa4] sm:$0xf]
        %v6140 = vld [vmem:[%s6111 + $0xa8] sm:$0xff]
        %v6141 = vld [vmem:[%s6111 + $0xb0] sm:$0xf]
        %v6142 = vld [vmem:[%s6111 + $0xb4] sm:$0xff]
        %v6143 = vld [vmem:[%s6111 + $0xbc] sm:$0xf]
        %s6144 = scalar_lea.vmem [#allocation13], 2
        %v6145 = vld [vmem:[%s6144] ss:$4 sm:$0x7]
        %v6147 = vlaneseq
        %v6148 = vshrl.u32 %v6147, 7
        %v6149 = vsub.s32 0, %v6148
        %v6150 = vrot.slane %v6145, %v6149
        %v6151 = vlaneseq
        %v6152 = vshrl.u32 %v6151, 7
        %v6153 = vsub.s32 1, %v6152
        %v6154 = vrot.slane %v6145, %v6153
        %v6155 = vlaneseq
        %v6156 = vshrl.u32 %v6155, 7
        %v6157 = vsub.s32 2, %v6156
        %v6158 = vrot.slane %v6145, %v6157
        %v6194 = vunpack.c.l.b16 %v6112
        %v6195 = vunpack.c.h.b16 %v6112
        %v6196 = vunpack.c.l.b16 %v6113
        %v6197 = vunpack.c.l.b16 %v6114
        %v6198 = vunpack.c.h.b16 %v6114
        %v6199 = vunpack.c.l.b16 %v6115
        %v6200 = vunpack.c.l.b16 %v6116
        %v6201 = vunpack.c.h.b16 %v6116
        %v6202 = vunpack.c.l.b16 %v6117
        %v6203 = vunpack.c.l.b16 %v6118
        %v6204 = vunpack.c.h.b16 %v6118
        %v6205 = vunpack.c.l.b16 %v6119
        %v6206 = vunpack.c.l.b16 %v6120
        %v6207 = vunpack.c.h.b16 %v6120
        %v6208 = vunpack.c.l.b16 %v6121
        %v6209 = vunpack.c.l.b16 %v6122
        %v6210 = vunpack.c.h.b16 %v6122
        %v6211 = vunpack.c.l.b16 %v6123
        %v6212 = vunpack.c.l.b16 %v6124
        %v6213 = vunpack.c.h.b16 %v6124
        %v6214 = vunpack.c.l.b16 %v6125
        %v6215 = vunpack.c.l.b16 %v6126
        %v6216 = vunpack.c.h.b16 %v6126
        %v6217 = vunpack.c.l.b16 %v6127
        %v6218 = vunpack.c.l.b16 %v6128
        %v6219 = vunpack.c.h.b16 %v6128
        %v6220 = vunpack.c.l.b16 %v6129
        %v6221 = vunpack.c.l.b16 %v6130
        %v6222 = vunpack.c.h.b16 %v6130
        %v6223 = vunpack.c.l.b16 %v6131
        %v6224 = vunpack.c.l.b16 %v6132
        %v6225 = vunpack.c.h.b16 %v6132
        %v6226 = vunpack.c.l.b16 %v6133
        %v6227 = vunpack.c.l.b16 %v6134
        %v6228 = vunpack.c.h.b16 %v6134
        %v6229 = vunpack.c.l.b16 %v6135
        %v6230 = vunpack.c.l.b16 %v6136
        %v6231 = vunpack.c.h.b16 %v6136
        %v6232 = vunpack.c.l.b16 %v6137
        %v6233 = vunpack.c.l.b16 %v6138
        %v6234 = vunpack.c.h.b16 %v6138
        %v6235 = vunpack.c.l.b16 %v6139
        %v6236 = vunpack.c.l.b16 %v6140
        %v6237 = vunpack.c.h.b16 %v6140
        %v6238 = vunpack.c.l.b16 %v6141
        %v6239 = vunpack.c.l.b16 %v6142
        %v6240 = vunpack.c.h.b16 %v6142
        %v6241 = vunpack.c.l.b16 %v6143
        %v6242 = vpack.c.b16 %v6197, %v6194
        %v6243 = vpack.c.b16 %v6198, %v6195
        %v6244 = vpack.c.b16 %v6199, %v6196
        %v6245 = vpack.c.b16 %v6203, %v6200
        %v6246 = vpack.c.b16 %v6204, %v6201
        %v6247 = vpack.c.b16 %v6205, %v6202
        %v6248 = vpack.c.b16 %v6209, %v6206
        %v6249 = vpack.c.b16 %v6210, %v6207
        %v6250 = vpack.c.b16 %v6211, %v6208
        %v6251 = vpack.c.b16 %v6215, %v6212
        %v6252 = vpack.c.b16 %v6216, %v6213
        %v6253 = vpack.c.b16 %v6217, %v6214
        %v6254 = vpack.c.b16 %v6221, %v6218
        %v6255 = vpack.c.b16 %v6222, %v6219
        %v6256 = vpack.c.b16 %v6223, %v6220
        %v6257 = vpack.c.b16 %v6227, %v6224
        %v6258 = vpack.c.b16 %v6228, %v6225
        %v6259 = vpack.c.b16 %v6229, %v6226
        %v6260 = vpack.c.b16 %v6233, %v6230
        %v6261 = vpack.c.b16 %v6234, %v6231
        %v6262 = vpack.c.b16 %v6235, %v6232
        %v6263 = vpack.c.b16 %v6239, %v6236
        %v6264 = vpack.c.b16 %v6240, %v6237
        %v6265 = vpack.c.b16 %v6241, %v6238
        %6290 = vmatprep.subr.bf16.mxu0 %v6243
        %6291 = vmatpush1.bf16.msra.mxu0 %v6242
        %6292 = vmatprep.subr.bf16.mxu0 %v6246
        %6293 = vmatpush1.bf16.msra.mxu0 %v6245
        %6294 = vmatprep.subr.bf16.mxu0 %v6249
        %6295 = vmatpush1.bf16.msra.mxu0 %v6248
        %6296 = vmatprep.subr.bf16.mxu0 %v6252
        %6297 = vmatpush1.bf16.msra.mxu0 %v6251
        %6298 = vmatprep.subr.bf16.mxu0 %v6255
        %6299 = vmatpush1.bf16.msra.mxu0 %v6254
        %6300 = vmatprep.subr.bf16.mxu0 %v6258
        %6301 = vmatpush1.bf16.msra.mxu0 %v6257
        %6302 = vmatprep.subr.bf16.mxu0 %v6261
        %6303 = vmatpush1.bf16.msra.mxu0 %v6260
        %6304 = vmatprep.subr.bf16.mxu0 %v6264
        %6305 = vmatpush1.bf16.msra.mxu0 %v6263
        %6306 = vmatprep.subr.bf16.mxu0 0
        %6307 = vmatpush1.bf16.msra.mxu0 0
        %6308 = vmatprep.subr.bf16.mxu0 0
        %6309 = vmatpush1.bf16.msra.mxu0 0
        %6310 = vmatprep.subr.bf16.mxu0 0
        %6311 = vmatpush1.bf16.msra.mxu0 0
        %6312 = vmatprep.subr.bf16.mxu0 0
        %6313 = vmatpush1.bf16.msra.mxu0 0
        %6314 = vmatprep.subr.bf16.mxu0 0
        %6315 = vmatpush1.bf16.msra.mxu0 0
        %6316 = vmatprep.subr.bf16.mxu0 0
        %6317 = vmatpush1.bf16.msra.mxu0 0
        %6318 = vmatprep.subr.bf16.mxu0 0
        %6319 = vmatpush1.bf16.msra.mxu0 0
        %6320 = vmatprep.subr.bf16.mxu0 0
        %6321 = vmatpush1.bf16.msra.mxu0 0
        %6322 = vmatprep.mubr.bf16.mxu0 0
        %6323 = vmatmul.mubr.bf16.gmra.mrb[0].mxu0 %v6110
        %v6324 = vpop.f32.mrb[0].mxu0
        %v6325 = vadd.f32 %v6150, %v6324
        %v6326 = vpop.f32.mrb[0].mxu0
        %v6327 = vadd.f32 %v6154, %v6326
        %v6328 = vpop.f32.mrb[0].mxu0
        %v6329 = vadd.f32 %v6150, %v6328
        %v6330 = vpop.f32.mrb[0].mxu0
        %v6331 = vadd.f32 %v6154, %v6330
        %6332 = vdwg.mxu0
        %6333 = vmatprep.subr.bf16.mxu0 0
        %6334 = vmatpush1.bf16.msra.mxu0 %v6244
        %6335 = vmatprep.subr.bf16.mxu0 0
        %6336 = vmatpush1.bf16.msra.mxu0 %v6247
        %6337 = vmatprep.subr.bf16.mxu0 0
        %6338 = vmatpush1.bf16.msra.mxu0 %v6250
        %6339 = vmatprep.subr.bf16.mxu0 0
        %6340 = vmatpush1.bf16.msra.mxu0 %v6253
        %6341 = vmatprep.subr.bf16.mxu0 0
        %6342 = vmatpush1.bf16.msra.mxu0 %v6256
        %6343 = vmatprep.subr.bf16.mxu0 0
        %6344 = vmatpush1.bf16.msra.mxu0 %v6259
        %6345 = vmatprep.subr.bf16.mxu0 0
        %6346 = vmatpush1.bf16.msra.mxu0 %v6262
        %6347 = vmatprep.subr.bf16.mxu0 0
        %6348 = vmatpush1.bf16.msra.mxu0 %v6265
        %6349 = vmatprep.subr.bf16.mxu0 0
        %6350 = vmatpush1.bf16.msra.mxu0 0
        %6351 = vmatprep.subr.bf16.mxu0 0
        %6352 = vmatpush1.bf16.msra.mxu0 0
        %6353 = vmatprep.subr.bf16.mxu0 0
        %6354 = vmatpush1.bf16.msra.mxu0 0
        %6355 = vmatprep.subr.bf16.mxu0 0
        %6356 = vmatpush1.bf16.msra.mxu0 0
        %6357 = vmatprep.subr.bf16.mxu0 0
        %6358 = vmatpush1.bf16.msra.mxu0 0
        %6359 = vmatprep.subr.bf16.mxu0 0
        %6360 = vmatpush1.bf16.msra.mxu0 0
        %6361 = vmatprep.subr.bf16.mxu0 0
        %6362 = vmatpush1.bf16.msra.mxu0 0
        %6363 = vmatprep.subr.bf16.mxu0 0
        %6364 = vmatpush1.bf16.msra.mxu0 0
        %6365 = vmatprep.mubr.bf16.mxu0 0
        %6366 = vmatmul.mubr.bf16.gmra.mrb[0].mxu0 %v6110
        %v6367 = vpop.f32.mrb[0].mxu0
        %v6368 = vadd.f32 %v6158, %v6367
        %v6369 = vpop.f32.mrb[0].mxu0
        %v6370 = vpop.f32.mrb[0].mxu0
        %v6371 = vadd.f32 %v6158, %v6370
        %v6372 = vpop.f32.mrb[0].mxu0
        %6373 = vdwg.mxu0
        %6376 = vrot.lane.b32.xlu0 %v6325, 112
        %v6377 = vpop.permute.xlu0 %6376
        %6378 = vrot.lane.b32.xlu0 %v6329, 112
        %v6379 = vpop.permute.xlu0 %6378
        %6382 = vrot.lane.b32.xlu0 %v6325, 96
        %v6383 = vpop.permute.xlu0 %6382
        %6384 = vrot.lane.b32.xlu0 %v6329, 96
        %v6385 = vpop.permute.xlu0 %6384
        %6388 = vrot.lane.b32.xlu0 %v6325, 80
        %v6389 = vpop.permute.xlu0 %6388
        %6390 = vrot.lane.b32.xlu0 %v6329, 80
        %v6391 = vpop.permute.xlu0 %6390
        %6394 = vrot.lane.b32.xlu0 %v6325, 64
        %v6395 = vpop.permute.xlu0 %6394
        %6396 = vrot.lane.b32.xlu0 %v6329, 64
        %v6397 = vpop.permute.xlu0 %6396
        %6400 = vrot.lane.b32.xlu0 %v6325, 48
        %v6401 = vpop.permute.xlu0 %6400
        %6402 = vrot.lane.b32.xlu0 %v6329, 48
        %v6403 = vpop.permute.xlu0 %6402
        %6406 = vrot.lane.b32.xlu0 %v6325, 32
        %v6407 = vpop.permute.xlu0 %6406
        %6408 = vrot.lane.b32.xlu0 %v6329, 32
        %v6409 = vpop.permute.xlu0 %6408
        %6412 = vrot.lane.b32.xlu0 %v6325, 16
        %v6413 = vpop.permute.xlu0 %6412
        %6414 = vrot.lane.b32.xlu0 %v6329, 16
        %v6415 = vpop.permute.xlu0 %6414
        %v6418 = vmul.f32 %v6325, 0.25
        %v6419 = vmul.f32 %v6329, 0.25
        %v6420 = vmul.f32 %v6377, 0.25
        %v6421 = vmul.f32 %v6379, 0.25
        %v6422 = vmul.f32 %v6383, 0.25
        %v6423 = vmul.f32 %v6385, 0.25
        %v6424 = vmul.f32 %v6389, 0.25
        %v6425 = vmul.f32 %v6391, 0.25
        %v6426 = vmul.f32 %v6395, 0.25
        %v6427 = vmul.f32 %v6397, 0.25
        %v6428 = vmul.f32 %v6401, 0.25
        %v6429 = vmul.f32 %v6403, 0.25
        %v6430 = vmul.f32 %v6407, 0.25
        %v6431 = vmul.f32 %v6409, 0.25
        %v6432 = vmul.f32 %v6413, 0.25
        %v6433 = vmul.f32 %v6415, 0.25
        %6436 = vrot.lane.b32.xlu0 %v6327, 112
        %v6437 = vpop.permute.xlu0 %6436
        %6438 = vrot.lane.b32.xlu0 %v6331, 112
        %v6439 = vpop.permute.xlu0 %6438
        %6442 = vrot.lane.b32.xlu0 %v6327, 96
        %v6443 = vpop.permute.xlu0 %6442
        %6444 = vrot.lane.b32.xlu0 %v6331, 96
        %v6445 = vpop.permute.xlu0 %6444
        %6448 = vrot.lane.b32.xlu0 %v6327, 80
        %v6449 = vpop.permute.xlu0 %6448
        %6450 = vrot.lane.b32.xlu0 %v6331, 80
        %v6451 = vpop.permute.xlu0 %6450
        %6454 = vrot.lane.b32.xlu0 %v6327, 64
        %v6455 = vpop.permute.xlu0 %6454
        %6456 = vrot.lane.b32.xlu0 %v6331, 64
        %v6457 = vpop.permute.xlu0 %6456
        %6460 = vrot.lane.b32.xlu0 %v6327, 48
        %v6461 = vpop.permute.xlu0 %6460
        %6462 = vrot.lane.b32.xlu0 %v6331, 48
        %v6463 = vpop.permute.xlu0 %6462
        %6466 = vrot.lane.b32.xlu0 %v6327, 32
        %v6467 = vpop.permute.xlu0 %6466
        %6468 = vrot.lane.b32.xlu0 %v6331, 32
        %v6469 = vpop.permute.xlu0 %6468
        %6472 = vrot.lane.b32.xlu0 %v6327, 16
        %v6473 = vpop.permute.xlu0 %6472
        %6474 = vrot.lane.b32.xlu0 %v6331, 16
        %v6475 = vpop.permute.xlu0 %6474
        %6480 = vrot.lane.b32.xlu0 %v6368, 112
        %v6481 = vpop.permute.xlu0 %6480
        %6482 = vrot.lane.b32.xlu0 %v6371, 112
        %v6483 = vpop.permute.xlu0 %6482
        %6486 = vrot.lane.b32.xlu0 %v6368, 96
        %v6487 = vpop.permute.xlu0 %6486
        %6488 = vrot.lane.b32.xlu0 %v6371, 96
        %v6489 = vpop.permute.xlu0 %6488
        %6492 = vrot.lane.b32.xlu0 %v6368, 80
        %v6493 = vpop.permute.xlu0 %6492
        %6494 = vrot.lane.b32.xlu0 %v6371, 80
        %v6495 = vpop.permute.xlu0 %6494
        %6498 = vrot.lane.b32.xlu0 %v6368, 64
        %v6499 = vpop.permute.xlu0 %6498
        %6500 = vrot.lane.b32.xlu0 %v6371, 64
        %v6501 = vpop.permute.xlu0 %6500
        %6504 = vrot.lane.b32.xlu0 %v6368, 48
        %v6505 = vpop.permute.xlu0 %6504
        %6506 = vrot.lane.b32.xlu0 %v6371, 48
        %v6507 = vpop.permute.xlu0 %6506
        %6510 = vrot.lane.b32.xlu0 %v6368, 32
        %v6511 = vpop.permute.xlu0 %6510
        %6512 = vrot.lane.b32.xlu0 %v6371, 32
        %v6513 = vpop.permute.xlu0 %6512
        %6516 = vrot.lane.b32.xlu0 %v6368, 16
        %v6517 = vpop.permute.xlu0 %6516
        %6518 = vrot.lane.b32.xlu0 %v6371, 16
        %v6519 = vpop.permute.xlu0 %6518
        %v6522 = vpack.c.bf16 %v6419, %v6418
        %v6523 = vpack.c.bf16 %v6421, %v6420
        %v6524 = vpack.c.bf16 %v6423, %v6422
        %v6525 = vpack.c.bf16 %v6425, %v6424
        %v6526 = vpack.c.bf16 %v6427, %v6426
        %v6527 = vpack.c.bf16 %v6429, %v6428
        %v6528 = vpack.c.bf16 %v6431, %v6430
        %v6529 = vpack.c.bf16 %v6433, %v6432
        %v6530 = vpack.c.bf16 %v6331, %v6327
        %v6531 = vpack.c.bf16 %v6439, %v6437
        %v6532 = vpack.c.bf16 %v6445, %v6443
        %v6533 = vpack.c.bf16 %v6451, %v6449
        %v6534 = vpack.c.bf16 %v6457, %v6455
        %v6535 = vpack.c.bf16 %v6463, %v6461
        %v6536 = vpack.c.bf16 %v6469, %v6467
        %v6537 = vpack.c.bf16 %v6475, %v6473
        %v6539 = vsel %vm1337, %v6522, 0
        %v6542 = vsel %vm1337, %v6530, 0
        %6544 = vmatprep.subr.bf16.mxu0 0
        %6545 = vmatpush1.bf16.xpose.msra.mxu0 %v6542
        %6546 = vmatprep.subr.bf16.mxu0 0
        %6547 = vmatpush1.bf16.xpose.msra.mxu0 0
        %6548 = vmatprep.subr.bf16.mxu0 0
        %6549 = vmatpush1.bf16.xpose.msra.mxu0 0
        %6550 = vmatprep.subr.bf16.mxu0 0
        %6551 = vmatpush1.bf16.xpose.msra.mxu0 0
        %6552 = vmatprep.subr.bf16.mxu0 0
        %6553 = vmatpush1.bf16.xpose.msra.mxu0 0
        %6554 = vmatprep.subr.bf16.mxu0 0
        %6555 = vmatpush1.bf16.xpose.msra.mxu0 0
        %6556 = vmatprep.subr.bf16.mxu0 0
        %6557 = vmatpush1.bf16.xpose.msra.mxu0 0
        %6558 = vmatprep.subr.bf16.mxu0 0
        %6559 = vmatpush1.bf16.xpose.msra.mxu0 0
        %6560 = vmatprep.subr.bf16.mxu0 0
        %6561 = vmatpush1.bf16.xpose.msra.mxu0 0
        %6562 = vmatprep.subr.bf16.mxu0 0
        %6563 = vmatpush1.bf16.xpose.msra.mxu0 0
        %6564 = vmatprep.subr.bf16.mxu0 0
        %6565 = vmatpush1.bf16.xpose.msra.mxu0 0
        %6566 = vmatprep.subr.bf16.mxu0 0
        %6567 = vmatpush1.bf16.xpose.msra.mxu0 0
        %6568 = vmatprep.subr.bf16.mxu0 0
        %6569 = vmatpush1.bf16.xpose.msra.mxu0 0
        %6570 = vmatprep.subr.bf16.mxu0 0
        %6571 = vmatpush1.bf16.xpose.msra.mxu0 0
        %6572 = vmatprep.subr.bf16.mxu0 0
        %6573 = vmatpush1.bf16.xpose.msra.mxu0 0
        %6574 = vmatprep.subr.bf16.mxu0 0
        %6575 = vmatpush1.bf16.xpose.msra.mxu0 0
        %6576 = vmatprep.mubr.bf16.mxu0 0
        %6577 = vmatmul.mubr.bf16.gmra.mrb[0].mxu0 %v6539
        %v6578 = vpop.f32.mrb[0].mxu0
        %v6579 = vadd.f32 0.0, %v6578
        %v6580 = vpop.f32.mrb[0].mxu0
        %v6581 = vpop.f32.mrb[0].mxu0
        %v6582 = vadd.f32 0.0, %v6581
        %v6583 = vpop.f32.mrb[0].mxu0
        %6584 = vdwg.mxu0
        %v6586 = vsel %vm1337, %v6523, 0
        %v6589 = vsel %vm1337, %v6531, 0
        %6591 = vmatprep.subr.bf16.mxu0 0
        %6592 = vmatpush1.bf16.xpose.msra.mxu0 %v6589
        %6593 = vmatprep.subr.bf16.mxu0 0
        %6594 = vmatpush1.bf16.xpose.msra.mxu0 0
        %6595 = vmatprep.subr.bf16.mxu0 0
        %6596 = vmatpush1.bf16.xpose.msra.mxu0 0
        %6597 = vmatprep.subr.bf16.mxu0 0
        %6598 = vmatpush1.bf16.xpose.msra.mxu0 0
        %6599 = vmatprep.subr.bf16.mxu0 0
        %6600 = vmatpush1.bf16.xpose.msra.mxu0 0
        %6601 = vmatprep.subr.bf16.mxu0 0
        %6602 = vmatpush1.bf16.xpose.msra.mxu0 0
        %6603 = vmatprep.subr.bf16.mxu0 0
        %6604 = vmatpush1.bf16.xpose.msra.mxu0 0
        %6605 = vmatprep.subr.bf16.mxu0 0
        %6606 = vmatpush1.bf16.xpose.msra.mxu0 0
        %6607 = vmatprep.subr.bf16.mxu0 0
        %6608 = vmatpush1.bf16.xpose.msra.mxu0 0
        %6609 = vmatprep.subr.bf16.mxu0 0
        %6610 = vmatpush1.bf16.xpose.msra.mxu0 0
        %6611 = vmatprep.subr.bf16.mxu0 0
        %6612 = vmatpush1.bf16.xpose.msra.mxu0 0
        %6613 = vmatprep.subr.bf16.mxu0 0
        %6614 = vmatpush1.bf16.xpose.msra.mxu0 0
        %6615 = vmatprep.subr.bf16.mxu0 0
        %6616 = vmatpush1.bf16.xpose.msra.mxu0 0
        %6617 = vmatprep.subr.bf16.mxu0 0
        %6618 = vmatpush1.bf16.xpose.msra.mxu0 0
        %6619 = vmatprep.subr.bf16.mxu0 0
        %6620 = vmatpush1.bf16.xpose.msra.mxu0 0
        %6621 = vmatprep.subr.bf16.mxu0 0
        %6622 = vmatpush1.bf16.xpose.msra.mxu0 0
        %6623 = vmatprep.mubr.bf16.mxu0 0
        %6624 = vmatmul.mubr.bf16.gmra.mrb[0].mxu0 %v6586
        %v6625 = vpop.f32.mrb[0].mxu0
        %v6626 = vadd.f32 0.0, %v6625
        %v6627 = vpop.f32.mrb[0].mxu0
        %v6628 = vpop.f32.mrb[0].mxu0
        %v6629 = vadd.f32 0.0, %v6628
        %v6630 = vpop.f32.mrb[0].mxu0
        %6631 = vdwg.mxu0
        %v6633 = vsel %vm1337, %v6524, 0
        %v6636 = vsel %vm1337, %v6532, 0
        %6638 = vmatprep.subr.bf16.mxu0 0
        %6639 = vmatpush1.bf16.xpose.msra.mxu0 %v6636
        %6640 = vmatprep.subr.bf16.mxu0 0
        %6641 = vmatpush1.bf16.xpose.msra.mxu0 0
        %6642 = vmatprep.subr.bf16.mxu0 0
        %6643 = vmatpush1.bf16.xpose.msra.mxu0 0
        %6644 = vmatprep.subr.bf16.mxu0 0
        %6645 = vmatpush1.bf16.xpose.msra.mxu0 0
        %6646 = vmatprep.subr.bf16.mxu0 0
        %6647 = vmatpush1.bf16.xpose.msra.mxu0 0
        %6648 = vmatprep.subr.bf16.mxu0 0
        %6649 = vmatpush1.bf16.xpose.msra.mxu0 0
        %6650 = vmatprep.subr.bf16.mxu0 0
        %6651 = vmatpush1.bf16.xpose.msra.mxu0 0
        %6652 = vmatprep.subr.bf16.mxu0 0
        %6653 = vmatpush1.bf16.xpose.msra.mxu0 0
        %6654 = vmatprep.subr.bf16.mxu0 0
        %6655 = vmatpush1.bf16.xpose.msra.mxu0 0
        %6656 = vmatprep.subr.bf16.mxu0 0
        %6657 = vmatpush1.bf16.xpose.msra.mxu0 0
        %6658 = vmatprep.subr.bf16.mxu0 0
        %6659 = vmatpush1.bf16.xpose.msra.mxu0 0
        %6660 = vmatprep.subr.bf16.mxu0 0
        %6661 = vmatpush1.bf16.xpose.msra.mxu0 0
        %6662 = vmatprep.subr.bf16.mxu0 0
        %6663 = vmatpush1.bf16.xpose.msra.mxu0 0
        %6664 = vmatprep.subr.bf16.mxu0 0
        %6665 = vmatpush1.bf16.xpose.msra.mxu0 0
        %6666 = vmatprep.subr.bf16.mxu0 0
        %6667 = vmatpush1.bf16.xpose.msra.mxu0 0
        %6668 = vmatprep.subr.bf16.mxu0 0
        %6669 = vmatpush1.bf16.xpose.msra.mxu0 0
        %6670 = vmatprep.mubr.bf16.mxu0 0
        %6671 = vmatmul.mubr.bf16.gmra.mrb[0].mxu0 %v6633
        %v6672 = vpop.f32.mrb[0].mxu0
        %v6673 = vadd.f32 0.0, %v6672
        %v6674 = vpop.f32.mrb[0].mxu0
        %v6675 = vpop.f32.mrb[0].mxu0
        %v6676 = vadd.f32 0.0, %v6675
        %v6677 = vpop.f32.mrb[0].mxu0
        %6678 = vdwg.mxu0
        %v6680 = vsel %vm1337, %v6525, 0
        %v6683 = vsel %vm1337, %v6533, 0
        %6685 = vmatprep.subr.bf16.mxu0 0
        %6686 = vmatpush1.bf16.xpose.msra.mxu0 %v6683
        %6687 = vmatprep.subr.bf16.mxu0 0
        %6688 = vmatpush1.bf16.xpose.msra.mxu0 0
        %6689 = vmatprep.subr.bf16.mxu0 0
        %6690 = vmatpush1.bf16.xpose.msra.mxu0 0
        %6691 = vmatprep.subr.bf16.mxu0 0
        %6692 = vmatpush1.bf16.xpose.msra.mxu0 0
        %6693 = vmatprep.subr.bf16.mxu0 0
        %6694 = vmatpush1.bf16.xpose.msra.mxu0 0
        %6695 = vmatprep.subr.bf16.mxu0 0
        %6696 = vmatpush1.bf16.xpose.msra.mxu0 0
        %6697 = vmatprep.subr.bf16.mxu0 0
        %6698 = vmatpush1.bf16.xpose.msra.mxu0 0
        %6699 = vmatprep.subr.bf16.mxu0 0
        %6700 = vmatpush1.bf16.xpose.msra.mxu0 0
        %6701 = vmatprep.subr.bf16.mxu0 0
        %6702 = vmatpush1.bf16.xpose.msra.mxu0 0
        %6703 = vmatprep.subr.bf16.mxu0 0
        %6704 = vmatpush1.bf16.xpose.msra.mxu0 0
        %6705 = vmatprep.subr.bf16.mxu0 0
        %6706 = vmatpush1.bf16.xpose.msra.mxu0 0
        %6707 = vmatprep.subr.bf16.mxu0 0
        %6708 = vmatpush1.bf16.xpose.msra.mxu0 0
        %6709 = vmatprep.subr.bf16.mxu0 0
        %6710 = vmatpush1.bf16.xpose.msra.mxu0 0
        %6711 = vmatprep.subr.bf16.mxu0 0
        %6712 = vmatpush1.bf16.xpose.msra.mxu0 0
        %6713 = vmatprep.subr.bf16.mxu0 0
        %6714 = vmatpush1.bf16.xpose.msra.mxu0 0
        %6715 = vmatprep.subr.bf16.mxu0 0
        %6716 = vmatpush1.bf16.xpose.msra.mxu0 0
        %6717 = vmatprep.mubr.bf16.mxu0 0
        %6718 = vmatmul.mubr.bf16.gmra.mrb[0].mxu0 %v6680
        %v6719 = vpop.f32.mrb[0].mxu0
        %v6720 = vadd.f32 0.0, %v6719
        %v6721 = vpop.f32.mrb[0].mxu0
        %v6722 = vpop.f32.mrb[0].mxu0
        %v6723 = vadd.f32 0.0, %v6722
        %v6724 = vpop.f32.mrb[0].mxu0
        %6725 = vdwg.mxu0
        %v6727 = vsel %vm1337, %v6526, 0
        %v6730 = vsel %vm1337, %v6534, 0
        %6732 = vmatprep.subr.bf16.mxu0 0
        %6733 = vmatpush1.bf16.xpose.msra.mxu0 %v6730
        %6734 = vmatprep.subr.bf16.mxu0 0
        %6735 = vmatpush1.bf16.xpose.msra.mxu0 0
        %6736 = vmatprep.subr.bf16.mxu0 0
        %6737 = vmatpush1.bf16.xpose.msra.mxu0 0
        %6738 = vmatprep.subr.bf16.mxu0 0
        %6739 = vmatpush1.bf16.xpose.msra.mxu0 0
        %6740 = vmatprep.subr.bf16.mxu0 0
        %6741 = vmatpush1.bf16.xpose.msra.mxu0 0
        %6742 = vmatprep.subr.bf16.mxu0 0
        %6743 = vmatpush1.bf16.xpose.msra.mxu0 0
        %6744 = vmatprep.subr.bf16.mxu0 0
        %6745 = vmatpush1.bf16.xpose.msra.mxu0 0
        %6746 = vmatprep.subr.bf16.mxu0 0
        %6747 = vmatpush1.bf16.xpose.msra.mxu0 0
        %6748 = vmatprep.subr.bf16.mxu0 0
        %6749 = vmatpush1.bf16.xpose.msra.mxu0 0
        %6750 = vmatprep.subr.bf16.mxu0 0
        %6751 = vmatpush1.bf16.xpose.msra.mxu0 0
        %6752 = vmatprep.subr.bf16.mxu0 0
        %6753 = vmatpush1.bf16.xpose.msra.mxu0 0
        %6754 = vmatprep.subr.bf16.mxu0 0
        %6755 = vmatpush1.bf16.xpose.msra.mxu0 0
        %6756 = vmatprep.subr.bf16.mxu0 0
        %6757 = vmatpush1.bf16.xpose.msra.mxu0 0
        %6758 = vmatprep.subr.bf16.mxu0 0
        %6759 = vmatpush1.bf16.xpose.msra.mxu0 0
        %6760 = vmatprep.subr.bf16.mxu0 0
        %6761 = vmatpush1.bf16.xpose.msra.mxu0 0
        %6762 = vmatprep.subr.bf16.mxu0 0
        %6763 = vmatpush1.bf16.xpose.msra.mxu0 0
        %6764 = vmatprep.mubr.bf16.mxu0 0
        %6765 = vmatmul.mubr.bf16.gmra.mrb[0].mxu0 %v6727
        %v6766 = vpop.f32.mrb[0].mxu0
        %v6767 = vadd.f32 0.0, %v6766
        %v6768 = vpop.f32.mrb[0].mxu0
        %v6769 = vpop.f32.mrb[0].mxu0
        %v6770 = vadd.f32 0.0, %v6769
        %v6771 = vpop.f32.mrb[0].mxu0
        %6772 = vdwg.mxu0
        %v6774 = vsel %vm1337, %v6527, 0
        %v6777 = vsel %vm1337, %v6535, 0
        %6779 = vmatprep.subr.bf16.mxu0 0
        %6780 = vmatpush1.bf16.xpose.msra.mxu0 %v6777
        %6781 = vmatprep.subr.bf16.mxu0 0
        %6782 = vmatpush1.bf16.xpose.msra.mxu0 0
        %6783 = vmatprep.subr.bf16.mxu0 0
        %6784 = vmatpush1.bf16.xpose.msra.mxu0 0
        %6785 = vmatprep.subr.bf16.mxu0 0
        %6786 = vmatpush1.bf16.xpose.msra.mxu0 0
        %6787 = vmatprep.subr.bf16.mxu0 0
        %6788 = vmatpush1.bf16.xpose.msra.mxu0 0
        %6789 = vmatprep.subr.bf16.mxu0 0
        %6790 = vmatpush1.bf16.xpose.msra.mxu0 0
        %6791 = vmatprep.subr.bf16.mxu0 0
        %6792 = vmatpush1.bf16.xpose.msra.mxu0 0
        %6793 = vmatprep.subr.bf16.mxu0 0
        %6794 = vmatpush1.bf16.xpose.msra.mxu0 0
        %6795 = vmatprep.subr.bf16.mxu0 0
        %6796 = vmatpush1.bf16.xpose.msra.mxu0 0
        %6797 = vmatprep.subr.bf16.mxu0 0
        %6798 = vmatpush1.bf16.xpose.msra.mxu0 0
        %6799 = vmatprep.subr.bf16.mxu0 0
        %6800 = vmatpush1.bf16.xpose.msra.mxu0 0
        %6801 = vmatprep.subr.bf16.mxu0 0
        %6802 = vmatpush1.bf16.xpose.msra.mxu0 0
        %6803 = vmatprep.subr.bf16.mxu0 0
        %6804 = vmatpush1.bf16.xpose.msra.mxu0 0
        %6805 = vmatprep.subr.bf16.mxu0 0
        %6806 = vmatpush1.bf16.xpose.msra.mxu0 0
        %6807 = vmatprep.subr.bf16.mxu0 0
        %6808 = vmatpush1.bf16.xpose.msra.mxu0 0
        %6809 = vmatprep.subr.bf16.mxu0 0
        %6810 = vmatpush1.bf16.xpose.msra.mxu0 0
        %6811 = vmatprep.mubr.bf16.mxu0 0
        %6812 = vmatmul.mubr.bf16.gmra.mrb[0].mxu0 %v6774
        %v6813 = vpop.f32.mrb[0].mxu0
        %v6814 = vadd.f32 0.0, %v6813
        %v6815 = vpop.f32.mrb[0].mxu0
        %v6816 = vpop.f32.mrb[0].mxu0
        %v6817 = vadd.f32 0.0, %v6816
        %v6818 = vpop.f32.mrb[0].mxu0
        %6819 = vdwg.mxu0
        %v6821 = vsel %vm1337, %v6528, 0
        %v6824 = vsel %vm1337, %v6536, 0
        %6826 = vmatprep.subr.bf16.mxu0 0
        %6827 = vmatpush1.bf16.xpose.msra.mxu0 %v6824
        %6828 = vmatprep.subr.bf16.mxu0 0
        %6829 = vmatpush1.bf16.xpose.msra.mxu0 0
        %6830 = vmatprep.subr.bf16.mxu0 0
        %6831 = vmatpush1.bf16.xpose.msra.mxu0 0
        %6832 = vmatprep.subr.bf16.mxu0 0
        %6833 = vmatpush1.bf16.xpose.msra.mxu0 0
        %6834 = vmatprep.subr.bf16.mxu0 0
        %6835 = vmatpush1.bf16.xpose.msra.mxu0 0
        %6836 = vmatprep.subr.bf16.mxu0 0
        %6837 = vmatpush1.bf16.xpose.msra.mxu0 0
        %6838 = vmatprep.subr.bf16.mxu0 0
        %6839 = vmatpush1.bf16.xpose.msra.mxu0 0
        %6840 = vmatprep.subr.bf16.mxu0 0
        %6841 = vmatpush1.bf16.xpose.msra.mxu0 0
        %6842 = vmatprep.subr.bf16.mxu0 0
        %6843 = vmatpush1.bf16.xpose.msra.mxu0 0
        %6844 = vmatprep.subr.bf16.mxu0 0
        %6845 = vmatpush1.bf16.xpose.msra.mxu0 0
        %6846 = vmatprep.subr.bf16.mxu0 0
        %6847 = vmatpush1.bf16.xpose.msra.mxu0 0
        %6848 = vmatprep.subr.bf16.mxu0 0
        %6849 = vmatpush1.bf16.xpose.msra.mxu0 0
        %6850 = vmatprep.subr.bf16.mxu0 0
        %6851 = vmatpush1.bf16.xpose.msra.mxu0 0
        %6852 = vmatprep.subr.bf16.mxu0 0
        %6853 = vmatpush1.bf16.xpose.msra.mxu0 0
        %6854 = vmatprep.subr.bf16.mxu0 0
        %6855 = vmatpush1.bf16.xpose.msra.mxu0 0
        %6856 = vmatprep.subr.bf16.mxu0 0
        %6857 = vmatpush1.bf16.xpose.msra.mxu0 0
        %6858 = vmatprep.mubr.bf16.mxu0 0
        %6859 = vmatmul.mubr.bf16.gmra.mrb[0].mxu0 %v6821
        %v6860 = vpop.f32.mrb[0].mxu0
        %v6861 = vadd.f32 0.0, %v6860
        %v6862 = vpop.f32.mrb[0].mxu0
        %v6863 = vpop.f32.mrb[0].mxu0
        %v6864 = vadd.f32 0.0, %v6863
        %v6865 = vpop.f32.mrb[0].mxu0
        %6866 = vdwg.mxu0
        %v6868 = vsel %vm1337, %v6529, 0
        %v6871 = vsel %vm1337, %v6537, 0
        %6873 = vmatprep.subr.bf16.mxu0 0
        %6874 = vmatpush1.bf16.xpose.msra.mxu0 %v6871
        %6875 = vmatprep.subr.bf16.mxu0 0
        %6876 = vmatpush1.bf16.xpose.msra.mxu0 0
        %6877 = vmatprep.subr.bf16.mxu0 0
        %6878 = vmatpush1.bf16.xpose.msra.mxu0 0
        %6879 = vmatprep.subr.bf16.mxu0 0
        %6880 = vmatpush1.bf16.xpose.msra.mxu0 0
        %6881 = vmatprep.subr.bf16.mxu0 0
        %6882 = vmatpush1.bf16.xpose.msra.mxu0 0
        %6883 = vmatprep.subr.bf16.mxu0 0
        %6884 = vmatpush1.bf16.xpose.msra.mxu0 0
        %6885 = vmatprep.subr.bf16.mxu0 0
        %6886 = vmatpush1.bf16.xpose.msra.mxu0 0
        %6887 = vmatprep.subr.bf16.mxu0 0
        %6888 = vmatpush1.bf16.xpose.msra.mxu0 0
        %6889 = vmatprep.subr.bf16.mxu0 0
        %6890 = vmatpush1.bf16.xpose.msra.mxu0 0
        %6891 = vmatprep.subr.bf16.mxu0 0
        %6892 = vmatpush1.bf16.xpose.msra.mxu0 0
        %6893 = vmatprep.subr.bf16.mxu0 0
        %6894 = vmatpush1.bf16.xpose.msra.mxu0 0
        %6895 = vmatprep.subr.bf16.mxu0 0
        %6896 = vmatpush1.bf16.xpose.msra.mxu0 0
        %6897 = vmatprep.subr.bf16.mxu0 0
        %6898 = vmatpush1.bf16.xpose.msra.mxu0 0
        %6899 = vmatprep.subr.bf16.mxu0 0
        %6900 = vmatpush1.bf16.xpose.msra.mxu0 0
        %6901 = vmatprep.subr.bf16.mxu0 0
        %6902 = vmatpush1.bf16.xpose.msra.mxu0 0
        %6903 = vmatprep.subr.bf16.mxu0 0
        %6904 = vmatpush1.bf16.xpose.msra.mxu0 0
        %6905 = vmatprep.mubr.bf16.mxu0 0
        %6906 = vmatmul.mubr.bf16.gmra.mrb[0].mxu0 %v6868
        %v6907 = vpop.f32.mrb[0].mxu0
        %v6908 = vadd.f32 0.0, %v6907
        %v6909 = vpop.f32.mrb[0].mxu0
        %v6910 = vpop.f32.mrb[0].mxu0
        %v6911 = vadd.f32 0.0, %v6910
        %v6912 = vpop.f32.mrb[0].mxu0
        %6913 = vdwg.mxu0
        %v6914 = vsel %vm1715, %v6579, -1e+30
        %v6915 = vsel %vm1715, %v6582, -1e+30
        %v6916 = vsel %vm1715, %v6626, -1e+30
        %v6917 = vsel %vm1715, %v6629, -1e+30
        %v6918 = vsel %vm1715, %v6673, -1e+30
        %v6919 = vsel %vm1715, %v6676, -1e+30
        %v6920 = vsel %vm1715, %v6720, -1e+30
        %v6921 = vsel %vm1715, %v6723, -1e+30
        %v6922 = vsel %vm1715, %v6767, -1e+30
        %v6923 = vsel %vm1715, %v6770, -1e+30
        %v6924 = vsel %vm1715, %v6814, -1e+30
        %v6925 = vsel %vm1715, %v6817, -1e+30
        %v6926 = vsel %vm1715, %v6861, -1e+30
        %v6927 = vsel %vm1715, %v6864, -1e+30
        %v6928 = vsel %vm1715, %v6908, -1e+30
        %v6929 = vsel %vm1715, %v6911, -1e+30
        %v6930 = vsel %vm1337, %v6914, -inf
        %6931 = vmax.xlane.f32.xlu0 %v6930
        %v6932 = vpop.xlane.xlu0 %6931
        %v6933 = vsel %vm1337, %v6915, -inf
        %6934 = vmax.xlane.f32.xlu0 %v6933
        %v6935 = vpop.xlane.xlu0 %6934
        %v6936 = vsel %vm1337, %v6916, -inf
        %6937 = vmax.xlane.f32.xlu0 %v6936
        %v6938 = vpop.xlane.xlu0 %6937
        %v6939 = vsel %vm1337, %v6917, -inf
        %6940 = vmax.xlane.f32.xlu0 %v6939
        %v6941 = vpop.xlane.xlu0 %6940
        %v6942 = vsel %vm1337, %v6918, -inf
        %6943 = vmax.xlane.f32.xlu0 %v6942
        %v6944 = vpop.xlane.xlu0 %6943
        %v6945 = vsel %vm1337, %v6919, -inf
        %6946 = vmax.xlane.f32.xlu0 %v6945
        %v6947 = vpop.xlane.xlu0 %6946
        %v6948 = vsel %vm1337, %v6920, -inf
        %6949 = vmax.xlane.f32.xlu0 %v6948
        %v6950 = vpop.xlane.xlu0 %6949
        %v6951 = vsel %vm1337, %v6921, -inf
        %6952 = vmax.xlane.f32.xlu0 %v6951
        %v6953 = vpop.xlane.xlu0 %6952
        %v6954 = vsel %vm1337, %v6922, -inf
        %6955 = vmax.xlane.f32.xlu0 %v6954
        %v6956 = vpop.xlane.xlu0 %6955
        %v6957 = vsel %vm1337, %v6923, -inf
        %6958 = vmax.xlane.f32.xlu0 %v6957
        %v6959 = vpop.xlane.xlu0 %6958
        %v6960 = vsel %vm1337, %v6924, -inf
        %6961 = vmax.xlane.f32.xlu0 %v6960
        %v6962 = vpop.xlane.xlu0 %6961
        %v6963 = vsel %vm1337, %v6925, -inf
        %6964 = vmax.xlane.f32.xlu0 %v6963
        %v6965 = vpop.xlane.xlu0 %6964
        %v6966 = vsel %vm1337, %v6926, -inf
        %6967 = vmax.xlane.f32.xlu0 %v6966
        %v6968 = vpop.xlane.xlu0 %6967
        %v6969 = vsel %vm1337, %v6927, -inf
        %6970 = vmax.xlane.f32.xlu0 %v6969
        %v6971 = vpop.xlane.xlu0 %6970
        %v6972 = vsel %vm1337, %v6928, -inf
        %6973 = vmax.xlane.f32.xlu0 %v6972
        %v6974 = vpop.xlane.xlu0 %6973
        %v6975 = vsel %vm1337, %v6929, -inf
        %6976 = vmax.xlane.f32.xlu0 %v6975
        %v6977 = vpop.xlane.xlu0 %6976
        %v6978 = vsub.f32 %v6914, %v6932
        %v6979 = vsub.f32 %v6915, %v6935
        %v6980 = vsub.f32 %v6916, %v6938
        %v6981 = vsub.f32 %v6917, %v6941
        %v6982 = vsub.f32 %v6918, %v6944
        %v6983 = vsub.f32 %v6919, %v6947
        %v6984 = vsub.f32 %v6920, %v6950
        %v6985 = vsub.f32 %v6921, %v6953
        %v6986 = vsub.f32 %v6922, %v6956
        %v6987 = vsub.f32 %v6923, %v6959
        %v6988 = vsub.f32 %v6924, %v6962
        %v6989 = vsub.f32 %v6925, %v6965
        %v6990 = vsub.f32 %v6926, %v6968
        %v6991 = vsub.f32 %v6927, %v6971
        %v6992 = vsub.f32 %v6928, %v6974
        %v6993 = vsub.f32 %v6929, %v6977
        %v6994 = vmul.f32 %v6978, 1.442695
        %v6995 = vpow.pop %v6994
        %v6996 = vmul.f32 %v6979, 1.442695
        %v6997 = vpow.pop %v6996
        %v6998 = vmul.f32 %v6980, 1.442695
        %v6999 = vpow.pop %v6998
        %v7000 = vmul.f32 %v6981, 1.442695
        %v7001 = vpow.pop %v7000
        %v7002 = vmul.f32 %v6982, 1.442695
        %v7003 = vpow.pop %v7002
        %v7004 = vmul.f32 %v6983, 1.442695
        %v7005 = vpow.pop %v7004
        %v7006 = vmul.f32 %v6984, 1.442695
        %v7007 = vpow.pop %v7006
        %v7008 = vmul.f32 %v6985, 1.442695
        %v7009 = vpow.pop %v7008
        %v7010 = vmul.f32 %v6986, 1.442695
        %v7011 = vpow.pop %v7010
        %v7012 = vmul.f32 %v6987, 1.442695
        %v7013 = vpow.pop %v7012
        %v7014 = vmul.f32 %v6988, 1.442695
        %v7015 = vpow.pop %v7014
        %v7016 = vmul.f32 %v6989, 1.442695
        %v7017 = vpow.pop %v7016
        %v7018 = vmul.f32 %v6990, 1.442695
        %v7019 = vpow.pop %v7018
        %v7020 = vmul.f32 %v6991, 1.442695
        %v7021 = vpow.pop %v7020
        %v7022 = vmul.f32 %v6992, 1.442695
        %v7023 = vpow.pop %v7022
        %v7024 = vmul.f32 %v6993, 1.442695
        %v7025 = vpow.pop %v7024
        %v7026 = vsel %vm1337, %v6995, 0.0
        %7027 = vadd.xlane.f32.xlu0 %v7026
        %v7028 = vpop.xlane.xlu0 %7027
        %v7029 = vsel %vm1337, %v6997, 0.0
        %7030 = vadd.xlane.f32.xlu0 %v7029
        %v7031 = vpop.xlane.xlu0 %7030
        %v7032 = vsel %vm1337, %v6999, 0.0
        %7033 = vadd.xlane.f32.xlu0 %v7032
        %v7034 = vpop.xlane.xlu0 %7033
        %v7035 = vsel %vm1337, %v7001, 0.0
        %7036 = vadd.xlane.f32.xlu0 %v7035
        %v7037 = vpop.xlane.xlu0 %7036
        %v7038 = vsel %vm1337, %v7003, 0.0
        %7039 = vadd.xlane.f32.xlu0 %v7038
        %v7040 = vpop.xlane.xlu0 %7039
        %v7041 = vsel %vm1337, %v7005, 0.0
        %7042 = vadd.xlane.f32.xlu0 %v7041
        %v7043 = vpop.xlane.xlu0 %7042
        %v7044 = vsel %vm1337, %v7007, 0.0
        %7045 = vadd.xlane.f32.xlu0 %v7044
        %v7046 = vpop.xlane.xlu0 %7045
        %v7047 = vsel %vm1337, %v7009, 0.0
        %7048 = vadd.xlane.f32.xlu0 %v7047
        %v7049 = vpop.xlane.xlu0 %7048
        %v7050 = vsel %vm1337, %v7011, 0.0
        %7051 = vadd.xlane.f32.xlu0 %v7050
        %v7052 = vpop.xlane.xlu0 %7051
        %v7053 = vsel %vm1337, %v7013, 0.0
        %7054 = vadd.xlane.f32.xlu0 %v7053
        %v7055 = vpop.xlane.xlu0 %7054
        %v7056 = vsel %vm1337, %v7015, 0.0
        %7057 = vadd.xlane.f32.xlu0 %v7056
        %v7058 = vpop.xlane.xlu0 %7057
        %v7059 = vsel %vm1337, %v7017, 0.0
        %7060 = vadd.xlane.f32.xlu0 %v7059
        %v7061 = vpop.xlane.xlu0 %7060
        %v7062 = vsel %vm1337, %v7019, 0.0
        %7063 = vadd.xlane.f32.xlu0 %v7062
        %v7064 = vpop.xlane.xlu0 %7063
        %v7065 = vsel %vm1337, %v7021, 0.0
        %7066 = vadd.xlane.f32.xlu0 %v7065
        %v7067 = vpop.xlane.xlu0 %7066
        %v7068 = vsel %vm1337, %v7023, 0.0
        %7069 = vadd.xlane.f32.xlu0 %v7068
        %v7070 = vpop.xlane.xlu0 %7069
        %v7071 = vsel %vm1337, %v7025, 0.0
        %7072 = vadd.xlane.f32.xlu0 %v7071
        %v7073 = vpop.xlane.xlu0 %7072
        %v7074 = vrcp.pop %v7028
        %v7075 = vrcp.pop %v7031
        %v7076 = vrcp.pop %v7034
        %v7077 = vrcp.pop %v7037
        %v7078 = vrcp.pop %v7040
        %v7079 = vrcp.pop %v7043
        %v7080 = vrcp.pop %v7046
        %v7081 = vrcp.pop %v7049
        %v7082 = vrcp.pop %v7052
        %v7083 = vrcp.pop %v7055
        %v7084 = vrcp.pop %v7058
        %v7085 = vrcp.pop %v7061
        %v7086 = vrcp.pop %v7064
        %v7087 = vrcp.pop %v7067
        %v7088 = vrcp.pop %v7070
        %v7089 = vrcp.pop %v7073
        %v7090 = vmul.f32 %v6995, %v7074
        %v7091 = vmul.f32 %v6997, %v7075
        %v7092 = vmul.f32 %v6999, %v7076
        %v7093 = vmul.f32 %v7001, %v7077
        %v7094 = vmul.f32 %v7003, %v7078
        %v7095 = vmul.f32 %v7005, %v7079
        %v7096 = vmul.f32 %v7007, %v7080
        %v7097 = vmul.f32 %v7009, %v7081
        %v7098 = vmul.f32 %v7011, %v7082
        %v7099 = vmul.f32 %v7013, %v7083
        %v7100 = vmul.f32 %v7015, %v7084
        %v7101 = vmul.f32 %v7017, %v7085
        %v7102 = vmul.f32 %v7019, %v7086
        %v7103 = vmul.f32 %v7021, %v7087
        %v7104 = vmul.f32 %v7023, %v7088
        %v7105 = vmul.f32 %v7025, %v7089
        %v7106 = vpack.c.bf16 %v7091, %v7090
        %v7107 = vpack.c.bf16 %v7093, %v7092
        %v7108 = vpack.c.bf16 %v7095, %v7094
        %v7109 = vpack.c.bf16 %v7097, %v7096
        %v7110 = vpack.c.bf16 %v7099, %v7098
        %v7111 = vpack.c.bf16 %v7101, %v7100
        %v7112 = vpack.c.bf16 %v7103, %v7102
        %v7113 = vpack.c.bf16 %v7105, %v7104
        %v7114 = vpack.c.bf16 %v6371, %v6368
        %v7115 = vpack.c.bf16 %v6483, %v6481
        %v7116 = vpack.c.bf16 %v6489, %v6487
        %v7117 = vpack.c.bf16 %v6495, %v6493
        %v7118 = vpack.c.bf16 %v6501, %v6499
        %v7119 = vpack.c.bf16 %v6507, %v6505
        %v7120 = vpack.c.bf16 %v6513, %v6511
        %v7121 = vpack.c.bf16 %v6519, %v6517
        %v7123 = vsel %vm1337, %v7106, 0
        %7125 = vmatprep.subr.bf16.mxu0 0
        %7126 = vmatpush1.bf16.msra.mxu0 %v7114
        %7127 = vmatprep.subr.bf16.mxu0 0
        %7128 = vmatpush1.bf16.msra.mxu0 0
        %7129 = vmatprep.subr.bf16.mxu0 0
        %7130 = vmatpush1.bf16.msra.mxu0 0
        %7131 = vmatprep.subr.bf16.mxu0 0
        %7132 = vmatpush1.bf16.msra.mxu0 0
        %7133 = vmatprep.subr.bf16.mxu0 0
        %7134 = vmatpush1.bf16.msra.mxu0 0
        %7135 = vmatprep.subr.bf16.mxu0 0
        %7136 = vmatpush1.bf16.msra.mxu0 0
        %7137 = vmatprep.subr.bf16.mxu0 0
        %7138 = vmatpush1.bf16.msra.mxu0 0
        %7139 = vmatprep.subr.bf16.mxu0 0
        %7140 = vmatpush1.bf16.msra.mxu0 0
        %7141 = vmatprep.subr.bf16.mxu0 0
        %7142 = vmatpush1.bf16.msra.mxu0 0
        %7143 = vmatprep.subr.bf16.mxu0 0
        %7144 = vmatpush1.bf16.msra.mxu0 0
        %7145 = vmatprep.subr.bf16.mxu0 0
        %7146 = vmatpush1.bf16.msra.mxu0 0
        %7147 = vmatprep.subr.bf16.mxu0 0
        %7148 = vmatpush1.bf16.msra.mxu0 0
        %7149 = vmatprep.subr.bf16.mxu0 0
        %7150 = vmatpush1.bf16.msra.mxu0 0
        %7151 = vmatprep.subr.bf16.mxu0 0
        %7152 = vmatpush1.bf16.msra.mxu0 0
        %7153 = vmatprep.subr.bf16.mxu0 0
        %7154 = vmatpush1.bf16.msra.mxu0 0
        %7155 = vmatprep.subr.bf16.mxu0 0
        %7156 = vmatpush1.bf16.msra.mxu0 0
        %7157 = vmatprep.mubr.bf16.mxu0 0
        %7158 = vmatmul.mubr.bf16.gmra.mrb[0].mxu0 %v7123
        %v7159 = vpop.f32.mrb[0].mxu0
        %v7160 = vadd.f32 0.0, %v7159
        %v7161 = vpop.f32.mrb[0].mxu0
        %v7162 = vpop.f32.mrb[0].mxu0
        %v7163 = vadd.f32 0.0, %v7162
        %v7164 = vpop.f32.mrb[0].mxu0
        %7165 = vdwg.mxu0
        %v7167 = vsel %vm1337, %v7107, 0
        %7169 = vmatprep.subr.bf16.mxu0 0
        %7170 = vmatpush1.bf16.msra.mxu0 %v7115
        %7171 = vmatprep.subr.bf16.mxu0 0
        %7172 = vmatpush1.bf16.msra.mxu0 0
        %7173 = vmatprep.subr.bf16.mxu0 0
        %7174 = vmatpush1.bf16.msra.mxu0 0
        %7175 = vmatprep.subr.bf16.mxu0 0
        %7176 = vmatpush1.bf16.msra.mxu0 0
        %7177 = vmatprep.subr.bf16.mxu0 0
        %7178 = vmatpush1.bf16.msra.mxu0 0
        %7179 = vmatprep.subr.bf16.mxu0 0
        %7180 = vmatpush1.bf16.msra.mxu0 0
        %7181 = vmatprep.subr.bf16.mxu0 0
        %7182 = vmatpush1.bf16.msra.mxu0 0
        %7183 = vmatprep.subr.bf16.mxu0 0
        %7184 = vmatpush1.bf16.msra.mxu0 0
        %7185 = vmatprep.subr.bf16.mxu0 0
        %7186 = vmatpush1.bf16.msra.mxu0 0
        %7187 = vmatprep.subr.bf16.mxu0 0
        %7188 = vmatpush1.bf16.msra.mxu0 0
        %7189 = vmatprep.subr.bf16.mxu0 0
        %7190 = vmatpush1.bf16.msra.mxu0 0
        %7191 = vmatprep.subr.bf16.mxu0 0
        %7192 = vmatpush1.bf16.msra.mxu0 0
        %7193 = vmatprep.subr.bf16.mxu0 0
        %7194 = vmatpush1.bf16.msra.mxu0 0
        %7195 = vmatprep.subr.bf16.mxu0 0
        %7196 = vmatpush1.bf16.msra.mxu0 0
        %7197 = vmatprep.subr.bf16.mxu0 0
        %7198 = vmatpush1.bf16.msra.mxu0 0
        %7199 = vmatprep.subr.bf16.mxu0 0
        %7200 = vmatpush1.bf16.msra.mxu0 0
        %7201 = vmatprep.mubr.bf16.mxu0 0
        %7202 = vmatmul.mubr.bf16.gmra.mrb[0].mxu0 %v7167
        %v7203 = vpop.f32.mrb[0].mxu0
        %v7204 = vadd.f32 0.0, %v7203
        %v7205 = vpop.f32.mrb[0].mxu0
        %v7206 = vpop.f32.mrb[0].mxu0
        %v7207 = vadd.f32 0.0, %v7206
        %v7208 = vpop.f32.mrb[0].mxu0
        %7209 = vdwg.mxu0
        %v7211 = vsel %vm1337, %v7108, 0
        %7213 = vmatprep.subr.bf16.mxu0 0
        %7214 = vmatpush1.bf16.msra.mxu0 %v7116
        %7215 = vmatprep.subr.bf16.mxu0 0
        %7216 = vmatpush1.bf16.msra.mxu0 0
        %7217 = vmatprep.subr.bf16.mxu0 0
        %7218 = vmatpush1.bf16.msra.mxu0 0
        %7219 = vmatprep.subr.bf16.mxu0 0
        %7220 = vmatpush1.bf16.msra.mxu0 0
        %7221 = vmatprep.subr.bf16.mxu0 0
        %7222 = vmatpush1.bf16.msra.mxu0 0
        %7223 = vmatprep.subr.bf16.mxu0 0
        %7224 = vmatpush1.bf16.msra.mxu0 0
        %7225 = vmatprep.subr.bf16.mxu0 0
        %7226 = vmatpush1.bf16.msra.mxu0 0
        %7227 = vmatprep.subr.bf16.mxu0 0
        %7228 = vmatpush1.bf16.msra.mxu0 0
        %7229 = vmatprep.subr.bf16.mxu0 0
        %7230 = vmatpush1.bf16.msra.mxu0 0
        %7231 = vmatprep.subr.bf16.mxu0 0
        %7232 = vmatpush1.bf16.msra.mxu0 0
        %7233 = vmatprep.subr.bf16.mxu0 0
        %7234 = vmatpush1.bf16.msra.mxu0 0
        %7235 = vmatprep.subr.bf16.mxu0 0
        %7236 = vmatpush1.bf16.msra.mxu0 0
        %7237 = vmatprep.subr.bf16.mxu0 0
        %7238 = vmatpush1.bf16.msra.mxu0 0
        %7239 = vmatprep.subr.bf16.mxu0 0
        %7240 = vmatpush1.bf16.msra.mxu0 0
        %7241 = vmatprep.subr.bf16.mxu0 0
        %7242 = vmatpush1.bf16.msra.mxu0 0
        %7243 = vmatprep.subr.bf16.mxu0 0
        %7244 = vmatpush1.bf16.msra.mxu0 0
        %7245 = vmatprep.mubr.bf16.mxu0 0
        %7246 = vmatmul.mubr.bf16.gmra.mrb[0].mxu0 %v7211
        %v7247 = vpop.f32.mrb[0].mxu0
        %v7248 = vadd.f32 0.0, %v7247
        %v7249 = vpop.f32.mrb[0].mxu0
        %v7250 = vpop.f32.mrb[0].mxu0
        %v7251 = vadd.f32 0.0, %v7250
        %v7252 = vpop.f32.mrb[0].mxu0
        %7253 = vdwg.mxu0
        %v7255 = vsel %vm1337, %v7109, 0
        %7257 = vmatprep.subr.bf16.mxu0 0
        %7258 = vmatpush1.bf16.msra.mxu0 %v7117
        %7259 = vmatprep.subr.bf16.mxu0 0
        %7260 = vmatpush1.bf16.msra.mxu0 0
        %7261 = vmatprep.subr.bf16.mxu0 0
        %7262 = vmatpush1.bf16.msra.mxu0 0
        %7263 = vmatprep.subr.bf16.mxu0 0
        %7264 = vmatpush1.bf16.msra.mxu0 0
        %7265 = vmatprep.subr.bf16.mxu0 0
        %7266 = vmatpush1.bf16.msra.mxu0 0
        %7267 = vmatprep.subr.bf16.mxu0 0
        %7268 = vmatpush1.bf16.msra.mxu0 0
        %7269 = vmatprep.subr.bf16.mxu0 0
        %7270 = vmatpush1.bf16.msra.mxu0 0
        %7271 = vmatprep.subr.bf16.mxu0 0
        %7272 = vmatpush1.bf16.msra.mxu0 0
        %7273 = vmatprep.subr.bf16.mxu0 0
        %7274 = vmatpush1.bf16.msra.mxu0 0
        %7275 = vmatprep.subr.bf16.mxu0 0
        %7276 = vmatpush1.bf16.msra.mxu0 0
        %7277 = vmatprep.subr.bf16.mxu0 0
        %7278 = vmatpush1.bf16.msra.mxu0 0
        %7279 = vmatprep.subr.bf16.mxu0 0
        %7280 = vmatpush1.bf16.msra.mxu0 0
        %7281 = vmatprep.subr.bf16.mxu0 0
        %7282 = vmatpush1.bf16.msra.mxu0 0
        %7283 = vmatprep.subr.bf16.mxu0 0
        %7284 = vmatpush1.bf16.msra.mxu0 0
        %7285 = vmatprep.subr.bf16.mxu0 0
        %7286 = vmatpush1.bf16.msra.mxu0 0
        %7287 = vmatprep.subr.bf16.mxu0 0
        %7288 = vmatpush1.bf16.msra.mxu0 0
        %7289 = vmatprep.mubr.bf16.mxu0 0
        %7290 = vmatmul.mubr.bf16.gmra.mrb[0].mxu0 %v7255
        %v7291 = vpop.f32.mrb[0].mxu0
        %v7292 = vadd.f32 0.0, %v7291
        %v7293 = vpop.f32.mrb[0].mxu0
        %v7294 = vpop.f32.mrb[0].mxu0
        %v7295 = vadd.f32 0.0, %v7294
        %v7296 = vpop.f32.mrb[0].mxu0
        %7297 = vdwg.mxu0
        %v7299 = vsel %vm1337, %v7110, 0
        %7301 = vmatprep.subr.bf16.mxu0 0
        %7302 = vmatpush1.bf16.msra.mxu0 %v7118
        %7303 = vmatprep.subr.bf16.mxu0 0
        %7304 = vmatpush1.bf16.msra.mxu0 0
        %7305 = vmatprep.subr.bf16.mxu0 0
        %7306 = vmatpush1.bf16.msra.mxu0 0
        %7307 = vmatprep.subr.bf16.mxu0 0
        %7308 = vmatpush1.bf16.msra.mxu0 0
        %7309 = vmatprep.subr.bf16.mxu0 0
        %7310 = vmatpush1.bf16.msra.mxu0 0
        %7311 = vmatprep.subr.bf16.mxu0 0
        %7312 = vmatpush1.bf16.msra.mxu0 0
        %7313 = vmatprep.subr.bf16.mxu0 0
        %7314 = vmatpush1.bf16.msra.mxu0 0
        %7315 = vmatprep.subr.bf16.mxu0 0
        %7316 = vmatpush1.bf16.msra.mxu0 0
        %7317 = vmatprep.subr.bf16.mxu0 0
        %7318 = vmatpush1.bf16.msra.mxu0 0
        %7319 = vmatprep.subr.bf16.mxu0 0
        %7320 = vmatpush1.bf16.msra.mxu0 0
        %7321 = vmatprep.subr.bf16.mxu0 0
        %7322 = vmatpush1.bf16.msra.mxu0 0
        %7323 = vmatprep.subr.bf16.mxu0 0
        %7324 = vmatpush1.bf16.msra.mxu0 0
        %7325 = vmatprep.subr.bf16.mxu0 0
        %7326 = vmatpush1.bf16.msra.mxu0 0
        %7327 = vmatprep.subr.bf16.mxu0 0
        %7328 = vmatpush1.bf16.msra.mxu0 0
        %7329 = vmatprep.subr.bf16.mxu0 0
        %7330 = vmatpush1.bf16.msra.mxu0 0
        %7331 = vmatprep.subr.bf16.mxu0 0
        %7332 = vmatpush1.bf16.msra.mxu0 0
        %7333 = vmatprep.mubr.bf16.mxu0 0
        %7334 = vmatmul.mubr.bf16.gmra.mrb[0].mxu0 %v7299
        %v7335 = vpop.f32.mrb[0].mxu0
        %v7336 = vadd.f32 0.0, %v7335
        %v7337 = vpop.f32.mrb[0].mxu0
        %v7338 = vpop.f32.mrb[0].mxu0
        %v7339 = vadd.f32 0.0, %v7338
        %v7340 = vpop.f32.mrb[0].mxu0
        %7341 = vdwg.mxu0
        %v7343 = vsel %vm1337, %v7111, 0
        %7345 = vmatprep.subr.bf16.mxu0 0
        %7346 = vmatpush1.bf16.msra.mxu0 %v7119
        %7347 = vmatprep.subr.bf16.mxu0 0
        %7348 = vmatpush1.bf16.msra.mxu0 0
        %7349 = vmatprep.subr.bf16.mxu0 0
        %7350 = vmatpush1.bf16.msra.mxu0 0
        %7351 = vmatprep.subr.bf16.mxu0 0
        %7352 = vmatpush1.bf16.msra.mxu0 0
        %7353 = vmatprep.subr.bf16.mxu0 0
        %7354 = vmatpush1.bf16.msra.mxu0 0
        %7355 = vmatprep.subr.bf16.mxu0 0
        %7356 = vmatpush1.bf16.msra.mxu0 0
        %7357 = vmatprep.subr.bf16.mxu0 0
        %7358 = vmatpush1.bf16.msra.mxu0 0
        %7359 = vmatprep.subr.bf16.mxu0 0
        %7360 = vmatpush1.bf16.msra.mxu0 0
        %7361 = vmatprep.subr.bf16.mxu0 0
        %7362 = vmatpush1.bf16.msra.mxu0 0
        %7363 = vmatprep.subr.bf16.mxu0 0
        %7364 = vmatpush1.bf16.msra.mxu0 0
        %7365 = vmatprep.subr.bf16.mxu0 0
        %7366 = vmatpush1.bf16.msra.mxu0 0
        %7367 = vmatprep.subr.bf16.mxu0 0
        %7368 = vmatpush1.bf16.msra.mxu0 0
        %7369 = vmatprep.subr.bf16.mxu0 0
        %7370 = vmatpush1.bf16.msra.mxu0 0
        %7371 = vmatprep.subr.bf16.mxu0 0
        %7372 = vmatpush1.bf16.msra.mxu0 0
        %7373 = vmatprep.subr.bf16.mxu0 0
        %7374 = vmatpush1.bf16.msra.mxu0 0
        %7375 = vmatprep.subr.bf16.mxu0 0
        %7376 = vmatpush1.bf16.msra.mxu0 0
        %7377 = vmatprep.mubr.bf16.mxu0 0
        %7378 = vmatmul.mubr.bf16.gmra.mrb[0].mxu0 %v7343
        %v7379 = vpop.f32.mrb[0].mxu0
        %v7380 = vadd.f32 0.0, %v7379
        %v7381 = vpop.f32.mrb[0].mxu0
        %v7382 = vpop.f32.mrb[0].mxu0
        %v7383 = vadd.f32 0.0, %v7382
        %v7384 = vpop.f32.mrb[0].mxu0
        %7385 = vdwg.mxu0
        %v7387 = vsel %vm1337, %v7112, 0
        %7389 = vmatprep.subr.bf16.mxu0 0
        %7390 = vmatpush1.bf16.msra.mxu0 %v7120
        %7391 = vmatprep.subr.bf16.mxu0 0
        %7392 = vmatpush1.bf16.msra.mxu0 0
        %7393 = vmatprep.subr.bf16.mxu0 0
        %7394 = vmatpush1.bf16.msra.mxu0 0
        %7395 = vmatprep.subr.bf16.mxu0 0
        %7396 = vmatpush1.bf16.msra.mxu0 0
        %7397 = vmatprep.subr.bf16.mxu0 0
        %7398 = vmatpush1.bf16.msra.mxu0 0
        %7399 = vmatprep.subr.bf16.mxu0 0
        %7400 = vmatpush1.bf16.msra.mxu0 0
        %7401 = vmatprep.subr.bf16.mxu0 0
        %7402 = vmatpush1.bf16.msra.mxu0 0
        %7403 = vmatprep.subr.bf16.mxu0 0
        %7404 = vmatpush1.bf16.msra.mxu0 0
        %7405 = vmatprep.subr.bf16.mxu0 0
        %7406 = vmatpush1.bf16.msra.mxu0 0
        %7407 = vmatprep.subr.bf16.mxu0 0
        %7408 = vmatpush1.bf16.msra.mxu0 0
        %7409 = vmatprep.subr.bf16.mxu0 0
        %7410 = vmatpush1.bf16.msra.mxu0 0
        %7411 = vmatprep.subr.bf16.mxu0 0
        %7412 = vmatpush1.bf16.msra.mxu0 0
        %7413 = vmatprep.subr.bf16.mxu0 0
        %7414 = vmatpush1.bf16.msra.mxu0 0
        %7415 = vmatprep.subr.bf16.mxu0 0
        %7416 = vmatpush1.bf16.msra.mxu0 0
        %7417 = vmatprep.subr.bf16.mxu0 0
        %7418 = vmatpush1.bf16.msra.mxu0 0
        %7419 = vmatprep.subr.bf16.mxu0 0
        %7420 = vmatpush1.bf16.msra.mxu0 0
        %7421 = vmatprep.mubr.bf16.mxu0 0
        %7422 = vmatmul.mubr.bf16.gmra.mrb[0].mxu0 %v7387
        %v7423 = vpop.f32.mrb[0].mxu0
        %v7424 = vadd.f32 0.0, %v7423
        %v7425 = vpop.f32.mrb[0].mxu0
        %v7426 = vpop.f32.mrb[0].mxu0
        %v7427 = vadd.f32 0.0, %v7426
        %v7428 = vpop.f32.mrb[0].mxu0
        %7429 = vdwg.mxu0
        %v7431 = vsel %vm1337, %v7113, 0
        %7433 = vmatprep.subr.bf16.mxu0 0
        %7434 = vmatpush1.bf16.msra.mxu0 %v7121
        %7435 = vmatprep.subr.bf16.mxu0 0
        %7436 = vmatpush1.bf16.msra.mxu0 0
        %7437 = vmatprep.subr.bf16.mxu0 0
        %7438 = vmatpush1.bf16.msra.mxu0 0
        %7439 = vmatprep.subr.bf16.mxu0 0
        %7440 = vmatpush1.bf16.msra.mxu0 0
        %7441 = vmatprep.subr.bf16.mxu0 0
        %7442 = vmatpush1.bf16.msra.mxu0 0
        %7443 = vmatprep.subr.bf16.mxu0 0
        %7444 = vmatpush1.bf16.msra.mxu0 0
        %7445 = vmatprep.subr.bf16.mxu0 0
        %7446 = vmatpush1.bf16.msra.mxu0 0
        %7447 = vmatprep.subr.bf16.mxu0 0
        %7448 = vmatpush1.bf16.msra.mxu0 0
        %7449 = vmatprep.subr.bf16.mxu0 0
        %7450 = vmatpush1.bf16.msra.mxu0 0
        %7451 = vmatprep.subr.bf16.mxu0 0
        %7452 = vmatpush1.bf16.msra.mxu0 0
        %7453 = vmatprep.subr.bf16.mxu0 0
        %7454 = vmatpush1.bf16.msra.mxu0 0
        %7455 = vmatprep.subr.bf16.mxu0 0
        %7456 = vmatpush1.bf16.msra.mxu0 0
        %7457 = vmatprep.subr.bf16.mxu0 0
        %7458 = vmatpush1.bf16.msra.mxu0 0
        %7459 = vmatprep.subr.bf16.mxu0 0
        %7460 = vmatpush1.bf16.msra.mxu0 0
        %7461 = vmatprep.subr.bf16.mxu0 0
        %7462 = vmatpush1.bf16.msra.mxu0 0
        %7463 = vmatprep.subr.bf16.mxu0 0
        %7464 = vmatpush1.bf16.msra.mxu0 0
        %7465 = vmatprep.mubr.bf16.mxu0 0
        %7466 = vmatmul.mubr.bf16.gmra.mrb[0].mxu0 %v7431
        %v7467 = vpop.f32.mrb[0].mxu0
        %v7468 = vadd.f32 0.0, %v7467
        %v7469 = vpop.f32.mrb[0].mxu0
        %v7470 = vpop.f32.mrb[0].mxu0
        %v7471 = vadd.f32 0.0, %v7470
        %v7472 = vpop.f32.mrb[0].mxu0
        %7473 = vdwg.mxu0
        %v7474 = vpack.c.bf16 %v7163, %v7160
        %v7475 = vpack.c.bf16 %v7207, %v7204
        %v7476 = vpack.c.bf16 %v7251, %v7248
        %v7477 = vpack.c.bf16 %v7295, %v7292
        %v7478 = vpack.c.bf16 %v7339, %v7336
        %v7479 = vpack.c.bf16 %v7383, %v7380
        %v7480 = vpack.c.bf16 %v7427, %v7424
        %v7481 = vpack.c.bf16 %v7471, %v7468
        %s7482 = scalar_lea.vmem [#allocation14], 128
        %v7483 = vld [vmem:[%s7482] sm:$0xf]
        %v7484 = vld [vmem:[%s7482 + $0x4] sm:$0xf]
        %v7485 = vld [vmem:[%s7482 + $0x8] sm:$0xf]
        %v7486 = vld [vmem:[%s7482 + $0xc] sm:$0xf]
        %v7487 = vld [vmem:[%s7482 + $0x10] sm:$0xf]
        %v7488 = vld [vmem:[%s7482 + $0x14] sm:$0xf]
        %v7489 = vld [vmem:[%s7482 + $0x18] sm:$0xf]
        %v7490 = vld [vmem:[%s7482 + $0x1c] sm:$0xf]
        %v7491 = vld [vmem:[%s7482 + $0x20] sm:$0xf]
        %v7492 = vld [vmem:[%s7482 + $0x24] sm:$0xf]
        %v7493 = vld [vmem:[%s7482 + $0x28] sm:$0xf]
        %v7494 = vld [vmem:[%s7482 + $0x2c] sm:$0xf]
        %v7495 = vld [vmem:[%s7482 + $0x30] sm:$0xf]
        %v7496 = vld [vmem:[%s7482 + $0x34] sm:$0xf]
        %v7497 = vld [vmem:[%s7482 + $0x38] sm:$0xf]
        %v7498 = vld [vmem:[%s7482 + $0x3c] sm:$0xf]
        %v7501 = vunpack.c.l.b16 %v7483
        %v7502 = vunpack.c.l.b16 %v7484
        %v7503 = vpack.c.b16 %v7502, %v7501
        %v7506 = vsel %vm1337, %v7474, 0
        %7508 = vmatprep.subr.bf16.mxu0 0
        %7509 = vmatpush1.bf16.msra.mxu0 %v7503
        %7510 = vmatprep.subr.bf16.mxu0 0
        %7511 = vmatpush1.bf16.msra.mxu0 0
        %7512 = vmatprep.subr.bf16.mxu0 0
        %7513 = vmatpush1.bf16.msra.mxu0 0
        %7514 = vmatprep.subr.bf16.mxu0 0
        %7515 = vmatpush1.bf16.msra.mxu0 0
        %7516 = vmatprep.subr.bf16.mxu0 0
        %7517 = vmatpush1.bf16.msra.mxu0 0
        %7518 = vmatprep.subr.bf16.mxu0 0
        %7519 = vmatpush1.bf16.msra.mxu0 0
        %7520 = vmatprep.subr.bf16.mxu0 0
        %7521 = vmatpush1.bf16.msra.mxu0 0
        %7522 = vmatprep.subr.bf16.mxu0 0
        %7523 = vmatpush1.bf16.msra.mxu0 0
        %7524 = vmatprep.subr.bf16.mxu0 0
        %7525 = vmatpush1.bf16.msra.mxu0 0
        %7526 = vmatprep.subr.bf16.mxu0 0
        %7527 = vmatpush1.bf16.msra.mxu0 0
        %7528 = vmatprep.subr.bf16.mxu0 0
        %7529 = vmatpush1.bf16.msra.mxu0 0
        %7530 = vmatprep.subr.bf16.mxu0 0
        %7531 = vmatpush1.bf16.msra.mxu0 0
        %7532 = vmatprep.subr.bf16.mxu0 0
        %7533 = vmatpush1.bf16.msra.mxu0 0
        %7534 = vmatprep.subr.bf16.mxu0 0
        %7535 = vmatpush1.bf16.msra.mxu0 0
        %7536 = vmatprep.subr.bf16.mxu0 0
        %7537 = vmatpush1.bf16.msra.mxu0 0
        %7538 = vmatprep.subr.bf16.mxu0 0
        %7539 = vmatpush1.bf16.msra.mxu0 0
        %7540 = vmatprep.mubr.bf16.mxu0 0
        %7541 = vmatmul.mubr.bf16.gmra.mrb[0].mxu0 %v7506
        %v7542 = vpop.f32.mrb[0].mxu0
        %v7543 = vadd.f32 0.0, %v7542
        %v7544 = vpop.f32.mrb[0].mxu0
        %v7545 = vpop.f32.mrb[0].mxu0
        %v7546 = vadd.f32 0.0, %v7545
        %v7547 = vpop.f32.mrb[0].mxu0
        %7548 = vdwg.mxu0
        %v7551 = vunpack.c.l.b16 %v7485
        %v7552 = vunpack.c.l.b16 %v7486
        %v7553 = vpack.c.b16 %v7552, %v7551
        %v7556 = vsel %vm1337, %v7475, 0
        %7558 = vmatprep.subr.bf16.mxu0 0
        %7559 = vmatpush1.bf16.msra.mxu0 %v7553
        %7560 = vmatprep.subr.bf16.mxu0 0
        %7561 = vmatpush1.bf16.msra.mxu0 0
        %7562 = vmatprep.subr.bf16.mxu0 0
        %7563 = vmatpush1.bf16.msra.mxu0 0
        %7564 = vmatprep.subr.bf16.mxu0 0
        %7565 = vmatpush1.bf16.msra.mxu0 0
        %7566 = vmatprep.subr.bf16.mxu0 0
        %7567 = vmatpush1.bf16.msra.mxu0 0
        %7568 = vmatprep.subr.bf16.mxu0 0
        %7569 = vmatpush1.bf16.msra.mxu0 0
        %7570 = vmatprep.subr.bf16.mxu0 0
        %7571 = vmatpush1.bf16.msra.mxu0 0
        %7572 = vmatprep.subr.bf16.mxu0 0
        %7573 = vmatpush1.bf16.msra.mxu0 0
        %7574 = vmatprep.subr.bf16.mxu0 0
        %7575 = vmatpush1.bf16.msra.mxu0 0
        %7576 = vmatprep.subr.bf16.mxu0 0
        %7577 = vmatpush1.bf16.msra.mxu0 0
        %7578 = vmatprep.subr.bf16.mxu0 0
        %7579 = vmatpush1.bf16.msra.mxu0 0
        %7580 = vmatprep.subr.bf16.mxu0 0
        %7581 = vmatpush1.bf16.msra.mxu0 0
        %7582 = vmatprep.subr.bf16.mxu0 0
        %7583 = vmatpush1.bf16.msra.mxu0 0
        %7584 = vmatprep.subr.bf16.mxu0 0
        %7585 = vmatpush1.bf16.msra.mxu0 0
        %7586 = vmatprep.subr.bf16.mxu0 0
        %7587 = vmatpush1.bf16.msra.mxu0 0
        %7588 = vmatprep.subr.bf16.mxu0 0
        %7589 = vmatpush1.bf16.msra.mxu0 0
        %7590 = vmatprep.mubr.bf16.mxu0 0
        %7591 = vmatmul.mubr.bf16.gmra.mrb[0].mxu0 %v7556
        %v7592 = vpop.f32.mrb[0].mxu0
        %v7593 = vadd.f32 0.0, %v7592
        %v7594 = vpop.f32.mrb[0].mxu0
        %v7595 = vpop.f32.mrb[0].mxu0
        %v7596 = vadd.f32 0.0, %v7595
        %v7597 = vpop.f32.mrb[0].mxu0
        %7598 = vdwg.mxu0
        %v7601 = vunpack.c.l.b16 %v7487
        %v7602 = vunpack.c.l.b16 %v7488
        %v7603 = vpack.c.b16 %v7602, %v7601
        %v7606 = vsel %vm1337, %v7476, 0
        %7608 = vmatprep.subr.bf16.mxu0 0
        %7609 = vmatpush1.bf16.msra.mxu0 %v7603
        %7610 = vmatprep.subr.bf16.mxu0 0
        %7611 = vmatpush1.bf16.msra.mxu0 0
        %7612 = vmatprep.subr.bf16.mxu0 0
        %7613 = vmatpush1.bf16.msra.mxu0 0
        %7614 = vmatprep.subr.bf16.mxu0 0
        %7615 = vmatpush1.bf16.msra.mxu0 0
        %7616 = vmatprep.subr.bf16.mxu0 0
        %7617 = vmatpush1.bf16.msra.mxu0 0
        %7618 = vmatprep.subr.bf16.mxu0 0
        %7619 = vmatpush1.bf16.msra.mxu0 0
        %7620 = vmatprep.subr.bf16.mxu0 0
        %7621 = vmatpush1.bf16.msra.mxu0 0
        %7622 = vmatprep.subr.bf16.mxu0 0
        %7623 = vmatpush1.bf16.msra.mxu0 0
        %7624 = vmatprep.subr.bf16.mxu0 0
        %7625 = vmatpush1.bf16.msra.mxu0 0
        %7626 = vmatprep.subr.bf16.mxu0 0
        %7627 = vmatpush1.bf16.msra.mxu0 0
        %7628 = vmatprep.subr.bf16.mxu0 0
        %7629 = vmatpush1.bf16.msra.mxu0 0
        %7630 = vmatprep.subr.bf16.mxu0 0
        %7631 = vmatpush1.bf16.msra.mxu0 0
        %7632 = vmatprep.subr.bf16.mxu0 0
        %7633 = vmatpush1.bf16.msra.mxu0 0
        %7634 = vmatprep.subr.bf16.mxu0 0
        %7635 = vmatpush1.bf16.msra.mxu0 0
        %7636 = vmatprep.subr.bf16.mxu0 0
        %7637 = vmatpush1.bf16.msra.mxu0 0
        %7638 = vmatprep.subr.bf16.mxu0 0
        %7639 = vmatpush1.bf16.msra.mxu0 0
        %7640 = vmatprep.mubr.bf16.mxu0 0
        %7641 = vmatmul.mubr.bf16.gmra.mrb[0].mxu0 %v7606
        %v7642 = vpop.f32.mrb[0].mxu0
        %v7643 = vadd.f32 0.0, %v7642
        %v7644 = vpop.f32.mrb[0].mxu0
        %v7645 = vpop.f32.mrb[0].mxu0
        %v7646 = vadd.f32 0.0, %v7645
        %v7647 = vpop.f32.mrb[0].mxu0
        %7648 = vdwg.mxu0
        %v7651 = vunpack.c.l.b16 %v7489
        %v7652 = vunpack.c.l.b16 %v7490
        %v7653 = vpack.c.b16 %v7652, %v7651
        %v7656 = vsel %vm1337, %v7477, 0
        %7658 = vmatprep.subr.bf16.mxu0 0
        %7659 = vmatpush1.bf16.msra.mxu0 %v7653
        %7660 = vmatprep.subr.bf16.mxu0 0
        %7661 = vmatpush1.bf16.msra.mxu0 0
        %7662 = vmatprep.subr.bf16.mxu0 0
        %7663 = vmatpush1.bf16.msra.mxu0 0
        %7664 = vmatprep.subr.bf16.mxu0 0
        %7665 = vmatpush1.bf16.msra.mxu0 0
        %7666 = vmatprep.subr.bf16.mxu0 0
        %7667 = vmatpush1.bf16.msra.mxu0 0
        %7668 = vmatprep.subr.bf16.mxu0 0
        %7669 = vmatpush1.bf16.msra.mxu0 0
        %7670 = vmatprep.subr.bf16.mxu0 0
        %7671 = vmatpush1.bf16.msra.mxu0 0
        %7672 = vmatprep.subr.bf16.mxu0 0
        %7673 = vmatpush1.bf16.msra.mxu0 0
        %7674 = vmatprep.subr.bf16.mxu0 0
        %7675 = vmatpush1.bf16.msra.mxu0 0
        %7676 = vmatprep.subr.bf16.mxu0 0
        %7677 = vmatpush1.bf16.msra.mxu0 0
        %7678 = vmatprep.subr.bf16.mxu0 0
        %7679 = vmatpush1.bf16.msra.mxu0 0
        %7680 = vmatprep.subr.bf16.mxu0 0
        %7681 = vmatpush1.bf16.msra.mxu0 0
        %7682 = vmatprep.subr.bf16.mxu0 0
        %7683 = vmatpush1.bf16.msra.mxu0 0
        %7684 = vmatprep.subr.bf16.mxu0 0
        %7685 = vmatpush1.bf16.msra.mxu0 0
        %7686 = vmatprep.subr.bf16.mxu0 0
        %7687 = vmatpush1.bf16.msra.mxu0 0
        %7688 = vmatprep.subr.bf16.mxu0 0
        %7689 = vmatpush1.bf16.msra.mxu0 0
        %7690 = vmatprep.mubr.bf16.mxu0 0
        %7691 = vmatmul.mubr.bf16.gmra.mrb[0].mxu0 %v7656
        %v7692 = vpop.f32.mrb[0].mxu0
        %v7693 = vadd.f32 0.0, %v7692
        %v7694 = vpop.f32.mrb[0].mxu0
        %v7695 = vpop.f32.mrb[0].mxu0
        %v7696 = vadd.f32 0.0, %v7695
        %v7697 = vpop.f32.mrb[0].mxu0
        %7698 = vdwg.mxu0
        %v7701 = vunpack.c.l.b16 %v7491
        %v7702 = vunpack.c.l.b16 %v7492
        %v7703 = vpack.c.b16 %v7702, %v7701
        %v7706 = vsel %vm1337, %v7478, 0
        %7708 = vmatprep.subr.bf16.mxu0 0
        %7709 = vmatpush1.bf16.msra.mxu0 %v7703
        %7710 = vmatprep.subr.bf16.mxu0 0
        %7711 = vmatpush1.bf16.msra.mxu0 0
        %7712 = vmatprep.subr.bf16.mxu0 0
        %7713 = vmatpush1.bf16.msra.mxu0 0
        %7714 = vmatprep.subr.bf16.mxu0 0
        %7715 = vmatpush1.bf16.msra.mxu0 0
        %7716 = vmatprep.subr.bf16.mxu0 0
        %7717 = vmatpush1.bf16.msra.mxu0 0
        %7718 = vmatprep.subr.bf16.mxu0 0
        %7719 = vmatpush1.bf16.msra.mxu0 0
        %7720 = vmatprep.subr.bf16.mxu0 0
        %7721 = vmatpush1.bf16.msra.mxu0 0
        %7722 = vmatprep.subr.bf16.mxu0 0
        %7723 = vmatpush1.bf16.msra.mxu0 0
        %7724 = vmatprep.subr.bf16.mxu0 0
        %7725 = vmatpush1.bf16.msra.mxu0 0
        %7726 = vmatprep.subr.bf16.mxu0 0
        %7727 = vmatpush1.bf16.msra.mxu0 0
        %7728 = vmatprep.subr.bf16.mxu0 0
        %7729 = vmatpush1.bf16.msra.mxu0 0
        %7730 = vmatprep.subr.bf16.mxu0 0
        %7731 = vmatpush1.bf16.msra.mxu0 0
        %7732 = vmatprep.subr.bf16.mxu0 0
        %7733 = vmatpush1.bf16.msra.mxu0 0
        %7734 = vmatprep.subr.bf16.mxu0 0
        %7735 = vmatpush1.bf16.msra.mxu0 0
        %7736 = vmatprep.subr.bf16.mxu0 0
        %7737 = vmatpush1.bf16.msra.mxu0 0
        %7738 = vmatprep.subr.bf16.mxu0 0
        %7739 = vmatpush1.bf16.msra.mxu0 0
        %7740 = vmatprep.mubr.bf16.mxu0 0
        %7741 = vmatmul.mubr.bf16.gmra.mrb[0].mxu0 %v7706
        %v7742 = vpop.f32.mrb[0].mxu0
        %v7743 = vadd.f32 0.0, %v7742
        %v7744 = vpop.f32.mrb[0].mxu0
        %v7745 = vpop.f32.mrb[0].mxu0
        %v7746 = vadd.f32 0.0, %v7745
        %v7747 = vpop.f32.mrb[0].mxu0
        %7748 = vdwg.mxu0
        %v7751 = vunpack.c.l.b16 %v7493
        %v7752 = vunpack.c.l.b16 %v7494
        %v7753 = vpack.c.b16 %v7752, %v7751
        %v7756 = vsel %vm1337, %v7479, 0
        %7758 = vmatprep.subr.bf16.mxu0 0
        %7759 = vmatpush1.bf16.msra.mxu0 %v7753
        %7760 = vmatprep.subr.bf16.mxu0 0
        %7761 = vmatpush1.bf16.msra.mxu0 0
        %7762 = vmatprep.subr.bf16.mxu0 0
        %7763 = vmatpush1.bf16.msra.mxu0 0
        %7764 = vmatprep.subr.bf16.mxu0 0
        %7765 = vmatpush1.bf16.msra.mxu0 0
        %7766 = vmatprep.subr.bf16.mxu0 0
        %7767 = vmatpush1.bf16.msra.mxu0 0
        %7768 = vmatprep.subr.bf16.mxu0 0
        %7769 = vmatpush1.bf16.msra.mxu0 0
        %7770 = vmatprep.subr.bf16.mxu0 0
        %7771 = vmatpush1.bf16.msra.mxu0 0
        %7772 = vmatprep.subr.bf16.mxu0 0
        %7773 = vmatpush1.bf16.msra.mxu0 0
        %7774 = vmatprep.subr.bf16.mxu0 0
        %7775 = vmatpush1.bf16.msra.mxu0 0
        %7776 = vmatprep.subr.bf16.mxu0 0
        %7777 = vmatpush1.bf16.msra.mxu0 0
        %7778 = vmatprep.subr.bf16.mxu0 0
        %7779 = vmatpush1.bf16.msra.mxu0 0
        %7780 = vmatprep.subr.bf16.mxu0 0
        %7781 = vmatpush1.bf16.msra.mxu0 0
        %7782 = vmatprep.subr.bf16.mxu0 0
        %7783 = vmatpush1.bf16.msra.mxu0 0
        %7784 = vmatprep.subr.bf16.mxu0 0
        %7785 = vmatpush1.bf16.msra.mxu0 0
        %7786 = vmatprep.subr.bf16.mxu0 0
        %7787 = vmatpush1.bf16.msra.mxu0 0
        %7788 = vmatprep.subr.bf16.mxu0 0
        %7789 = vmatpush1.bf16.msra.mxu0 0
        %7790 = vmatprep.mubr.bf16.mxu0 0
        %7791 = vmatmul.mubr.bf16.gmra.mrb[0].mxu0 %v7756
        %v7792 = vpop.f32.mrb[0].mxu0
        %v7793 = vadd.f32 0.0, %v7792
        %v7794 = vpop.f32.mrb[0].mxu0
        %v7795 = vpop.f32.mrb[0].mxu0
        %v7796 = vadd.f32 0.0, %v7795
        %v7797 = vpop.f32.mrb[0].mxu0
        %7798 = vdwg.mxu0
        %v7801 = vunpack.c.l.b16 %v7495
        %v7802 = vunpack.c.l.b16 %v7496
        %v7803 = vpack.c.b16 %v7802, %v7801
        %v7806 = vsel %vm1337, %v7480, 0
        %7808 = vmatprep.subr.bf16.mxu0 0
        %7809 = vmatpush1.bf16.msra.mxu0 %v7803
        %7810 = vmatprep.subr.bf16.mxu0 0
        %7811 = vmatpush1.bf16.msra.mxu0 0
        %7812 = vmatprep.subr.bf16.mxu0 0
        %7813 = vmatpush1.bf16.msra.mxu0 0
        %7814 = vmatprep.subr.bf16.mxu0 0
        %7815 = vmatpush1.bf16.msra.mxu0 0
        %7816 = vmatprep.subr.bf16.mxu0 0
        %7817 = vmatpush1.bf16.msra.mxu0 0
        %7818 = vmatprep.subr.bf16.mxu0 0
        %7819 = vmatpush1.bf16.msra.mxu0 0
        %7820 = vmatprep.subr.bf16.mxu0 0
        %7821 = vmatpush1.bf16.msra.mxu0 0
        %7822 = vmatprep.subr.bf16.mxu0 0
        %7823 = vmatpush1.bf16.msra.mxu0 0
        %7824 = vmatprep.subr.bf16.mxu0 0
        %7825 = vmatpush1.bf16.msra.mxu0 0
        %7826 = vmatprep.subr.bf16.mxu0 0
        %7827 = vmatpush1.bf16.msra.mxu0 0
        %7828 = vmatprep.subr.bf16.mxu0 0
        %7829 = vmatpush1.bf16.msra.mxu0 0
        %7830 = vmatprep.subr.bf16.mxu0 0
        %7831 = vmatpush1.bf16.msra.mxu0 0
        %7832 = vmatprep.subr.bf16.mxu0 0
        %7833 = vmatpush1.bf16.msra.mxu0 0
        %7834 = vmatprep.subr.bf16.mxu0 0
        %7835 = vmatpush1.bf16.msra.mxu0 0
        %7836 = vmatprep.subr.bf16.mxu0 0
        %7837 = vmatpush1.bf16.msra.mxu0 0
        %7838 = vmatprep.subr.bf16.mxu0 0
        %7839 = vmatpush1.bf16.msra.mxu0 0
        %7840 = vmatprep.mubr.bf16.mxu0 0
        %7841 = vmatmul.mubr.bf16.gmra.mrb[0].mxu0 %v7806
        %v7842 = vpop.f32.mrb[0].mxu0
        %v7843 = vadd.f32 0.0, %v7842
        %v7844 = vpop.f32.mrb[0].mxu0
        %v7845 = vpop.f32.mrb[0].mxu0
        %v7846 = vadd.f32 0.0, %v7845
        %v7847 = vpop.f32.mrb[0].mxu0
        %7848 = vdwg.mxu0
        %v7851 = vunpack.c.l.b16 %v7497
        %v7852 = vunpack.c.l.b16 %v7498
        %v7853 = vpack.c.b16 %v7852, %v7851
        %v7856 = vsel %vm1337, %v7481, 0
        %7858 = vmatprep.subr.bf16.mxu0 0
        %7859 = vmatpush1.bf16.msra.mxu0 %v7853
        %7860 = vmatprep.subr.bf16.mxu0 0
        %7861 = vmatpush1.bf16.msra.mxu0 0
        %7862 = vmatprep.subr.bf16.mxu0 0
        %7863 = vmatpush1.bf16.msra.mxu0 0
        %7864 = vmatprep.subr.bf16.mxu0 0
        %7865 = vmatpush1.bf16.msra.mxu0 0
        %7866 = vmatprep.subr.bf16.mxu0 0
        %7867 = vmatpush1.bf16.msra.mxu0 0
        %7868 = vmatprep.subr.bf16.mxu0 0
        %7869 = vmatpush1.bf16.msra.mxu0 0
        %7870 = vmatprep.subr.bf16.mxu0 0
        %7871 = vmatpush1.bf16.msra.mxu0 0
        %7872 = vmatprep.subr.bf16.mxu0 0
        %7873 = vmatpush1.bf16.msra.mxu0 0
        %7874 = vmatprep.subr.bf16.mxu0 0
        %7875 = vmatpush1.bf16.msra.mxu0 0
        %7876 = vmatprep.subr.bf16.mxu0 0
        %7877 = vmatpush1.bf16.msra.mxu0 0
        %7878 = vmatprep.subr.bf16.mxu0 0
        %7879 = vmatpush1.bf16.msra.mxu0 0
        %7880 = vmatprep.subr.bf16.mxu0 0
        %7881 = vmatpush1.bf16.msra.mxu0 0
        %7882 = vmatprep.subr.bf16.mxu0 0
        %7883 = vmatpush1.bf16.msra.mxu0 0
        %7884 = vmatprep.subr.bf16.mxu0 0
        %7885 = vmatpush1.bf16.msra.mxu0 0
        %7886 = vmatprep.subr.bf16.mxu0 0
        %7887 = vmatpush1.bf16.msra.mxu0 0
        %7888 = vmatprep.subr.bf16.mxu0 0
        %7889 = vmatpush1.bf16.msra.mxu0 0
        %7890 = vmatprep.mubr.bf16.mxu0 0
        %7891 = vmatmul.mubr.bf16.gmra.mrb[0].mxu0 %v7856
        %v7892 = vpop.f32.mrb[0].mxu0
        %v7893 = vadd.f32 0.0, %v7892
        %v7894 = vpop.f32.mrb[0].mxu0
        %v7895 = vpop.f32.mrb[0].mxu0
        %v7896 = vadd.f32 0.0, %v7895
        %v7897 = vpop.f32.mrb[0].mxu0
        %7898 = vdwg.mxu0
        %v7899 = vadd.f32 %v7543, %v7593
        %v7900 = vadd.f32 %v7899, %v7643
        %v7901 = vadd.f32 %v7900, %v7693
        %v7902 = vadd.f32 %v7901, %v7743
        %v7903 = vadd.f32 %v7902, %v7793
        %v7904 = vadd.f32 %v7903, %v7843
        %v7905 = vadd.f32 %v7904, %v7893
        %v7906 = vadd.f32 %v7546, %v7596
        %v7907 = vadd.f32 %v7906, %v7646
        %v7908 = vadd.f32 %v7907, %v7696
        %v7909 = vadd.f32 %v7908, %v7746
        %v7910 = vadd.f32 %v7909, %v7796
        %v7911 = vadd.f32 %v7910, %v7846
        %v7912 = vadd.f32 %v7911, %v7896
        %v7913 = vadd.f32 %v6072, %v7905
        %v7914 = vadd.f32 %v6073, %v7912
        %v7915 = vld [vmem:[#allocation16 + $0x2] sm:$0x1]
        %v7916 = vlaneseq
        %v7917 = vshrl.u32 %v7916, 7
        %v7918 = vsub.s32 0, %v7917
        %v7919 = vrot.slane %v7915, %v7918
        %v7920 = vadd.f32 %v7913, %v7919
        %v7921 = vadd.f32 %v7914, %v7919
        %v7922 = vld [vmem:[#allocation17 + $0x2] sm:$0x1]
        %v7923 = vld [vmem:[#allocation19 + $0x2] sm:$0x1]
        %7924 = vadd.xlane.f32.xlu0 %v7920
        %v7925 = vpop.xlane.xlu0 %7924
        %7926 = vadd.xlane.f32.xlu0 %v7921
        %v7927 = vpop.xlane.xlu0 %7926
        %v7928 = vmul.f32 %v7925, %v837
        %v7929 = vmul.f32 %v7927, %v837
        %v7930 = vsub.f32 %v7920, %v7928
        %v7931 = vsub.f32 %v7921, %v7929
        %v7932 = vmul.f32 %v7930, %v7930
        %v7933 = vmul.f32 %v7931, %v7931
        %7934 = vadd.xlane.f32.xlu0 %v7932
        %v7935 = vpop.xlane.xlu0 %7934
        %7936 = vadd.xlane.f32.xlu0 %v7933
        %v7937 = vpop.xlane.xlu0 %7936
        %v7938 = vmul.f32 %v7935, %v837
        %v7939 = vmul.f32 %v7937, %v837
        %v7940 = vadd.f32 %v7938, 1e-05
        %v7941 = vadd.f32 %v7939, 1e-05
        %v7942 = vrsqrt.pop %v7940
        %v7943 = vrsqrt.pop %v7941
        %v7944 = vmul.f32 %v7930, %v7942
        %v7945 = vmul.f32 %v7931, %v7943
        %v7946 = vlaneseq
        %v7947 = vshrl.u32 %v7946, 7
        %v7948 = vsub.s32 0, %v7947
        %v7949 = vrot.slane %v7922, %v7948
        %v7950 = vmul.f32 %v7944, %v7949
        %v7951 = vmul.f32 %v7945, %v7949
        %v7952 = vlaneseq
        %v7953 = vshrl.u32 %v7952, 7
        %v7954 = vsub.s32 0, %v7953
        %v7955 = vrot.slane %v7923, %v7954
        %v7956 = vadd.f32 %v7950, %v7955
        %v7957 = vadd.f32 %v7951, %v7955
        %v7958 = vpack.c.bf16 %v7957, %v7956
        %s7959 = scalar_lea.vmem [#allocation20], 512
        %v7960 = vld [vmem:[%s7959] sm:$0xff]
        %v7961 = vld [vmem:[%s7959 + $0x8] sm:$0xff]
        %v7962 = vld [vmem:[%s7959 + $0x10] sm:$0xff]
        %v7963 = vld [vmem:[%s7959 + $0x18] sm:$0xff]
        %v7964 = vld [vmem:[%s7959 + $0x20] sm:$0xff]
        %v7965 = vld [vmem:[%s7959 + $0x28] sm:$0xff]
        %v7966 = vld [vmem:[%s7959 + $0x30] sm:$0xff]
        %v7967 = vld [vmem:[%s7959 + $0x38] sm:$0xff]
        %v7968 = vld [vmem:[%s7959 + $0x40] sm:$0xff]
        %v7969 = vld [vmem:[%s7959 + $0x48] sm:$0xff]
        %v7970 = vld [vmem:[%s7959 + $0x50] sm:$0xff]
        %v7971 = vld [vmem:[%s7959 + $0x58] sm:$0xff]
        %v7972 = vld [vmem:[%s7959 + $0x60] sm:$0xff]
        %v7973 = vld [vmem:[%s7959 + $0x68] sm:$0xff]
        %v7974 = vld [vmem:[%s7959 + $0x70] sm:$0xff]
        %v7975 = vld [vmem:[%s7959 + $0x78] sm:$0xff]
        %v7976 = vld [vmem:[%s7959 + $0x80] sm:$0xff]
        %v7977 = vld [vmem:[%s7959 + $0x88] sm:$0xff]
        %v7978 = vld [vmem:[%s7959 + $0x90] sm:$0xff]
        %v7979 = vld [vmem:[%s7959 + $0x98] sm:$0xff]
        %v7980 = vld [vmem:[%s7959 + $0xa0] sm:$0xff]
        %v7981 = vld [vmem:[%s7959 + $0xa8] sm:$0xff]
        %v7982 = vld [vmem:[%s7959 + $0xb0] sm:$0xff]
        %v7983 = vld [vmem:[%s7959 + $0xb8] sm:$0xff]
        %v7984 = vld [vmem:[%s7959 + $0xc0] sm:$0xff]
        %v7985 = vld [vmem:[%s7959 + $0xc8] sm:$0xff]
        %v7986 = vld [vmem:[%s7959 + $0xd0] sm:$0xff]
        %v7987 = vld [vmem:[%s7959 + $0xd8] sm:$0xff]
        %v7988 = vld [vmem:[%s7959 + $0xe0] sm:$0xff]
        %v7989 = vld [vmem:[%s7959 + $0xe8] sm:$0xff]
        %v7990 = vld [vmem:[%s7959 + $0xf0] sm:$0xff]
        %v7991 = vld [vmem:[%s7959 + $0xf8] sm:$0xff]
        %s7992 = scalar_lea.vmem [#allocation22], 2
        %v7993 = vld [vmem:[%s7992] ss:$4 sm:$0xf]
        %v7995 = vlaneseq
        %v7996 = vshrl.u32 %v7995, 7
        %v7997 = vsub.s32 0, %v7996
        %v7998 = vrot.slane %v7993, %v7997
        %v7999 = vlaneseq
        %v8000 = vshrl.u32 %v7999, 7
        %v8001 = vsub.s32 1, %v8000
        %v8002 = vrot.slane %v7993, %v8001
        %v8003 = vlaneseq
        %v8004 = vshrl.u32 %v8003, 7
        %v8005 = vsub.s32 2, %v8004
        %v8006 = vrot.slane %v7993, %v8005
        %v8007 = vlaneseq
        %v8008 = vshrl.u32 %v8007, 7
        %v8009 = vsub.s32 3, %v8008
        %v8010 = vrot.slane %v7993, %v8009
        %v8047 = vunpack.c.l.b16 %v7960
        %v8048 = vunpack.c.h.b16 %v7960
        %v8049 = vunpack.c.l.b16 %v7961
        %v8050 = vunpack.c.h.b16 %v7961
        %v8051 = vunpack.c.l.b16 %v7962
        %v8052 = vunpack.c.h.b16 %v7962
        %v8053 = vunpack.c.l.b16 %v7963
        %v8054 = vunpack.c.h.b16 %v7963
        %v8055 = vunpack.c.l.b16 %v7964
        %v8056 = vunpack.c.h.b16 %v7964
        %v8057 = vunpack.c.l.b16 %v7965
        %v8058 = vunpack.c.h.b16 %v7965
        %v8059 = vunpack.c.l.b16 %v7966
        %v8060 = vunpack.c.h.b16 %v7966
        %v8061 = vunpack.c.l.b16 %v7967
        %v8062 = vunpack.c.h.b16 %v7967
        %v8063 = vunpack.c.l.b16 %v7968
        %v8064 = vunpack.c.h.b16 %v7968
        %v8065 = vunpack.c.l.b16 %v7969
        %v8066 = vunpack.c.h.b16 %v7969
        %v8067 = vunpack.c.l.b16 %v7970
        %v8068 = vunpack.c.h.b16 %v7970
        %v8069 = vunpack.c.l.b16 %v7971
        %v8070 = vunpack.c.h.b16 %v7971
        %v8071 = vunpack.c.l.b16 %v7972
        %v8072 = vunpack.c.h.b16 %v7972
        %v8073 = vunpack.c.l.b16 %v7973
        %v8074 = vunpack.c.h.b16 %v7973
        %v8075 = vunpack.c.l.b16 %v7974
        %v8076 = vunpack.c.h.b16 %v7974
        %v8077 = vunpack.c.l.b16 %v7975
        %v8078 = vunpack.c.h.b16 %v7975
        %v8079 = vunpack.c.l.b16 %v7976
        %v8080 = vunpack.c.h.b16 %v7976
        %v8081 = vunpack.c.l.b16 %v7977
        %v8082 = vunpack.c.h.b16 %v7977
        %v8083 = vunpack.c.l.b16 %v7978
        %v8084 = vunpack.c.h.b16 %v7978
        %v8085 = vunpack.c.l.b16 %v7979
        %v8086 = vunpack.c.h.b16 %v7979
        %v8087 = vunpack.c.l.b16 %v7980
        %v8088 = vunpack.c.h.b16 %v7980
        %v8089 = vunpack.c.l.b16 %v7981
        %v8090 = vunpack.c.h.b16 %v7981
        %v8091 = vunpack.c.l.b16 %v7982
        %v8092 = vunpack.c.h.b16 %v7982
        %v8093 = vunpack.c.l.b16 %v7983
        %v8094 = vunpack.c.h.b16 %v7983
        %v8095 = vunpack.c.l.b16 %v7984
        %v8096 = vunpack.c.h.b16 %v7984
        %v8097 = vunpack.c.l.b16 %v7985
        %v8098 = vunpack.c.h.b16 %v7985
        %v8099 = vunpack.c.l.b16 %v7986
        %v8100 = vunpack.c.h.b16 %v7986
        %v8101 = vunpack.c.l.b16 %v7987
        %v8102 = vunpack.c.h.b16 %v7987
        %v8103 = vunpack.c.l.b16 %v7988
        %v8104 = vunpack.c.h.b16 %v7988
        %v8105 = vunpack.c.l.b16 %v7989
        %v8106 = vunpack.c.h.b16 %v7989
        %v8107 = vunpack.c.l.b16 %v7990
        %v8108 = vunpack.c.h.b16 %v7990
        %v8109 = vunpack.c.l.b16 %v7991
        %v8110 = vunpack.c.h.b16 %v7991
        %v8111 = vpack.c.b16 %v8051, %v8047
        %v8112 = vpack.c.b16 %v8052, %v8048
        %v8113 = vpack.c.b16 %v8053, %v8049
        %v8114 = vpack.c.b16 %v8054, %v8050
        %v8115 = vpack.c.b16 %v8059, %v8055
        %v8116 = vpack.c.b16 %v8060, %v8056
        %v8117 = vpack.c.b16 %v8061, %v8057
        %v8118 = vpack.c.b16 %v8062, %v8058
        %v8119 = vpack.c.b16 %v8067, %v8063
        %v8120 = vpack.c.b16 %v8068, %v8064
        %v8121 = vpack.c.b16 %v8069, %v8065
        %v8122 = vpack.c.b16 %v8070, %v8066
        %v8123 = vpack.c.b16 %v8075, %v8071
        %v8124 = vpack.c.b16 %v8076, %v8072
        %v8125 = vpack.c.b16 %v8077, %v8073
        %v8126 = vpack.c.b16 %v8078, %v8074
        %v8127 = vpack.c.b16 %v8083, %v8079
        %v8128 = vpack.c.b16 %v8084, %v8080
        %v8129 = vpack.c.b16 %v8085, %v8081
        %v8130 = vpack.c.b16 %v8086, %v8082
        %v8131 = vpack.c.b16 %v8091, %v8087
        %v8132 = vpack.c.b16 %v8092, %v8088
        %v8133 = vpack.c.b16 %v8093, %v8089
        %v8134 = vpack.c.b16 %v8094, %v8090
        %v8135 = vpack.c.b16 %v8099, %v8095
        %v8136 = vpack.c.b16 %v8100, %v8096
        %v8137 = vpack.c.b16 %v8101, %v8097
        %v8138 = vpack.c.b16 %v8102, %v8098
        %v8139 = vpack.c.b16 %v8107, %v8103
        %v8140 = vpack.c.b16 %v8108, %v8104
        %v8141 = vpack.c.b16 %v8109, %v8105
        %v8142 = vpack.c.b16 %v8110, %v8106
        %8175 = vmatprep.subr.bf16.mxu0 %v8112
        %8176 = vmatpush1.bf16.msra.mxu0 %v8111
        %8177 = vmatprep.subr.bf16.mxu0 %v8116
        %8178 = vmatpush1.bf16.msra.mxu0 %v8115
        %8179 = vmatprep.subr.bf16.mxu0 %v8120
        %8180 = vmatpush1.bf16.msra.mxu0 %v8119
        %8181 = vmatprep.subr.bf16.mxu0 %v8124
        %8182 = vmatpush1.bf16.msra.mxu0 %v8123
        %8183 = vmatprep.subr.bf16.mxu0 %v8128
        %8184 = vmatpush1.bf16.msra.mxu0 %v8127
        %8185 = vmatprep.subr.bf16.mxu0 %v8132
        %8186 = vmatpush1.bf16.msra.mxu0 %v8131
        %8187 = vmatprep.subr.bf16.mxu0 %v8136
        %8188 = vmatpush1.bf16.msra.mxu0 %v8135
        %8189 = vmatprep.subr.bf16.mxu0 %v8140
        %8190 = vmatpush1.bf16.msra.mxu0 %v8139
        %8191 = vmatprep.subr.bf16.mxu0 0
        %8192 = vmatpush1.bf16.msra.mxu0 0
        %8193 = vmatprep.subr.bf16.mxu0 0
        %8194 = vmatpush1.bf16.msra.mxu0 0
        %8195 = vmatprep.subr.bf16.mxu0 0
        %8196 = vmatpush1.bf16.msra.mxu0 0
        %8197 = vmatprep.subr.bf16.mxu0 0
        %8198 = vmatpush1.bf16.msra.mxu0 0
        %8199 = vmatprep.subr.bf16.mxu0 0
        %8200 = vmatpush1.bf16.msra.mxu0 0
        %8201 = vmatprep.subr.bf16.mxu0 0
        %8202 = vmatpush1.bf16.msra.mxu0 0
        %8203 = vmatprep.subr.bf16.mxu0 0
        %8204 = vmatpush1.bf16.msra.mxu0 0
        %8205 = vmatprep.subr.bf16.mxu0 0
        %8206 = vmatpush1.bf16.msra.mxu0 0
        %8207 = vmatprep.mubr.bf16.mxu0 0
        %8208 = vmatmul.mubr.bf16.gmra.mrb[0].mxu0 %v7958
        %v8209 = vpop.f32.mrb[0].mxu0
        %v8210 = vadd.f32 %v7998, %v8209
        %v8211 = vpop.f32.mrb[0].mxu0
        %v8212 = vadd.f32 %v8002, %v8211
        %v8213 = vpop.f32.mrb[0].mxu0
        %v8214 = vadd.f32 %v7998, %v8213
        %v8215 = vpop.f32.mrb[0].mxu0
        %v8216 = vadd.f32 %v8002, %v8215
        %8217 = vdwg.mxu0
        %8218 = vmatprep.subr.bf16.mxu0 %v8114
        %8219 = vmatpush1.bf16.msra.mxu0 %v8113
        %8220 = vmatprep.subr.bf16.mxu0 %v8118
        %8221 = vmatpush1.bf16.msra.mxu0 %v8117
        %8222 = vmatprep.subr.bf16.mxu0 %v8122
        %8223 = vmatpush1.bf16.msra.mxu0 %v8121
        %8224 = vmatprep.subr.bf16.mxu0 %v8126
        %8225 = vmatpush1.bf16.msra.mxu0 %v8125
        %8226 = vmatprep.subr.bf16.mxu0 %v8130
        %8227 = vmatpush1.bf16.msra.mxu0 %v8129
        %8228 = vmatprep.subr.bf16.mxu0 %v8134
        %8229 = vmatpush1.bf16.msra.mxu0 %v8133
        %8230 = vmatprep.subr.bf16.mxu0 %v8138
        %8231 = vmatpush1.bf16.msra.mxu0 %v8137
        %8232 = vmatprep.subr.bf16.mxu0 %v8142
        %8233 = vmatpush1.bf16.msra.mxu0 %v8141
        %8234 = vmatprep.subr.bf16.mxu0 0
        %8235 = vmatpush1.bf16.msra.mxu0 0
        %8236 = vmatprep.subr.bf16.mxu0 0
        %8237 = vmatpush1.bf16.msra.mxu0 0
        %8238 = vmatprep.subr.bf16.mxu0 0
        %8239 = vmatpush1.bf16.msra.mxu0 0
        %8240 = vmatprep.subr.bf16.mxu0 0
        %8241 = vmatpush1.bf16.msra.mxu0 0
        %8242 = vmatprep.subr.bf16.mxu0 0
        %8243 = vmatpush1.bf16.msra.mxu0 0
        %8244 = vmatprep.subr.bf16.mxu0 0
        %8245 = vmatpush1.bf16.msra.mxu0 0
        %8246 = vmatprep.subr.bf16.mxu0 0
        %8247 = vmatpush1.bf16.msra.mxu0 0
        %8248 = vmatprep.subr.bf16.mxu0 0
        %8249 = vmatpush1.bf16.msra.mxu0 0
        %8250 = vmatprep.mubr.bf16.mxu0 0
        %8251 = vmatmul.mubr.bf16.gmra.mrb[0].mxu0 %v7958
        %v8252 = vpop.f32.mrb[0].mxu0
        %v8253 = vadd.f32 %v8006, %v8252
        %v8254 = vpop.f32.mrb[0].mxu0
        %v8255 = vadd.f32 %v8010, %v8254
        %v8256 = vpop.f32.mrb[0].mxu0
        %v8257 = vadd.f32 %v8006, %v8256
        %v8258 = vpop.f32.mrb[0].mxu0
        %v8259 = vadd.f32 %v8010, %v8258
        %8260 = vdwg.mxu0
        %v8261 = vmul.f32 %v8210, 1.702
        %v8262 = vmul.f32 %v8212, 1.702
        %v8263 = vmul.f32 %v8253, 1.702
        %v8264 = vmul.f32 %v8255, 1.702
        %v8265 = vmul.f32 %v8214, 1.702
        %v8266 = vmul.f32 %v8216, 1.702
        %v8267 = vmul.f32 %v8257, 1.702
        %v8268 = vmul.f32 %v8259, 1.702
        %v8269 = vxor.u32 %v8261, 2147483648
        %v8270 = vxor.u32 %v8262, 2147483648
        %v8271 = vxor.u32 %v8263, 2147483648
        %v8272 = vxor.u32 %v8264, 2147483648
        %v8273 = vxor.u32 %v8265, 2147483648
        %v8274 = vxor.u32 %v8266, 2147483648
        %v8275 = vxor.u32 %v8267, 2147483648
        %v8276 = vxor.u32 %v8268, 2147483648
        %v8277 = vmul.f32 %v8269, 1.442695
        %v8278 = vpow.pop %v8277
        %v8279 = vmul.f32 %v8270, 1.442695
        %v8280 = vpow.pop %v8279
        %v8281 = vmul.f32 %v8271, 1.442695
        %v8282 = vpow.pop %v8281
        %v8283 = vmul.f32 %v8272, 1.442695
        %v8284 = vpow.pop %v8283
        %v8285 = vmul.f32 %v8273, 1.442695
        %v8286 = vpow.pop %v8285
        %v8287 = vmul.f32 %v8274, 1.442695
        %v8288 = vpow.pop %v8287
        %v8289 = vmul.f32 %v8275, 1.442695
        %v8290 = vpow.pop %v8289
        %v8291 = vmul.f32 %v8276, 1.442695
        %v8292 = vpow.pop %v8291
        %v8293 = vadd.f32 %v8278, 1.0
        %v8294 = vadd.f32 %v8280, 1.0
        %v8295 = vadd.f32 %v8282, 1.0
        %v8296 = vadd.f32 %v8284, 1.0
        %v8297 = vadd.f32 %v8286, 1.0
        %v8298 = vadd.f32 %v8288, 1.0
        %v8299 = vadd.f32 %v8290, 1.0
        %v8300 = vadd.f32 %v8292, 1.0
        %v8301 = vrcp.pop %v8293
        %v8302 = vmul.f32 1.0, %v8301
        %v8303 = vrcp.pop %v8294
        %v8304 = vmul.f32 1.0, %v8303
        %v8305 = vrcp.pop %v8295
        %v8306 = vmul.f32 1.0, %v8305
        %v8307 = vrcp.pop %v8296
        %v8308 = vmul.f32 1.0, %v8307
        %v8309 = vrcp.pop %v8297
        %v8310 = vmul.f32 1.0, %v8309
        %v8311 = vrcp.pop %v8298
        %v8312 = vmul.f32 1.0, %v8311
        %v8313 = vrcp.pop %v8299
        %v8314 = vmul.f32 1.0, %v8313
        %v8315 = vrcp.pop %v8300
        %v8316 = vmul.f32 1.0, %v8315
        %v8317 = vmul.f32 %v8210, %v8302
        %v8318 = vmul.f32 %v8212, %v8304
        %v8319 = vmul.f32 %v8253, %v8306
        %v8320 = vmul.f32 %v8255, %v8308
        %v8321 = vmul.f32 %v8214, %v8310
        %v8322 = vmul.f32 %v8216, %v8312
        %v8323 = vmul.f32 %v8257, %v8314
        %v8324 = vmul.f32 %v8259, %v8316
        %v8325 = vpack.c.bf16 %v8321, %v8317
        %v8326 = vpack.c.bf16 %v8322, %v8318
        %v8327 = vpack.c.bf16 %v8323, %v8319
        %v8328 = vpack.c.bf16 %v8324, %v8320
        %s8329 = scalar_lea.vmem [#allocation23], 512
        %v8330 = vld [vmem:[%s8329] sm:$0xf]
        %v8331 = vld [vmem:[%s8329 + $0x4] sm:$0xf]
        %v8332 = vld [vmem:[%s8329 + $0x8] sm:$0xf]
        %v8333 = vld [vmem:[%s8329 + $0xc] sm:$0xf]
        %v8334 = vld [vmem:[%s8329 + $0x10] sm:$0xf]
        %v8335 = vld [vmem:[%s8329 + $0x14] sm:$0xf]
        %v8336 = vld [vmem:[%s8329 + $0x18] sm:$0xf]
        %v8337 = vld [vmem:[%s8329 + $0x1c] sm:$0xf]
        %v8338 = vld [vmem:[%s8329 + $0x20] sm:$0xf]
        %v8339 = vld [vmem:[%s8329 + $0x24] sm:$0xf]
        %v8340 = vld [vmem:[%s8329 + $0x28] sm:$0xf]
        %v8341 = vld [vmem:[%s8329 + $0x2c] sm:$0xf]
        %v8342 = vld [vmem:[%s8329 + $0x30] sm:$0xf]
        %v8343 = vld [vmem:[%s8329 + $0x34] sm:$0xf]
        %v8344 = vld [vmem:[%s8329 + $0x38] sm:$0xf]
        %v8345 = vld [vmem:[%s8329 + $0x3c] sm:$0xf]
        %v8346 = vld [vmem:[%s8329 + $0x40] sm:$0xf]
        %v8347 = vld [vmem:[%s8329 + $0x44] sm:$0xf]
        %v8348 = vld [vmem:[%s8329 + $0x48] sm:$0xf]
        %v8349 = vld [vmem:[%s8329 + $0x4c] sm:$0xf]
        %v8350 = vld [vmem:[%s8329 + $0x50] sm:$0xf]
        %v8351 = vld [vmem:[%s8329 + $0x54] sm:$0xf]
        %v8352 = vld [vmem:[%s8329 + $0x58] sm:$0xf]
        %v8353 = vld [vmem:[%s8329 + $0x5c] sm:$0xf]
        %v8354 = vld [vmem:[%s8329 + $0x60] sm:$0xf]
        %v8355 = vld [vmem:[%s8329 + $0x64] sm:$0xf]
        %v8356 = vld [vmem:[%s8329 + $0x68] sm:$0xf]
        %v8357 = vld [vmem:[%s8329 + $0x6c] sm:$0xf]
        %v8358 = vld [vmem:[%s8329 + $0x70] sm:$0xf]
        %v8359 = vld [vmem:[%s8329 + $0x74] sm:$0xf]
        %v8360 = vld [vmem:[%s8329 + $0x78] sm:$0xf]
        %v8361 = vld [vmem:[%s8329 + $0x7c] sm:$0xf]
        %v8362 = vld [vmem:[%s8329 + $0x80] sm:$0xf]
        %v8363 = vld [vmem:[%s8329 + $0x84] sm:$0xf]
        %v8364 = vld [vmem:[%s8329 + $0x88] sm:$0xf]
        %v8365 = vld [vmem:[%s8329 + $0x8c] sm:$0xf]
        %v8366 = vld [vmem:[%s8329 + $0x90] sm:$0xf]
        %v8367 = vld [vmem:[%s8329 + $0x94] sm:$0xf]
        %v8368 = vld [vmem:[%s8329 + $0x98] sm:$0xf]
        %v8369 = vld [vmem:[%s8329 + $0x9c] sm:$0xf]
        %v8370 = vld [vmem:[%s8329 + $0xa0] sm:$0xf]
        %v8371 = vld [vmem:[%s8329 + $0xa4] sm:$0xf]
        %v8372 = vld [vmem:[%s8329 + $0xa8] sm:$0xf]
        %v8373 = vld [vmem:[%s8329 + $0xac] sm:$0xf]
        %v8374 = vld [vmem:[%s8329 + $0xb0] sm:$0xf]
        %v8375 = vld [vmem:[%s8329 + $0xb4] sm:$0xf]
        %v8376 = vld [vmem:[%s8329 + $0xb8] sm:$0xf]
        %v8377 = vld [vmem:[%s8329 + $0xbc] sm:$0xf]
        %v8378 = vld [vmem:[%s8329 + $0xc0] sm:$0xf]
        %v8379 = vld [vmem:[%s8329 + $0xc4] sm:$0xf]
        %v8380 = vld [vmem:[%s8329 + $0xc8] sm:$0xf]
        %v8381 = vld [vmem:[%s8329 + $0xcc] sm:$0xf]
        %v8382 = vld [vmem:[%s8329 + $0xd0] sm:$0xf]
        %v8383 = vld [vmem:[%s8329 + $0xd4] sm:$0xf]
        %v8384 = vld [vmem:[%s8329 + $0xd8] sm:$0xf]
        %v8385 = vld [vmem:[%s8329 + $0xdc] sm:$0xf]
        %v8386 = vld [vmem:[%s8329 + $0xe0] sm:$0xf]
        %v8387 = vld [vmem:[%s8329 + $0xe4] sm:$0xf]
        %v8388 = vld [vmem:[%s8329 + $0xe8] sm:$0xf]
        %v8389 = vld [vmem:[%s8329 + $0xec] sm:$0xf]
        %v8390 = vld [vmem:[%s8329 + $0xf0] sm:$0xf]
        %v8391 = vld [vmem:[%s8329 + $0xf4] sm:$0xf]
        %v8392 = vld [vmem:[%s8329 + $0xf8] sm:$0xf]
        %v8393 = vld [vmem:[%s8329 + $0xfc] sm:$0xf]
        %v8394 = vld [vmem:[#allocation25 + $0x2] sm:$0x1]
        %v8395 = vlaneseq
        %v8396 = vshrl.u32 %v8395, 7
        %v8397 = vsub.s32 0, %v8396
        %v8398 = vrot.slane %v8394, %v8397
        %v8463 = vunpack.c.l.b16 %v8330
        %v8464 = vunpack.c.l.b16 %v8331
        %v8465 = vunpack.c.l.b16 %v8332
        %v8466 = vunpack.c.l.b16 %v8333
        %v8467 = vunpack.c.l.b16 %v8334
        %v8468 = vunpack.c.l.b16 %v8335
        %v8469 = vunpack.c.l.b16 %v8336
        %v8470 = vunpack.c.l.b16 %v8337
        %v8471 = vunpack.c.l.b16 %v8338
        %v8472 = vunpack.c.l.b16 %v8339
        %v8473 = vunpack.c.l.b16 %v8340
        %v8474 = vunpack.c.l.b16 %v8341
        %v8475 = vunpack.c.l.b16 %v8342
        %v8476 = vunpack.c.l.b16 %v8343
        %v8477 = vunpack.c.l.b16 %v8344
        %v8478 = vunpack.c.l.b16 %v8345
        %v8479 = vunpack.c.l.b16 %v8346
        %v8480 = vunpack.c.l.b16 %v8347
        %v8481 = vunpack.c.l.b16 %v8348
        %v8482 = vunpack.c.l.b16 %v8349
        %v8483 = vunpack.c.l.b16 %v8350
        %v8484 = vunpack.c.l.b16 %v8351
        %v8485 = vunpack.c.l.b16 %v8352
        %v8486 = vunpack.c.l.b16 %v8353
        %v8487 = vunpack.c.l.b16 %v8354
        %v8488 = vunpack.c.l.b16 %v8355
        %v8489 = vunpack.c.l.b16 %v8356
        %v8490 = vunpack.c.l.b16 %v8357
        %v8491 = vunpack.c.l.b16 %v8358
        %v8492 = vunpack.c.l.b16 %v8359
        %v8493 = vunpack.c.l.b16 %v8360
        %v8494 = vunpack.c.l.b16 %v8361
        %v8495 = vunpack.c.l.b16 %v8362
        %v8496 = vunpack.c.l.b16 %v8363
        %v8497 = vunpack.c.l.b16 %v8364
        %v8498 = vunpack.c.l.b16 %v8365
        %v8499 = vunpack.c.l.b16 %v8366
        %v8500 = vunpack.c.l.b16 %v8367
        %v8501 = vunpack.c.l.b16 %v8368
        %v8502 = vunpack.c.l.b16 %v8369
        %v8503 = vunpack.c.l.b16 %v8370
        %v8504 = vunpack.c.l.b16 %v8371
        %v8505 = vunpack.c.l.b16 %v8372
        %v8506 = vunpack.c.l.b16 %v8373
        %v8507 = vunpack.c.l.b16 %v8374
        %v8508 = vunpack.c.l.b16 %v8375
        %v8509 = vunpack.c.l.b16 %v8376
        %v8510 = vunpack.c.l.b16 %v8377
        %v8511 = vunpack.c.l.b16 %v8378
        %v8512 = vunpack.c.l.b16 %v8379
        %v8513 = vunpack.c.l.b16 %v8380
        %v8514 = vunpack.c.l.b16 %v8381
        %v8515 = vunpack.c.l.b16 %v8382
        %v8516 = vunpack.c.l.b16 %v8383
        %v8517 = vunpack.c.l.b16 %v8384
        %v8518 = vunpack.c.l.b16 %v8385
        %v8519 = vunpack.c.l.b16 %v8386
        %v8520 = vunpack.c.l.b16 %v8387
        %v8521 = vunpack.c.l.b16 %v8388
        %v8522 = vunpack.c.l.b16 %v8389
        %v8523 = vunpack.c.l.b16 %v8390
        %v8524 = vunpack.c.l.b16 %v8391
        %v8525 = vunpack.c.l.b16 %v8392
        %v8526 = vunpack.c.l.b16 %v8393
        %v8527 = vpack.c.b16 %v8464, %v8463
        %v8528 = vpack.c.b16 %v8466, %v8465
        %v8529 = vpack.c.b16 %v8468, %v8467
        %v8530 = vpack.c.b16 %v8470, %v8469
        %v8531 = vpack.c.b16 %v8472, %v8471
        %v8532 = vpack.c.b16 %v8474, %v8473
        %v8533 = vpack.c.b16 %v8476, %v8475
        %v8534 = vpack.c.b16 %v8478, %v8477
        %v8535 = vpack.c.b16 %v8480, %v8479
        %v8536 = vpack.c.b16 %v8482, %v8481
        %v8537 = vpack.c.b16 %v8484, %v8483
        %v8538 = vpack.c.b16 %v8486, %v8485
        %v8539 = vpack.c.b16 %v8488, %v8487
        %v8540 = vpack.c.b16 %v8490, %v8489
        %v8541 = vpack.c.b16 %v8492, %v8491
        %v8542 = vpack.c.b16 %v8494, %v8493
        %v8543 = vpack.c.b16 %v8496, %v8495
        %v8544 = vpack.c.b16 %v8498, %v8497
        %v8545 = vpack.c.b16 %v8500, %v8499
        %v8546 = vpack.c.b16 %v8502, %v8501
        %v8547 = vpack.c.b16 %v8504, %v8503
        %v8548 = vpack.c.b16 %v8506, %v8505
        %v8549 = vpack.c.b16 %v8508, %v8507
        %v8550 = vpack.c.b16 %v8510, %v8509
        %v8551 = vpack.c.b16 %v8512, %v8511
        %v8552 = vpack.c.b16 %v8514, %v8513
        %v8553 = vpack.c.b16 %v8516, %v8515
        %v8554 = vpack.c.b16 %v8518, %v8517
        %v8555 = vpack.c.b16 %v8520, %v8519
        %v8556 = vpack.c.b16 %v8522, %v8521
        %v8557 = vpack.c.b16 %v8524, %v8523
        %v8558 = vpack.c.b16 %v8526, %v8525
        %8591 = vmatprep.subr.bf16.mxu0 0
        %8592 = vmatpush1.bf16.msra.mxu0 %v8527
        %8593 = vmatprep.subr.bf16.mxu0 0
        %8594 = vmatpush1.bf16.msra.mxu0 %v8528
        %8595 = vmatprep.subr.bf16.mxu0 0
        %8596 = vmatpush1.bf16.msra.mxu0 %v8529
        %8597 = vmatprep.subr.bf16.mxu0 0
        %8598 = vmatpush1.bf16.msra.mxu0 %v8530
        %8599 = vmatprep.subr.bf16.mxu0 0
        %8600 = vmatpush1.bf16.msra.mxu0 %v8531
        %8601 = vmatprep.subr.bf16.mxu0 0
        %8602 = vmatpush1.bf16.msra.mxu0 %v8532
        %8603 = vmatprep.subr.bf16.mxu0 0
        %8604 = vmatpush1.bf16.msra.mxu0 %v8533
        %8605 = vmatprep.subr.bf16.mxu0 0
        %8606 = vmatpush1.bf16.msra.mxu0 %v8534
        %8607 = vmatprep.subr.bf16.mxu0 0
        %8608 = vmatpush1.bf16.msra.mxu0 %v8535
        %8609 = vmatprep.subr.bf16.mxu0 0
        %8610 = vmatpush1.bf16.msra.mxu0 %v8536
        %8611 = vmatprep.subr.bf16.mxu0 0
        %8612 = vmatpush1.bf16.msra.mxu0 %v8537
        %8613 = vmatprep.subr.bf16.mxu0 0
        %8614 = vmatpush1.bf16.msra.mxu0 %v8538
        %8615 = vmatprep.subr.bf16.mxu0 0
        %8616 = vmatpush1.bf16.msra.mxu0 %v8539
        %8617 = vmatprep.subr.bf16.mxu0 0
        %8618 = vmatpush1.bf16.msra.mxu0 %v8540
        %8619 = vmatprep.subr.bf16.mxu0 0
        %8620 = vmatpush1.bf16.msra.mxu0 %v8541
        %8621 = vmatprep.subr.bf16.mxu0 0
        %8622 = vmatpush1.bf16.msra.mxu0 %v8542
        %8623 = vmatprep.mubr.bf16.mxu0 %v8326
        %8624 = vmatmul.mubr.bf16.gmra.mrb[0].mxu0 %v8325
        %v8625 = vpop.f32.mrb[0].mxu0
        %v8626 = vpop.f32.mrb[0].mxu0
        %v8627 = vpop.f32.mrb[0].mxu0
        %v8628 = vadd.f32 %v8398, %v8627
        %v8629 = vpop.f32.mrb[0].mxu0
        %8630 = vdwg.mxu0
        %8631 = vmatprep.subr.bf16.mxu0 0
        %8632 = vmatpush1.bf16.msra.mxu0 %v8543
        %8633 = vmatprep.subr.bf16.mxu0 0
        %8634 = vmatpush1.bf16.msra.mxu0 %v8544
        %8635 = vmatprep.subr.bf16.mxu0 0
        %8636 = vmatpush1.bf16.msra.mxu0 %v8545
        %8637 = vmatprep.subr.bf16.mxu0 0
        %8638 = vmatpush1.bf16.msra.mxu0 %v8546
        %8639 = vmatprep.subr.bf16.mxu0 0
        %8640 = vmatpush1.bf16.msra.mxu0 %v8547
        %8641 = vmatprep.subr.bf16.mxu0 0
        %8642 = vmatpush1.bf16.msra.mxu0 %v8548
        %8643 = vmatprep.subr.bf16.mxu0 0
        %8644 = vmatpush1.bf16.msra.mxu0 %v8549
        %8645 = vmatprep.subr.bf16.mxu0 0
        %8646 = vmatpush1.bf16.msra.mxu0 %v8550
        %8647 = vmatprep.subr.bf16.mxu0 0
        %8648 = vmatpush1.bf16.msra.mxu0 %v8551
        %8649 = vmatprep.subr.bf16.mxu0 0
        %8650 = vmatpush1.bf16.msra.mxu0 %v8552
        %8651 = vmatprep.subr.bf16.mxu0 0
        %8652 = vmatpush1.bf16.msra.mxu0 %v8553
        %8653 = vmatprep.subr.bf16.mxu0 0
        %8654 = vmatpush1.bf16.msra.mxu0 %v8554
        %8655 = vmatprep.subr.bf16.mxu0 0
        %8656 = vmatpush1.bf16.msra.mxu0 %v8555
        %8657 = vmatprep.subr.bf16.mxu0 0
        %8658 = vmatpush1.bf16.msra.mxu0 %v8556
        %8659 = vmatprep.subr.bf16.mxu0 0
        %8660 = vmatpush1.bf16.msra.mxu0 %v8557
        %8661 = vmatprep.subr.bf16.mxu0 0
        %8662 = vmatpush1.bf16.msra.mxu0 %v8558
        %8663 = vmatprep.mubr.bf16.mxu0 %v8328
        %8664 = vmatmul.mubr.bf16.gmra.mrb[0].mxu0 %v8327
        %v8665 = vpop.f32.mrb[0].mxu0
        %v8666 = vpop.f32.mrb[0].mxu0
        %v8667 = vpop.f32.mrb[0].mxu0
        %v8668 = vadd.f32 %v8628, %v8667
        %v8669 = vpop.f32.mrb[0].mxu0
        %8670 = vdwg.mxu0
        %v8671 = vadd.f32 %v7921, %v8668
        %v8672 = vld [vmem:[#allocation26] sm:$0x1]
        %v8673 = vld [vmem:[#allocation28] sm:$0x1]
        %v8674 = vsel %vm829, %v8671, 0.0
        %8675 = vadd.xlane.f32.xlu0 %v8674
        %v8676 = vpop.xlane.xlu0 %8675
        %v8677 = vmul.f32 %v8676, %v837
        %v8678 = vsub.f32 %v8671, %v8677
        %v8679 = vmul.f32 %v8678, %v8678
        %v8680 = vsel %vm829, %v8679, 0.0
        %8681 = vadd.xlane.f32.xlu0 %v8680
        %v8682 = vpop.xlane.xlu0 %8681
        %v8683 = vmul.f32 %v8682, %v837
        %v8684 = vadd.f32 %v8683, 1e-05
        %v8685 = vrsqrt.pop %v8684
        %v8686 = vmul.f32 %v8678, %v8685
        %v8688 = vlaneseq
        %v8689 = vshrl.u32 %v8688, 7
        %v8690 = vsub.s32 0, %v8689
        %v8691 = vrot.slane %v8672, %v8690
        %v8693 = vmul.f32 %v8686, %v8691
        %v8695 = vlaneseq
        %v8696 = vshrl.u32 %v8695, 7
        %v8697 = vsub.s32 0, %v8696
        %v8698 = vrot.slane %v8673, %v8697
        %v8700 = vadd.f32 %v8693, %v8698
        %v8701 = vpack.c.bf16 %v8700, %v8700
        %v8702 = vld [vmem:[%s18] sm:$0xf]
        %v8703 = vld [vmem:[%s18 + $0x4] sm:$0xf]
        %v8704 = vld [vmem:[%s18 + $0x8] sm:$0xf]
        %v8705 = vld [vmem:[%s18 + $0xc] sm:$0xf]
        %v8706 = vld [vmem:[%s18 + $0x10] sm:$0xf]
        %v8707 = vld [vmem:[%s18 + $0x14] sm:$0xf]
        %v8708 = vld [vmem:[%s18 + $0x18] sm:$0xf]
        %v8709 = vld [vmem:[%s18 + $0x1c] sm:$0xf]
        %v8710 = vld [vmem:[%s18 + $0x20] sm:$0xf]
        %v8711 = vld [vmem:[%s18 + $0x24] sm:$0xf]
        %v8712 = vld [vmem:[%s18 + $0x28] sm:$0xf]
        %v8713 = vld [vmem:[%s18 + $0x2c] sm:$0xf]
        %v8714 = vld [vmem:[%s18 + $0x30] sm:$0xf]
        %v8715 = vld [vmem:[%s18 + $0x34] sm:$0xf]
        %v8716 = vld [vmem:[%s18 + $0x38] sm:$0xf]
        %v8717 = vld [vmem:[%s18 + $0x3c] sm:$0xf]
        %v8734 = vunpack.c.l.b16 %v8702
        %v8735 = vunpack.c.l.b16 %v8703
        %v8736 = vunpack.c.l.b16 %v8704
        %v8737 = vunpack.c.l.b16 %v8705
        %v8738 = vunpack.c.l.b16 %v8706
        %v8739 = vunpack.c.l.b16 %v8707
        %v8740 = vunpack.c.l.b16 %v8708
        %v8741 = vunpack.c.l.b16 %v8709
        %v8742 = vunpack.c.l.b16 %v8710
        %v8743 = vunpack.c.l.b16 %v8711
        %v8744 = vunpack.c.l.b16 %v8712
        %v8745 = vunpack.c.l.b16 %v8713
        %v8746 = vunpack.c.l.b16 %v8714
        %v8747 = vunpack.c.l.b16 %v8715
        %v8748 = vunpack.c.l.b16 %v8716
        %v8749 = vunpack.c.l.b16 %v8717
        %v8750 = vpack.c.b16 %v8735, %v8734
        %v8751 = vpack.c.b16 %v8737, %v8736
        %v8752 = vpack.c.b16 %v8739, %v8738
        %v8753 = vpack.c.b16 %v8741, %v8740
        %v8754 = vpack.c.b16 %v8743, %v8742
        %v8755 = vpack.c.b16 %v8745, %v8744
        %v8756 = vpack.c.b16 %v8747, %v8746
        %v8757 = vpack.c.b16 %v8749, %v8748
        %8766 = vmatprep.subr.bf16.mxu0 0
        %8767 = vmatpush1.bf16.msra.mxu0 %v8750
        %8768 = vmatprep.subr.bf16.mxu0 0
        %8769 = vmatpush1.bf16.msra.mxu0 %v8751
        %8770 = vmatprep.subr.bf16.mxu0 0
        %8771 = vmatpush1.bf16.msra.mxu0 %v8752
        %8772 = vmatprep.subr.bf16.mxu0 0
        %8773 = vmatpush1.bf16.msra.mxu0 %v8753
        %8774 = vmatprep.subr.bf16.mxu0 0
        %8775 = vmatpush1.bf16.msra.mxu0 %v8754
        %8776 = vmatprep.subr.bf16.mxu0 0
        %8777 = vmatpush1.bf16.msra.mxu0 %v8755
        %8778 = vmatprep.subr.bf16.mxu0 0
        %8779 = vmatpush1.bf16.msra.mxu0 %v8756
        %8780 = vmatprep.subr.bf16.mxu0 0
        %8781 = vmatpush1.bf16.msra.mxu0 %v8757
        %8782 = vmatprep.subr.bf16.mxu0 0
        %8783 = vmatpush1.bf16.msra.mxu0 0
        %8784 = vmatprep.subr.bf16.mxu0 0
        %8785 = vmatpush1.bf16.msra.mxu0 0
        %8786 = vmatprep.subr.bf16.mxu0 0
        %8787 = vmatpush1.bf16.msra.mxu0 0
        %8788 = vmatprep.subr.bf16.mxu0 0
        %8789 = vmatpush1.bf16.msra.mxu0 0
        %8790 = vmatprep.subr.bf16.mxu0 0
        %8791 = vmatpush1.bf16.msra.mxu0 0
        %8792 = vmatprep.subr.bf16.mxu0 0
        %8793 = vmatpush1.bf16.msra.mxu0 0
        %8794 = vmatprep.subr.bf16.mxu0 0
        %8795 = vmatpush1.bf16.msra.mxu0 0
        %8796 = vmatprep.subr.bf16.mxu0 0
        %8797 = vmatpush1.bf16.msra.mxu0 0
        %8798 = vmatprep.mubr.bf16.mxu0 0
        %8799 = vmatmul.mubr.bf16.gmra.mrb[0].mxu0 %v8701
        %v8800 = vpop.f32.mrb[0].mxu0
        %v8801 = vadd.f32 0.0, %v8800
        %v8802 = vpop.f32.mrb[0].mxu0
        %v8803 = vpop.f32.mrb[0].mxu0
        %v8804 = vpop.f32.mrb[0].mxu0
        %8805 = vdwg.mxu0
        %8806 = vst [vmem:[%s825] sm:$0xf] %v8801
        %s8807 = sand.u32 %s456, 1
        %s8808 = scalar_lea.sflag [#allocation4], %s8807
        %s8809 = sand.u32 %s456, 1
        %s8810 = smul.addr %s8809, 4
        %s8811 = scalar_lea.vmem [#allocation29], %s8810
        // Predicated region
        $region165: #{tpu_custom_call.1} parent=95 // pred_check
          %p8812 = pneg %p466
        $region166: #{tpu_custom_call.1} parent=95 // pred_check_branch
          %8814 = sbr.rel (%p8812) target = $region168
        $region167: #{tpu_custom_call.1} parent=95 // pred_region
          %s8816 = ssub.s32 64, 64
          %8817 = vsyncadd %s8808, %s8816
          %s8818 = smul.addr %s44, 64
          %s8819 = scalar_lea.hbm %s19, %s8818
          %s8821 = sshll.u32 %s8811, 4
          %s8822 = int_to_ptr.vmem [resolvable:$true] %s8821
          %8824 = dma.vmem_to_hbm [thread:$0]  %s8822, 64, %s8819, %s8808
        $region168: #{tpu_custom_call.1} parent=95 // pred_fallthru
          _
      $region96: #{tpu_custom_call.1} parent=5 // pred_fallthru
        _
      %p8825 = scmp.le.s32.totalorder 2, %s39
      // Predicated region
      $region169: #{tpu_custom_call.1} parent=5 // pred_check
        %p8826 = pneg %p8825
      $region170: #{tpu_custom_call.1} parent=5 // pred_check_branch
        %8828 = sbr.rel (%p8826) target = $region172
      $region171: #{tpu_custom_call.1} parent=5 // pred_region
        %s8829 = ssub.s32 %s39, 2
        // Predicated region
        $region173: #{tpu_custom_call.1} parent=171 // pred_check
          %p8830 = pneg %p472
        $region174: #{tpu_custom_call.1} parent=171 // pred_check_branch
          %8832 = sbr.rel (%p8830) target = $region176
        $region175: #{tpu_custom_call.1} parent=171 // pred_region
          %s8833 = sand.u32 %s457, 1
          %s8834 = scalar_lea.sflag [#allocation4], %s8833
          %s8835 = sand.u32 %s457, 1
          %s8836 = smul.addr %s8835, 4
          %s8837 = scalar_lea.vmem [#allocation29], %s8836
          %8838 = dma.done %s8834, 64
        $region176: #{tpu_custom_call.1} parent=171 // pred_fallthru
          _
      $region172: #{tpu_custom_call.1} parent=5 // pred_fallthru
        _
    $region6: #{tpu_custom_call.1} parent=1 // loop_footer
      %s43 = sadd.s32 1, %s39
    $region7: #{tpu_custom_call.1} parent=1 // loop_footer_branch
      %38 = sbr.rel target = $region3
    $region8: #{tpu_custom_call.1} parent=1 // loop_exit
      _
    %8839 = vsyncpa [#allocation3], 1
    %s8840 = scalar_lea.sflag [#allocation3], 1
    %8841 = vsyncpa %s8840, 1
    %8842 = vsyncpa [#allocation6], 1
    %8843 = vsyncpa [#allocation9], 1
    %8844 = vsyncpa [#allocation12], 1
    %8845 = vsyncpa [#allocation15], 1
    %8846 = vsyncpa [#allocation18], 1
    %8847 = vsyncpa [#allocation21], 1
    %8848 = vsyncpa [#allocation24], 1
    %8849 = vsyncpa [#allocation27], 1
    %8850 = vsyncpa [#allocation4], 1
    %s8851 = scalar_lea.sflag [#allocation4], 1
    %8852 = vsyncpa %s8851, 1

</llo_original>
